<compile_context>
chip_gen: v7x
topology: tpu7x:2x2x1
jax: 0.10.0
libtpu: 0.0.40
codegen_flags: <defaults>
</compile_context>

<pallas_src>
import numpy as np
from functools import partial

import jax
import jax.numpy as jnp
from jax import lax
from jax.experimental import pallas as pl
from jax.experimental.pallas import tpu as pltpu


# Fixed layer dims of the instantiated graph.
C_IN, C_OUT, KH, KW = 4, 8, 3, 3
H = W = 16
PAD = 1
HP, WP = H + 2 * PAD, W + 2 * PAD          # 18, 18
HW = H * W                                  # 256
F_IN = C_IN * HP * WP                       # 1296 padded-input features / sample
F_CONV = C_OUT * HW                         # 2048 NCHW-flattened conv outputs / sample
HIDDEN = 32

BATCH_BLOCK = 128                           # samples per grid step


def _fused_chain_kernel(x_ref, wc_ref, cb_ref, wl_ref, lb_ref, o_ref):
    """One batch block per grid step: conv(as dense matmul)+bias+ReLU+linear."""
    # Conv as a single dense matmul against the unfolded (Toeplitz) weight:
    # (TB, F_IN) @ (F_IN, F_CONV) -> (TB, F_CONV), rows = samples, lanes dense.
    h = jnp.dot(x_ref[...], wc_ref[...], preferred_element_type=jnp.float32)
    h = jnp.maximum(h + cb_ref[...], 0.0)                      # conv bias + ReLU

    # Flatten is implicit (columns already in NCHW order c*HW + h*W + w).
    # Linear: (TB, 2048) @ (2048, 32) + bias.
    y = jnp.dot(h, wl_ref[...], preferred_element_type=jnp.float32) + lb_ref[...]
    o_ref[...] = y.astype(o_ref.dtype)


def prepare_params(params):
    """One-time host-side repack of PyTorch-layout weights.

    Builds the unfolded conv weight wc[f_in, f_out] where
      f_in  = ci*HP*WP + (h+i)*WP + (w+j)   (zero-padded input, flattened)
      f_out = c*HW + h*W + w                (PyTorch NCHW flatten order)
    so the conv becomes one dense matmul and its output is already in the
    exact order the Linear layer expects (no in-kernel transpose/reshape).
    """
    conv_w = np.asarray(jax.device_get(params["conv_w"]), np.float32)  # (8,4,3,3)
    conv_b = np.asarray(jax.device_get(params["conv_b"]), np.float32)  # (8,)
    lin_w = np.asarray(jax.device_get(params["lin_w"]), np.float32)    # (32, 2048)
    lin_b = np.asarray(jax.device_get(params["lin_b"]), np.float32)    # (32,)

    wc = np.zeros((F_IN, F_CONV), np.float32)
    c, ci, i, j, h, w = np.meshgrid(
        np.arange(C_OUT), np.arange(C_IN), np.arange(KH), np.arange(KW),
        np.arange(H), np.arange(W), indexing="ij")
    rows = ci * (HP * WP) + (h + i) * WP + (w + j)
    cols = c * HW + h * W + w
    wc[rows.ravel(), cols.ravel()] = conv_w[c, ci, i, j].ravel()

    cb = np.repeat(conv_b, HW).reshape(1, F_CONV)     # bias per flattened conv output
    wl = np.ascontiguousarray(lin_w.T)                # (F_CONV, HIDDEN)
    lb = lin_b.reshape(1, HIDDEN)

    return {"wc": jnp.asarray(wc), "cb": jnp.asarray(cb),
            "wl": jnp.asarray(wl), "lb": jnp.asarray(lb)}


@jax.jit
def model_forward(x, prepped):
    """x: (N, C_in, H, W) NCHW float32, like PyTorch."""
    n = x.shape[0]
    tb = min(BATCH_BLOCK, n)
    n_pad = -(-n // tb) * tb                  # round batch up to a multiple of tb

    # Zero-pad spatially (conv padding=1), zero-pad the batch tail, flatten.
    xp = jnp.pad(x, ((0, n_pad - n), (0, 0), (PAD, PAD), (PAD, PAD)))
    xf = xp.reshape(n_pad, F_IN)              # (N_pad, 1296), lane-dense rows

    num_blocks = n_pad // tb
    out = pl.pallas_call(
        _fused_chain_kernel,
        out_shape=jax.ShapeDtypeStruct((n_pad, HIDDEN), x.dtype),
        grid_spec=pltpu.PrefetchScalarGridSpec(
            num_scalar_prefetch=0,
            grid=(num_blocks,),
            in_specs=[
                pl.BlockSpec((tb, F_IN), lambda b: (b, 0)),        # batch block
                pl.BlockSpec((F_IN, F_CONV), lambda b: (0, 0)),    # resident conv W
                pl.BlockSpec((1, F_CONV), lambda b: (0, 0)),       # resident conv bias row
                pl.BlockSpec((F_CONV, HIDDEN), lambda b: (0, 0)),  # resident linear W
                pl.BlockSpec((1, HIDDEN), lambda b: (0, 0)),       # resident linear bias
            ],
            out_specs=pl.BlockSpec((tb, HIDDEN), lambda b: (b, 0)),
        ),
        compiler_params=pltpu.CompilerParams(
            dimension_semantics=("parallel",),          # batch blocks split over cores
            vmem_limit_bytes=40 * 1024 * 1024,          # resident weights + double buffers
        ),
    )(xf, prepped["wc"], prepped["cb"], prepped["wl"], prepped["lb"])

    return out[:n]


def init_params(key):
    k1, k2, k3, k4 = jax.random.split(key, 4)
    conv_w = jax.random.normal(k1, (C_OUT, C_IN, KH, KW), jnp.float32) * 0.1
    conv_b = jax.random.normal(k2, (C_OUT,), jnp.float32) * 0.1
    in_feat = C_OUT * H * W
    lin_w = jax.random.normal(k3, (HIDDEN, in_feat), jnp.float32) * 0.02
    lin_b = jax.random.normal(k4, (HIDDEN,), jnp.float32) * 0.02
    return {"conv_w": conv_w, "conv_b": conv_b, "lin_w": lin_w, "lin_b": lin_b}


if __name__ == "__main__":
    key = jax.random.PRNGKey(0)
    kx, kp = jax.random.split(key)
    x = jax.random.normal(kx, (2, C_IN, H, W), jnp.float32)       # NCHW
    params = init_params(kp)
    prepped = prepare_params(params)                               # one-time repack

    y = model_forward(x, prepped)
    y = jax.block_until_ready(y)

    # Sanity check against a plain-JAX reference of the same chain.
    ref_conv = lax.conv_general_dilated(
        x, params["conv_w"], window_strides=(1, 1), padding=((1, 1), (1, 1)),
        dimension_numbers=("NCHW", "OIHW", "NCHW"))
    ref_h = jnp.maximum(ref_conv + params["conv_b"][None, :, None, None], 0.0)
    ref_y = ref_h.reshape(x.shape[0], -1) @ params["lin_w"].T + params["lin_b"]

    assert y.shape == (2, HIDDEN)
    assert jnp.allclose(y, ref_y, atol=1e-3, rtol=1e-3), float(jnp.max(jnp.abs(y - ref_y)))

    print("KERNEL_OK")
</pallas_src>

<mosaic_0001>
module attributes {stable_mosaic.version = 11 : i64} {
  func.func @_fused_chain_kernel(%arg0: i32, %arg1: memref<2x1296xf32, #tpu.memory_space<vmem>>, %arg2: memref<1296x2048xf32, #tpu.memory_space<vmem>>, %arg3: memref<1x2048xf32, #tpu.memory_space<vmem>>, %arg4: memref<2048x32xf32, #tpu.memory_space<vmem>>, %arg5: memref<1x32xf32, #tpu.memory_space<vmem>>, %arg6: memref<2x32xf32, #tpu.memory_space<vmem>>) attributes {dimension_semantics = [#tpu.dimension_semantics<parallel>], iteration_bounds = array<i64: 1>, scalar_prefetch = 0 : i64, scratch_operands = 0 : i64, tpu.core_type = #tpu.core_type<tc>, window_params = [{transform_indices = @transform_0, window_bounds = array<i64: 2, 1296>}, {pipeline_mode = #tpu.pipeline_mode<synchronous>, transform_indices = @transform_1, window_bounds = array<i64: 1296, 2048>}, {pipeline_mode = #tpu.pipeline_mode<synchronous>, transform_indices = @transform_2, window_bounds = array<i64: 1, 2048>}, {pipeline_mode = #tpu.pipeline_mode<synchronous>, transform_indices = @transform_3, window_bounds = array<i64: 2048, 32>}, {pipeline_mode = #tpu.pipeline_mode<synchronous>, transform_indices = @transform_4, window_bounds = array<i64: 1, 32>}, {transform_indices = @transform_5, window_bounds = array<i64: 2, 32>}]} {
    %c0 = arith.constant 0 : index
    %c0_0 = arith.constant 0 : index
    %0 = vector.load %arg1[%c0, %c0_0] : memref<2x1296xf32, #tpu.memory_space<vmem>>, vector<2x1296xf32>
    %c0_1 = arith.constant 0 : index
    %c0_2 = arith.constant 0 : index
    %1 = vector.load %arg2[%c0_1, %c0_2] : memref<1296x2048xf32, #tpu.memory_space<vmem>>, vector<1296x2048xf32>
    %cst = arith.constant dense<0.000000e+00> : vector<2x2048xf32>
    %2 = tpu.matmul %0, %1, %cst {dimension_numbers = #tpu.dot_dimension_numbers<[1], [0], [0], [1], [0, 0, 1, 1], [], []>} : vector<2x1296xf32>, vector<1296x2048xf32>, vector<2x2048xf32> -> vector<2x2048xf32>
    %c0_3 = arith.constant 0 : index
    %c0_4 = arith.constant 0 : index
    %3 = vector.load %arg3[%c0_3, %c0_4] : memref<1x2048xf32, #tpu.memory_space<vmem>>, vector<1x2048xf32>
    %4 = vector.broadcast %3 : vector<1x2048xf32> to vector<2x2048xf32>
    %5 = arith.addf %2, %4 : vector<2x2048xf32>
    %cst_5 = arith.constant 0.000000e+00 : f32
    %6 = vector.broadcast %cst_5 : f32 to vector<2x2048xf32>
    %7 = arith.maximumf %5, %6 : vector<2x2048xf32>
    %c0_6 = arith.constant 0 : index
    %c0_7 = arith.constant 0 : index
    %8 = vector.load %arg4[%c0_6, %c0_7] : memref<2048x32xf32, #tpu.memory_space<vmem>>, vector<2048x32xf32>
    %cst_8 = arith.constant dense<0.000000e+00> : vector<2x32xf32>
    %9 = tpu.matmul %7, %8, %cst_8 {dimension_numbers = #tpu.dot_dimension_numbers<[1], [0], [0], [1], [0, 0, 1, 1], [], []>} : vector<2x2048xf32>, vector<2048x32xf32>, vector<2x32xf32> -> vector<2x32xf32>
    %c0_9 = arith.constant 0 : index
    %c0_10 = arith.constant 0 : index
    %10 = vector.load %arg5[%c0_9, %c0_10] : memref<1x32xf32, #tpu.memory_space<vmem>>, vector<1x32xf32>
    %11 = vector.broadcast %10 : vector<1x32xf32> to vector<2x32xf32>
    %12 = arith.addf %9, %11 : vector<2x32xf32>
    %c0_11 = arith.constant 0 : index
    %c0_12 = arith.constant 0 : index
    %13 = vector.load %arg6[%c0_11, %c0_12] : memref<2x32xf32, #tpu.memory_space<vmem>>, vector<2x32xf32>
    tpu.vector_store %arg6[%c0_11, %c0_12], %12 {strides = array<i32>} : memref<2x32xf32, #tpu.memory_space<vmem>>, vector<2x32xf32>,
    return
  }
  func.func @transform_0(%arg0: i32) -> (i32, i32) {
    %c0_i32 = arith.constant 0 : i32
    %c0_i32_0 = arith.constant 0 : i32
    return %arg0, %c0_i32 : i32, i32
  }
  func.func @transform_1(%arg0: i32) -> (i32, i32) {
    %c0_i32 = arith.constant 0 : i32
    %c0_i32_0 = arith.constant 0 : i32
    %c0_i32_1 = arith.constant 0 : i32
    return %c0_i32, %c0_i32_0 : i32, i32
  }
  func.func @transform_2(%arg0: i32) -> (i32, i32) {
    %c0_i32 = arith.constant 0 : i32
    %c0_i32_0 = arith.constant 0 : i32
    %c0_i32_1 = arith.constant 0 : i32
    return %c0_i32, %c0_i32_0 : i32, i32
  }
  func.func @transform_3(%arg0: i32) -> (i32, i32) {
    %c0_i32 = arith.constant 0 : i32
    %c0_i32_0 = arith.constant 0 : i32
    %c0_i32_1 = arith.constant 0 : i32
    return %c0_i32, %c0_i32_0 : i32, i32
  }
  func.func @transform_4(%arg0: i32) -> (i32, i32) {
    %c0_i32 = arith.constant 0 : i32
    %c0_i32_0 = arith.constant 0 : i32
    %c0_i32_1 = arith.constant 0 : i32
    return %c0_i32, %c0_i32_0 : i32, i32
  }
  func.func @transform_5(%arg0: i32) -> (i32, i32) {
    %c0_i32 = arith.constant 0 : i32
    %c0_i32_0 = arith.constant 0 : i32
    return %arg0, %c0_i32 : i32, i32
  }
}

</mosaic_0001>

<llo_original>
// kernel: model_forward.1
$region0: #{model_forward.1}
  #allocation0 [shape = 'u32[]', space=smem, size = 0x4, offset = 0x4, fixed_abs, tag = 'smem constant byte address 0x4 - core index']
  #allocation1 [shape = 'u32[144,128]{1,0:T(1,128)}', space=vmem, size = 0x12000, scoped, tag = 'internal scratch']
  %s0 = inlined_call_operand.vmem [shape: f32[2,1296], index: 0, kind: input, shape index: {}]
  %s1 = inlined_call_operand.hbm [shape: f32[1296,2048], index: 1, kind: input, shape index: {}]
  %s2 = inlined_call_operand.hbm [shape: f32[1,2048], index: 2, kind: input, shape index: {}]
  %s3 = inlined_call_operand.vmem [shape: f32[2048,32], index: 3, kind: input, shape index: {}]
  %s4 = inlined_call_operand.hbm [shape: f32[1,32], index: 4, kind: input, shape index: {}]
  %s5 = inlined_call_operand.hbm [shape: f32[2,32], index: 5, kind: output, shape index: {}]
  %s6 = sld [smem:[#allocation0]]
  $region42: #{model_forward.1} parent=0
    _
  %s8 = ssub.s32 1, %s6
  %s9 = scalar_select 0, %s8, %s6
  $region1: #{model_forward.1} parent=0
    #allocation2 [shape = 'u8[10616832]{0}', space=vmem, size = 0xa20000, scoped, tag = 'input window, operand 1, single buffered']
    #allocation3 [shape = 's32[1]{0}', space=sflag, size = 0x4, scoped, tag = 'scoped memory for model_forward.1']
    #allocation4 [shape = 's32[1]{0}', space=sflag, size = 0x4, scoped, tag = 'scoped memory for model_forward.1']
    #allocation5 [shape = 'u8[8192]{0}', space=vmem, size = 0x2000, scoped, tag = 'input window, operand 2, single buffered']
    #allocation6 [shape = 's32[1]{0}', space=sflag, size = 0x4, scoped, tag = 'scoped memory for model_forward.1']
    #allocation7 [shape = 'u8[512]{0}', space=vmem, size = 0x400, scoped, tag = 'input window, operand 4, single buffered']
    #allocation8 [shape = 'u8[1024]{0}', space=vmem, size = 0x400, scoped, tag = 'output window, operand 0, single buffered']
    %10 = vsyncpa [#allocation3], 0
    %11 = vsyncpa [#allocation6], 0
    %12 = vsyncpa [#allocation4], 0
    // Predicated region
    $region2: #{model_forward.1} parent=1 // pred_check
      _
    $region3: #{model_forward.1} parent=1 // pred_check_branch
      %14 = sbr.rel (0) target = $region5
    $region4: #{model_forward.1} parent=1 // pred_region
      _
    $region5: #{model_forward.1} parent=1 // pred_fallthru
      _
    // Predicated region
    $region6: #{model_forward.1} parent=1 // pred_check
      _
    $region7: #{model_forward.1} parent=1 // pred_check_branch
      %16 = sbr.rel (0) target = $region9
    $region8: #{model_forward.1} parent=1 // pred_region
      %s18 = ssub.s32 331776, 331776
      %19 = vsyncadd [#allocation3], %s18
      %s20 = sshll.u32 [#allocation2], 4
      %s21 = int_to_ptr.vmem [resolvable:$true] %s20
      %26 = dma.hbm_to_vmem [thread:$0]  %s1, 331776, %s21, [#allocation3], 2048, 2048, 128
    $region9: #{model_forward.1} parent=1 // pred_fallthru
      _
    // Predicated region
    $region10: #{model_forward.1} parent=1 // pred_check
      _
    $region11: #{model_forward.1} parent=1 // pred_check_branch
      %28 = sbr.rel (0) target = $region13
    $region12: #{model_forward.1} parent=1 // pred_region
      %s30 = ssub.s32 256, 256
      %31 = vsyncadd [#allocation6], %s30
      %s33 = sshll.u32 [#allocation5], 4
      %s34 = int_to_ptr.vmem [resolvable:$true] %s33
      %36 = dma.hbm_to_vmem [thread:$0]  %s2, 256, %s34, [#allocation6]
    $region13: #{model_forward.1} parent=1 // pred_fallthru
      _
    // Predicated region
    $region14: #{model_forward.1} parent=1 // pred_check
      _
    $region15: #{model_forward.1} parent=1 // pred_check_branch
      %38 = sbr.rel (0) target = $region17
    $region16: #{model_forward.1} parent=1 // pred_region
      _
    $region17: #{model_forward.1} parent=1 // pred_fallthru
      _
    // Predicated region
    $region18: #{model_forward.1} parent=1 // pred_check
      _
    $region19: #{model_forward.1} parent=1 // pred_check_branch
      %40 = sbr.rel (0) target = $region21
    $region20: #{model_forward.1} parent=1 // pred_region
      %s42 = ssub.s32 16, 16
      %43 = vsyncadd [#allocation6], %s42
      %s45 = sshll.u32 [#allocation7], 4
      %s46 = int_to_ptr.vmem [resolvable:$true] %s45
      %48 = dma.hbm_to_vmem [thread:$0]  %s4, 16, %s46, [#allocation6]
    $region21: #{model_forward.1} parent=1 // pred_fallthru
      _
    // Predicated region
    $region22: #{model_forward.1} parent=1 // pred_check
      _
    $region23: #{model_forward.1} parent=1 // pred_check_branch
      %50 = sbr.rel (0) target = $region25
    $region24: #{model_forward.1} parent=1 // pred_region
      %51 = dma.done [#allocation3], 331776
    $region25: #{model_forward.1} parent=1 // pred_fallthru
      _
    // Predicated region
    $region26: #{model_forward.1} parent=1 // pred_check
      _
    $region27: #{model_forward.1} parent=1 // pred_check_branch
      %53 = sbr.rel (0) target = $region29
    $region28: #{model_forward.1} parent=1 // pred_region
      %54 = dma.done [#allocation6], 256
    $region29: #{model_forward.1} parent=1 // pred_fallthru
      _
    // Predicated region
    $region30: #{model_forward.1} parent=1 // pred_check
      _
    $region31: #{model_forward.1} parent=1 // pred_check_branch
      %56 = sbr.rel (0) target = $region33
    $region32: #{model_forward.1} parent=1 // pred_region
      %57 = dma.done [#allocation6], 16
    $region33: #{model_forward.1} parent=1 // pred_fallthru
      _
    %v58 = vld [vmem:[%s0] sm:$0xff]
    %v59 = vld [vmem:[%s0 + $0x8] sm:$0xff]
    %v60 = vld [vmem:[%s0 + $0x10] sm:$0x3f]
    %v61 = vld [vmem:[#allocation2] sm:$0xff]
    %v62 = vld [vmem:[#allocation2 + $0x8] sm:$0xff]
    %v63 = vld [vmem:[#allocation2 + $0x10] sm:$0xff]
    %v64 = vld [vmem:[#allocation2 + $0x18] sm:$0xff]
    %v65 = vld [vmem:[#allocation2 + $0x20] sm:$0xff]
    %v66 = vld [vmem:[#allocation2 + $0x28] sm:$0xff]
    %v67 = vld [vmem:[#allocation2 + $0x30] sm:$0xff]
    %v68 = vld [vmem:[#allocation2 + $0x38] sm:$0xff]
    %v69 = vld [vmem:[#allocation2 + $0x40] sm:$0xff]
    %v70 = vld [vmem:[#allocation2 + $0x48] sm:$0xff]
    %v71 = vld [vmem:[#allocation2 + $0x50] sm:$0xff]
    %v72 = vld [vmem:[#allocation2 + $0x58] sm:$0xff]
    %v73 = vld [vmem:[#allocation2 + $0x60] sm:$0xff]
    %v74 = vld [vmem:[#allocation2 + $0x68] sm:$0xff]
    %v75 = vld [vmem:[#allocation2 + $0x70] sm:$0xff]
    %v76 = vld [vmem:[#allocation2 + $0x78] sm:$0xff]
    %v77 = vld [vmem:[#allocation2 + $0x80] sm:$0xff]
    %v78 = vld [vmem:[#allocation2 + $0x88] sm:$0xff]
    %v79 = vld [vmem:[#allocation2 + $0x90] sm:$0xff]
    %v80 = vld [vmem:[#allocation2 + $0x98] sm:$0xff]
    %v81 = vld [vmem:[#allocation2 + $0xa0] sm:$0xff]
    %v82 = vld [vmem:[#allocation2 + $0xa8] sm:$0xff]
    %v83 = vld [vmem:[#allocation2 + $0xb0] sm:$0xff]
    %v84 = vld [vmem:[#allocation2 + $0xb8] sm:$0xff]
    %v85 = vld [vmem:[#allocation2 + $0xc0] sm:$0xff]
    %v86 = vld [vmem:[#allocation2 + $0xc8] sm:$0xff]
    %v87 = vld [vmem:[#allocation2 + $0xd0] sm:$0xff]
    %v88 = vld [vmem:[#allocation2 + $0xd8] sm:$0xff]
    %v89 = vld [vmem:[#allocation2 + $0xe0] sm:$0xff]
    %v90 = vld [vmem:[#allocation2 + $0xe8] sm:$0xff]
    %v91 = vld [vmem:[#allocation2 + $0xf0] sm:$0xff]
    %v92 = vld [vmem:[#allocation2 + $0xf8] sm:$0xff]
    %v93 = vld [vmem:[#allocation2 + $0x100] sm:$0xff]
    %v94 = vld [vmem:[#allocation2 + $0x108] sm:$0xff]
    %v95 = vld [vmem:[#allocation2 + $0x110] sm:$0xff]
    %v96 = vld [vmem:[#allocation2 + $0x118] sm:$0xff]
    %v97 = vld [vmem:[#allocation2 + $0x120] sm:$0xff]
    %v98 = vld [vmem:[#allocation2 + $0x128] sm:$0xff]
    %v99 = vld [vmem:[#allocation2 + $0x130] sm:$0xff]
    %v100 = vld [vmem:[#allocation2 + $0x138] sm:$0xff]
    %v101 = vld [vmem:[#allocation2 + $0x140] sm:$0xff]
    %v102 = vld [vmem:[#allocation2 + $0x148] sm:$0xff]
    %v103 = vld [vmem:[#allocation2 + $0x150] sm:$0xff]
    %v104 = vld [vmem:[#allocation2 + $0x158] sm:$0xff]
    %v105 = vld [vmem:[#allocation2 + $0x160] sm:$0xff]
    %v106 = vld [vmem:[#allocation2 + $0x168] sm:$0xff]
    %v107 = vld [vmem:[#allocation2 + $0x170] sm:$0xff]
    %v108 = vld [vmem:[#allocation2 + $0x178] sm:$0xff]
    %v109 = vld [vmem:[#allocation2 + $0x180] sm:$0xff]
    %v110 = vld [vmem:[#allocation2 + $0x188] sm:$0xff]
    %v111 = vld [vmem:[#allocation2 + $0x190] sm:$0xff]
    %v112 = vld [vmem:[#allocation2 + $0x198] sm:$0xff]
    %v113 = vld [vmem:[#allocation2 + $0x1a0] sm:$0xff]
    %v114 = vld [vmem:[#allocation2 + $0x1a8] sm:$0xff]
    %v115 = vld [vmem:[#allocation2 + $0x1b0] sm:$0xff]
    %v116 = vld [vmem:[#allocation2 + $0x1b8] sm:$0xff]
    %v117 = vld [vmem:[#allocation2 + $0x1c0] sm:$0xff]
    %v118 = vld [vmem:[#allocation2 + $0x1c8] sm:$0xff]
    %v119 = vld [vmem:[#allocation2 + $0x1d0] sm:$0xff]
    %v120 = vld [vmem:[#allocation2 + $0x1d8] sm:$0xff]
    %v121 = vld [vmem:[#allocation2 + $0x1e0] sm:$0xff]
    %v122 = vld [vmem:[#allocation2 + $0x1e8] sm:$0xff]
    %v123 = vld [vmem:[#allocation2 + $0x1f0] sm:$0xff]
    %v124 = vld [vmem:[#allocation2 + $0x1f8] sm:$0xff]
    %v125 = vld [vmem:[#allocation2 + $0x200] sm:$0xff]
    %v126 = vld [vmem:[#allocation2 + $0x208] sm:$0xff]
    %v127 = vld [vmem:[#allocation2 + $0x210] sm:$0xff]
    %v128 = vld [vmem:[#allocation2 + $0x218] sm:$0xff]
    %v129 = vld [vmem:[#allocation2 + $0x220] sm:$0xff]
    %v130 = vld [vmem:[#allocation2 + $0x228] sm:$0xff]
    %v131 = vld [vmem:[#allocation2 + $0x230] sm:$0xff]
    %v132 = vld [vmem:[#allocation2 + $0x238] sm:$0xff]
    %v133 = vld [vmem:[#allocation2 + $0x240] sm:$0xff]
    %v134 = vld [vmem:[#allocation2 + $0x248] sm:$0xff]
    %v135 = vld [vmem:[#allocation2 + $0x250] sm:$0xff]
    %v136 = vld [vmem:[#allocation2 + $0x258] sm:$0xff]
    %v137 = vld [vmem:[#allocation2 + $0x260] sm:$0xff]
    %v138 = vld [vmem:[#allocation2 + $0x268] sm:$0xff]
    %v139 = vld [vmem:[#allocation2 + $0x270] sm:$0xff]
    %v140 = vld [vmem:[#allocation2 + $0x278] sm:$0xff]
    %v141 = vld [vmem:[#allocation2 + $0x280] sm:$0xff]
    %v142 = vld [vmem:[#allocation2 + $0x288] sm:$0xff]
    %v143 = vld [vmem:[#allocation2 + $0x290] sm:$0xff]
    %v144 = vld [vmem:[#allocation2 + $0x298] sm:$0xff]
    %v145 = vld [vmem:[#allocation2 + $0x2a0] sm:$0xff]
    %v146 = vld [vmem:[#allocation2 + $0x2a8] sm:$0xff]
    %v147 = vld [vmem:[#allocation2 + $0x2b0] sm:$0xff]
    %v148 = vld [vmem:[#allocation2 + $0x2b8] sm:$0xff]
    %v149 = vld [vmem:[#allocation2 + $0x2c0] sm:$0xff]
    %v150 = vld [vmem:[#allocation2 + $0x2c8] sm:$0xff]
    %v151 = vld [vmem:[#allocation2 + $0x2d0] sm:$0xff]
    %v152 = vld [vmem:[#allocation2 + $0x2d8] sm:$0xff]
    %v153 = vld [vmem:[#allocation2 + $0x2e0] sm:$0xff]
    %v154 = vld [vmem:[#allocation2 + $0x2e8] sm:$0xff]
    %v155 = vld [vmem:[#allocation2 + $0x2f0] sm:$0xff]
    %v156 = vld [vmem:[#allocation2 + $0x2f8] sm:$0xff]
    %v157 = vld [vmem:[#allocation2 + $0x300] sm:$0xff]
    %v158 = vld [vmem:[#allocation2 + $0x308] sm:$0xff]
    %v159 = vld [vmem:[#allocation2 + $0x310] sm:$0xff]
    %v160 = vld [vmem:[#allocation2 + $0x318] sm:$0xff]
    %v161 = vld [vmem:[#allocation2 + $0x320] sm:$0xff]
    %v162 = vld [vmem:[#allocation2 + $0x328] sm:$0xff]
    %v163 = vld [vmem:[#allocation2 + $0x330] sm:$0xff]
    %v164 = vld [vmem:[#allocation2 + $0x338] sm:$0xff]
    %v165 = vld [vmem:[#allocation2 + $0x340] sm:$0xff]
    %v166 = vld [vmem:[#allocation2 + $0x348] sm:$0xff]
    %v167 = vld [vmem:[#allocation2 + $0x350] sm:$0xff]
    %v168 = vld [vmem:[#allocation2 + $0x358] sm:$0xff]
    %v169 = vld [vmem:[#allocation2 + $0x360] sm:$0xff]
    %v170 = vld [vmem:[#allocation2 + $0x368] sm:$0xff]
    %v171 = vld [vmem:[#allocation2 + $0x370] sm:$0xff]
    %v172 = vld [vmem:[#allocation2 + $0x378] sm:$0xff]
    %v173 = vld [vmem:[#allocation2 + $0x380] sm:$0xff]
    %v174 = vld [vmem:[#allocation2 + $0x388] sm:$0xff]
    %v175 = vld [vmem:[#allocation2 + $0x390] sm:$0xff]
    %v176 = vld [vmem:[#allocation2 + $0x398] sm:$0xff]
    %v177 = vld [vmem:[#allocation2 + $0x3a0] sm:$0xff]
    %v178 = vld [vmem:[#allocation2 + $0x3a8] sm:$0xff]
    %v179 = vld [vmem:[#allocation2 + $0x3b0] sm:$0xff]
    %v180 = vld [vmem:[#allocation2 + $0x3b8] sm:$0xff]
    %v181 = vld [vmem:[#allocation2 + $0x3c0] sm:$0xff]
    %v182 = vld [vmem:[#allocation2 + $0x3c8] sm:$0xff]
    %v183 = vld [vmem:[#allocation2 + $0x3d0] sm:$0xff]
    %v184 = vld [vmem:[#allocation2 + $0x3d8] sm:$0xff]
    %v185 = vld [vmem:[#allocation2 + $0x3e0] sm:$0xff]
    %v186 = vld [vmem:[#allocation2 + $0x3e8] sm:$0xff]
    %v187 = vld [vmem:[#allocation2 + $0x3f0] sm:$0xff]
    %v188 = vld [vmem:[#allocation2 + $0x3f8] sm:$0xff]
    %v189 = vld [vmem:[#allocation2 + $0x400] sm:$0xff]
    %v190 = vld [vmem:[#allocation2 + $0x408] sm:$0xff]
    %v191 = vld [vmem:[#allocation2 + $0x410] sm:$0xff]
    %v192 = vld [vmem:[#allocation2 + $0x418] sm:$0xff]
    %v193 = vld [vmem:[#allocation2 + $0x420] sm:$0xff]
    %v194 = vld [vmem:[#allocation2 + $0x428] sm:$0xff]
    %v195 = vld [vmem:[#allocation2 + $0x430] sm:$0xff]
    %v196 = vld [vmem:[#allocation2 + $0x438] sm:$0xff]
    %v197 = vld [vmem:[#allocation2 + $0x440] sm:$0xff]
    %v198 = vld [vmem:[#allocation2 + $0x448] sm:$0xff]
    %v199 = vld [vmem:[#allocation2 + $0x450] sm:$0xff]
    %v200 = vld [vmem:[#allocation2 + $0x458] sm:$0xff]
    %v201 = vld [vmem:[#allocation2 + $0x460] sm:$0xff]
    %v202 = vld [vmem:[#allocation2 + $0x468] sm:$0xff]
    %v203 = vld [vmem:[#allocation2 + $0x470] sm:$0xff]
    %v204 = vld [vmem:[#allocation2 + $0x478] sm:$0xff]
    %v205 = vld [vmem:[#allocation2 + $0x480] sm:$0xff]
    %v206 = vld [vmem:[#allocation2 + $0x488] sm:$0xff]
    %v207 = vld [vmem:[#allocation2 + $0x490] sm:$0xff]
    %v208 = vld [vmem:[#allocation2 + $0x498] sm:$0xff]
    %v209 = vld [vmem:[#allocation2 + $0x4a0] sm:$0xff]
    %v210 = vld [vmem:[#allocation2 + $0x4a8] sm:$0xff]
    %v211 = vld [vmem:[#allocation2 + $0x4b0] sm:$0xff]
    %v212 = vld [vmem:[#allocation2 + $0x4b8] sm:$0xff]
    %v213 = vld [vmem:[#allocation2 + $0x4c0] sm:$0xff]
    %v214 = vld [vmem:[#allocation2 + $0x4c8] sm:$0xff]
    %v215 = vld [vmem:[#allocation2 + $0x4d0] sm:$0xff]
    %v216 = vld [vmem:[#allocation2 + $0x4d8] sm:$0xff]
    %v217 = vld [vmem:[#allocation2 + $0x4e0] sm:$0xff]
    %v218 = vld [vmem:[#allocation2 + $0x4e8] sm:$0xff]
    %v219 = vld [vmem:[#allocation2 + $0x4f0] sm:$0xff]
    %v220 = vld [vmem:[#allocation2 + $0x4f8] sm:$0xff]
    %v221 = vld [vmem:[#allocation2 + $0x500] sm:$0xff]
    %v222 = vld [vmem:[#allocation2 + $0x508] sm:$0xff]
    %v223 = vld [vmem:[#allocation2 + $0x510] sm:$0xff]
    %v224 = vld [vmem:[#allocation2 + $0x518] sm:$0xff]
    %v225 = vld [vmem:[#allocation2 + $0x520] sm:$0xff]
    %v226 = vld [vmem:[#allocation2 + $0x528] sm:$0xff]
    %v227 = vld [vmem:[#allocation2 + $0x530] sm:$0xff]
    %v228 = vld [vmem:[#allocation2 + $0x538] sm:$0xff]
    %v229 = vld [vmem:[#allocation2 + $0x540] sm:$0xff]
    %v230 = vld [vmem:[#allocation2 + $0x548] sm:$0xff]
    %v231 = vld [vmem:[#allocation2 + $0x550] sm:$0xff]
    %v232 = vld [vmem:[#allocation2 + $0x558] sm:$0xff]
    %v233 = vld [vmem:[#allocation2 + $0x560] sm:$0xff]
    %v234 = vld [vmem:[#allocation2 + $0x568] sm:$0xff]
    %v235 = vld [vmem:[#allocation2 + $0x570] sm:$0xff]
    %v236 = vld [vmem:[#allocation2 + $0x578] sm:$0xff]
    %v237 = vld [vmem:[#allocation2 + $0x580] sm:$0xff]
    %v238 = vld [vmem:[#allocation2 + $0x588] sm:$0xff]
    %v239 = vld [vmem:[#allocation2 + $0x590] sm:$0xff]
    %v240 = vld [vmem:[#allocation2 + $0x598] sm:$0xff]
    %v241 = vld [vmem:[#allocation2 + $0x5a0] sm:$0xff]
    %v242 = vld [vmem:[#allocation2 + $0x5a8] sm:$0xff]
    %v243 = vld [vmem:[#allocation2 + $0x5b0] sm:$0xff]
    %v244 = vld [vmem:[#allocation2 + $0x5b8] sm:$0xff]
    %v245 = vld [vmem:[#allocation2 + $0x5c0] sm:$0xff]
    %v246 = vld [vmem:[#allocation2 + $0x5c8] sm:$0xff]
    %v247 = vld [vmem:[#allocation2 + $0x5d0] sm:$0xff]
    %v248 = vld [vmem:[#allocation2 + $0x5d8] sm:$0xff]
    %v249 = vld [vmem:[#allocation2 + $0x5e0] sm:$0xff]
    %v250 = vld [vmem:[#allocation2 + $0x5e8] sm:$0xff]
    %v251 = vld [vmem:[#allocation2 + $0x5f0] sm:$0xff]
    %v252 = vld [vmem:[#allocation2 + $0x5f8] sm:$0xff]
    %v253 = vld [vmem:[#allocation2 + $0x600] sm:$0xff]
    %v254 = vld [vmem:[#allocation2 + $0x608] sm:$0xff]
    %v255 = vld [vmem:[#allocation2 + $0x610] sm:$0xff]
    %v256 = vld [vmem:[#allocation2 + $0x618] sm:$0xff]
    %v257 = vld [vmem:[#allocation2 + $0x620] sm:$0xff]
    %v258 = vld [vmem:[#allocation2 + $0x628] sm:$0xff]
    %v259 = vld [vmem:[#allocation2 + $0x630] sm:$0xff]
    %v260 = vld [vmem:[#allocation2 + $0x638] sm:$0xff]
    %v261 = vld [vmem:[#allocation2 + $0x640] sm:$0xff]
    %v262 = vld [vmem:[#allocation2 + $0x648] sm:$0xff]
    %v263 = vld [vmem:[#allocation2 + $0x650] sm:$0xff]
    %v264 = vld [vmem:[#allocation2 + $0x658] sm:$0xff]
    %v265 = vld [vmem:[#allocation2 + $0x660] sm:$0xff]
    %v266 = vld [vmem:[#allocation2 + $0x668] sm:$0xff]
    %v267 = vld [vmem:[#allocation2 + $0x670] sm:$0xff]
    %v268 = vld [vmem:[#allocation2 + $0x678] sm:$0xff]
    %v269 = vld [vmem:[#allocation2 + $0x680] sm:$0xff]
    %v270 = vld [vmem:[#allocation2 + $0x688] sm:$0xff]
    %v271 = vld [vmem:[#allocation2 + $0x690] sm:$0xff]
    %v272 = vld [vmem:[#allocation2 + $0x698] sm:$0xff]
    %v273 = vld [vmem:[#allocation2 + $0x6a0] sm:$0xff]
    %v274 = vld [vmem:[#allocation2 + $0x6a8] sm:$0xff]
    %v275 = vld [vmem:[#allocation2 + $0x6b0] sm:$0xff]
    %v276 = vld [vmem:[#allocation2 + $0x6b8] sm:$0xff]
    %v277 = vld [vmem:[#allocation2 + $0x6c0] sm:$0xff]
    %v278 = vld [vmem:[#allocation2 + $0x6c8] sm:$0xff]
    %v279 = vld [vmem:[#allocation2 + $0x6d0] sm:$0xff]
    %v280 = vld [vmem:[#allocation2 + $0x6d8] sm:$0xff]
    %v281 = vld [vmem:[#allocation2 + $0x6e0] sm:$0xff]
    %v282 = vld [vmem:[#allocation2 + $0x6e8] sm:$0xff]
    %v283 = vld [vmem:[#allocation2 + $0x6f0] sm:$0xff]
    %v284 = vld [vmem:[#allocation2 + $0x6f8] sm:$0xff]
    %v285 = vld [vmem:[#allocation2 + $0x700] sm:$0xff]
    %v286 = vld [vmem:[#allocation2 + $0x708] sm:$0xff]
    %v287 = vld [vmem:[#allocation2 + $0x710] sm:$0xff]
    %v288 = vld [vmem:[#allocation2 + $0x718] sm:$0xff]
    %v289 = vld [vmem:[#allocation2 + $0x720] sm:$0xff]
    %v290 = vld [vmem:[#allocation2 + $0x728] sm:$0xff]
    %v291 = vld [vmem:[#allocation2 + $0x730] sm:$0xff]
    %v292 = vld [vmem:[#allocation2 + $0x738] sm:$0xff]
    %v293 = vld [vmem:[#allocation2 + $0x740] sm:$0xff]
    %v294 = vld [vmem:[#allocation2 + $0x748] sm:$0xff]
    %v295 = vld [vmem:[#allocation2 + $0x750] sm:$0xff]
    %v296 = vld [vmem:[#allocation2 + $0x758] sm:$0xff]
    %v297 = vld [vmem:[#allocation2 + $0x760] sm:$0xff]
    %v298 = vld [vmem:[#allocation2 + $0x768] sm:$0xff]
    %v299 = vld [vmem:[#allocation2 + $0x770] sm:$0xff]
    %v300 = vld [vmem:[#allocation2 + $0x778] sm:$0xff]
    %v301 = vld [vmem:[#allocation2 + $0x780] sm:$0xff]
    %v302 = vld [vmem:[#allocation2 + $0x788] sm:$0xff]
    %v303 = vld [vmem:[#allocation2 + $0x790] sm:$0xff]
    %v304 = vld [vmem:[#allocation2 + $0x798] sm:$0xff]
    %v305 = vld [vmem:[#allocation2 + $0x7a0] sm:$0xff]
    %v306 = vld [vmem:[#allocation2 + $0x7a8] sm:$0xff]
    %v307 = vld [vmem:[#allocation2 + $0x7b0] sm:$0xff]
    %v308 = vld [vmem:[#allocation2 + $0x7b8] sm:$0xff]
    %v309 = vld [vmem:[#allocation2 + $0x7c0] sm:$0xff]
    %v310 = vld [vmem:[#allocation2 + $0x7c8] sm:$0xff]
    %v311 = vld [vmem:[#allocation2 + $0x7d0] sm:$0xff]
    %v312 = vld [vmem:[#allocation2 + $0x7d8] sm:$0xff]
    %v313 = vld [vmem:[#allocation2 + $0x7e0] sm:$0xff]
    %v314 = vld [vmem:[#allocation2 + $0x7e8] sm:$0xff]
    %v315 = vld [vmem:[#allocation2 + $0x7f0] sm:$0xff]
    %v316 = vld [vmem:[#allocation2 + $0x7f8] sm:$0xff]
    %v317 = vld [vmem:[#allocation2 + $0x800] sm:$0xff]
    %v318 = vld [vmem:[#allocation2 + $0x808] sm:$0xff]
    %v319 = vld [vmem:[#allocation2 + $0x810] sm:$0xff]
    %v320 = vld [vmem:[#allocation2 + $0x818] sm:$0xff]
    %v321 = vld [vmem:[#allocation2 + $0x820] sm:$0xff]
    %v322 = vld [vmem:[#allocation2 + $0x828] sm:$0xff]
    %v323 = vld [vmem:[#allocation2 + $0x830] sm:$0xff]
    %v324 = vld [vmem:[#allocation2 + $0x838] sm:$0xff]
    %v325 = vld [vmem:[#allocation2 + $0x840] sm:$0xff]
    %v326 = vld [vmem:[#allocation2 + $0x848] sm:$0xff]
    %v327 = vld [vmem:[#allocation2 + $0x850] sm:$0xff]
    %v328 = vld [vmem:[#allocation2 + $0x858] sm:$0xff]
    %v329 = vld [vmem:[#allocation2 + $0x860] sm:$0xff]
    %v330 = vld [vmem:[#allocation2 + $0x868] sm:$0xff]
    %v331 = vld [vmem:[#allocation2 + $0x870] sm:$0xff]
    %v332 = vld [vmem:[#allocation2 + $0x878] sm:$0xff]
    %v333 = vld [vmem:[#allocation2 + $0x880] sm:$0xff]
    %v334 = vld [vmem:[#allocation2 + $0x888] sm:$0xff]
    %v335 = vld [vmem:[#allocation2 + $0x890] sm:$0xff]
    %v336 = vld [vmem:[#allocation2 + $0x898] sm:$0xff]
    %v337 = vld [vmem:[#allocation2 + $0x8a0] sm:$0xff]
    %v338 = vld [vmem:[#allocation2 + $0x8a8] sm:$0xff]
    %v339 = vld [vmem:[#allocation2 + $0x8b0] sm:$0xff]
    %v340 = vld [vmem:[#allocation2 + $0x8b8] sm:$0xff]
    %v341 = vld [vmem:[#allocation2 + $0x8c0] sm:$0xff]
    %v342 = vld [vmem:[#allocation2 + $0x8c8] sm:$0xff]
    %v343 = vld [vmem:[#allocation2 + $0x8d0] sm:$0xff]
    %v344 = vld [vmem:[#allocation2 + $0x8d8] sm:$0xff]
    %v345 = vld [vmem:[#allocation2 + $0x8e0] sm:$0xff]
    %v346 = vld [vmem:[#allocation2 + $0x8e8] sm:$0xff]
    %v347 = vld [vmem:[#allocation2 + $0x8f0] sm:$0xff]
    %v348 = vld [vmem:[#allocation2 + $0x8f8] sm:$0xff]
    %v349 = vld [vmem:[#allocation2 + $0x900] sm:$0xff]
    %v350 = vld [vmem:[#allocation2 + $0x908] sm:$0xff]
    %v351 = vld [vmem:[#allocation2 + $0x910] sm:$0xff]
    %v352 = vld [vmem:[#allocation2 + $0x918] sm:$0xff]
    %v353 = vld [vmem:[#allocation2 + $0x920] sm:$0xff]
    %v354 = vld [vmem:[#allocation2 + $0x928] sm:$0xff]
    %v355 = vld [vmem:[#allocation2 + $0x930] sm:$0xff]
    %v356 = vld [vmem:[#allocation2 + $0x938] sm:$0xff]
    %v357 = vld [vmem:[#allocation2 + $0x940] sm:$0xff]
    %v358 = vld [vmem:[#allocation2 + $0x948] sm:$0xff]
    %v359 = vld [vmem:[#allocation2 + $0x950] sm:$0xff]
    %v360 = vld [vmem:[#allocation2 + $0x958] sm:$0xff]
    %v361 = vld [vmem:[#allocation2 + $0x960] sm:$0xff]
    %v362 = vld [vmem:[#allocation2 + $0x968] sm:$0xff]
    %v363 = vld [vmem:[#allocation2 + $0x970] sm:$0xff]
    %v364 = vld [vmem:[#allocation2 + $0x978] sm:$0xff]
    %v365 = vld [vmem:[#allocation2 + $0x980] sm:$0xff]
    %v366 = vld [vmem:[#allocation2 + $0x988] sm:$0xff]
    %v367 = vld [vmem:[#allocation2 + $0x990] sm:$0xff]
    %v368 = vld [vmem:[#allocation2 + $0x998] sm:$0xff]
    %v369 = vld [vmem:[#allocation2 + $0x9a0] sm:$0xff]
    %v370 = vld [vmem:[#allocation2 + $0x9a8] sm:$0xff]
    %v371 = vld [vmem:[#allocation2 + $0x9b0] sm:$0xff]
    %v372 = vld [vmem:[#allocation2 + $0x9b8] sm:$0xff]
    %v373 = vld [vmem:[#allocation2 + $0x9c0] sm:$0xff]
    %v374 = vld [vmem:[#allocation2 + $0x9c8] sm:$0xff]
    %v375 = vld [vmem:[#allocation2 + $0x9d0] sm:$0xff]
    %v376 = vld [vmem:[#allocation2 + $0x9d8] sm:$0xff]
    %v377 = vld [vmem:[#allocation2 + $0x9e0] sm:$0xff]
    %v378 = vld [vmem:[#allocation2 + $0x9e8] sm:$0xff]
    %v379 = vld [vmem:[#allocation2 + $0x9f0] sm:$0xff]
    %v380 = vld [vmem:[#allocation2 + $0x9f8] sm:$0xff]
    %v381 = vld [vmem:[#allocation2 + $0xa00] sm:$0xff]
    %v382 = vld [vmem:[#allocation2 + $0xa08] sm:$0xff]
    %v383 = vld [vmem:[#allocation2 + $0xa10] sm:$0xff]
    %v384 = vld [vmem:[#allocation2 + $0xa18] sm:$0xff]
    %v385 = vld [vmem:[#allocation2 + $0xa20] sm:$0xff]
    %v386 = vld [vmem:[#allocation2 + $0xa28] sm:$0xff]
    %v387 = vld [vmem:[#allocation2 + $0xa30] sm:$0xff]
    %v388 = vld [vmem:[#allocation2 + $0xa38] sm:$0xff]
    %v389 = vld [vmem:[#allocation2 + $0xa40] sm:$0xff]
    %v390 = vld [vmem:[#allocation2 + $0xa48] sm:$0xff]
    %v391 = vld [vmem:[#allocation2 + $0xa50] sm:$0xff]
    %v392 = vld [vmem:[#allocation2 + $0xa58] sm:$0xff]
    %v393 = vld [vmem:[#allocation2 + $0xa60] sm:$0xff]
    %v394 = vld [vmem:[#allocation2 + $0xa68] sm:$0xff]
    %v395 = vld [vmem:[#allocation2 + $0xa70] sm:$0xff]
    %v396 = vld [vmem:[#allocation2 + $0xa78] sm:$0xff]
    %v397 = vld [vmem:[#allocation2 + $0xa80] sm:$0xff]
    %v398 = vld [vmem:[#allocation2 + $0xa88] sm:$0xff]
    %v399 = vld [vmem:[#allocation2 + $0xa90] sm:$0xff]
    %v400 = vld [vmem:[#allocation2 + $0xa98] sm:$0xff]
    %v401 = vld [vmem:[#allocation2 + $0xaa0] sm:$0xff]
    %v402 = vld [vmem:[#allocation2 + $0xaa8] sm:$0xff]
    %v403 = vld [vmem:[#allocation2 + $0xab0] sm:$0xff]
    %v404 = vld [vmem:[#allocation2 + $0xab8] sm:$0xff]
    %v405 = vld [vmem:[#allocation2 + $0xac0] sm:$0xff]
    %v406 = vld [vmem:[#allocation2 + $0xac8] sm:$0xff]
    %v407 = vld [vmem:[#allocation2 + $0xad0] sm:$0xff]
    %v408 = vld [vmem:[#allocation2 + $0xad8] sm:$0xff]
    %v409 = vld [vmem:[#allocation2 + $0xae0] sm:$0xff]
    %v410 = vld [vmem:[#allocation2 + $0xae8] sm:$0xff]
    %v411 = vld [vmem:[#allocation2 + $0xaf0] sm:$0xff]
    %v412 = vld [vmem:[#allocation2 + $0xaf8] sm:$0xff]
    %v413 = vld [vmem:[#allocation2 + $0xb00] sm:$0xff]
    %v414 = vld [vmem:[#allocation2 + $0xb08] sm:$0xff]
    %v415 = vld [vmem:[#allocation2 + $0xb10] sm:$0xff]
    %v416 = vld [vmem:[#allocation2 + $0xb18] sm:$0xff]
    %v417 = vld [vmem:[#allocation2 + $0xb20] sm:$0xff]
    %v418 = vld [vmem:[#allocation2 + $0xb28] sm:$0xff]
    %v419 = vld [vmem:[#allocation2 + $0xb30] sm:$0xff]
    %v420 = vld [vmem:[#allocation2 + $0xb38] sm:$0xff]
    %v421 = vld [vmem:[#allocation2 + $0xb40] sm:$0xff]
    %v422 = vld [vmem:[#allocation2 + $0xb48] sm:$0xff]
    %v423 = vld [vmem:[#allocation2 + $0xb50] sm:$0xff]
    %v424 = vld [vmem:[#allocation2 + $0xb58] sm:$0xff]
    %v425 = vld [vmem:[#allocation2 + $0xb60] sm:$0xff]
    %v426 = vld [vmem:[#allocation2 + $0xb68] sm:$0xff]
    %v427 = vld [vmem:[#allocation2 + $0xb70] sm:$0xff]
    %v428 = vld [vmem:[#allocation2 + $0xb78] sm:$0xff]
    %v429 = vld [vmem:[#allocation2 + $0xb80] sm:$0xff]
    %v430 = vld [vmem:[#allocation2 + $0xb88] sm:$0xff]
    %v431 = vld [vmem:[#allocation2 + $0xb90] sm:$0xff]
    %v432 = vld [vmem:[#allocation2 + $0xb98] sm:$0xff]
    %v433 = vld [vmem:[#allocation2 + $0xba0] sm:$0xff]
    %v434 = vld [vmem:[#allocation2 + $0xba8] sm:$0xff]
    %v435 = vld [vmem:[#allocation2 + $0xbb0] sm:$0xff]
    %v436 = vld [vmem:[#allocation2 + $0xbb8] sm:$0xff]
    %v437 = vld [vmem:[#allocation2 + $0xbc0] sm:$0xff]
    %v438 = vld [vmem:[#allocation2 + $0xbc8] sm:$0xff]
    %v439 = vld [vmem:[#allocation2 + $0xbd0] sm:$0xff]
    %v440 = vld [vmem:[#allocation2 + $0xbd8] sm:$0xff]
    %v441 = vld [vmem:[#allocation2 + $0xbe0] sm:$0xff]
    %v442 = vld [vmem:[#allocation2 + $0xbe8] sm:$0xff]
    %v443 = vld [vmem:[#allocation2 + $0xbf0] sm:$0xff]
    %v444 = vld [vmem:[#allocation2 + $0xbf8] sm:$0xff]
    %v445 = vld [vmem:[#allocation2 + $0xc00] sm:$0xff]
    %v446 = vld [vmem:[#allocation2 + $0xc08] sm:$0xff]
    %v447 = vld [vmem:[#allocation2 + $0xc10] sm:$0xff]
    %v448 = vld [vmem:[#allocation2 + $0xc18] sm:$0xff]
    %v449 = vld [vmem:[#allocation2 + $0xc20] sm:$0xff]
    %v450 = vld [vmem:[#allocation2 + $0xc28] sm:$0xff]
    %v451 = vld [vmem:[#allocation2 + $0xc30] sm:$0xff]
    %v452 = vld [vmem:[#allocation2 + $0xc38] sm:$0xff]
    %v453 = vld [vmem:[#allocation2 + $0xc40] sm:$0xff]
    %v454 = vld [vmem:[#allocation2 + $0xc48] sm:$0xff]
    %v455 = vld [vmem:[#allocation2 + $0xc50] sm:$0xff]
    %v456 = vld [vmem:[#allocation2 + $0xc58] sm:$0xff]
    %v457 = vld [vmem:[#allocation2 + $0xc60] sm:$0xff]
    %v458 = vld [vmem:[#allocation2 + $0xc68] sm:$0xff]
    %v459 = vld [vmem:[#allocation2 + $0xc70] sm:$0xff]
    %v460 = vld [vmem:[#allocation2 + $0xc78] sm:$0xff]
    %v461 = vld [vmem:[#allocation2 + $0xc80] sm:$0xff]
    %v462 = vld [vmem:[#allocation2 + $0xc88] sm:$0xff]
    %v463 = vld [vmem:[#allocation2 + $0xc90] sm:$0xff]
    %v464 = vld [vmem:[#allocation2 + $0xc98] sm:$0xff]
    %v465 = vld [vmem:[#allocation2 + $0xca0] sm:$0xff]
    %v466 = vld [vmem:[#allocation2 + $0xca8] sm:$0xff]
    %v467 = vld [vmem:[#allocation2 + $0xcb0] sm:$0xff]
    %v468 = vld [vmem:[#allocation2 + $0xcb8] sm:$0xff]
    %v469 = vld [vmem:[#allocation2 + $0xcc0] sm:$0xff]
    %v470 = vld [vmem:[#allocation2 + $0xcc8] sm:$0xff]
    %v471 = vld [vmem:[#allocation2 + $0xcd0] sm:$0xff]
    %v472 = vld [vmem:[#allocation2 + $0xcd8] sm:$0xff]
    %v473 = vld [vmem:[#allocation2 + $0xce0] sm:$0xff]
    %v474 = vld [vmem:[#allocation2 + $0xce8] sm:$0xff]
    %v475 = vld [vmem:[#allocation2 + $0xcf0] sm:$0xff]
    %v476 = vld [vmem:[#allocation2 + $0xcf8] sm:$0xff]
    %v477 = vld [vmem:[#allocation2 + $0xd00] sm:$0xff]
    %v478 = vld [vmem:[#allocation2 + $0xd08] sm:$0xff]
    %v479 = vld [vmem:[#allocation2 + $0xd10] sm:$0xff]
    %v480 = vld [vmem:[#allocation2 + $0xd18] sm:$0xff]
    %v481 = vld [vmem:[#allocation2 + $0xd20] sm:$0xff]
    %v482 = vld [vmem:[#allocation2 + $0xd28] sm:$0xff]
    %v483 = vld [vmem:[#allocation2 + $0xd30] sm:$0xff]
    %v484 = vld [vmem:[#allocation2 + $0xd38] sm:$0xff]
    %v485 = vld [vmem:[#allocation2 + $0xd40] sm:$0xff]
    %v486 = vld [vmem:[#allocation2 + $0xd48] sm:$0xff]
    %v487 = vld [vmem:[#allocation2 + $0xd50] sm:$0xff]
    %v488 = vld [vmem:[#allocation2 + $0xd58] sm:$0xff]
    %v489 = vld [vmem:[#allocation2 + $0xd60] sm:$0xff]
    %v490 = vld [vmem:[#allocation2 + $0xd68] sm:$0xff]
    %v491 = vld [vmem:[#allocation2 + $0xd70] sm:$0xff]
    %v492 = vld [vmem:[#allocation2 + $0xd78] sm:$0xff]
    %v493 = vld [vmem:[#allocation2 + $0xd80] sm:$0xff]
    %v494 = vld [vmem:[#allocation2 + $0xd88] sm:$0xff]
    %v495 = vld [vmem:[#allocation2 + $0xd90] sm:$0xff]
    %v496 = vld [vmem:[#allocation2 + $0xd98] sm:$0xff]
    %v497 = vld [vmem:[#allocation2 + $0xda0] sm:$0xff]
    %v498 = vld [vmem:[#allocation2 + $0xda8] sm:$0xff]
    %v499 = vld [vmem:[#allocation2 + $0xdb0] sm:$0xff]
    %v500 = vld [vmem:[#allocation2 + $0xdb8] sm:$0xff]
    %v501 = vld [vmem:[#allocation2 + $0xdc0] sm:$0xff]
    %v502 = vld [vmem:[#allocation2 + $0xdc8] sm:$0xff]
    %v503 = vld [vmem:[#allocation2 + $0xdd0] sm:$0xff]
    %v504 = vld [vmem:[#allocation2 + $0xdd8] sm:$0xff]
    %v505 = vld [vmem:[#allocation2 + $0xde0] sm:$0xff]
    %v506 = vld [vmem:[#allocation2 + $0xde8] sm:$0xff]
    %v507 = vld [vmem:[#allocation2 + $0xdf0] sm:$0xff]
    %v508 = vld [vmem:[#allocation2 + $0xdf8] sm:$0xff]
    %v509 = vld [vmem:[#allocation2 + $0xe00] sm:$0xff]
    %v510 = vld [vmem:[#allocation2 + $0xe08] sm:$0xff]
    %v511 = vld [vmem:[#allocation2 + $0xe10] sm:$0xff]
    %v512 = vld [vmem:[#allocation2 + $0xe18] sm:$0xff]
    %v513 = vld [vmem:[#allocation2 + $0xe20] sm:$0xff]
    %v514 = vld [vmem:[#allocation2 + $0xe28] sm:$0xff]
    %v515 = vld [vmem:[#allocation2 + $0xe30] sm:$0xff]
    %v516 = vld [vmem:[#allocation2 + $0xe38] sm:$0xff]
    %v517 = vld [vmem:[#allocation2 + $0xe40] sm:$0xff]
    %v518 = vld [vmem:[#allocation2 + $0xe48] sm:$0xff]
    %v519 = vld [vmem:[#allocation2 + $0xe50] sm:$0xff]
    %v520 = vld [vmem:[#allocation2 + $0xe58] sm:$0xff]
    %v521 = vld [vmem:[#allocation2 + $0xe60] sm:$0xff]
    %v522 = vld [vmem:[#allocation2 + $0xe68] sm:$0xff]
    %v523 = vld [vmem:[#allocation2 + $0xe70] sm:$0xff]
    %v524 = vld [vmem:[#allocation2 + $0xe78] sm:$0xff]
    %v525 = vld [vmem:[#allocation2 + $0xe80] sm:$0xff]
    %v526 = vld [vmem:[#allocation2 + $0xe88] sm:$0xff]
    %v527 = vld [vmem:[#allocation2 + $0xe90] sm:$0xff]
    %v528 = vld [vmem:[#allocation2 + $0xe98] sm:$0xff]
    %v529 = vld [vmem:[#allocation2 + $0xea0] sm:$0xff]
    %v530 = vld [vmem:[#allocation2 + $0xea8] sm:$0xff]
    %v531 = vld [vmem:[#allocation2 + $0xeb0] sm:$0xff]
    %v532 = vld [vmem:[#allocation2 + $0xeb8] sm:$0xff]
    %v533 = vld [vmem:[#allocation2 + $0xec0] sm:$0xff]
    %v534 = vld [vmem:[#allocation2 + $0xec8] sm:$0xff]
    %v535 = vld [vmem:[#allocation2 + $0xed0] sm:$0xff]
    %v536 = vld [vmem:[#allocation2 + $0xed8] sm:$0xff]
    %v537 = vld [vmem:[#allocation2 + $0xee0] sm:$0xff]
    %v538 = vld [vmem:[#allocation2 + $0xee8] sm:$0xff]
    %v539 = vld [vmem:[#allocation2 + $0xef0] sm:$0xff]
    %v540 = vld [vmem:[#allocation2 + $0xef8] sm:$0xff]
    %v541 = vld [vmem:[#allocation2 + $0xf00] sm:$0xff]
    %v542 = vld [vmem:[#allocation2 + $0xf08] sm:$0xff]
    %v543 = vld [vmem:[#allocation2 + $0xf10] sm:$0xff]
    %v544 = vld [vmem:[#allocation2 + $0xf18] sm:$0xff]
    %v545 = vld [vmem:[#allocation2 + $0xf20] sm:$0xff]
    %v546 = vld [vmem:[#allocation2 + $0xf28] sm:$0xff]
    %v547 = vld [vmem:[#allocation2 + $0xf30] sm:$0xff]
    %v548 = vld [vmem:[#allocation2 + $0xf38] sm:$0xff]
    %v549 = vld [vmem:[#allocation2 + $0xf40] sm:$0xff]
    %v550 = vld [vmem:[#allocation2 + $0xf48] sm:$0xff]
    %v551 = vld [vmem:[#allocation2 + $0xf50] sm:$0xff]
    %v552 = vld [vmem:[#allocation2 + $0xf58] sm:$0xff]
    %v553 = vld [vmem:[#allocation2 + $0xf60] sm:$0xff]
    %v554 = vld [vmem:[#allocation2 + $0xf68] sm:$0xff]
    %v555 = vld [vmem:[#allocation2 + $0xf70] sm:$0xff]
    %v556 = vld [vmem:[#allocation2 + $0xf78] sm:$0xff]
    %v557 = vld [vmem:[#allocation2 + $0xf80] sm:$0xff]
    %v558 = vld [vmem:[#allocation2 + $0xf88] sm:$0xff]
    %v559 = vld [vmem:[#allocation2 + $0xf90] sm:$0xff]
    %v560 = vld [vmem:[#allocation2 + $0xf98] sm:$0xff]
    %v561 = vld [vmem:[#allocation2 + $0xfa0] sm:$0xff]
    %v562 = vld [vmem:[#allocation2 + $0xfa8] sm:$0xff]
    %v563 = vld [vmem:[#allocation2 + $0xfb0] sm:$0xff]
    %v564 = vld [vmem:[#allocation2 + $0xfb8] sm:$0xff]
    %v565 = vld [vmem:[#allocation2 + $0xfc0] sm:$0xff]
    %v566 = vld [vmem:[#allocation2 + $0xfc8] sm:$0xff]
    %v567 = vld [vmem:[#allocation2 + $0xfd0] sm:$0xff]
    %v568 = vld [vmem:[#allocation2 + $0xfd8] sm:$0xff]
    %v569 = vld [vmem:[#allocation2 + $0xfe0] sm:$0xff]
    %v570 = vld [vmem:[#allocation2 + $0xfe8] sm:$0xff]
    %v571 = vld [vmem:[#allocation2 + $0xff0] sm:$0xff]
    %v572 = vld [vmem:[#allocation2 + $0xff8] sm:$0xff]
    %v573 = vld [vmem:[#allocation2 + $0x1000] sm:$0xff]
    %v574 = vld [vmem:[#allocation2 + $0x1008] sm:$0xff]
    %v575 = vld [vmem:[#allocation2 + $0x1010] sm:$0xff]
    %v576 = vld [vmem:[#allocation2 + $0x1018] sm:$0xff]
    %v577 = vld [vmem:[#allocation2 + $0x1020] sm:$0xff]
    %v578 = vld [vmem:[#allocation2 + $0x1028] sm:$0xff]
    %v579 = vld [vmem:[#allocation2 + $0x1030] sm:$0xff]
    %v580 = vld [vmem:[#allocation2 + $0x1038] sm:$0xff]
    %v581 = vld [vmem:[#allocation2 + $0x1040] sm:$0xff]
    %v582 = vld [vmem:[#allocation2 + $0x1048] sm:$0xff]
    %v583 = vld [vmem:[#allocation2 + $0x1050] sm:$0xff]
    %v584 = vld [vmem:[#allocation2 + $0x1058] sm:$0xff]
    %v585 = vld [vmem:[#allocation2 + $0x1060] sm:$0xff]
    %v586 = vld [vmem:[#allocation2 + $0x1068] sm:$0xff]
    %v587 = vld [vmem:[#allocation2 + $0x1070] sm:$0xff]
    %v588 = vld [vmem:[#allocation2 + $0x1078] sm:$0xff]
    %v589 = vld [vmem:[#allocation2 + $0x1080] sm:$0xff]
    %v590 = vld [vmem:[#allocation2 + $0x1088] sm:$0xff]
    %v591 = vld [vmem:[#allocation2 + $0x1090] sm:$0xff]
    %v592 = vld [vmem:[#allocation2 + $0x1098] sm:$0xff]
    %v593 = vld [vmem:[#allocation2 + $0x10a0] sm:$0xff]
    %v594 = vld [vmem:[#allocation2 + $0x10a8] sm:$0xff]
    %v595 = vld [vmem:[#allocation2 + $0x10b0] sm:$0xff]
    %v596 = vld [vmem:[#allocation2 + $0x10b8] sm:$0xff]
    %v597 = vld [vmem:[#allocation2 + $0x10c0] sm:$0xff]
    %v598 = vld [vmem:[#allocation2 + $0x10c8] sm:$0xff]
    %v599 = vld [vmem:[#allocation2 + $0x10d0] sm:$0xff]
    %v600 = vld [vmem:[#allocation2 + $0x10d8] sm:$0xff]
    %v601 = vld [vmem:[#allocation2 + $0x10e0] sm:$0xff]
    %v602 = vld [vmem:[#allocation2 + $0x10e8] sm:$0xff]
    %v603 = vld [vmem:[#allocation2 + $0x10f0] sm:$0xff]
    %v604 = vld [vmem:[#allocation2 + $0x10f8] sm:$0xff]
    %v605 = vld [vmem:[#allocation2 + $0x1100] sm:$0xff]
    %v606 = vld [vmem:[#allocation2 + $0x1108] sm:$0xff]
    %v607 = vld [vmem:[#allocation2 + $0x1110] sm:$0xff]
    %v608 = vld [vmem:[#allocation2 + $0x1118] sm:$0xff]
    %v609 = vld [vmem:[#allocation2 + $0x1120] sm:$0xff]
    %v610 = vld [vmem:[#allocation2 + $0x1128] sm:$0xff]
    %v611 = vld [vmem:[#allocation2 + $0x1130] sm:$0xff]
    %v612 = vld [vmem:[#allocation2 + $0x1138] sm:$0xff]
    %v613 = vld [vmem:[#allocation2 + $0x1140] sm:$0xff]
    %v614 = vld [vmem:[#allocation2 + $0x1148] sm:$0xff]
    %v615 = vld [vmem:[#allocation2 + $0x1150] sm:$0xff]
    %v616 = vld [vmem:[#allocation2 + $0x1158] sm:$0xff]
    %v617 = vld [vmem:[#allocation2 + $0x1160] sm:$0xff]
    %v618 = vld [vmem:[#allocation2 + $0x1168] sm:$0xff]
    %v619 = vld [vmem:[#allocation2 + $0x1170] sm:$0xff]
    %v620 = vld [vmem:[#allocation2 + $0x1178] sm:$0xff]
    %v621 = vld [vmem:[#allocation2 + $0x1180] sm:$0xff]
    %v622 = vld [vmem:[#allocation2 + $0x1188] sm:$0xff]
    %v623 = vld [vmem:[#allocation2 + $0x1190] sm:$0xff]
    %v624 = vld [vmem:[#allocation2 + $0x1198] sm:$0xff]
    %v625 = vld [vmem:[#allocation2 + $0x11a0] sm:$0xff]
    %v626 = vld [vmem:[#allocation2 + $0x11a8] sm:$0xff]
    %v627 = vld [vmem:[#allocation2 + $0x11b0] sm:$0xff]
    %v628 = vld [vmem:[#allocation2 + $0x11b8] sm:$0xff]
    %v629 = vld [vmem:[#allocation2 + $0x11c0] sm:$0xff]
    %v630 = vld [vmem:[#allocation2 + $0x11c8] sm:$0xff]
    %v631 = vld [vmem:[#allocation2 + $0x11d0] sm:$0xff]
    %v632 = vld [vmem:[#allocation2 + $0x11d8] sm:$0xff]
    %v633 = vld [vmem:[#allocation2 + $0x11e0] sm:$0xff]
    %v634 = vld [vmem:[#allocation2 + $0x11e8] sm:$0xff]
    %v635 = vld [vmem:[#allocation2 + $0x11f0] sm:$0xff]
    %v636 = vld [vmem:[#allocation2 + $0x11f8] sm:$0xff]
    %v637 = vld [vmem:[#allocation2 + $0x1200] sm:$0xff]
    %v638 = vld [vmem:[#allocation2 + $0x1208] sm:$0xff]
    %v639 = vld [vmem:[#allocation2 + $0x1210] sm:$0xff]
    %v640 = vld [vmem:[#allocation2 + $0x1218] sm:$0xff]
    %v641 = vld [vmem:[#allocation2 + $0x1220] sm:$0xff]
    %v642 = vld [vmem:[#allocation2 + $0x1228] sm:$0xff]
    %v643 = vld [vmem:[#allocation2 + $0x1230] sm:$0xff]
    %v644 = vld [vmem:[#allocation2 + $0x1238] sm:$0xff]
    %v645 = vld [vmem:[#allocation2 + $0x1240] sm:$0xff]
    %v646 = vld [vmem:[#allocation2 + $0x1248] sm:$0xff]
    %v647 = vld [vmem:[#allocation2 + $0x1250] sm:$0xff]
    %v648 = vld [vmem:[#allocation2 + $0x1258] sm:$0xff]
    %v649 = vld [vmem:[#allocation2 + $0x1260] sm:$0xff]
    %v650 = vld [vmem:[#allocation2 + $0x1268] sm:$0xff]
    %v651 = vld [vmem:[#allocation2 + $0x1270] sm:$0xff]
    %v652 = vld [vmem:[#allocation2 + $0x1278] sm:$0xff]
    %v653 = vld [vmem:[#allocation2 + $0x1280] sm:$0xff]
    %v654 = vld [vmem:[#allocation2 + $0x1288] sm:$0xff]
    %v655 = vld [vmem:[#allocation2 + $0x1290] sm:$0xff]
    %v656 = vld [vmem:[#allocation2 + $0x1298] sm:$0xff]
    %v657 = vld [vmem:[#allocation2 + $0x12a0] sm:$0xff]
    %v658 = vld [vmem:[#allocation2 + $0x12a8] sm:$0xff]
    %v659 = vld [vmem:[#allocation2 + $0x12b0] sm:$0xff]
    %v660 = vld [vmem:[#allocation2 + $0x12b8] sm:$0xff]
    %v661 = vld [vmem:[#allocation2 + $0x12c0] sm:$0xff]
    %v662 = vld [vmem:[#allocation2 + $0x12c8] sm:$0xff]
    %v663 = vld [vmem:[#allocation2 + $0x12d0] sm:$0xff]
    %v664 = vld [vmem:[#allocation2 + $0x12d8] sm:$0xff]
    %v665 = vld [vmem:[#allocation2 + $0x12e0] sm:$0xff]
    %v666 = vld [vmem:[#allocation2 + $0x12e8] sm:$0xff]
    %v667 = vld [vmem:[#allocation2 + $0x12f0] sm:$0xff]
    %v668 = vld [vmem:[#allocation2 + $0x12f8] sm:$0xff]
    %v669 = vld [vmem:[#allocation2 + $0x1300] sm:$0xff]
    %v670 = vld [vmem:[#allocation2 + $0x1308] sm:$0xff]
    %v671 = vld [vmem:[#allocation2 + $0x1310] sm:$0xff]
    %v672 = vld [vmem:[#allocation2 + $0x1318] sm:$0xff]
    %v673 = vld [vmem:[#allocation2 + $0x1320] sm:$0xff]
    %v674 = vld [vmem:[#allocation2 + $0x1328] sm:$0xff]
    %v675 = vld [vmem:[#allocation2 + $0x1330] sm:$0xff]
    %v676 = vld [vmem:[#allocation2 + $0x1338] sm:$0xff]
    %v677 = vld [vmem:[#allocation2 + $0x1340] sm:$0xff]
    %v678 = vld [vmem:[#allocation2 + $0x1348] sm:$0xff]
    %v679 = vld [vmem:[#allocation2 + $0x1350] sm:$0xff]
    %v680 = vld [vmem:[#allocation2 + $0x1358] sm:$0xff]
    %v681 = vld [vmem:[#allocation2 + $0x1360] sm:$0xff]
    %v682 = vld [vmem:[#allocation2 + $0x1368] sm:$0xff]
    %v683 = vld [vmem:[#allocation2 + $0x1370] sm:$0xff]
    %v684 = vld [vmem:[#allocation2 + $0x1378] sm:$0xff]
    %v685 = vld [vmem:[#allocation2 + $0x1380] sm:$0xff]
    %v686 = vld [vmem:[#allocation2 + $0x1388] sm:$0xff]
    %v687 = vld [vmem:[#allocation2 + $0x1390] sm:$0xff]
    %v688 = vld [vmem:[#allocation2 + $0x1398] sm:$0xff]
    %v689 = vld [vmem:[#allocation2 + $0x13a0] sm:$0xff]
    %v690 = vld [vmem:[#allocation2 + $0x13a8] sm:$0xff]
    %v691 = vld [vmem:[#allocation2 + $0x13b0] sm:$0xff]
    %v692 = vld [vmem:[#allocation2 + $0x13b8] sm:$0xff]
    %v693 = vld [vmem:[#allocation2 + $0x13c0] sm:$0xff]
    %v694 = vld [vmem:[#allocation2 + $0x13c8] sm:$0xff]
    %v695 = vld [vmem:[#allocation2 + $0x13d0] sm:$0xff]
    %v696 = vld [vmem:[#allocation2 + $0x13d8] sm:$0xff]
    %v697 = vld [vmem:[#allocation2 + $0x13e0] sm:$0xff]
    %v698 = vld [vmem:[#allocation2 + $0x13e8] sm:$0xff]
    %v699 = vld [vmem:[#allocation2 + $0x13f0] sm:$0xff]
    %v700 = vld [vmem:[#allocation2 + $0x13f8] sm:$0xff]
    %v701 = vld [vmem:[#allocation2 + $0x1400] sm:$0xff]
    %v702 = vld [vmem:[#allocation2 + $0x1408] sm:$0xff]
    %v703 = vld [vmem:[#allocation2 + $0x1410] sm:$0xff]
    %v704 = vld [vmem:[#allocation2 + $0x1418] sm:$0xff]
    %v705 = vld [vmem:[#allocation2 + $0x1420] sm:$0xff]
    %v706 = vld [vmem:[#allocation2 + $0x1428] sm:$0xff]
    %v707 = vld [vmem:[#allocation2 + $0x1430] sm:$0xff]
    %v708 = vld [vmem:[#allocation2 + $0x1438] sm:$0xff]
    %v709 = vld [vmem:[#allocation2 + $0x1440] sm:$0xff]
    %v710 = vld [vmem:[#allocation2 + $0x1448] sm:$0xff]
    %v711 = vld [vmem:[#allocation2 + $0x1450] sm:$0xff]
    %v712 = vld [vmem:[#allocation2 + $0x1458] sm:$0xff]
    %v713 = vld [vmem:[#allocation2 + $0x1460] sm:$0xff]
    %v714 = vld [vmem:[#allocation2 + $0x1468] sm:$0xff]
    %v715 = vld [vmem:[#allocation2 + $0x1470] sm:$0xff]
    %v716 = vld [vmem:[#allocation2 + $0x1478] sm:$0xff]
    %v717 = vld [vmem:[#allocation2 + $0x1480] sm:$0xff]
    %v718 = vld [vmem:[#allocation2 + $0x1488] sm:$0xff]
    %v719 = vld [vmem:[#allocation2 + $0x1490] sm:$0xff]
    %v720 = vld [vmem:[#allocation2 + $0x1498] sm:$0xff]
    %v721 = vld [vmem:[#allocation2 + $0x14a0] sm:$0xff]
    %v722 = vld [vmem:[#allocation2 + $0x14a8] sm:$0xff]
    %v723 = vld [vmem:[#allocation2 + $0x14b0] sm:$0xff]
    %v724 = vld [vmem:[#allocation2 + $0x14b8] sm:$0xff]
    %v725 = vld [vmem:[#allocation2 + $0x14c0] sm:$0xff]
    %v726 = vld [vmem:[#allocation2 + $0x14c8] sm:$0xff]
    %v727 = vld [vmem:[#allocation2 + $0x14d0] sm:$0xff]
    %v728 = vld [vmem:[#allocation2 + $0x14d8] sm:$0xff]
    %v729 = vld [vmem:[#allocation2 + $0x14e0] sm:$0xff]
    %v730 = vld [vmem:[#allocation2 + $0x14e8] sm:$0xff]
    %v731 = vld [vmem:[#allocation2 + $0x14f0] sm:$0xff]
    %v732 = vld [vmem:[#allocation2 + $0x14f8] sm:$0xff]
    %v733 = vld [vmem:[#allocation2 + $0x1500] sm:$0xff]
    %v734 = vld [vmem:[#allocation2 + $0x1508] sm:$0xff]
    %v735 = vld [vmem:[#allocation2 + $0x1510] sm:$0xff]
    %v736 = vld [vmem:[#allocation2 + $0x1518] sm:$0xff]
    %v737 = vld [vmem:[#allocation2 + $0x1520] sm:$0xff]
    %v738 = vld [vmem:[#allocation2 + $0x1528] sm:$0xff]
    %v739 = vld [vmem:[#allocation2 + $0x1530] sm:$0xff]
    %v740 = vld [vmem:[#allocation2 + $0x1538] sm:$0xff]
    %v741 = vld [vmem:[#allocation2 + $0x1540] sm:$0xff]
    %v742 = vld [vmem:[#allocation2 + $0x1548] sm:$0xff]
    %v743 = vld [vmem:[#allocation2 + $0x1550] sm:$0xff]
    %v744 = vld [vmem:[#allocation2 + $0x1558] sm:$0xff]
    %v745 = vld [vmem:[#allocation2 + $0x1560] sm:$0xff]
    %v746 = vld [vmem:[#allocation2 + $0x1568] sm:$0xff]
    %v747 = vld [vmem:[#allocation2 + $0x1570] sm:$0xff]
    %v748 = vld [vmem:[#allocation2 + $0x1578] sm:$0xff]
    %v749 = vld [vmem:[#allocation2 + $0x1580] sm:$0xff]
    %v750 = vld [vmem:[#allocation2 + $0x1588] sm:$0xff]
    %v751 = vld [vmem:[#allocation2 + $0x1590] sm:$0xff]
    %v752 = vld [vmem:[#allocation2 + $0x1598] sm:$0xff]
    %v753 = vld [vmem:[#allocation2 + $0x15a0] sm:$0xff]
    %v754 = vld [vmem:[#allocation2 + $0x15a8] sm:$0xff]
    %v755 = vld [vmem:[#allocation2 + $0x15b0] sm:$0xff]
    %v756 = vld [vmem:[#allocation2 + $0x15b8] sm:$0xff]
    %v757 = vld [vmem:[#allocation2 + $0x15c0] sm:$0xff]
    %v758 = vld [vmem:[#allocation2 + $0x15c8] sm:$0xff]
    %v759 = vld [vmem:[#allocation2 + $0x15d0] sm:$0xff]
    %v760 = vld [vmem:[#allocation2 + $0x15d8] sm:$0xff]
    %v761 = vld [vmem:[#allocation2 + $0x15e0] sm:$0xff]
    %v762 = vld [vmem:[#allocation2 + $0x15e8] sm:$0xff]
    %v763 = vld [vmem:[#allocation2 + $0x15f0] sm:$0xff]
    %v764 = vld [vmem:[#allocation2 + $0x15f8] sm:$0xff]
    %v765 = vld [vmem:[#allocation2 + $0x1600] sm:$0xff]
    %v766 = vld [vmem:[#allocation2 + $0x1608] sm:$0xff]
    %v767 = vld [vmem:[#allocation2 + $0x1610] sm:$0xff]
    %v768 = vld [vmem:[#allocation2 + $0x1618] sm:$0xff]
    %v769 = vld [vmem:[#allocation2 + $0x1620] sm:$0xff]
    %v770 = vld [vmem:[#allocation2 + $0x1628] sm:$0xff]
    %v771 = vld [vmem:[#allocation2 + $0x1630] sm:$0xff]
    %v772 = vld [vmem:[#allocation2 + $0x1638] sm:$0xff]
    %v773 = vld [vmem:[#allocation2 + $0x1640] sm:$0xff]
    %v774 = vld [vmem:[#allocation2 + $0x1648] sm:$0xff]
    %v775 = vld [vmem:[#allocation2 + $0x1650] sm:$0xff]
    %v776 = vld [vmem:[#allocation2 + $0x1658] sm:$0xff]
    %v777 = vld [vmem:[#allocation2 + $0x1660] sm:$0xff]
    %v778 = vld [vmem:[#allocation2 + $0x1668] sm:$0xff]
    %v779 = vld [vmem:[#allocation2 + $0x1670] sm:$0xff]
    %v780 = vld [vmem:[#allocation2 + $0x1678] sm:$0xff]
    %v781 = vld [vmem:[#allocation2 + $0x1680] sm:$0xff]
    %v782 = vld [vmem:[#allocation2 + $0x1688] sm:$0xff]
    %v783 = vld [vmem:[#allocation2 + $0x1690] sm:$0xff]
    %v784 = vld [vmem:[#allocation2 + $0x1698] sm:$0xff]
    %v785 = vld [vmem:[#allocation2 + $0x16a0] sm:$0xff]
    %v786 = vld [vmem:[#allocation2 + $0x16a8] sm:$0xff]
    %v787 = vld [vmem:[#allocation2 + $0x16b0] sm:$0xff]
    %v788 = vld [vmem:[#allocation2 + $0x16b8] sm:$0xff]
    %v789 = vld [vmem:[#allocation2 + $0x16c0] sm:$0xff]
    %v790 = vld [vmem:[#allocation2 + $0x16c8] sm:$0xff]
    %v791 = vld [vmem:[#allocation2 + $0x16d0] sm:$0xff]
    %v792 = vld [vmem:[#allocation2 + $0x16d8] sm:$0xff]
    %v793 = vld [vmem:[#allocation2 + $0x16e0] sm:$0xff]
    %v794 = vld [vmem:[#allocation2 + $0x16e8] sm:$0xff]
    %v795 = vld [vmem:[#allocation2 + $0x16f0] sm:$0xff]
    %v796 = vld [vmem:[#allocation2 + $0x16f8] sm:$0xff]
    %v797 = vld [vmem:[#allocation2 + $0x1700] sm:$0xff]
    %v798 = vld [vmem:[#allocation2 + $0x1708] sm:$0xff]
    %v799 = vld [vmem:[#allocation2 + $0x1710] sm:$0xff]
    %v800 = vld [vmem:[#allocation2 + $0x1718] sm:$0xff]
    %v801 = vld [vmem:[#allocation2 + $0x1720] sm:$0xff]
    %v802 = vld [vmem:[#allocation2 + $0x1728] sm:$0xff]
    %v803 = vld [vmem:[#allocation2 + $0x1730] sm:$0xff]
    %v804 = vld [vmem:[#allocation2 + $0x1738] sm:$0xff]
    %v805 = vld [vmem:[#allocation2 + $0x1740] sm:$0xff]
    %v806 = vld [vmem:[#allocation2 + $0x1748] sm:$0xff]
    %v807 = vld [vmem:[#allocation2 + $0x1750] sm:$0xff]
    %v808 = vld [vmem:[#allocation2 + $0x1758] sm:$0xff]
    %v809 = vld [vmem:[#allocation2 + $0x1760] sm:$0xff]
    %v810 = vld [vmem:[#allocation2 + $0x1768] sm:$0xff]
    %v811 = vld [vmem:[#allocation2 + $0x1770] sm:$0xff]
    %v812 = vld [vmem:[#allocation2 + $0x1778] sm:$0xff]
    %v813 = vld [vmem:[#allocation2 + $0x1780] sm:$0xff]
    %v814 = vld [vmem:[#allocation2 + $0x1788] sm:$0xff]
    %v815 = vld [vmem:[#allocation2 + $0x1790] sm:$0xff]
    %v816 = vld [vmem:[#allocation2 + $0x1798] sm:$0xff]
    %v817 = vld [vmem:[#allocation2 + $0x17a0] sm:$0xff]
    %v818 = vld [vmem:[#allocation2 + $0x17a8] sm:$0xff]
    %v819 = vld [vmem:[#allocation2 + $0x17b0] sm:$0xff]
    %v820 = vld [vmem:[#allocation2 + $0x17b8] sm:$0xff]
    %v821 = vld [vmem:[#allocation2 + $0x17c0] sm:$0xff]
    %v822 = vld [vmem:[#allocation2 + $0x17c8] sm:$0xff]
    %v823 = vld [vmem:[#allocation2 + $0x17d0] sm:$0xff]
    %v824 = vld [vmem:[#allocation2 + $0x17d8] sm:$0xff]
    %v825 = vld [vmem:[#allocation2 + $0x17e0] sm:$0xff]
    %v826 = vld [vmem:[#allocation2 + $0x17e8] sm:$0xff]
    %v827 = vld [vmem:[#allocation2 + $0x17f0] sm:$0xff]
    %v828 = vld [vmem:[#allocation2 + $0x17f8] sm:$0xff]
    %v829 = vld [vmem:[#allocation2 + $0x1800] sm:$0xff]
    %v830 = vld [vmem:[#allocation2 + $0x1808] sm:$0xff]
    %v831 = vld [vmem:[#allocation2 + $0x1810] sm:$0xff]
    %v832 = vld [vmem:[#allocation2 + $0x1818] sm:$0xff]
    %v833 = vld [vmem:[#allocation2 + $0x1820] sm:$0xff]
    %v834 = vld [vmem:[#allocation2 + $0x1828] sm:$0xff]
    %v835 = vld [vmem:[#allocation2 + $0x1830] sm:$0xff]
    %v836 = vld [vmem:[#allocation2 + $0x1838] sm:$0xff]
    %v837 = vld [vmem:[#allocation2 + $0x1840] sm:$0xff]
    %v838 = vld [vmem:[#allocation2 + $0x1848] sm:$0xff]
    %v839 = vld [vmem:[#allocation2 + $0x1850] sm:$0xff]
    %v840 = vld [vmem:[#allocation2 + $0x1858] sm:$0xff]
    %v841 = vld [vmem:[#allocation2 + $0x1860] sm:$0xff]
    %v842 = vld [vmem:[#allocation2 + $0x1868] sm:$0xff]
    %v843 = vld [vmem:[#allocation2 + $0x1870] sm:$0xff]
    %v844 = vld [vmem:[#allocation2 + $0x1878] sm:$0xff]
    %v845 = vld [vmem:[#allocation2 + $0x1880] sm:$0xff]
    %v846 = vld [vmem:[#allocation2 + $0x1888] sm:$0xff]
    %v847 = vld [vmem:[#allocation2 + $0x1890] sm:$0xff]
    %v848 = vld [vmem:[#allocation2 + $0x1898] sm:$0xff]
    %v849 = vld [vmem:[#allocation2 + $0x18a0] sm:$0xff]
    %v850 = vld [vmem:[#allocation2 + $0x18a8] sm:$0xff]
    %v851 = vld [vmem:[#allocation2 + $0x18b0] sm:$0xff]
    %v852 = vld [vmem:[#allocation2 + $0x18b8] sm:$0xff]
    %v853 = vld [vmem:[#allocation2 + $0x18c0] sm:$0xff]
    %v854 = vld [vmem:[#allocation2 + $0x18c8] sm:$0xff]
    %v855 = vld [vmem:[#allocation2 + $0x18d0] sm:$0xff]
    %v856 = vld [vmem:[#allocation2 + $0x18d8] sm:$0xff]
    %v857 = vld [vmem:[#allocation2 + $0x18e0] sm:$0xff]
    %v858 = vld [vmem:[#allocation2 + $0x18e8] sm:$0xff]
    %v859 = vld [vmem:[#allocation2 + $0x18f0] sm:$0xff]
    %v860 = vld [vmem:[#allocation2 + $0x18f8] sm:$0xff]
    %v861 = vld [vmem:[#allocation2 + $0x1900] sm:$0xff]
    %v862 = vld [vmem:[#allocation2 + $0x1908] sm:$0xff]
    %v863 = vld [vmem:[#allocation2 + $0x1910] sm:$0xff]
    %v864 = vld [vmem:[#allocation2 + $0x1918] sm:$0xff]
    %v865 = vld [vmem:[#allocation2 + $0x1920] sm:$0xff]
    %v866 = vld [vmem:[#allocation2 + $0x1928] sm:$0xff]
    %v867 = vld [vmem:[#allocation2 + $0x1930] sm:$0xff]
    %v868 = vld [vmem:[#allocation2 + $0x1938] sm:$0xff]
    %v869 = vld [vmem:[#allocation2 + $0x1940] sm:$0xff]
    %v870 = vld [vmem:[#allocation2 + $0x1948] sm:$0xff]
    %v871 = vld [vmem:[#allocation2 + $0x1950] sm:$0xff]
    %v872 = vld [vmem:[#allocation2 + $0x1958] sm:$0xff]
    %v873 = vld [vmem:[#allocation2 + $0x1960] sm:$0xff]
    %v874 = vld [vmem:[#allocation2 + $0x1968] sm:$0xff]
    %v875 = vld [vmem:[#allocation2 + $0x1970] sm:$0xff]
    %v876 = vld [vmem:[#allocation2 + $0x1978] sm:$0xff]
    %v877 = vld [vmem:[#allocation2 + $0x1980] sm:$0xff]
    %v878 = vld [vmem:[#allocation2 + $0x1988] sm:$0xff]
    %v879 = vld [vmem:[#allocation2 + $0x1990] sm:$0xff]
    %v880 = vld [vmem:[#allocation2 + $0x1998] sm:$0xff]
    %v881 = vld [vmem:[#allocation2 + $0x19a0] sm:$0xff]
    %v882 = vld [vmem:[#allocation2 + $0x19a8] sm:$0xff]
    %v883 = vld [vmem:[#allocation2 + $0x19b0] sm:$0xff]
    %v884 = vld [vmem:[#allocation2 + $0x19b8] sm:$0xff]
    %v885 = vld [vmem:[#allocation2 + $0x19c0] sm:$0xff]
    %v886 = vld [vmem:[#allocation2 + $0x19c8] sm:$0xff]
    %v887 = vld [vmem:[#allocation2 + $0x19d0] sm:$0xff]
    %v888 = vld [vmem:[#allocation2 + $0x19d8] sm:$0xff]
    %v889 = vld [vmem:[#allocation2 + $0x19e0] sm:$0xff]
    %v890 = vld [vmem:[#allocation2 + $0x19e8] sm:$0xff]
    %v891 = vld [vmem:[#allocation2 + $0x19f0] sm:$0xff]
    %v892 = vld [vmem:[#allocation2 + $0x19f8] sm:$0xff]
    %v893 = vld [vmem:[#allocation2 + $0x1a00] sm:$0xff]
    %v894 = vld [vmem:[#allocation2 + $0x1a08] sm:$0xff]
    %v895 = vld [vmem:[#allocation2 + $0x1a10] sm:$0xff]
    %v896 = vld [vmem:[#allocation2 + $0x1a18] sm:$0xff]
    %v897 = vld [vmem:[#allocation2 + $0x1a20] sm:$0xff]
    %v898 = vld [vmem:[#allocation2 + $0x1a28] sm:$0xff]
    %v899 = vld [vmem:[#allocation2 + $0x1a30] sm:$0xff]
    %v900 = vld [vmem:[#allocation2 + $0x1a38] sm:$0xff]
    %v901 = vld [vmem:[#allocation2 + $0x1a40] sm:$0xff]
    %v902 = vld [vmem:[#allocation2 + $0x1a48] sm:$0xff]
    %v903 = vld [vmem:[#allocation2 + $0x1a50] sm:$0xff]
    %v904 = vld [vmem:[#allocation2 + $0x1a58] sm:$0xff]
    %v905 = vld [vmem:[#allocation2 + $0x1a60] sm:$0xff]
    %v906 = vld [vmem:[#allocation2 + $0x1a68] sm:$0xff]
    %v907 = vld [vmem:[#allocation2 + $0x1a70] sm:$0xff]
    %v908 = vld [vmem:[#allocation2 + $0x1a78] sm:$0xff]
    %v909 = vld [vmem:[#allocation2 + $0x1a80] sm:$0xff]
    %v910 = vld [vmem:[#allocation2 + $0x1a88] sm:$0xff]
    %v911 = vld [vmem:[#allocation2 + $0x1a90] sm:$0xff]
    %v912 = vld [vmem:[#allocation2 + $0x1a98] sm:$0xff]
    %v913 = vld [vmem:[#allocation2 + $0x1aa0] sm:$0xff]
    %v914 = vld [vmem:[#allocation2 + $0x1aa8] sm:$0xff]
    %v915 = vld [vmem:[#allocation2 + $0x1ab0] sm:$0xff]
    %v916 = vld [vmem:[#allocation2 + $0x1ab8] sm:$0xff]
    %v917 = vld [vmem:[#allocation2 + $0x1ac0] sm:$0xff]
    %v918 = vld [vmem:[#allocation2 + $0x1ac8] sm:$0xff]
    %v919 = vld [vmem:[#allocation2 + $0x1ad0] sm:$0xff]
    %v920 = vld [vmem:[#allocation2 + $0x1ad8] sm:$0xff]
    %v921 = vld [vmem:[#allocation2 + $0x1ae0] sm:$0xff]
    %v922 = vld [vmem:[#allocation2 + $0x1ae8] sm:$0xff]
    %v923 = vld [vmem:[#allocation2 + $0x1af0] sm:$0xff]
    %v924 = vld [vmem:[#allocation2 + $0x1af8] sm:$0xff]
    %v925 = vld [vmem:[#allocation2 + $0x1b00] sm:$0xff]
    %v926 = vld [vmem:[#allocation2 + $0x1b08] sm:$0xff]
    %v927 = vld [vmem:[#allocation2 + $0x1b10] sm:$0xff]
    %v928 = vld [vmem:[#allocation2 + $0x1b18] sm:$0xff]
    %v929 = vld [vmem:[#allocation2 + $0x1b20] sm:$0xff]
    %v930 = vld [vmem:[#allocation2 + $0x1b28] sm:$0xff]
    %v931 = vld [vmem:[#allocation2 + $0x1b30] sm:$0xff]
    %v932 = vld [vmem:[#allocation2 + $0x1b38] sm:$0xff]
    %v933 = vld [vmem:[#allocation2 + $0x1b40] sm:$0xff]
    %v934 = vld [vmem:[#allocation2 + $0x1b48] sm:$0xff]
    %v935 = vld [vmem:[#allocation2 + $0x1b50] sm:$0xff]
    %v936 = vld [vmem:[#allocation2 + $0x1b58] sm:$0xff]
    %v937 = vld [vmem:[#allocation2 + $0x1b60] sm:$0xff]
    %v938 = vld [vmem:[#allocation2 + $0x1b68] sm:$0xff]
    %v939 = vld [vmem:[#allocation2 + $0x1b70] sm:$0xff]
    %v940 = vld [vmem:[#allocation2 + $0x1b78] sm:$0xff]
    %v941 = vld [vmem:[#allocation2 + $0x1b80] sm:$0xff]
    %v942 = vld [vmem:[#allocation2 + $0x1b88] sm:$0xff]
    %v943 = vld [vmem:[#allocation2 + $0x1b90] sm:$0xff]
    %v944 = vld [vmem:[#allocation2 + $0x1b98] sm:$0xff]
    %v945 = vld [vmem:[#allocation2 + $0x1ba0] sm:$0xff]
    %v946 = vld [vmem:[#allocation2 + $0x1ba8] sm:$0xff]
    %v947 = vld [vmem:[#allocation2 + $0x1bb0] sm:$0xff]
    %v948 = vld [vmem:[#allocation2 + $0x1bb8] sm:$0xff]
    %v949 = vld [vmem:[#allocation2 + $0x1bc0] sm:$0xff]
    %v950 = vld [vmem:[#allocation2 + $0x1bc8] sm:$0xff]
    %v951 = vld [vmem:[#allocation2 + $0x1bd0] sm:$0xff]
    %v952 = vld [vmem:[#allocation2 + $0x1bd8] sm:$0xff]
    %v953 = vld [vmem:[#allocation2 + $0x1be0] sm:$0xff]
    %v954 = vld [vmem:[#allocation2 + $0x1be8] sm:$0xff]
    %v955 = vld [vmem:[#allocation2 + $0x1bf0] sm:$0xff]
    %v956 = vld [vmem:[#allocation2 + $0x1bf8] sm:$0xff]
    %v957 = vld [vmem:[#allocation2 + $0x1c00] sm:$0xff]
    %v958 = vld [vmem:[#allocation2 + $0x1c08] sm:$0xff]
    %v959 = vld [vmem:[#allocation2 + $0x1c10] sm:$0xff]
    %v960 = vld [vmem:[#allocation2 + $0x1c18] sm:$0xff]
    %v961 = vld [vmem:[#allocation2 + $0x1c20] sm:$0xff]
    %v962 = vld [vmem:[#allocation2 + $0x1c28] sm:$0xff]
    %v963 = vld [vmem:[#allocation2 + $0x1c30] sm:$0xff]
    %v964 = vld [vmem:[#allocation2 + $0x1c38] sm:$0xff]
    %v965 = vld [vmem:[#allocation2 + $0x1c40] sm:$0xff]
    %v966 = vld [vmem:[#allocation2 + $0x1c48] sm:$0xff]
    %v967 = vld [vmem:[#allocation2 + $0x1c50] sm:$0xff]
    %v968 = vld [vmem:[#allocation2 + $0x1c58] sm:$0xff]
    %v969 = vld [vmem:[#allocation2 + $0x1c60] sm:$0xff]
    %v970 = vld [vmem:[#allocation2 + $0x1c68] sm:$0xff]
    %v971 = vld [vmem:[#allocation2 + $0x1c70] sm:$0xff]
    %v972 = vld [vmem:[#allocation2 + $0x1c78] sm:$0xff]
    %v973 = vld [vmem:[#allocation2 + $0x1c80] sm:$0xff]
    %v974 = vld [vmem:[#allocation2 + $0x1c88] sm:$0xff]
    %v975 = vld [vmem:[#allocation2 + $0x1c90] sm:$0xff]
    %v976 = vld [vmem:[#allocation2 + $0x1c98] sm:$0xff]
    %v977 = vld [vmem:[#allocation2 + $0x1ca0] sm:$0xff]
    %v978 = vld [vmem:[#allocation2 + $0x1ca8] sm:$0xff]
    %v979 = vld [vmem:[#allocation2 + $0x1cb0] sm:$0xff]
    %v980 = vld [vmem:[#allocation2 + $0x1cb8] sm:$0xff]
    %v981 = vld [vmem:[#allocation2 + $0x1cc0] sm:$0xff]
    %v982 = vld [vmem:[#allocation2 + $0x1cc8] sm:$0xff]
    %v983 = vld [vmem:[#allocation2 + $0x1cd0] sm:$0xff]
    %v984 = vld [vmem:[#allocation2 + $0x1cd8] sm:$0xff]
    %v985 = vld [vmem:[#allocation2 + $0x1ce0] sm:$0xff]
    %v986 = vld [vmem:[#allocation2 + $0x1ce8] sm:$0xff]
    %v987 = vld [vmem:[#allocation2 + $0x1cf0] sm:$0xff]
    %v988 = vld [vmem:[#allocation2 + $0x1cf8] sm:$0xff]
    %v989 = vld [vmem:[#allocation2 + $0x1d00] sm:$0xff]
    %v990 = vld [vmem:[#allocation2 + $0x1d08] sm:$0xff]
    %v991 = vld [vmem:[#allocation2 + $0x1d10] sm:$0xff]
    %v992 = vld [vmem:[#allocation2 + $0x1d18] sm:$0xff]
    %v993 = vld [vmem:[#allocation2 + $0x1d20] sm:$0xff]
    %v994 = vld [vmem:[#allocation2 + $0x1d28] sm:$0xff]
    %v995 = vld [vmem:[#allocation2 + $0x1d30] sm:$0xff]
    %v996 = vld [vmem:[#allocation2 + $0x1d38] sm:$0xff]
    %v997 = vld [vmem:[#allocation2 + $0x1d40] sm:$0xff]
    %v998 = vld [vmem:[#allocation2 + $0x1d48] sm:$0xff]
    %v999 = vld [vmem:[#allocation2 + $0x1d50] sm:$0xff]
    %v1000 = vld [vmem:[#allocation2 + $0x1d58] sm:$0xff]
    %v1001 = vld [vmem:[#allocation2 + $0x1d60] sm:$0xff]
    %v1002 = vld [vmem:[#allocation2 + $0x1d68] sm:$0xff]
    %v1003 = vld [vmem:[#allocation2 + $0x1d70] sm:$0xff]
    %v1004 = vld [vmem:[#allocation2 + $0x1d78] sm:$0xff]
    %v1005 = vld [vmem:[#allocation2 + $0x1d80] sm:$0xff]
    %v1006 = vld [vmem:[#allocation2 + $0x1d88] sm:$0xff]
    %v1007 = vld [vmem:[#allocation2 + $0x1d90] sm:$0xff]
    %v1008 = vld [vmem:[#allocation2 + $0x1d98] sm:$0xff]
    %v1009 = vld [vmem:[#allocation2 + $0x1da0] sm:$0xff]
    %v1010 = vld [vmem:[#allocation2 + $0x1da8] sm:$0xff]
    %v1011 = vld [vmem:[#allocation2 + $0x1db0] sm:$0xff]
    %v1012 = vld [vmem:[#allocation2 + $0x1db8] sm:$0xff]
    %v1013 = vld [vmem:[#allocation2 + $0x1dc0] sm:$0xff]
    %v1014 = vld [vmem:[#allocation2 + $0x1dc8] sm:$0xff]
    %v1015 = vld [vmem:[#allocation2 + $0x1dd0] sm:$0xff]
    %v1016 = vld [vmem:[#allocation2 + $0x1dd8] sm:$0xff]
    %v1017 = vld [vmem:[#allocation2 + $0x1de0] sm:$0xff]
    %v1018 = vld [vmem:[#allocation2 + $0x1de8] sm:$0xff]
    %v1019 = vld [vmem:[#allocation2 + $0x1df0] sm:$0xff]
    %v1020 = vld [vmem:[#allocation2 + $0x1df8] sm:$0xff]
    %v1021 = vld [vmem:[#allocation2 + $0x1e00] sm:$0xff]
    %v1022 = vld [vmem:[#allocation2 + $0x1e08] sm:$0xff]
    %v1023 = vld [vmem:[#allocation2 + $0x1e10] sm:$0xff]
    %v1024 = vld [vmem:[#allocation2 + $0x1e18] sm:$0xff]
    %v1025 = vld [vmem:[#allocation2 + $0x1e20] sm:$0xff]
    %v1026 = vld [vmem:[#allocation2 + $0x1e28] sm:$0xff]
    %v1027 = vld [vmem:[#allocation2 + $0x1e30] sm:$0xff]
    %v1028 = vld [vmem:[#allocation2 + $0x1e38] sm:$0xff]
    %v1029 = vld [vmem:[#allocation2 + $0x1e40] sm:$0xff]
    %v1030 = vld [vmem:[#allocation2 + $0x1e48] sm:$0xff]
    %v1031 = vld [vmem:[#allocation2 + $0x1e50] sm:$0xff]
    %v1032 = vld [vmem:[#allocation2 + $0x1e58] sm:$0xff]
    %v1033 = vld [vmem:[#allocation2 + $0x1e60] sm:$0xff]
    %v1034 = vld [vmem:[#allocation2 + $0x1e68] sm:$0xff]
    %v1035 = vld [vmem:[#allocation2 + $0x1e70] sm:$0xff]
    %v1036 = vld [vmem:[#allocation2 + $0x1e78] sm:$0xff]
    %v1037 = vld [vmem:[#allocation2 + $0x1e80] sm:$0xff]
    %v1038 = vld [vmem:[#allocation2 + $0x1e88] sm:$0xff]
    %v1039 = vld [vmem:[#allocation2 + $0x1e90] sm:$0xff]
    %v1040 = vld [vmem:[#allocation2 + $0x1e98] sm:$0xff]
    %v1041 = vld [vmem:[#allocation2 + $0x1ea0] sm:$0xff]
    %v1042 = vld [vmem:[#allocation2 + $0x1ea8] sm:$0xff]
    %v1043 = vld [vmem:[#allocation2 + $0x1eb0] sm:$0xff]
    %v1044 = vld [vmem:[#allocation2 + $0x1eb8] sm:$0xff]
    %v1045 = vld [vmem:[#allocation2 + $0x1ec0] sm:$0xff]
    %v1046 = vld [vmem:[#allocation2 + $0x1ec8] sm:$0xff]
    %v1047 = vld [vmem:[#allocation2 + $0x1ed0] sm:$0xff]
    %v1048 = vld [vmem:[#allocation2 + $0x1ed8] sm:$0xff]
    %v1049 = vld [vmem:[#allocation2 + $0x1ee0] sm:$0xff]
    %v1050 = vld [vmem:[#allocation2 + $0x1ee8] sm:$0xff]
    %v1051 = vld [vmem:[#allocation2 + $0x1ef0] sm:$0xff]
    %v1052 = vld [vmem:[#allocation2 + $0x1ef8] sm:$0xff]
    %v1053 = vld [vmem:[#allocation2 + $0x1f00] sm:$0xff]
    %v1054 = vld [vmem:[#allocation2 + $0x1f08] sm:$0xff]
    %v1055 = vld [vmem:[#allocation2 + $0x1f10] sm:$0xff]
    %v1056 = vld [vmem:[#allocation2 + $0x1f18] sm:$0xff]
    %v1057 = vld [vmem:[#allocation2 + $0x1f20] sm:$0xff]
    %v1058 = vld [vmem:[#allocation2 + $0x1f28] sm:$0xff]
    %v1059 = vld [vmem:[#allocation2 + $0x1f30] sm:$0xff]
    %v1060 = vld [vmem:[#allocation2 + $0x1f38] sm:$0xff]
    %v1061 = vld [vmem:[#allocation2 + $0x1f40] sm:$0xff]
    %v1062 = vld [vmem:[#allocation2 + $0x1f48] sm:$0xff]
    %v1063 = vld [vmem:[#allocation2 + $0x1f50] sm:$0xff]
    %v1064 = vld [vmem:[#allocation2 + $0x1f58] sm:$0xff]
    %v1065 = vld [vmem:[#allocation2 + $0x1f60] sm:$0xff]
    %v1066 = vld [vmem:[#allocation2 + $0x1f68] sm:$0xff]
    %v1067 = vld [vmem:[#allocation2 + $0x1f70] sm:$0xff]
    %v1068 = vld [vmem:[#allocation2 + $0x1f78] sm:$0xff]
    %v1069 = vld [vmem:[#allocation2 + $0x1f80] sm:$0xff]
    %v1070 = vld [vmem:[#allocation2 + $0x1f88] sm:$0xff]
    %v1071 = vld [vmem:[#allocation2 + $0x1f90] sm:$0xff]
    %v1072 = vld [vmem:[#allocation2 + $0x1f98] sm:$0xff]
    %v1073 = vld [vmem:[#allocation2 + $0x1fa0] sm:$0xff]
    %v1074 = vld [vmem:[#allocation2 + $0x1fa8] sm:$0xff]
    %v1075 = vld [vmem:[#allocation2 + $0x1fb0] sm:$0xff]
    %v1076 = vld [vmem:[#allocation2 + $0x1fb8] sm:$0xff]
    %v1077 = vld [vmem:[#allocation2 + $0x1fc0] sm:$0xff]
    %v1078 = vld [vmem:[#allocation2 + $0x1fc8] sm:$0xff]
    %v1079 = vld [vmem:[#allocation2 + $0x1fd0] sm:$0xff]
    %v1080 = vld [vmem:[#allocation2 + $0x1fd8] sm:$0xff]
    %v1081 = vld [vmem:[#allocation2 + $0x1fe0] sm:$0xff]
    %v1082 = vld [vmem:[#allocation2 + $0x1fe8] sm:$0xff]
    %v1083 = vld [vmem:[#allocation2 + $0x1ff0] sm:$0xff]
    %v1084 = vld [vmem:[#allocation2 + $0x1ff8] sm:$0xff]
    %v1085 = vld [vmem:[#allocation2 + $0x2000] sm:$0xff]
    %v1086 = vld [vmem:[#allocation2 + $0x2008] sm:$0xff]
    %v1087 = vld [vmem:[#allocation2 + $0x2010] sm:$0xff]
    %v1088 = vld [vmem:[#allocation2 + $0x2018] sm:$0xff]
    %v1089 = vld [vmem:[#allocation2 + $0x2020] sm:$0xff]
    %v1090 = vld [vmem:[#allocation2 + $0x2028] sm:$0xff]
    %v1091 = vld [vmem:[#allocation2 + $0x2030] sm:$0xff]
    %v1092 = vld [vmem:[#allocation2 + $0x2038] sm:$0xff]
    %v1093 = vld [vmem:[#allocation2 + $0x2040] sm:$0xff]
    %v1094 = vld [vmem:[#allocation2 + $0x2048] sm:$0xff]
    %v1095 = vld [vmem:[#allocation2 + $0x2050] sm:$0xff]
    %v1096 = vld [vmem:[#allocation2 + $0x2058] sm:$0xff]
    %v1097 = vld [vmem:[#allocation2 + $0x2060] sm:$0xff]
    %v1098 = vld [vmem:[#allocation2 + $0x2068] sm:$0xff]
    %v1099 = vld [vmem:[#allocation2 + $0x2070] sm:$0xff]
    %v1100 = vld [vmem:[#allocation2 + $0x2078] sm:$0xff]
    %v1101 = vld [vmem:[#allocation2 + $0x2080] sm:$0xff]
    %v1102 = vld [vmem:[#allocation2 + $0x2088] sm:$0xff]
    %v1103 = vld [vmem:[#allocation2 + $0x2090] sm:$0xff]
    %v1104 = vld [vmem:[#allocation2 + $0x2098] sm:$0xff]
    %v1105 = vld [vmem:[#allocation2 + $0x20a0] sm:$0xff]
    %v1106 = vld [vmem:[#allocation2 + $0x20a8] sm:$0xff]
    %v1107 = vld [vmem:[#allocation2 + $0x20b0] sm:$0xff]
    %v1108 = vld [vmem:[#allocation2 + $0x20b8] sm:$0xff]
    %v1109 = vld [vmem:[#allocation2 + $0x20c0] sm:$0xff]
    %v1110 = vld [vmem:[#allocation2 + $0x20c8] sm:$0xff]
    %v1111 = vld [vmem:[#allocation2 + $0x20d0] sm:$0xff]
    %v1112 = vld [vmem:[#allocation2 + $0x20d8] sm:$0xff]
    %v1113 = vld [vmem:[#allocation2 + $0x20e0] sm:$0xff]
    %v1114 = vld [vmem:[#allocation2 + $0x20e8] sm:$0xff]
    %v1115 = vld [vmem:[#allocation2 + $0x20f0] sm:$0xff]
    %v1116 = vld [vmem:[#allocation2 + $0x20f8] sm:$0xff]
    %v1117 = vld [vmem:[#allocation2 + $0x2100] sm:$0xff]
    %v1118 = vld [vmem:[#allocation2 + $0x2108] sm:$0xff]
    %v1119 = vld [vmem:[#allocation2 + $0x2110] sm:$0xff]
    %v1120 = vld [vmem:[#allocation2 + $0x2118] sm:$0xff]
    %v1121 = vld [vmem:[#allocation2 + $0x2120] sm:$0xff]
    %v1122 = vld [vmem:[#allocation2 + $0x2128] sm:$0xff]
    %v1123 = vld [vmem:[#allocation2 + $0x2130] sm:$0xff]
    %v1124 = vld [vmem:[#allocation2 + $0x2138] sm:$0xff]
    %v1125 = vld [vmem:[#allocation2 + $0x2140] sm:$0xff]
    %v1126 = vld [vmem:[#allocation2 + $0x2148] sm:$0xff]
    %v1127 = vld [vmem:[#allocation2 + $0x2150] sm:$0xff]
    %v1128 = vld [vmem:[#allocation2 + $0x2158] sm:$0xff]
    %v1129 = vld [vmem:[#allocation2 + $0x2160] sm:$0xff]
    %v1130 = vld [vmem:[#allocation2 + $0x2168] sm:$0xff]
    %v1131 = vld [vmem:[#allocation2 + $0x2170] sm:$0xff]
    %v1132 = vld [vmem:[#allocation2 + $0x2178] sm:$0xff]
    %v1133 = vld [vmem:[#allocation2 + $0x2180] sm:$0xff]
    %v1134 = vld [vmem:[#allocation2 + $0x2188] sm:$0xff]
    %v1135 = vld [vmem:[#allocation2 + $0x2190] sm:$0xff]
    %v1136 = vld [vmem:[#allocation2 + $0x2198] sm:$0xff]
    %v1137 = vld [vmem:[#allocation2 + $0x21a0] sm:$0xff]
    %v1138 = vld [vmem:[#allocation2 + $0x21a8] sm:$0xff]
    %v1139 = vld [vmem:[#allocation2 + $0x21b0] sm:$0xff]
    %v1140 = vld [vmem:[#allocation2 + $0x21b8] sm:$0xff]
    %v1141 = vld [vmem:[#allocation2 + $0x21c0] sm:$0xff]
    %v1142 = vld [vmem:[#allocation2 + $0x21c8] sm:$0xff]
    %v1143 = vld [vmem:[#allocation2 + $0x21d0] sm:$0xff]
    %v1144 = vld [vmem:[#allocation2 + $0x21d8] sm:$0xff]
    %v1145 = vld [vmem:[#allocation2 + $0x21e0] sm:$0xff]
    %v1146 = vld [vmem:[#allocation2 + $0x21e8] sm:$0xff]
    %v1147 = vld [vmem:[#allocation2 + $0x21f0] sm:$0xff]
    %v1148 = vld [vmem:[#allocation2 + $0x21f8] sm:$0xff]
    %v1149 = vld [vmem:[#allocation2 + $0x2200] sm:$0xff]
    %v1150 = vld [vmem:[#allocation2 + $0x2208] sm:$0xff]
    %v1151 = vld [vmem:[#allocation2 + $0x2210] sm:$0xff]
    %v1152 = vld [vmem:[#allocation2 + $0x2218] sm:$0xff]
    %v1153 = vld [vmem:[#allocation2 + $0x2220] sm:$0xff]
    %v1154 = vld [vmem:[#allocation2 + $0x2228] sm:$0xff]
    %v1155 = vld [vmem:[#allocation2 + $0x2230] sm:$0xff]
    %v1156 = vld [vmem:[#allocation2 + $0x2238] sm:$0xff]
    %v1157 = vld [vmem:[#allocation2 + $0x2240] sm:$0xff]
    %v1158 = vld [vmem:[#allocation2 + $0x2248] sm:$0xff]
    %v1159 = vld [vmem:[#allocation2 + $0x2250] sm:$0xff]
    %v1160 = vld [vmem:[#allocation2 + $0x2258] sm:$0xff]
    %v1161 = vld [vmem:[#allocation2 + $0x2260] sm:$0xff]
    %v1162 = vld [vmem:[#allocation2 + $0x2268] sm:$0xff]
    %v1163 = vld [vmem:[#allocation2 + $0x2270] sm:$0xff]
    %v1164 = vld [vmem:[#allocation2 + $0x2278] sm:$0xff]
    %v1165 = vld [vmem:[#allocation2 + $0x2280] sm:$0xff]
    %v1166 = vld [vmem:[#allocation2 + $0x2288] sm:$0xff]
    %v1167 = vld [vmem:[#allocation2 + $0x2290] sm:$0xff]
    %v1168 = vld [vmem:[#allocation2 + $0x2298] sm:$0xff]
    %v1169 = vld [vmem:[#allocation2 + $0x22a0] sm:$0xff]
    %v1170 = vld [vmem:[#allocation2 + $0x22a8] sm:$0xff]
    %v1171 = vld [vmem:[#allocation2 + $0x22b0] sm:$0xff]
    %v1172 = vld [vmem:[#allocation2 + $0x22b8] sm:$0xff]
    %v1173 = vld [vmem:[#allocation2 + $0x22c0] sm:$0xff]
    %v1174 = vld [vmem:[#allocation2 + $0x22c8] sm:$0xff]
    %v1175 = vld [vmem:[#allocation2 + $0x22d0] sm:$0xff]
    %v1176 = vld [vmem:[#allocation2 + $0x22d8] sm:$0xff]
    %v1177 = vld [vmem:[#allocation2 + $0x22e0] sm:$0xff]
    %v1178 = vld [vmem:[#allocation2 + $0x22e8] sm:$0xff]
    %v1179 = vld [vmem:[#allocation2 + $0x22f0] sm:$0xff]
    %v1180 = vld [vmem:[#allocation2 + $0x22f8] sm:$0xff]
    %v1181 = vld [vmem:[#allocation2 + $0x2300] sm:$0xff]
    %v1182 = vld [vmem:[#allocation2 + $0x2308] sm:$0xff]
    %v1183 = vld [vmem:[#allocation2 + $0x2310] sm:$0xff]
    %v1184 = vld [vmem:[#allocation2 + $0x2318] sm:$0xff]
    %v1185 = vld [vmem:[#allocation2 + $0x2320] sm:$0xff]
    %v1186 = vld [vmem:[#allocation2 + $0x2328] sm:$0xff]
    %v1187 = vld [vmem:[#allocation2 + $0x2330] sm:$0xff]
    %v1188 = vld [vmem:[#allocation2 + $0x2338] sm:$0xff]
    %v1189 = vld [vmem:[#allocation2 + $0x2340] sm:$0xff]
    %v1190 = vld [vmem:[#allocation2 + $0x2348] sm:$0xff]
    %v1191 = vld [vmem:[#allocation2 + $0x2350] sm:$0xff]
    %v1192 = vld [vmem:[#allocation2 + $0x2358] sm:$0xff]
    %v1193 = vld [vmem:[#allocation2 + $0x2360] sm:$0xff]
    %v1194 = vld [vmem:[#allocation2 + $0x2368] sm:$0xff]
    %v1195 = vld [vmem:[#allocation2 + $0x2370] sm:$0xff]
    %v1196 = vld [vmem:[#allocation2 + $0x2378] sm:$0xff]
    %v1197 = vld [vmem:[#allocation2 + $0x2380] sm:$0xff]
    %v1198 = vld [vmem:[#allocation2 + $0x2388] sm:$0xff]
    %v1199 = vld [vmem:[#allocation2 + $0x2390] sm:$0xff]
    %v1200 = vld [vmem:[#allocation2 + $0x2398] sm:$0xff]
    %v1201 = vld [vmem:[#allocation2 + $0x23a0] sm:$0xff]
    %v1202 = vld [vmem:[#allocation2 + $0x23a8] sm:$0xff]
    %v1203 = vld [vmem:[#allocation2 + $0x23b0] sm:$0xff]
    %v1204 = vld [vmem:[#allocation2 + $0x23b8] sm:$0xff]
    %v1205 = vld [vmem:[#allocation2 + $0x23c0] sm:$0xff]
    %v1206 = vld [vmem:[#allocation2 + $0x23c8] sm:$0xff]
    %v1207 = vld [vmem:[#allocation2 + $0x23d0] sm:$0xff]
    %v1208 = vld [vmem:[#allocation2 + $0x23d8] sm:$0xff]
    %v1209 = vld [vmem:[#allocation2 + $0x23e0] sm:$0xff]
    %v1210 = vld [vmem:[#allocation2 + $0x23e8] sm:$0xff]
    %v1211 = vld [vmem:[#allocation2 + $0x23f0] sm:$0xff]
    %v1212 = vld [vmem:[#allocation2 + $0x23f8] sm:$0xff]
    %v1213 = vld [vmem:[#allocation2 + $0x2400] sm:$0xff]
    %v1214 = vld [vmem:[#allocation2 + $0x2408] sm:$0xff]
    %v1215 = vld [vmem:[#allocation2 + $0x2410] sm:$0xff]
    %v1216 = vld [vmem:[#allocation2 + $0x2418] sm:$0xff]
    %v1217 = vld [vmem:[#allocation2 + $0x2420] sm:$0xff]
    %v1218 = vld [vmem:[#allocation2 + $0x2428] sm:$0xff]
    %v1219 = vld [vmem:[#allocation2 + $0x2430] sm:$0xff]
    %v1220 = vld [vmem:[#allocation2 + $0x2438] sm:$0xff]
    %v1221 = vld [vmem:[#allocation2 + $0x2440] sm:$0xff]
    %v1222 = vld [vmem:[#allocation2 + $0x2448] sm:$0xff]
    %v1223 = vld [vmem:[#allocation2 + $0x2450] sm:$0xff]
    %v1224 = vld [vmem:[#allocation2 + $0x2458] sm:$0xff]
    %v1225 = vld [vmem:[#allocation2 + $0x2460] sm:$0xff]
    %v1226 = vld [vmem:[#allocation2 + $0x2468] sm:$0xff]
    %v1227 = vld [vmem:[#allocation2 + $0x2470] sm:$0xff]
    %v1228 = vld [vmem:[#allocation2 + $0x2478] sm:$0xff]
    %v1229 = vld [vmem:[#allocation2 + $0x2480] sm:$0xff]
    %v1230 = vld [vmem:[#allocation2 + $0x2488] sm:$0xff]
    %v1231 = vld [vmem:[#allocation2 + $0x2490] sm:$0xff]
    %v1232 = vld [vmem:[#allocation2 + $0x2498] sm:$0xff]
    %v1233 = vld [vmem:[#allocation2 + $0x24a0] sm:$0xff]
    %v1234 = vld [vmem:[#allocation2 + $0x24a8] sm:$0xff]
    %v1235 = vld [vmem:[#allocation2 + $0x24b0] sm:$0xff]
    %v1236 = vld [vmem:[#allocation2 + $0x24b8] sm:$0xff]
    %v1237 = vld [vmem:[#allocation2 + $0x24c0] sm:$0xff]
    %v1238 = vld [vmem:[#allocation2 + $0x24c8] sm:$0xff]
    %v1239 = vld [vmem:[#allocation2 + $0x24d0] sm:$0xff]
    %v1240 = vld [vmem:[#allocation2 + $0x24d8] sm:$0xff]
    %v1241 = vld [vmem:[#allocation2 + $0x24e0] sm:$0xff]
    %v1242 = vld [vmem:[#allocation2 + $0x24e8] sm:$0xff]
    %v1243 = vld [vmem:[#allocation2 + $0x24f0] sm:$0xff]
    %v1244 = vld [vmem:[#allocation2 + $0x24f8] sm:$0xff]
    %v1245 = vld [vmem:[#allocation2 + $0x2500] sm:$0xff]
    %v1246 = vld [vmem:[#allocation2 + $0x2508] sm:$0xff]
    %v1247 = vld [vmem:[#allocation2 + $0x2510] sm:$0xff]
    %v1248 = vld [vmem:[#allocation2 + $0x2518] sm:$0xff]
    %v1249 = vld [vmem:[#allocation2 + $0x2520] sm:$0xff]
    %v1250 = vld [vmem:[#allocation2 + $0x2528] sm:$0xff]
    %v1251 = vld [vmem:[#allocation2 + $0x2530] sm:$0xff]
    %v1252 = vld [vmem:[#allocation2 + $0x2538] sm:$0xff]
    %v1253 = vld [vmem:[#allocation2 + $0x2540] sm:$0xff]
    %v1254 = vld [vmem:[#allocation2 + $0x2548] sm:$0xff]
    %v1255 = vld [vmem:[#allocation2 + $0x2550] sm:$0xff]
    %v1256 = vld [vmem:[#allocation2 + $0x2558] sm:$0xff]
    %v1257 = vld [vmem:[#allocation2 + $0x2560] sm:$0xff]
    %v1258 = vld [vmem:[#allocation2 + $0x2568] sm:$0xff]
    %v1259 = vld [vmem:[#allocation2 + $0x2570] sm:$0xff]
    %v1260 = vld [vmem:[#allocation2 + $0x2578] sm:$0xff]
    %v1261 = vld [vmem:[#allocation2 + $0x2580] sm:$0xff]
    %v1262 = vld [vmem:[#allocation2 + $0x2588] sm:$0xff]
    %v1263 = vld [vmem:[#allocation2 + $0x2590] sm:$0xff]
    %v1264 = vld [vmem:[#allocation2 + $0x2598] sm:$0xff]
    %v1265 = vld [vmem:[#allocation2 + $0x25a0] sm:$0xff]
    %v1266 = vld [vmem:[#allocation2 + $0x25a8] sm:$0xff]
    %v1267 = vld [vmem:[#allocation2 + $0x25b0] sm:$0xff]
    %v1268 = vld [vmem:[#allocation2 + $0x25b8] sm:$0xff]
    %v1269 = vld [vmem:[#allocation2 + $0x25c0] sm:$0xff]
    %v1270 = vld [vmem:[#allocation2 + $0x25c8] sm:$0xff]
    %v1271 = vld [vmem:[#allocation2 + $0x25d0] sm:$0xff]
    %v1272 = vld [vmem:[#allocation2 + $0x25d8] sm:$0xff]
    %v1273 = vld [vmem:[#allocation2 + $0x25e0] sm:$0xff]
    %v1274 = vld [vmem:[#allocation2 + $0x25e8] sm:$0xff]
    %v1275 = vld [vmem:[#allocation2 + $0x25f0] sm:$0xff]
    %v1276 = vld [vmem:[#allocation2 + $0x25f8] sm:$0xff]
    %v1277 = vld [vmem:[#allocation2 + $0x2600] sm:$0xff]
    %v1278 = vld [vmem:[#allocation2 + $0x2608] sm:$0xff]
    %v1279 = vld [vmem:[#allocation2 + $0x2610] sm:$0xff]
    %v1280 = vld [vmem:[#allocation2 + $0x2618] sm:$0xff]
    %v1281 = vld [vmem:[#allocation2 + $0x2620] sm:$0xff]
    %v1282 = vld [vmem:[#allocation2 + $0x2628] sm:$0xff]
    %v1283 = vld [vmem:[#allocation2 + $0x2630] sm:$0xff]
    %v1284 = vld [vmem:[#allocation2 + $0x2638] sm:$0xff]
    %v1285 = vld [vmem:[#allocation2 + $0x2640] sm:$0xff]
    %v1286 = vld [vmem:[#allocation2 + $0x2648] sm:$0xff]
    %v1287 = vld [vmem:[#allocation2 + $0x2650] sm:$0xff]
    %v1288 = vld [vmem:[#allocation2 + $0x2658] sm:$0xff]
    %v1289 = vld [vmem:[#allocation2 + $0x2660] sm:$0xff]
    %v1290 = vld [vmem:[#allocation2 + $0x2668] sm:$0xff]
    %v1291 = vld [vmem:[#allocation2 + $0x2670] sm:$0xff]
    %v1292 = vld [vmem:[#allocation2 + $0x2678] sm:$0xff]
    %v1293 = vld [vmem:[#allocation2 + $0x2680] sm:$0xff]
    %v1294 = vld [vmem:[#allocation2 + $0x2688] sm:$0xff]
    %v1295 = vld [vmem:[#allocation2 + $0x2690] sm:$0xff]
    %v1296 = vld [vmem:[#allocation2 + $0x2698] sm:$0xff]
    %v1297 = vld [vmem:[#allocation2 + $0x26a0] sm:$0xff]
    %v1298 = vld [vmem:[#allocation2 + $0x26a8] sm:$0xff]
    %v1299 = vld [vmem:[#allocation2 + $0x26b0] sm:$0xff]
    %v1300 = vld [vmem:[#allocation2 + $0x26b8] sm:$0xff]
    %v1301 = vld [vmem:[#allocation2 + $0x26c0] sm:$0xff]
    %v1302 = vld [vmem:[#allocation2 + $0x26c8] sm:$0xff]
    %v1303 = vld [vmem:[#allocation2 + $0x26d0] sm:$0xff]
    %v1304 = vld [vmem:[#allocation2 + $0x26d8] sm:$0xff]
    %v1305 = vld [vmem:[#allocation2 + $0x26e0] sm:$0xff]
    %v1306 = vld [vmem:[#allocation2 + $0x26e8] sm:$0xff]
    %v1307 = vld [vmem:[#allocation2 + $0x26f0] sm:$0xff]
    %v1308 = vld [vmem:[#allocation2 + $0x26f8] sm:$0xff]
    %v1309 = vld [vmem:[#allocation2 + $0x2700] sm:$0xff]
    %v1310 = vld [vmem:[#allocation2 + $0x2708] sm:$0xff]
    %v1311 = vld [vmem:[#allocation2 + $0x2710] sm:$0xff]
    %v1312 = vld [vmem:[#allocation2 + $0x2718] sm:$0xff]
    %v1313 = vld [vmem:[#allocation2 + $0x2720] sm:$0xff]
    %v1314 = vld [vmem:[#allocation2 + $0x2728] sm:$0xff]
    %v1315 = vld [vmem:[#allocation2 + $0x2730] sm:$0xff]
    %v1316 = vld [vmem:[#allocation2 + $0x2738] sm:$0xff]
    %v1317 = vld [vmem:[#allocation2 + $0x2740] sm:$0xff]
    %v1318 = vld [vmem:[#allocation2 + $0x2748] sm:$0xff]
    %v1319 = vld [vmem:[#allocation2 + $0x2750] sm:$0xff]
    %v1320 = vld [vmem:[#allocation2 + $0x2758] sm:$0xff]
    %v1321 = vld [vmem:[#allocation2 + $0x2760] sm:$0xff]
    %v1322 = vld [vmem:[#allocation2 + $0x2768] sm:$0xff]
    %v1323 = vld [vmem:[#allocation2 + $0x2770] sm:$0xff]
    %v1324 = vld [vmem:[#allocation2 + $0x2778] sm:$0xff]
    %v1325 = vld [vmem:[#allocation2 + $0x2780] sm:$0xff]
    %v1326 = vld [vmem:[#allocation2 + $0x2788] sm:$0xff]
    %v1327 = vld [vmem:[#allocation2 + $0x2790] sm:$0xff]
    %v1328 = vld [vmem:[#allocation2 + $0x2798] sm:$0xff]
    %v1329 = vld [vmem:[#allocation2 + $0x27a0] sm:$0xff]
    %v1330 = vld [vmem:[#allocation2 + $0x27a8] sm:$0xff]
    %v1331 = vld [vmem:[#allocation2 + $0x27b0] sm:$0xff]
    %v1332 = vld [vmem:[#allocation2 + $0x27b8] sm:$0xff]
    %v1333 = vld [vmem:[#allocation2 + $0x27c0] sm:$0xff]
    %v1334 = vld [vmem:[#allocation2 + $0x27c8] sm:$0xff]
    %v1335 = vld [vmem:[#allocation2 + $0x27d0] sm:$0xff]
    %v1336 = vld [vmem:[#allocation2 + $0x27d8] sm:$0xff]
    %v1337 = vld [vmem:[#allocation2 + $0x27e0] sm:$0xff]
    %v1338 = vld [vmem:[#allocation2 + $0x27e8] sm:$0xff]
    %v1339 = vld [vmem:[#allocation2 + $0x27f0] sm:$0xff]
    %v1340 = vld [vmem:[#allocation2 + $0x27f8] sm:$0xff]
    %v1341 = vld [vmem:[#allocation2 + $0x2800] sm:$0xff]
    %v1342 = vld [vmem:[#allocation2 + $0x2808] sm:$0xff]
    %v1343 = vld [vmem:[#allocation2 + $0x2810] sm:$0xff]
    %v1344 = vld [vmem:[#allocation2 + $0x2818] sm:$0xff]
    %v1345 = vld [vmem:[#allocation2 + $0x2820] sm:$0xff]
    %v1346 = vld [vmem:[#allocation2 + $0x2828] sm:$0xff]
    %v1347 = vld [vmem:[#allocation2 + $0x2830] sm:$0xff]
    %v1348 = vld [vmem:[#allocation2 + $0x2838] sm:$0xff]
    %v1349 = vld [vmem:[#allocation2 + $0x2840] sm:$0xff]
    %v1350 = vld [vmem:[#allocation2 + $0x2848] sm:$0xff]
    %v1351 = vld [vmem:[#allocation2 + $0x2850] sm:$0xff]
    %v1352 = vld [vmem:[#allocation2 + $0x2858] sm:$0xff]
    %v1353 = vld [vmem:[#allocation2 + $0x2860] sm:$0xff]
    %v1354 = vld [vmem:[#allocation2 + $0x2868] sm:$0xff]
    %v1355 = vld [vmem:[#allocation2 + $0x2870] sm:$0xff]
    %v1356 = vld [vmem:[#allocation2 + $0x2878] sm:$0xff]
    %v1357 = vld [vmem:[#allocation2 + $0x2880] sm:$0xff]
    %v1358 = vld [vmem:[#allocation2 + $0x2888] sm:$0xff]
    %v1359 = vld [vmem:[#allocation2 + $0x2890] sm:$0xff]
    %v1360 = vld [vmem:[#allocation2 + $0x2898] sm:$0xff]
    %v1361 = vld [vmem:[#allocation2 + $0x28a0] sm:$0xff]
    %v1362 = vld [vmem:[#allocation2 + $0x28a8] sm:$0xff]
    %v1363 = vld [vmem:[#allocation2 + $0x28b0] sm:$0xff]
    %v1364 = vld [vmem:[#allocation2 + $0x28b8] sm:$0xff]
    %v1365 = vld [vmem:[#allocation2 + $0x28c0] sm:$0xff]
    %v1366 = vld [vmem:[#allocation2 + $0x28c8] sm:$0xff]
    %v1367 = vld [vmem:[#allocation2 + $0x28d0] sm:$0xff]
    %v1368 = vld [vmem:[#allocation2 + $0x28d8] sm:$0xff]
    %v1369 = vld [vmem:[#allocation2 + $0x28e0] sm:$0xff]
    %v1370 = vld [vmem:[#allocation2 + $0x28e8] sm:$0xff]
    %v1371 = vld [vmem:[#allocation2 + $0x28f0] sm:$0xff]
    %v1372 = vld [vmem:[#allocation2 + $0x28f8] sm:$0xff]
    %v1373 = vld [vmem:[#allocation2 + $0x2900] sm:$0xff]
    %v1374 = vld [vmem:[#allocation2 + $0x2908] sm:$0xff]
    %v1375 = vld [vmem:[#allocation2 + $0x2910] sm:$0xff]
    %v1376 = vld [vmem:[#allocation2 + $0x2918] sm:$0xff]
    %v1377 = vld [vmem:[#allocation2 + $0x2920] sm:$0xff]
    %v1378 = vld [vmem:[#allocation2 + $0x2928] sm:$0xff]
    %v1379 = vld [vmem:[#allocation2 + $0x2930] sm:$0xff]
    %v1380 = vld [vmem:[#allocation2 + $0x2938] sm:$0xff]
    %v1381 = vld [vmem:[#allocation2 + $0x2940] sm:$0xff]
    %v1382 = vld [vmem:[#allocation2 + $0x2948] sm:$0xff]
    %v1383 = vld [vmem:[#allocation2 + $0x2950] sm:$0xff]
    %v1384 = vld [vmem:[#allocation2 + $0x2958] sm:$0xff]
    %v1385 = vld [vmem:[#allocation2 + $0x2960] sm:$0xff]
    %v1386 = vld [vmem:[#allocation2 + $0x2968] sm:$0xff]
    %v1387 = vld [vmem:[#allocation2 + $0x2970] sm:$0xff]
    %v1388 = vld [vmem:[#allocation2 + $0x2978] sm:$0xff]
    %v1389 = vld [vmem:[#allocation2 + $0x2980] sm:$0xff]
    %v1390 = vld [vmem:[#allocation2 + $0x2988] sm:$0xff]
    %v1391 = vld [vmem:[#allocation2 + $0x2990] sm:$0xff]
    %v1392 = vld [vmem:[#allocation2 + $0x2998] sm:$0xff]
    %v1393 = vld [vmem:[#allocation2 + $0x29a0] sm:$0xff]
    %v1394 = vld [vmem:[#allocation2 + $0x29a8] sm:$0xff]
    %v1395 = vld [vmem:[#allocation2 + $0x29b0] sm:$0xff]
    %v1396 = vld [vmem:[#allocation2 + $0x29b8] sm:$0xff]
    %v1397 = vld [vmem:[#allocation2 + $0x29c0] sm:$0xff]
    %v1398 = vld [vmem:[#allocation2 + $0x29c8] sm:$0xff]
    %v1399 = vld [vmem:[#allocation2 + $0x29d0] sm:$0xff]
    %v1400 = vld [vmem:[#allocation2 + $0x29d8] sm:$0xff]
    %v1401 = vld [vmem:[#allocation2 + $0x29e0] sm:$0xff]
    %v1402 = vld [vmem:[#allocation2 + $0x29e8] sm:$0xff]
    %v1403 = vld [vmem:[#allocation2 + $0x29f0] sm:$0xff]
    %v1404 = vld [vmem:[#allocation2 + $0x29f8] sm:$0xff]
    %v1405 = vld [vmem:[#allocation2 + $0x2a00] sm:$0xff]
    %v1406 = vld [vmem:[#allocation2 + $0x2a08] sm:$0xff]
    %v1407 = vld [vmem:[#allocation2 + $0x2a10] sm:$0xff]
    %v1408 = vld [vmem:[#allocation2 + $0x2a18] sm:$0xff]
    %v1409 = vld [vmem:[#allocation2 + $0x2a20] sm:$0xff]
    %v1410 = vld [vmem:[#allocation2 + $0x2a28] sm:$0xff]
    %v1411 = vld [vmem:[#allocation2 + $0x2a30] sm:$0xff]
    %v1412 = vld [vmem:[#allocation2 + $0x2a38] sm:$0xff]
    %v1413 = vld [vmem:[#allocation2 + $0x2a40] sm:$0xff]
    %v1414 = vld [vmem:[#allocation2 + $0x2a48] sm:$0xff]
    %v1415 = vld [vmem:[#allocation2 + $0x2a50] sm:$0xff]
    %v1416 = vld [vmem:[#allocation2 + $0x2a58] sm:$0xff]
    %v1417 = vld [vmem:[#allocation2 + $0x2a60] sm:$0xff]
    %v1418 = vld [vmem:[#allocation2 + $0x2a68] sm:$0xff]
    %v1419 = vld [vmem:[#allocation2 + $0x2a70] sm:$0xff]
    %v1420 = vld [vmem:[#allocation2 + $0x2a78] sm:$0xff]
    %v1421 = vld [vmem:[#allocation2 + $0x2a80] sm:$0xff]
    %v1422 = vld [vmem:[#allocation2 + $0x2a88] sm:$0xff]
    %v1423 = vld [vmem:[#allocation2 + $0x2a90] sm:$0xff]
    %v1424 = vld [vmem:[#allocation2 + $0x2a98] sm:$0xff]
    %v1425 = vld [vmem:[#allocation2 + $0x2aa0] sm:$0xff]
    %v1426 = vld [vmem:[#allocation2 + $0x2aa8] sm:$0xff]
    %v1427 = vld [vmem:[#allocation2 + $0x2ab0] sm:$0xff]
    %v1428 = vld [vmem:[#allocation2 + $0x2ab8] sm:$0xff]
    %v1429 = vld [vmem:[#allocation2 + $0x2ac0] sm:$0xff]
    %v1430 = vld [vmem:[#allocation2 + $0x2ac8] sm:$0xff]
    %v1431 = vld [vmem:[#allocation2 + $0x2ad0] sm:$0xff]
    %v1432 = vld [vmem:[#allocation2 + $0x2ad8] sm:$0xff]
    %v1433 = vld [vmem:[#allocation2 + $0x2ae0] sm:$0xff]
    %v1434 = vld [vmem:[#allocation2 + $0x2ae8] sm:$0xff]
    %v1435 = vld [vmem:[#allocation2 + $0x2af0] sm:$0xff]
    %v1436 = vld [vmem:[#allocation2 + $0x2af8] sm:$0xff]
    %v1437 = vld [vmem:[#allocation2 + $0x2b00] sm:$0xff]
    %v1438 = vld [vmem:[#allocation2 + $0x2b08] sm:$0xff]
    %v1439 = vld [vmem:[#allocation2 + $0x2b10] sm:$0xff]
    %v1440 = vld [vmem:[#allocation2 + $0x2b18] sm:$0xff]
    %v1441 = vld [vmem:[#allocation2 + $0x2b20] sm:$0xff]
    %v1442 = vld [vmem:[#allocation2 + $0x2b28] sm:$0xff]
    %v1443 = vld [vmem:[#allocation2 + $0x2b30] sm:$0xff]
    %v1444 = vld [vmem:[#allocation2 + $0x2b38] sm:$0xff]
    %v1445 = vld [vmem:[#allocation2 + $0x2b40] sm:$0xff]
    %v1446 = vld [vmem:[#allocation2 + $0x2b48] sm:$0xff]
    %v1447 = vld [vmem:[#allocation2 + $0x2b50] sm:$0xff]
    %v1448 = vld [vmem:[#allocation2 + $0x2b58] sm:$0xff]
    %v1449 = vld [vmem:[#allocation2 + $0x2b60] sm:$0xff]
    %v1450 = vld [vmem:[#allocation2 + $0x2b68] sm:$0xff]
    %v1451 = vld [vmem:[#allocation2 + $0x2b70] sm:$0xff]
    %v1452 = vld [vmem:[#allocation2 + $0x2b78] sm:$0xff]
    %v1453 = vld [vmem:[#allocation2 + $0x2b80] sm:$0xff]
    %v1454 = vld [vmem:[#allocation2 + $0x2b88] sm:$0xff]
    %v1455 = vld [vmem:[#allocation2 + $0x2b90] sm:$0xff]
    %v1456 = vld [vmem:[#allocation2 + $0x2b98] sm:$0xff]
    %v1457 = vld [vmem:[#allocation2 + $0x2ba0] sm:$0xff]
    %v1458 = vld [vmem:[#allocation2 + $0x2ba8] sm:$0xff]
    %v1459 = vld [vmem:[#allocation2 + $0x2bb0] sm:$0xff]
    %v1460 = vld [vmem:[#allocation2 + $0x2bb8] sm:$0xff]
    %v1461 = vld [vmem:[#allocation2 + $0x2bc0] sm:$0xff]
    %v1462 = vld [vmem:[#allocation2 + $0x2bc8] sm:$0xff]
    %v1463 = vld [vmem:[#allocation2 + $0x2bd0] sm:$0xff]
    %v1464 = vld [vmem:[#allocation2 + $0x2bd8] sm:$0xff]
    %v1465 = vld [vmem:[#allocation2 + $0x2be0] sm:$0xff]
    %v1466 = vld [vmem:[#allocation2 + $0x2be8] sm:$0xff]
    %v1467 = vld [vmem:[#allocation2 + $0x2bf0] sm:$0xff]
    %v1468 = vld [vmem:[#allocation2 + $0x2bf8] sm:$0xff]
    %v1469 = vld [vmem:[#allocation2 + $0x2c00] sm:$0xff]
    %v1470 = vld [vmem:[#allocation2 + $0x2c08] sm:$0xff]
    %v1471 = vld [vmem:[#allocation2 + $0x2c10] sm:$0xff]
    %v1472 = vld [vmem:[#allocation2 + $0x2c18] sm:$0xff]
    %v1473 = vld [vmem:[#allocation2 + $0x2c20] sm:$0xff]
    %v1474 = vld [vmem:[#allocation2 + $0x2c28] sm:$0xff]
    %v1475 = vld [vmem:[#allocation2 + $0x2c30] sm:$0xff]
    %v1476 = vld [vmem:[#allocation2 + $0x2c38] sm:$0xff]
    %v1477 = vld [vmem:[#allocation2 + $0x2c40] sm:$0xff]
    %v1478 = vld [vmem:[#allocation2 + $0x2c48] sm:$0xff]
    %v1479 = vld [vmem:[#allocation2 + $0x2c50] sm:$0xff]
    %v1480 = vld [vmem:[#allocation2 + $0x2c58] sm:$0xff]
    %v1481 = vld [vmem:[#allocation2 + $0x2c60] sm:$0xff]
    %v1482 = vld [vmem:[#allocation2 + $0x2c68] sm:$0xff]
    %v1483 = vld [vmem:[#allocation2 + $0x2c70] sm:$0xff]
    %v1484 = vld [vmem:[#allocation2 + $0x2c78] sm:$0xff]
    %v1485 = vld [vmem:[#allocation2 + $0x2c80] sm:$0xff]
    %v1486 = vld [vmem:[#allocation2 + $0x2c88] sm:$0xff]
    %v1487 = vld [vmem:[#allocation2 + $0x2c90] sm:$0xff]
    %v1488 = vld [vmem:[#allocation2 + $0x2c98] sm:$0xff]
    %v1489 = vld [vmem:[#allocation2 + $0x2ca0] sm:$0xff]
    %v1490 = vld [vmem:[#allocation2 + $0x2ca8] sm:$0xff]
    %v1491 = vld [vmem:[#allocation2 + $0x2cb0] sm:$0xff]
    %v1492 = vld [vmem:[#allocation2 + $0x2cb8] sm:$0xff]
    %v1493 = vld [vmem:[#allocation2 + $0x2cc0] sm:$0xff]
    %v1494 = vld [vmem:[#allocation2 + $0x2cc8] sm:$0xff]
    %v1495 = vld [vmem:[#allocation2 + $0x2cd0] sm:$0xff]
    %v1496 = vld [vmem:[#allocation2 + $0x2cd8] sm:$0xff]
    %v1497 = vld [vmem:[#allocation2 + $0x2ce0] sm:$0xff]
    %v1498 = vld [vmem:[#allocation2 + $0x2ce8] sm:$0xff]
    %v1499 = vld [vmem:[#allocation2 + $0x2cf0] sm:$0xff]
    %v1500 = vld [vmem:[#allocation2 + $0x2cf8] sm:$0xff]
    %v1501 = vld [vmem:[#allocation2 + $0x2d00] sm:$0xff]
    %v1502 = vld [vmem:[#allocation2 + $0x2d08] sm:$0xff]
    %v1503 = vld [vmem:[#allocation2 + $0x2d10] sm:$0xff]
    %v1504 = vld [vmem:[#allocation2 + $0x2d18] sm:$0xff]
    %v1505 = vld [vmem:[#allocation2 + $0x2d20] sm:$0xff]
    %v1506 = vld [vmem:[#allocation2 + $0x2d28] sm:$0xff]
    %v1507 = vld [vmem:[#allocation2 + $0x2d30] sm:$0xff]
    %v1508 = vld [vmem:[#allocation2 + $0x2d38] sm:$0xff]
    %v1509 = vld [vmem:[#allocation2 + $0x2d40] sm:$0xff]
    %v1510 = vld [vmem:[#allocation2 + $0x2d48] sm:$0xff]
    %v1511 = vld [vmem:[#allocation2 + $0x2d50] sm:$0xff]
    %v1512 = vld [vmem:[#allocation2 + $0x2d58] sm:$0xff]
    %v1513 = vld [vmem:[#allocation2 + $0x2d60] sm:$0xff]
    %v1514 = vld [vmem:[#allocation2 + $0x2d68] sm:$0xff]
    %v1515 = vld [vmem:[#allocation2 + $0x2d70] sm:$0xff]
    %v1516 = vld [vmem:[#allocation2 + $0x2d78] sm:$0xff]
    %v1517 = vld [vmem:[#allocation2 + $0x2d80] sm:$0xff]
    %v1518 = vld [vmem:[#allocation2 + $0x2d88] sm:$0xff]
    %v1519 = vld [vmem:[#allocation2 + $0x2d90] sm:$0xff]
    %v1520 = vld [vmem:[#allocation2 + $0x2d98] sm:$0xff]
    %v1521 = vld [vmem:[#allocation2 + $0x2da0] sm:$0xff]
    %v1522 = vld [vmem:[#allocation2 + $0x2da8] sm:$0xff]
    %v1523 = vld [vmem:[#allocation2 + $0x2db0] sm:$0xff]
    %v1524 = vld [vmem:[#allocation2 + $0x2db8] sm:$0xff]
    %v1525 = vld [vmem:[#allocation2 + $0x2dc0] sm:$0xff]
    %v1526 = vld [vmem:[#allocation2 + $0x2dc8] sm:$0xff]
    %v1527 = vld [vmem:[#allocation2 + $0x2dd0] sm:$0xff]
    %v1528 = vld [vmem:[#allocation2 + $0x2dd8] sm:$0xff]
    %v1529 = vld [vmem:[#allocation2 + $0x2de0] sm:$0xff]
    %v1530 = vld [vmem:[#allocation2 + $0x2de8] sm:$0xff]
    %v1531 = vld [vmem:[#allocation2 + $0x2df0] sm:$0xff]
    %v1532 = vld [vmem:[#allocation2 + $0x2df8] sm:$0xff]
    %v1533 = vld [vmem:[#allocation2 + $0x2e00] sm:$0xff]
    %v1534 = vld [vmem:[#allocation2 + $0x2e08] sm:$0xff]
    %v1535 = vld [vmem:[#allocation2 + $0x2e10] sm:$0xff]
    %v1536 = vld [vmem:[#allocation2 + $0x2e18] sm:$0xff]
    %v1537 = vld [vmem:[#allocation2 + $0x2e20] sm:$0xff]
    %v1538 = vld [vmem:[#allocation2 + $0x2e28] sm:$0xff]
    %v1539 = vld [vmem:[#allocation2 + $0x2e30] sm:$0xff]
    %v1540 = vld [vmem:[#allocation2 + $0x2e38] sm:$0xff]
    %v1541 = vld [vmem:[#allocation2 + $0x2e40] sm:$0xff]
    %v1542 = vld [vmem:[#allocation2 + $0x2e48] sm:$0xff]
    %v1543 = vld [vmem:[#allocation2 + $0x2e50] sm:$0xff]
    %v1544 = vld [vmem:[#allocation2 + $0x2e58] sm:$0xff]
    %v1545 = vld [vmem:[#allocation2 + $0x2e60] sm:$0xff]
    %v1546 = vld [vmem:[#allocation2 + $0x2e68] sm:$0xff]
    %v1547 = vld [vmem:[#allocation2 + $0x2e70] sm:$0xff]
    %v1548 = vld [vmem:[#allocation2 + $0x2e78] sm:$0xff]
    %v1549 = vld [vmem:[#allocation2 + $0x2e80] sm:$0xff]
    %v1550 = vld [vmem:[#allocation2 + $0x2e88] sm:$0xff]
    %v1551 = vld [vmem:[#allocation2 + $0x2e90] sm:$0xff]
    %v1552 = vld [vmem:[#allocation2 + $0x2e98] sm:$0xff]
    %v1553 = vld [vmem:[#allocation2 + $0x2ea0] sm:$0xff]
    %v1554 = vld [vmem:[#allocation2 + $0x2ea8] sm:$0xff]
    %v1555 = vld [vmem:[#allocation2 + $0x2eb0] sm:$0xff]
    %v1556 = vld [vmem:[#allocation2 + $0x2eb8] sm:$0xff]
    %v1557 = vld [vmem:[#allocation2 + $0x2ec0] sm:$0xff]
    %v1558 = vld [vmem:[#allocation2 + $0x2ec8] sm:$0xff]
    %v1559 = vld [vmem:[#allocation2 + $0x2ed0] sm:$0xff]
    %v1560 = vld [vmem:[#allocation2 + $0x2ed8] sm:$0xff]
    %v1561 = vld [vmem:[#allocation2 + $0x2ee0] sm:$0xff]
    %v1562 = vld [vmem:[#allocation2 + $0x2ee8] sm:$0xff]
    %v1563 = vld [vmem:[#allocation2 + $0x2ef0] sm:$0xff]
    %v1564 = vld [vmem:[#allocation2 + $0x2ef8] sm:$0xff]
    %v1565 = vld [vmem:[#allocation2 + $0x2f00] sm:$0xff]
    %v1566 = vld [vmem:[#allocation2 + $0x2f08] sm:$0xff]
    %v1567 = vld [vmem:[#allocation2 + $0x2f10] sm:$0xff]
    %v1568 = vld [vmem:[#allocation2 + $0x2f18] sm:$0xff]
    %v1569 = vld [vmem:[#allocation2 + $0x2f20] sm:$0xff]
    %v1570 = vld [vmem:[#allocation2 + $0x2f28] sm:$0xff]
    %v1571 = vld [vmem:[#allocation2 + $0x2f30] sm:$0xff]
    %v1572 = vld [vmem:[#allocation2 + $0x2f38] sm:$0xff]
    %v1573 = vld [vmem:[#allocation2 + $0x2f40] sm:$0xff]
    %v1574 = vld [vmem:[#allocation2 + $0x2f48] sm:$0xff]
    %v1575 = vld [vmem:[#allocation2 + $0x2f50] sm:$0xff]
    %v1576 = vld [vmem:[#allocation2 + $0x2f58] sm:$0xff]
    %v1577 = vld [vmem:[#allocation2 + $0x2f60] sm:$0xff]
    %v1578 = vld [vmem:[#allocation2 + $0x2f68] sm:$0xff]
    %v1579 = vld [vmem:[#allocation2 + $0x2f70] sm:$0xff]
    %v1580 = vld [vmem:[#allocation2 + $0x2f78] sm:$0xff]
    %v1581 = vld [vmem:[#allocation2 + $0x2f80] sm:$0xff]
    %v1582 = vld [vmem:[#allocation2 + $0x2f88] sm:$0xff]
    %v1583 = vld [vmem:[#allocation2 + $0x2f90] sm:$0xff]
    %v1584 = vld [vmem:[#allocation2 + $0x2f98] sm:$0xff]
    %v1585 = vld [vmem:[#allocation2 + $0x2fa0] sm:$0xff]
    %v1586 = vld [vmem:[#allocation2 + $0x2fa8] sm:$0xff]
    %v1587 = vld [vmem:[#allocation2 + $0x2fb0] sm:$0xff]
    %v1588 = vld [vmem:[#allocation2 + $0x2fb8] sm:$0xff]
    %v1589 = vld [vmem:[#allocation2 + $0x2fc0] sm:$0xff]
    %v1590 = vld [vmem:[#allocation2 + $0x2fc8] sm:$0xff]
    %v1591 = vld [vmem:[#allocation2 + $0x2fd0] sm:$0xff]
    %v1592 = vld [vmem:[#allocation2 + $0x2fd8] sm:$0xff]
    %v1593 = vld [vmem:[#allocation2 + $0x2fe0] sm:$0xff]
    %v1594 = vld [vmem:[#allocation2 + $0x2fe8] sm:$0xff]
    %v1595 = vld [vmem:[#allocation2 + $0x2ff0] sm:$0xff]
    %v1596 = vld [vmem:[#allocation2 + $0x2ff8] sm:$0xff]
    %v1597 = vld [vmem:[#allocation2 + $0x3000] sm:$0xff]
    %v1598 = vld [vmem:[#allocation2 + $0x3008] sm:$0xff]
    %v1599 = vld [vmem:[#allocation2 + $0x3010] sm:$0xff]
    %v1600 = vld [vmem:[#allocation2 + $0x3018] sm:$0xff]
    %v1601 = vld [vmem:[#allocation2 + $0x3020] sm:$0xff]
    %v1602 = vld [vmem:[#allocation2 + $0x3028] sm:$0xff]
    %v1603 = vld [vmem:[#allocation2 + $0x3030] sm:$0xff]
    %v1604 = vld [vmem:[#allocation2 + $0x3038] sm:$0xff]
    %v1605 = vld [vmem:[#allocation2 + $0x3040] sm:$0xff]
    %v1606 = vld [vmem:[#allocation2 + $0x3048] sm:$0xff]
    %v1607 = vld [vmem:[#allocation2 + $0x3050] sm:$0xff]
    %v1608 = vld [vmem:[#allocation2 + $0x3058] sm:$0xff]
    %v1609 = vld [vmem:[#allocation2 + $0x3060] sm:$0xff]
    %v1610 = vld [vmem:[#allocation2 + $0x3068] sm:$0xff]
    %v1611 = vld [vmem:[#allocation2 + $0x3070] sm:$0xff]
    %v1612 = vld [vmem:[#allocation2 + $0x3078] sm:$0xff]
    %v1613 = vld [vmem:[#allocation2 + $0x3080] sm:$0xff]
    %v1614 = vld [vmem:[#allocation2 + $0x3088] sm:$0xff]
    %v1615 = vld [vmem:[#allocation2 + $0x3090] sm:$0xff]
    %v1616 = vld [vmem:[#allocation2 + $0x3098] sm:$0xff]
    %v1617 = vld [vmem:[#allocation2 + $0x30a0] sm:$0xff]
    %v1618 = vld [vmem:[#allocation2 + $0x30a8] sm:$0xff]
    %v1619 = vld [vmem:[#allocation2 + $0x30b0] sm:$0xff]
    %v1620 = vld [vmem:[#allocation2 + $0x30b8] sm:$0xff]
    %v1621 = vld [vmem:[#allocation2 + $0x30c0] sm:$0xff]
    %v1622 = vld [vmem:[#allocation2 + $0x30c8] sm:$0xff]
    %v1623 = vld [vmem:[#allocation2 + $0x30d0] sm:$0xff]
    %v1624 = vld [vmem:[#allocation2 + $0x30d8] sm:$0xff]
    %v1625 = vld [vmem:[#allocation2 + $0x30e0] sm:$0xff]
    %v1626 = vld [vmem:[#allocation2 + $0x30e8] sm:$0xff]
    %v1627 = vld [vmem:[#allocation2 + $0x30f0] sm:$0xff]
    %v1628 = vld [vmem:[#allocation2 + $0x30f8] sm:$0xff]
    %v1629 = vld [vmem:[#allocation2 + $0x3100] sm:$0xff]
    %v1630 = vld [vmem:[#allocation2 + $0x3108] sm:$0xff]
    %v1631 = vld [vmem:[#allocation2 + $0x3110] sm:$0xff]
    %v1632 = vld [vmem:[#allocation2 + $0x3118] sm:$0xff]
    %v1633 = vld [vmem:[#allocation2 + $0x3120] sm:$0xff]
    %v1634 = vld [vmem:[#allocation2 + $0x3128] sm:$0xff]
    %v1635 = vld [vmem:[#allocation2 + $0x3130] sm:$0xff]
    %v1636 = vld [vmem:[#allocation2 + $0x3138] sm:$0xff]
    %v1637 = vld [vmem:[#allocation2 + $0x3140] sm:$0xff]
    %v1638 = vld [vmem:[#allocation2 + $0x3148] sm:$0xff]
    %v1639 = vld [vmem:[#allocation2 + $0x3150] sm:$0xff]
    %v1640 = vld [vmem:[#allocation2 + $0x3158] sm:$0xff]
    %v1641 = vld [vmem:[#allocation2 + $0x3160] sm:$0xff]
    %v1642 = vld [vmem:[#allocation2 + $0x3168] sm:$0xff]
    %v1643 = vld [vmem:[#allocation2 + $0x3170] sm:$0xff]
    %v1644 = vld [vmem:[#allocation2 + $0x3178] sm:$0xff]
    %v1645 = vld [vmem:[#allocation2 + $0x3180] sm:$0xff]
    %v1646 = vld [vmem:[#allocation2 + $0x3188] sm:$0xff]
    %v1647 = vld [vmem:[#allocation2 + $0x3190] sm:$0xff]
    %v1648 = vld [vmem:[#allocation2 + $0x3198] sm:$0xff]
    %v1649 = vld [vmem:[#allocation2 + $0x31a0] sm:$0xff]
    %v1650 = vld [vmem:[#allocation2 + $0x31a8] sm:$0xff]
    %v1651 = vld [vmem:[#allocation2 + $0x31b0] sm:$0xff]
    %v1652 = vld [vmem:[#allocation2 + $0x31b8] sm:$0xff]
    %v1653 = vld [vmem:[#allocation2 + $0x31c0] sm:$0xff]
    %v1654 = vld [vmem:[#allocation2 + $0x31c8] sm:$0xff]
    %v1655 = vld [vmem:[#allocation2 + $0x31d0] sm:$0xff]
    %v1656 = vld [vmem:[#allocation2 + $0x31d8] sm:$0xff]
    %v1657 = vld [vmem:[#allocation2 + $0x31e0] sm:$0xff]
    %v1658 = vld [vmem:[#allocation2 + $0x31e8] sm:$0xff]
    %v1659 = vld [vmem:[#allocation2 + $0x31f0] sm:$0xff]
    %v1660 = vld [vmem:[#allocation2 + $0x31f8] sm:$0xff]
    %v1661 = vld [vmem:[#allocation2 + $0x3200] sm:$0xff]
    %v1662 = vld [vmem:[#allocation2 + $0x3208] sm:$0xff]
    %v1663 = vld [vmem:[#allocation2 + $0x3210] sm:$0xff]
    %v1664 = vld [vmem:[#allocation2 + $0x3218] sm:$0xff]
    %v1665 = vld [vmem:[#allocation2 + $0x3220] sm:$0xff]
    %v1666 = vld [vmem:[#allocation2 + $0x3228] sm:$0xff]
    %v1667 = vld [vmem:[#allocation2 + $0x3230] sm:$0xff]
    %v1668 = vld [vmem:[#allocation2 + $0x3238] sm:$0xff]
    %v1669 = vld [vmem:[#allocation2 + $0x3240] sm:$0xff]
    %v1670 = vld [vmem:[#allocation2 + $0x3248] sm:$0xff]
    %v1671 = vld [vmem:[#allocation2 + $0x3250] sm:$0xff]
    %v1672 = vld [vmem:[#allocation2 + $0x3258] sm:$0xff]
    %v1673 = vld [vmem:[#allocation2 + $0x3260] sm:$0xff]
    %v1674 = vld [vmem:[#allocation2 + $0x3268] sm:$0xff]
    %v1675 = vld [vmem:[#allocation2 + $0x3270] sm:$0xff]
    %v1676 = vld [vmem:[#allocation2 + $0x3278] sm:$0xff]
    %v1677 = vld [vmem:[#allocation2 + $0x3280] sm:$0xff]
    %v1678 = vld [vmem:[#allocation2 + $0x3288] sm:$0xff]
    %v1679 = vld [vmem:[#allocation2 + $0x3290] sm:$0xff]
    %v1680 = vld [vmem:[#allocation2 + $0x3298] sm:$0xff]
    %v1681 = vld [vmem:[#allocation2 + $0x32a0] sm:$0xff]
    %v1682 = vld [vmem:[#allocation2 + $0x32a8] sm:$0xff]
    %v1683 = vld [vmem:[#allocation2 + $0x32b0] sm:$0xff]
    %v1684 = vld [vmem:[#allocation2 + $0x32b8] sm:$0xff]
    %v1685 = vld [vmem:[#allocation2 + $0x32c0] sm:$0xff]
    %v1686 = vld [vmem:[#allocation2 + $0x32c8] sm:$0xff]
    %v1687 = vld [vmem:[#allocation2 + $0x32d0] sm:$0xff]
    %v1688 = vld [vmem:[#allocation2 + $0x32d8] sm:$0xff]
    %v1689 = vld [vmem:[#allocation2 + $0x32e0] sm:$0xff]
    %v1690 = vld [vmem:[#allocation2 + $0x32e8] sm:$0xff]
    %v1691 = vld [vmem:[#allocation2 + $0x32f0] sm:$0xff]
    %v1692 = vld [vmem:[#allocation2 + $0x32f8] sm:$0xff]
    %v1693 = vld [vmem:[#allocation2 + $0x3300] sm:$0xff]
    %v1694 = vld [vmem:[#allocation2 + $0x3308] sm:$0xff]
    %v1695 = vld [vmem:[#allocation2 + $0x3310] sm:$0xff]
    %v1696 = vld [vmem:[#allocation2 + $0x3318] sm:$0xff]
    %v1697 = vld [vmem:[#allocation2 + $0x3320] sm:$0xff]
    %v1698 = vld [vmem:[#allocation2 + $0x3328] sm:$0xff]
    %v1699 = vld [vmem:[#allocation2 + $0x3330] sm:$0xff]
    %v1700 = vld [vmem:[#allocation2 + $0x3338] sm:$0xff]
    %v1701 = vld [vmem:[#allocation2 + $0x3340] sm:$0xff]
    %v1702 = vld [vmem:[#allocation2 + $0x3348] sm:$0xff]
    %v1703 = vld [vmem:[#allocation2 + $0x3350] sm:$0xff]
    %v1704 = vld [vmem:[#allocation2 + $0x3358] sm:$0xff]
    %v1705 = vld [vmem:[#allocation2 + $0x3360] sm:$0xff]
    %v1706 = vld [vmem:[#allocation2 + $0x3368] sm:$0xff]
    %v1707 = vld [vmem:[#allocation2 + $0x3370] sm:$0xff]
    %v1708 = vld [vmem:[#allocation2 + $0x3378] sm:$0xff]
    %v1709 = vld [vmem:[#allocation2 + $0x3380] sm:$0xff]
    %v1710 = vld [vmem:[#allocation2 + $0x3388] sm:$0xff]
    %v1711 = vld [vmem:[#allocation2 + $0x3390] sm:$0xff]
    %v1712 = vld [vmem:[#allocation2 + $0x3398] sm:$0xff]
    %v1713 = vld [vmem:[#allocation2 + $0x33a0] sm:$0xff]
    %v1714 = vld [vmem:[#allocation2 + $0x33a8] sm:$0xff]
    %v1715 = vld [vmem:[#allocation2 + $0x33b0] sm:$0xff]
    %v1716 = vld [vmem:[#allocation2 + $0x33b8] sm:$0xff]
    %v1717 = vld [vmem:[#allocation2 + $0x33c0] sm:$0xff]
    %v1718 = vld [vmem:[#allocation2 + $0x33c8] sm:$0xff]
    %v1719 = vld [vmem:[#allocation2 + $0x33d0] sm:$0xff]
    %v1720 = vld [vmem:[#allocation2 + $0x33d8] sm:$0xff]
    %v1721 = vld [vmem:[#allocation2 + $0x33e0] sm:$0xff]
    %v1722 = vld [vmem:[#allocation2 + $0x33e8] sm:$0xff]
    %v1723 = vld [vmem:[#allocation2 + $0x33f0] sm:$0xff]
    %v1724 = vld [vmem:[#allocation2 + $0x33f8] sm:$0xff]
    %v1725 = vld [vmem:[#allocation2 + $0x3400] sm:$0xff]
    %v1726 = vld [vmem:[#allocation2 + $0x3408] sm:$0xff]
    %v1727 = vld [vmem:[#allocation2 + $0x3410] sm:$0xff]
    %v1728 = vld [vmem:[#allocation2 + $0x3418] sm:$0xff]
    %v1729 = vld [vmem:[#allocation2 + $0x3420] sm:$0xff]
    %v1730 = vld [vmem:[#allocation2 + $0x3428] sm:$0xff]
    %v1731 = vld [vmem:[#allocation2 + $0x3430] sm:$0xff]
    %v1732 = vld [vmem:[#allocation2 + $0x3438] sm:$0xff]
    %v1733 = vld [vmem:[#allocation2 + $0x3440] sm:$0xff]
    %v1734 = vld [vmem:[#allocation2 + $0x3448] sm:$0xff]
    %v1735 = vld [vmem:[#allocation2 + $0x3450] sm:$0xff]
    %v1736 = vld [vmem:[#allocation2 + $0x3458] sm:$0xff]
    %v1737 = vld [vmem:[#allocation2 + $0x3460] sm:$0xff]
    %v1738 = vld [vmem:[#allocation2 + $0x3468] sm:$0xff]
    %v1739 = vld [vmem:[#allocation2 + $0x3470] sm:$0xff]
    %v1740 = vld [vmem:[#allocation2 + $0x3478] sm:$0xff]
    %v1741 = vld [vmem:[#allocation2 + $0x3480] sm:$0xff]
    %v1742 = vld [vmem:[#allocation2 + $0x3488] sm:$0xff]
    %v1743 = vld [vmem:[#allocation2 + $0x3490] sm:$0xff]
    %v1744 = vld [vmem:[#allocation2 + $0x3498] sm:$0xff]
    %v1745 = vld [vmem:[#allocation2 + $0x34a0] sm:$0xff]
    %v1746 = vld [vmem:[#allocation2 + $0x34a8] sm:$0xff]
    %v1747 = vld [vmem:[#allocation2 + $0x34b0] sm:$0xff]
    %v1748 = vld [vmem:[#allocation2 + $0x34b8] sm:$0xff]
    %v1749 = vld [vmem:[#allocation2 + $0x34c0] sm:$0xff]
    %v1750 = vld [vmem:[#allocation2 + $0x34c8] sm:$0xff]
    %v1751 = vld [vmem:[#allocation2 + $0x34d0] sm:$0xff]
    %v1752 = vld [vmem:[#allocation2 + $0x34d8] sm:$0xff]
    %v1753 = vld [vmem:[#allocation2 + $0x34e0] sm:$0xff]
    %v1754 = vld [vmem:[#allocation2 + $0x34e8] sm:$0xff]
    %v1755 = vld [vmem:[#allocation2 + $0x34f0] sm:$0xff]
    %v1756 = vld [vmem:[#allocation2 + $0x34f8] sm:$0xff]
    %v1757 = vld [vmem:[#allocation2 + $0x3500] sm:$0xff]
    %v1758 = vld [vmem:[#allocation2 + $0x3508] sm:$0xff]
    %v1759 = vld [vmem:[#allocation2 + $0x3510] sm:$0xff]
    %v1760 = vld [vmem:[#allocation2 + $0x3518] sm:$0xff]
    %v1761 = vld [vmem:[#allocation2 + $0x3520] sm:$0xff]
    %v1762 = vld [vmem:[#allocation2 + $0x3528] sm:$0xff]
    %v1763 = vld [vmem:[#allocation2 + $0x3530] sm:$0xff]
    %v1764 = vld [vmem:[#allocation2 + $0x3538] sm:$0xff]
    %v1765 = vld [vmem:[#allocation2 + $0x3540] sm:$0xff]
    %v1766 = vld [vmem:[#allocation2 + $0x3548] sm:$0xff]
    %v1767 = vld [vmem:[#allocation2 + $0x3550] sm:$0xff]
    %v1768 = vld [vmem:[#allocation2 + $0x3558] sm:$0xff]
    %v1769 = vld [vmem:[#allocation2 + $0x3560] sm:$0xff]
    %v1770 = vld [vmem:[#allocation2 + $0x3568] sm:$0xff]
    %v1771 = vld [vmem:[#allocation2 + $0x3570] sm:$0xff]
    %v1772 = vld [vmem:[#allocation2 + $0x3578] sm:$0xff]
    %v1773 = vld [vmem:[#allocation2 + $0x3580] sm:$0xff]
    %v1774 = vld [vmem:[#allocation2 + $0x3588] sm:$0xff]
    %v1775 = vld [vmem:[#allocation2 + $0x3590] sm:$0xff]
    %v1776 = vld [vmem:[#allocation2 + $0x3598] sm:$0xff]
    %v1777 = vld [vmem:[#allocation2 + $0x35a0] sm:$0xff]
    %v1778 = vld [vmem:[#allocation2 + $0x35a8] sm:$0xff]
    %v1779 = vld [vmem:[#allocation2 + $0x35b0] sm:$0xff]
    %v1780 = vld [vmem:[#allocation2 + $0x35b8] sm:$0xff]
    %v1781 = vld [vmem:[#allocation2 + $0x35c0] sm:$0xff]
    %v1782 = vld [vmem:[#allocation2 + $0x35c8] sm:$0xff]
    %v1783 = vld [vmem:[#allocation2 + $0x35d0] sm:$0xff]
    %v1784 = vld [vmem:[#allocation2 + $0x35d8] sm:$0xff]
    %v1785 = vld [vmem:[#allocation2 + $0x35e0] sm:$0xff]
    %v1786 = vld [vmem:[#allocation2 + $0x35e8] sm:$0xff]
    %v1787 = vld [vmem:[#allocation2 + $0x35f0] sm:$0xff]
    %v1788 = vld [vmem:[#allocation2 + $0x35f8] sm:$0xff]
    %v1789 = vld [vmem:[#allocation2 + $0x3600] sm:$0xff]
    %v1790 = vld [vmem:[#allocation2 + $0x3608] sm:$0xff]
    %v1791 = vld [vmem:[#allocation2 + $0x3610] sm:$0xff]
    %v1792 = vld [vmem:[#allocation2 + $0x3618] sm:$0xff]
    %v1793 = vld [vmem:[#allocation2 + $0x3620] sm:$0xff]
    %v1794 = vld [vmem:[#allocation2 + $0x3628] sm:$0xff]
    %v1795 = vld [vmem:[#allocation2 + $0x3630] sm:$0xff]
    %v1796 = vld [vmem:[#allocation2 + $0x3638] sm:$0xff]
    %v1797 = vld [vmem:[#allocation2 + $0x3640] sm:$0xff]
    %v1798 = vld [vmem:[#allocation2 + $0x3648] sm:$0xff]
    %v1799 = vld [vmem:[#allocation2 + $0x3650] sm:$0xff]
    %v1800 = vld [vmem:[#allocation2 + $0x3658] sm:$0xff]
    %v1801 = vld [vmem:[#allocation2 + $0x3660] sm:$0xff]
    %v1802 = vld [vmem:[#allocation2 + $0x3668] sm:$0xff]
    %v1803 = vld [vmem:[#allocation2 + $0x3670] sm:$0xff]
    %v1804 = vld [vmem:[#allocation2 + $0x3678] sm:$0xff]
    %v1805 = vld [vmem:[#allocation2 + $0x3680] sm:$0xff]
    %v1806 = vld [vmem:[#allocation2 + $0x3688] sm:$0xff]
    %v1807 = vld [vmem:[#allocation2 + $0x3690] sm:$0xff]
    %v1808 = vld [vmem:[#allocation2 + $0x3698] sm:$0xff]
    %v1809 = vld [vmem:[#allocation2 + $0x36a0] sm:$0xff]
    %v1810 = vld [vmem:[#allocation2 + $0x36a8] sm:$0xff]
    %v1811 = vld [vmem:[#allocation2 + $0x36b0] sm:$0xff]
    %v1812 = vld [vmem:[#allocation2 + $0x36b8] sm:$0xff]
    %v1813 = vld [vmem:[#allocation2 + $0x36c0] sm:$0xff]
    %v1814 = vld [vmem:[#allocation2 + $0x36c8] sm:$0xff]
    %v1815 = vld [vmem:[#allocation2 + $0x36d0] sm:$0xff]
    %v1816 = vld [vmem:[#allocation2 + $0x36d8] sm:$0xff]
    %v1817 = vld [vmem:[#allocation2 + $0x36e0] sm:$0xff]
    %v1818 = vld [vmem:[#allocation2 + $0x36e8] sm:$0xff]
    %v1819 = vld [vmem:[#allocation2 + $0x36f0] sm:$0xff]
    %v1820 = vld [vmem:[#allocation2 + $0x36f8] sm:$0xff]
    %v1821 = vld [vmem:[#allocation2 + $0x3700] sm:$0xff]
    %v1822 = vld [vmem:[#allocation2 + $0x3708] sm:$0xff]
    %v1823 = vld [vmem:[#allocation2 + $0x3710] sm:$0xff]
    %v1824 = vld [vmem:[#allocation2 + $0x3718] sm:$0xff]
    %v1825 = vld [vmem:[#allocation2 + $0x3720] sm:$0xff]
    %v1826 = vld [vmem:[#allocation2 + $0x3728] sm:$0xff]
    %v1827 = vld [vmem:[#allocation2 + $0x3730] sm:$0xff]
    %v1828 = vld [vmem:[#allocation2 + $0x3738] sm:$0xff]
    %v1829 = vld [vmem:[#allocation2 + $0x3740] sm:$0xff]
    %v1830 = vld [vmem:[#allocation2 + $0x3748] sm:$0xff]
    %v1831 = vld [vmem:[#allocation2 + $0x3750] sm:$0xff]
    %v1832 = vld [vmem:[#allocation2 + $0x3758] sm:$0xff]
    %v1833 = vld [vmem:[#allocation2 + $0x3760] sm:$0xff]
    %v1834 = vld [vmem:[#allocation2 + $0x3768] sm:$0xff]
    %v1835 = vld [vmem:[#allocation2 + $0x3770] sm:$0xff]
    %v1836 = vld [vmem:[#allocation2 + $0x3778] sm:$0xff]
    %v1837 = vld [vmem:[#allocation2 + $0x3780] sm:$0xff]
    %v1838 = vld [vmem:[#allocation2 + $0x3788] sm:$0xff]
    %v1839 = vld [vmem:[#allocation2 + $0x3790] sm:$0xff]
    %v1840 = vld [vmem:[#allocation2 + $0x3798] sm:$0xff]
    %v1841 = vld [vmem:[#allocation2 + $0x37a0] sm:$0xff]
    %v1842 = vld [vmem:[#allocation2 + $0x37a8] sm:$0xff]
    %v1843 = vld [vmem:[#allocation2 + $0x37b0] sm:$0xff]
    %v1844 = vld [vmem:[#allocation2 + $0x37b8] sm:$0xff]
    %v1845 = vld [vmem:[#allocation2 + $0x37c0] sm:$0xff]
    %v1846 = vld [vmem:[#allocation2 + $0x37c8] sm:$0xff]
    %v1847 = vld [vmem:[#allocation2 + $0x37d0] sm:$0xff]
    %v1848 = vld [vmem:[#allocation2 + $0x37d8] sm:$0xff]
    %v1849 = vld [vmem:[#allocation2 + $0x37e0] sm:$0xff]
    %v1850 = vld [vmem:[#allocation2 + $0x37e8] sm:$0xff]
    %v1851 = vld [vmem:[#allocation2 + $0x37f0] sm:$0xff]
    %v1852 = vld [vmem:[#allocation2 + $0x37f8] sm:$0xff]
    %v1853 = vld [vmem:[#allocation2 + $0x3800] sm:$0xff]
    %v1854 = vld [vmem:[#allocation2 + $0x3808] sm:$0xff]
    %v1855 = vld [vmem:[#allocation2 + $0x3810] sm:$0xff]
    %v1856 = vld [vmem:[#allocation2 + $0x3818] sm:$0xff]
    %v1857 = vld [vmem:[#allocation2 + $0x3820] sm:$0xff]
    %v1858 = vld [vmem:[#allocation2 + $0x3828] sm:$0xff]
    %v1859 = vld [vmem:[#allocation2 + $0x3830] sm:$0xff]
    %v1860 = vld [vmem:[#allocation2 + $0x3838] sm:$0xff]
    %v1861 = vld [vmem:[#allocation2 + $0x3840] sm:$0xff]
    %v1862 = vld [vmem:[#allocation2 + $0x3848] sm:$0xff]
    %v1863 = vld [vmem:[#allocation2 + $0x3850] sm:$0xff]
    %v1864 = vld [vmem:[#allocation2 + $0x3858] sm:$0xff]
    %v1865 = vld [vmem:[#allocation2 + $0x3860] sm:$0xff]
    %v1866 = vld [vmem:[#allocation2 + $0x3868] sm:$0xff]
    %v1867 = vld [vmem:[#allocation2 + $0x3870] sm:$0xff]
    %v1868 = vld [vmem:[#allocation2 + $0x3878] sm:$0xff]
    %v1869 = vld [vmem:[#allocation2 + $0x3880] sm:$0xff]
    %v1870 = vld [vmem:[#allocation2 + $0x3888] sm:$0xff]
    %v1871 = vld [vmem:[#allocation2 + $0x3890] sm:$0xff]
    %v1872 = vld [vmem:[#allocation2 + $0x3898] sm:$0xff]
    %v1873 = vld [vmem:[#allocation2 + $0x38a0] sm:$0xff]
    %v1874 = vld [vmem:[#allocation2 + $0x38a8] sm:$0xff]
    %v1875 = vld [vmem:[#allocation2 + $0x38b0] sm:$0xff]
    %v1876 = vld [vmem:[#allocation2 + $0x38b8] sm:$0xff]
    %v1877 = vld [vmem:[#allocation2 + $0x38c0] sm:$0xff]
    %v1878 = vld [vmem:[#allocation2 + $0x38c8] sm:$0xff]
    %v1879 = vld [vmem:[#allocation2 + $0x38d0] sm:$0xff]
    %v1880 = vld [vmem:[#allocation2 + $0x38d8] sm:$0xff]
    %v1881 = vld [vmem:[#allocation2 + $0x38e0] sm:$0xff]
    %v1882 = vld [vmem:[#allocation2 + $0x38e8] sm:$0xff]
    %v1883 = vld [vmem:[#allocation2 + $0x38f0] sm:$0xff]
    %v1884 = vld [vmem:[#allocation2 + $0x38f8] sm:$0xff]
    %v1885 = vld [vmem:[#allocation2 + $0x3900] sm:$0xff]
    %v1886 = vld [vmem:[#allocation2 + $0x3908] sm:$0xff]
    %v1887 = vld [vmem:[#allocation2 + $0x3910] sm:$0xff]
    %v1888 = vld [vmem:[#allocation2 + $0x3918] sm:$0xff]
    %v1889 = vld [vmem:[#allocation2 + $0x3920] sm:$0xff]
    %v1890 = vld [vmem:[#allocation2 + $0x3928] sm:$0xff]
    %v1891 = vld [vmem:[#allocation2 + $0x3930] sm:$0xff]
    %v1892 = vld [vmem:[#allocation2 + $0x3938] sm:$0xff]
    %v1893 = vld [vmem:[#allocation2 + $0x3940] sm:$0xff]
    %v1894 = vld [vmem:[#allocation2 + $0x3948] sm:$0xff]
    %v1895 = vld [vmem:[#allocation2 + $0x3950] sm:$0xff]
    %v1896 = vld [vmem:[#allocation2 + $0x3958] sm:$0xff]
    %v1897 = vld [vmem:[#allocation2 + $0x3960] sm:$0xff]
    %v1898 = vld [vmem:[#allocation2 + $0x3968] sm:$0xff]
    %v1899 = vld [vmem:[#allocation2 + $0x3970] sm:$0xff]
    %v1900 = vld [vmem:[#allocation2 + $0x3978] sm:$0xff]
    %v1901 = vld [vmem:[#allocation2 + $0x3980] sm:$0xff]
    %v1902 = vld [vmem:[#allocation2 + $0x3988] sm:$0xff]
    %v1903 = vld [vmem:[#allocation2 + $0x3990] sm:$0xff]
    %v1904 = vld [vmem:[#allocation2 + $0x3998] sm:$0xff]
    %v1905 = vld [vmem:[#allocation2 + $0x39a0] sm:$0xff]
    %v1906 = vld [vmem:[#allocation2 + $0x39a8] sm:$0xff]
    %v1907 = vld [vmem:[#allocation2 + $0x39b0] sm:$0xff]
    %v1908 = vld [vmem:[#allocation2 + $0x39b8] sm:$0xff]
    %v1909 = vld [vmem:[#allocation2 + $0x39c0] sm:$0xff]
    %v1910 = vld [vmem:[#allocation2 + $0x39c8] sm:$0xff]
    %v1911 = vld [vmem:[#allocation2 + $0x39d0] sm:$0xff]
    %v1912 = vld [vmem:[#allocation2 + $0x39d8] sm:$0xff]
    %v1913 = vld [vmem:[#allocation2 + $0x39e0] sm:$0xff]
    %v1914 = vld [vmem:[#allocation2 + $0x39e8] sm:$0xff]
    %v1915 = vld [vmem:[#allocation2 + $0x39f0] sm:$0xff]
    %v1916 = vld [vmem:[#allocation2 + $0x39f8] sm:$0xff]
    %v1917 = vld [vmem:[#allocation2 + $0x3a00] sm:$0xff]
    %v1918 = vld [vmem:[#allocation2 + $0x3a08] sm:$0xff]
    %v1919 = vld [vmem:[#allocation2 + $0x3a10] sm:$0xff]
    %v1920 = vld [vmem:[#allocation2 + $0x3a18] sm:$0xff]
    %v1921 = vld [vmem:[#allocation2 + $0x3a20] sm:$0xff]
    %v1922 = vld [vmem:[#allocation2 + $0x3a28] sm:$0xff]
    %v1923 = vld [vmem:[#allocation2 + $0x3a30] sm:$0xff]
    %v1924 = vld [vmem:[#allocation2 + $0x3a38] sm:$0xff]
    %v1925 = vld [vmem:[#allocation2 + $0x3a40] sm:$0xff]
    %v1926 = vld [vmem:[#allocation2 + $0x3a48] sm:$0xff]
    %v1927 = vld [vmem:[#allocation2 + $0x3a50] sm:$0xff]
    %v1928 = vld [vmem:[#allocation2 + $0x3a58] sm:$0xff]
    %v1929 = vld [vmem:[#allocation2 + $0x3a60] sm:$0xff]
    %v1930 = vld [vmem:[#allocation2 + $0x3a68] sm:$0xff]
    %v1931 = vld [vmem:[#allocation2 + $0x3a70] sm:$0xff]
    %v1932 = vld [vmem:[#allocation2 + $0x3a78] sm:$0xff]
    %v1933 = vld [vmem:[#allocation2 + $0x3a80] sm:$0xff]
    %v1934 = vld [vmem:[#allocation2 + $0x3a88] sm:$0xff]
    %v1935 = vld [vmem:[#allocation2 + $0x3a90] sm:$0xff]
    %v1936 = vld [vmem:[#allocation2 + $0x3a98] sm:$0xff]
    %v1937 = vld [vmem:[#allocation2 + $0x3aa0] sm:$0xff]
    %v1938 = vld [vmem:[#allocation2 + $0x3aa8] sm:$0xff]
    %v1939 = vld [vmem:[#allocation2 + $0x3ab0] sm:$0xff]
    %v1940 = vld [vmem:[#allocation2 + $0x3ab8] sm:$0xff]
    %v1941 = vld [vmem:[#allocation2 + $0x3ac0] sm:$0xff]
    %v1942 = vld [vmem:[#allocation2 + $0x3ac8] sm:$0xff]
    %v1943 = vld [vmem:[#allocation2 + $0x3ad0] sm:$0xff]
    %v1944 = vld [vmem:[#allocation2 + $0x3ad8] sm:$0xff]
    %v1945 = vld [vmem:[#allocation2 + $0x3ae0] sm:$0xff]
    %v1946 = vld [vmem:[#allocation2 + $0x3ae8] sm:$0xff]
    %v1947 = vld [vmem:[#allocation2 + $0x3af0] sm:$0xff]
    %v1948 = vld [vmem:[#allocation2 + $0x3af8] sm:$0xff]
    %v1949 = vld [vmem:[#allocation2 + $0x3b00] sm:$0xff]
    %v1950 = vld [vmem:[#allocation2 + $0x3b08] sm:$0xff]
    %v1951 = vld [vmem:[#allocation2 + $0x3b10] sm:$0xff]
    %v1952 = vld [vmem:[#allocation2 + $0x3b18] sm:$0xff]
    %v1953 = vld [vmem:[#allocation2 + $0x3b20] sm:$0xff]
    %v1954 = vld [vmem:[#allocation2 + $0x3b28] sm:$0xff]
    %v1955 = vld [vmem:[#allocation2 + $0x3b30] sm:$0xff]
    %v1956 = vld [vmem:[#allocation2 + $0x3b38] sm:$0xff]
    %v1957 = vld [vmem:[#allocation2 + $0x3b40] sm:$0xff]
    %v1958 = vld [vmem:[#allocation2 + $0x3b48] sm:$0xff]
    %v1959 = vld [vmem:[#allocation2 + $0x3b50] sm:$0xff]
    %v1960 = vld [vmem:[#allocation2 + $0x3b58] sm:$0xff]
    %v1961 = vld [vmem:[#allocation2 + $0x3b60] sm:$0xff]
    %v1962 = vld [vmem:[#allocation2 + $0x3b68] sm:$0xff]
    %v1963 = vld [vmem:[#allocation2 + $0x3b70] sm:$0xff]
    %v1964 = vld [vmem:[#allocation2 + $0x3b78] sm:$0xff]
    %v1965 = vld [vmem:[#allocation2 + $0x3b80] sm:$0xff]
    %v1966 = vld [vmem:[#allocation2 + $0x3b88] sm:$0xff]
    %v1967 = vld [vmem:[#allocation2 + $0x3b90] sm:$0xff]
    %v1968 = vld [vmem:[#allocation2 + $0x3b98] sm:$0xff]
    %v1969 = vld [vmem:[#allocation2 + $0x3ba0] sm:$0xff]
    %v1970 = vld [vmem:[#allocation2 + $0x3ba8] sm:$0xff]
    %v1971 = vld [vmem:[#allocation2 + $0x3bb0] sm:$0xff]
    %v1972 = vld [vmem:[#allocation2 + $0x3bb8] sm:$0xff]
    %v1973 = vld [vmem:[#allocation2 + $0x3bc0] sm:$0xff]
    %v1974 = vld [vmem:[#allocation2 + $0x3bc8] sm:$0xff]
    %v1975 = vld [vmem:[#allocation2 + $0x3bd0] sm:$0xff]
    %v1976 = vld [vmem:[#allocation2 + $0x3bd8] sm:$0xff]
    %v1977 = vld [vmem:[#allocation2 + $0x3be0] sm:$0xff]
    %v1978 = vld [vmem:[#allocation2 + $0x3be8] sm:$0xff]
    %v1979 = vld [vmem:[#allocation2 + $0x3bf0] sm:$0xff]
    %v1980 = vld [vmem:[#allocation2 + $0x3bf8] sm:$0xff]
    %v1981 = vld [vmem:[#allocation2 + $0x3c00] sm:$0xff]
    %v1982 = vld [vmem:[#allocation2 + $0x3c08] sm:$0xff]
    %v1983 = vld [vmem:[#allocation2 + $0x3c10] sm:$0xff]
    %v1984 = vld [vmem:[#allocation2 + $0x3c18] sm:$0xff]
    %v1985 = vld [vmem:[#allocation2 + $0x3c20] sm:$0xff]
    %v1986 = vld [vmem:[#allocation2 + $0x3c28] sm:$0xff]
    %v1987 = vld [vmem:[#allocation2 + $0x3c30] sm:$0xff]
    %v1988 = vld [vmem:[#allocation2 + $0x3c38] sm:$0xff]
    %v1989 = vld [vmem:[#allocation2 + $0x3c40] sm:$0xff]
    %v1990 = vld [vmem:[#allocation2 + $0x3c48] sm:$0xff]
    %v1991 = vld [vmem:[#allocation2 + $0x3c50] sm:$0xff]
    %v1992 = vld [vmem:[#allocation2 + $0x3c58] sm:$0xff]
    %v1993 = vld [vmem:[#allocation2 + $0x3c60] sm:$0xff]
    %v1994 = vld [vmem:[#allocation2 + $0x3c68] sm:$0xff]
    %v1995 = vld [vmem:[#allocation2 + $0x3c70] sm:$0xff]
    %v1996 = vld [vmem:[#allocation2 + $0x3c78] sm:$0xff]
    %v1997 = vld [vmem:[#allocation2 + $0x3c80] sm:$0xff]
    %v1998 = vld [vmem:[#allocation2 + $0x3c88] sm:$0xff]
    %v1999 = vld [vmem:[#allocation2 + $0x3c90] sm:$0xff]
    %v2000 = vld [vmem:[#allocation2 + $0x3c98] sm:$0xff]
    %v2001 = vld [vmem:[#allocation2 + $0x3ca0] sm:$0xff]
    %v2002 = vld [vmem:[#allocation2 + $0x3ca8] sm:$0xff]
    %v2003 = vld [vmem:[#allocation2 + $0x3cb0] sm:$0xff]
    %v2004 = vld [vmem:[#allocation2 + $0x3cb8] sm:$0xff]
    %v2005 = vld [vmem:[#allocation2 + $0x3cc0] sm:$0xff]
    %v2006 = vld [vmem:[#allocation2 + $0x3cc8] sm:$0xff]
    %v2007 = vld [vmem:[#allocation2 + $0x3cd0] sm:$0xff]
    %v2008 = vld [vmem:[#allocation2 + $0x3cd8] sm:$0xff]
    %v2009 = vld [vmem:[#allocation2 + $0x3ce0] sm:$0xff]
    %v2010 = vld [vmem:[#allocation2 + $0x3ce8] sm:$0xff]
    %v2011 = vld [vmem:[#allocation2 + $0x3cf0] sm:$0xff]
    %v2012 = vld [vmem:[#allocation2 + $0x3cf8] sm:$0xff]
    %v2013 = vld [vmem:[#allocation2 + $0x3d00] sm:$0xff]
    %v2014 = vld [vmem:[#allocation2 + $0x3d08] sm:$0xff]
    %v2015 = vld [vmem:[#allocation2 + $0x3d10] sm:$0xff]
    %v2016 = vld [vmem:[#allocation2 + $0x3d18] sm:$0xff]
    %v2017 = vld [vmem:[#allocation2 + $0x3d20] sm:$0xff]
    %v2018 = vld [vmem:[#allocation2 + $0x3d28] sm:$0xff]
    %v2019 = vld [vmem:[#allocation2 + $0x3d30] sm:$0xff]
    %v2020 = vld [vmem:[#allocation2 + $0x3d38] sm:$0xff]
    %v2021 = vld [vmem:[#allocation2 + $0x3d40] sm:$0xff]
    %v2022 = vld [vmem:[#allocation2 + $0x3d48] sm:$0xff]
    %v2023 = vld [vmem:[#allocation2 + $0x3d50] sm:$0xff]
    %v2024 = vld [vmem:[#allocation2 + $0x3d58] sm:$0xff]
    %v2025 = vld [vmem:[#allocation2 + $0x3d60] sm:$0xff]
    %v2026 = vld [vmem:[#allocation2 + $0x3d68] sm:$0xff]
    %v2027 = vld [vmem:[#allocation2 + $0x3d70] sm:$0xff]
    %v2028 = vld [vmem:[#allocation2 + $0x3d78] sm:$0xff]
    %v2029 = vld [vmem:[#allocation2 + $0x3d80] sm:$0xff]
    %v2030 = vld [vmem:[#allocation2 + $0x3d88] sm:$0xff]
    %v2031 = vld [vmem:[#allocation2 + $0x3d90] sm:$0xff]
    %v2032 = vld [vmem:[#allocation2 + $0x3d98] sm:$0xff]
    %v2033 = vld [vmem:[#allocation2 + $0x3da0] sm:$0xff]
    %v2034 = vld [vmem:[#allocation2 + $0x3da8] sm:$0xff]
    %v2035 = vld [vmem:[#allocation2 + $0x3db0] sm:$0xff]
    %v2036 = vld [vmem:[#allocation2 + $0x3db8] sm:$0xff]
    %v2037 = vld [vmem:[#allocation2 + $0x3dc0] sm:$0xff]
    %v2038 = vld [vmem:[#allocation2 + $0x3dc8] sm:$0xff]
    %v2039 = vld [vmem:[#allocation2 + $0x3dd0] sm:$0xff]
    %v2040 = vld [vmem:[#allocation2 + $0x3dd8] sm:$0xff]
    %v2041 = vld [vmem:[#allocation2 + $0x3de0] sm:$0xff]
    %v2042 = vld [vmem:[#allocation2 + $0x3de8] sm:$0xff]
    %v2043 = vld [vmem:[#allocation2 + $0x3df0] sm:$0xff]
    %v2044 = vld [vmem:[#allocation2 + $0x3df8] sm:$0xff]
    %v2045 = vld [vmem:[#allocation2 + $0x3e00] sm:$0xff]
    %v2046 = vld [vmem:[#allocation2 + $0x3e08] sm:$0xff]
    %v2047 = vld [vmem:[#allocation2 + $0x3e10] sm:$0xff]
    %v2048 = vld [vmem:[#allocation2 + $0x3e18] sm:$0xff]
    %v2049 = vld [vmem:[#allocation2 + $0x3e20] sm:$0xff]
    %v2050 = vld [vmem:[#allocation2 + $0x3e28] sm:$0xff]
    %v2051 = vld [vmem:[#allocation2 + $0x3e30] sm:$0xff]
    %v2052 = vld [vmem:[#allocation2 + $0x3e38] sm:$0xff]
    %v2053 = vld [vmem:[#allocation2 + $0x3e40] sm:$0xff]
    %v2054 = vld [vmem:[#allocation2 + $0x3e48] sm:$0xff]
    %v2055 = vld [vmem:[#allocation2 + $0x3e50] sm:$0xff]
    %v2056 = vld [vmem:[#allocation2 + $0x3e58] sm:$0xff]
    %v2057 = vld [vmem:[#allocation2 + $0x3e60] sm:$0xff]
    %v2058 = vld [vmem:[#allocation2 + $0x3e68] sm:$0xff]
    %v2059 = vld [vmem:[#allocation2 + $0x3e70] sm:$0xff]
    %v2060 = vld [vmem:[#allocation2 + $0x3e78] sm:$0xff]
    %v2061 = vld [vmem:[#allocation2 + $0x3e80] sm:$0xff]
    %v2062 = vld [vmem:[#allocation2 + $0x3e88] sm:$0xff]
    %v2063 = vld [vmem:[#allocation2 + $0x3e90] sm:$0xff]
    %v2064 = vld [vmem:[#allocation2 + $0x3e98] sm:$0xff]
    %v2065 = vld [vmem:[#allocation2 + $0x3ea0] sm:$0xff]
    %v2066 = vld [vmem:[#allocation2 + $0x3ea8] sm:$0xff]
    %v2067 = vld [vmem:[#allocation2 + $0x3eb0] sm:$0xff]
    %v2068 = vld [vmem:[#allocation2 + $0x3eb8] sm:$0xff]
    %v2069 = vld [vmem:[#allocation2 + $0x3ec0] sm:$0xff]
    %v2070 = vld [vmem:[#allocation2 + $0x3ec8] sm:$0xff]
    %v2071 = vld [vmem:[#allocation2 + $0x3ed0] sm:$0xff]
    %v2072 = vld [vmem:[#allocation2 + $0x3ed8] sm:$0xff]
    %v2073 = vld [vmem:[#allocation2 + $0x3ee0] sm:$0xff]
    %v2074 = vld [vmem:[#allocation2 + $0x3ee8] sm:$0xff]
    %v2075 = vld [vmem:[#allocation2 + $0x3ef0] sm:$0xff]
    %v2076 = vld [vmem:[#allocation2 + $0x3ef8] sm:$0xff]
    %v2077 = vld [vmem:[#allocation2 + $0x3f00] sm:$0xff]
    %v2078 = vld [vmem:[#allocation2 + $0x3f08] sm:$0xff]
    %v2079 = vld [vmem:[#allocation2 + $0x3f10] sm:$0xff]
    %v2080 = vld [vmem:[#allocation2 + $0x3f18] sm:$0xff]
    %v2081 = vld [vmem:[#allocation2 + $0x3f20] sm:$0xff]
    %v2082 = vld [vmem:[#allocation2 + $0x3f28] sm:$0xff]
    %v2083 = vld [vmem:[#allocation2 + $0x3f30] sm:$0xff]
    %v2084 = vld [vmem:[#allocation2 + $0x3f38] sm:$0xff]
    %v2085 = vld [vmem:[#allocation2 + $0x3f40] sm:$0xff]
    %v2086 = vld [vmem:[#allocation2 + $0x3f48] sm:$0xff]
    %v2087 = vld [vmem:[#allocation2 + $0x3f50] sm:$0xff]
    %v2088 = vld [vmem:[#allocation2 + $0x3f58] sm:$0xff]
    %v2089 = vld [vmem:[#allocation2 + $0x3f60] sm:$0xff]
    %v2090 = vld [vmem:[#allocation2 + $0x3f68] sm:$0xff]
    %v2091 = vld [vmem:[#allocation2 + $0x3f70] sm:$0xff]
    %v2092 = vld [vmem:[#allocation2 + $0x3f78] sm:$0xff]
    %v2093 = vld [vmem:[#allocation2 + $0x3f80] sm:$0xff]
    %v2094 = vld [vmem:[#allocation2 + $0x3f88] sm:$0xff]
    %v2095 = vld [vmem:[#allocation2 + $0x3f90] sm:$0xff]
    %v2096 = vld [vmem:[#allocation2 + $0x3f98] sm:$0xff]
    %v2097 = vld [vmem:[#allocation2 + $0x3fa0] sm:$0xff]
    %v2098 = vld [vmem:[#allocation2 + $0x3fa8] sm:$0xff]
    %v2099 = vld [vmem:[#allocation2 + $0x3fb0] sm:$0xff]
    %v2100 = vld [vmem:[#allocation2 + $0x3fb8] sm:$0xff]
    %v2101 = vld [vmem:[#allocation2 + $0x3fc0] sm:$0xff]
    %v2102 = vld [vmem:[#allocation2 + $0x3fc8] sm:$0xff]
    %v2103 = vld [vmem:[#allocation2 + $0x3fd0] sm:$0xff]
    %v2104 = vld [vmem:[#allocation2 + $0x3fd8] sm:$0xff]
    %v2105 = vld [vmem:[#allocation2 + $0x3fe0] sm:$0xff]
    %v2106 = vld [vmem:[#allocation2 + $0x3fe8] sm:$0xff]
    %v2107 = vld [vmem:[#allocation2 + $0x3ff0] sm:$0xff]
    %v2108 = vld [vmem:[#allocation2 + $0x3ff8] sm:$0xff]
    %v2109 = vld [vmem:[#allocation2 + $0x4000] sm:$0xff]
    %v2110 = vld [vmem:[#allocation2 + $0x4008] sm:$0xff]
    %v2111 = vld [vmem:[#allocation2 + $0x4010] sm:$0xff]
    %v2112 = vld [vmem:[#allocation2 + $0x4018] sm:$0xff]
    %v2113 = vld [vmem:[#allocation2 + $0x4020] sm:$0xff]
    %v2114 = vld [vmem:[#allocation2 + $0x4028] sm:$0xff]
    %v2115 = vld [vmem:[#allocation2 + $0x4030] sm:$0xff]
    %v2116 = vld [vmem:[#allocation2 + $0x4038] sm:$0xff]
    %v2117 = vld [vmem:[#allocation2 + $0x4040] sm:$0xff]
    %v2118 = vld [vmem:[#allocation2 + $0x4048] sm:$0xff]
    %v2119 = vld [vmem:[#allocation2 + $0x4050] sm:$0xff]
    %v2120 = vld [vmem:[#allocation2 + $0x4058] sm:$0xff]
    %v2121 = vld [vmem:[#allocation2 + $0x4060] sm:$0xff]
    %v2122 = vld [vmem:[#allocation2 + $0x4068] sm:$0xff]
    %v2123 = vld [vmem:[#allocation2 + $0x4070] sm:$0xff]
    %v2124 = vld [vmem:[#allocation2 + $0x4078] sm:$0xff]
    %v2125 = vld [vmem:[#allocation2 + $0x4080] sm:$0xff]
    %v2126 = vld [vmem:[#allocation2 + $0x4088] sm:$0xff]
    %v2127 = vld [vmem:[#allocation2 + $0x4090] sm:$0xff]
    %v2128 = vld [vmem:[#allocation2 + $0x4098] sm:$0xff]
    %v2129 = vld [vmem:[#allocation2 + $0x40a0] sm:$0xff]
    %v2130 = vld [vmem:[#allocation2 + $0x40a8] sm:$0xff]
    %v2131 = vld [vmem:[#allocation2 + $0x40b0] sm:$0xff]
    %v2132 = vld [vmem:[#allocation2 + $0x40b8] sm:$0xff]
    %v2133 = vld [vmem:[#allocation2 + $0x40c0] sm:$0xff]
    %v2134 = vld [vmem:[#allocation2 + $0x40c8] sm:$0xff]
    %v2135 = vld [vmem:[#allocation2 + $0x40d0] sm:$0xff]
    %v2136 = vld [vmem:[#allocation2 + $0x40d8] sm:$0xff]
    %v2137 = vld [vmem:[#allocation2 + $0x40e0] sm:$0xff]
    %v2138 = vld [vmem:[#allocation2 + $0x40e8] sm:$0xff]
    %v2139 = vld [vmem:[#allocation2 + $0x40f0] sm:$0xff]
    %v2140 = vld [vmem:[#allocation2 + $0x40f8] sm:$0xff]
    %v2141 = vld [vmem:[#allocation2 + $0x4100] sm:$0xff]
    %v2142 = vld [vmem:[#allocation2 + $0x4108] sm:$0xff]
    %v2143 = vld [vmem:[#allocation2 + $0x4110] sm:$0xff]
    %v2144 = vld [vmem:[#allocation2 + $0x4118] sm:$0xff]
    %v2145 = vld [vmem:[#allocation2 + $0x4120] sm:$0xff]
    %v2146 = vld [vmem:[#allocation2 + $0x4128] sm:$0xff]
    %v2147 = vld [vmem:[#allocation2 + $0x4130] sm:$0xff]
    %v2148 = vld [vmem:[#allocation2 + $0x4138] sm:$0xff]
    %v2149 = vld [vmem:[#allocation2 + $0x4140] sm:$0xff]
    %v2150 = vld [vmem:[#allocation2 + $0x4148] sm:$0xff]
    %v2151 = vld [vmem:[#allocation2 + $0x4150] sm:$0xff]
    %v2152 = vld [vmem:[#allocation2 + $0x4158] sm:$0xff]
    %v2153 = vld [vmem:[#allocation2 + $0x4160] sm:$0xff]
    %v2154 = vld [vmem:[#allocation2 + $0x4168] sm:$0xff]
    %v2155 = vld [vmem:[#allocation2 + $0x4170] sm:$0xff]
    %v2156 = vld [vmem:[#allocation2 + $0x4178] sm:$0xff]
    %v2157 = vld [vmem:[#allocation2 + $0x4180] sm:$0xff]
    %v2158 = vld [vmem:[#allocation2 + $0x4188] sm:$0xff]
    %v2159 = vld [vmem:[#allocation2 + $0x4190] sm:$0xff]
    %v2160 = vld [vmem:[#allocation2 + $0x4198] sm:$0xff]
    %v2161 = vld [vmem:[#allocation2 + $0x41a0] sm:$0xff]
    %v2162 = vld [vmem:[#allocation2 + $0x41a8] sm:$0xff]
    %v2163 = vld [vmem:[#allocation2 + $0x41b0] sm:$0xff]
    %v2164 = vld [vmem:[#allocation2 + $0x41b8] sm:$0xff]
    %v2165 = vld [vmem:[#allocation2 + $0x41c0] sm:$0xff]
    %v2166 = vld [vmem:[#allocation2 + $0x41c8] sm:$0xff]
    %v2167 = vld [vmem:[#allocation2 + $0x41d0] sm:$0xff]
    %v2168 = vld [vmem:[#allocation2 + $0x41d8] sm:$0xff]
    %v2169 = vld [vmem:[#allocation2 + $0x41e0] sm:$0xff]
    %v2170 = vld [vmem:[#allocation2 + $0x41e8] sm:$0xff]
    %v2171 = vld [vmem:[#allocation2 + $0x41f0] sm:$0xff]
    %v2172 = vld [vmem:[#allocation2 + $0x41f8] sm:$0xff]
    %v2173 = vld [vmem:[#allocation2 + $0x4200] sm:$0xff]
    %v2174 = vld [vmem:[#allocation2 + $0x4208] sm:$0xff]
    %v2175 = vld [vmem:[#allocation2 + $0x4210] sm:$0xff]
    %v2176 = vld [vmem:[#allocation2 + $0x4218] sm:$0xff]
    %v2177 = vld [vmem:[#allocation2 + $0x4220] sm:$0xff]
    %v2178 = vld [vmem:[#allocation2 + $0x4228] sm:$0xff]
    %v2179 = vld [vmem:[#allocation2 + $0x4230] sm:$0xff]
    %v2180 = vld [vmem:[#allocation2 + $0x4238] sm:$0xff]
    %v2181 = vld [vmem:[#allocation2 + $0x4240] sm:$0xff]
    %v2182 = vld [vmem:[#allocation2 + $0x4248] sm:$0xff]
    %v2183 = vld [vmem:[#allocation2 + $0x4250] sm:$0xff]
    %v2184 = vld [vmem:[#allocation2 + $0x4258] sm:$0xff]
    %v2185 = vld [vmem:[#allocation2 + $0x4260] sm:$0xff]
    %v2186 = vld [vmem:[#allocation2 + $0x4268] sm:$0xff]
    %v2187 = vld [vmem:[#allocation2 + $0x4270] sm:$0xff]
    %v2188 = vld [vmem:[#allocation2 + $0x4278] sm:$0xff]
    %v2189 = vld [vmem:[#allocation2 + $0x4280] sm:$0xff]
    %v2190 = vld [vmem:[#allocation2 + $0x4288] sm:$0xff]
    %v2191 = vld [vmem:[#allocation2 + $0x4290] sm:$0xff]
    %v2192 = vld [vmem:[#allocation2 + $0x4298] sm:$0xff]
    %v2193 = vld [vmem:[#allocation2 + $0x42a0] sm:$0xff]
    %v2194 = vld [vmem:[#allocation2 + $0x42a8] sm:$0xff]
    %v2195 = vld [vmem:[#allocation2 + $0x42b0] sm:$0xff]
    %v2196 = vld [vmem:[#allocation2 + $0x42b8] sm:$0xff]
    %v2197 = vld [vmem:[#allocation2 + $0x42c0] sm:$0xff]
    %v2198 = vld [vmem:[#allocation2 + $0x42c8] sm:$0xff]
    %v2199 = vld [vmem:[#allocation2 + $0x42d0] sm:$0xff]
    %v2200 = vld [vmem:[#allocation2 + $0x42d8] sm:$0xff]
    %v2201 = vld [vmem:[#allocation2 + $0x42e0] sm:$0xff]
    %v2202 = vld [vmem:[#allocation2 + $0x42e8] sm:$0xff]
    %v2203 = vld [vmem:[#allocation2 + $0x42f0] sm:$0xff]
    %v2204 = vld [vmem:[#allocation2 + $0x42f8] sm:$0xff]
    %v2205 = vld [vmem:[#allocation2 + $0x4300] sm:$0xff]
    %v2206 = vld [vmem:[#allocation2 + $0x4308] sm:$0xff]
    %v2207 = vld [vmem:[#allocation2 + $0x4310] sm:$0xff]
    %v2208 = vld [vmem:[#allocation2 + $0x4318] sm:$0xff]
    %v2209 = vld [vmem:[#allocation2 + $0x4320] sm:$0xff]
    %v2210 = vld [vmem:[#allocation2 + $0x4328] sm:$0xff]
    %v2211 = vld [vmem:[#allocation2 + $0x4330] sm:$0xff]
    %v2212 = vld [vmem:[#allocation2 + $0x4338] sm:$0xff]
    %v2213 = vld [vmem:[#allocation2 + $0x4340] sm:$0xff]
    %v2214 = vld [vmem:[#allocation2 + $0x4348] sm:$0xff]
    %v2215 = vld [vmem:[#allocation2 + $0x4350] sm:$0xff]
    %v2216 = vld [vmem:[#allocation2 + $0x4358] sm:$0xff]
    %v2217 = vld [vmem:[#allocation2 + $0x4360] sm:$0xff]
    %v2218 = vld [vmem:[#allocation2 + $0x4368] sm:$0xff]
    %v2219 = vld [vmem:[#allocation2 + $0x4370] sm:$0xff]
    %v2220 = vld [vmem:[#allocation2 + $0x4378] sm:$0xff]
    %v2221 = vld [vmem:[#allocation2 + $0x4380] sm:$0xff]
    %v2222 = vld [vmem:[#allocation2 + $0x4388] sm:$0xff]
    %v2223 = vld [vmem:[#allocation2 + $0x4390] sm:$0xff]
    %v2224 = vld [vmem:[#allocation2 + $0x4398] sm:$0xff]
    %v2225 = vld [vmem:[#allocation2 + $0x43a0] sm:$0xff]
    %v2226 = vld [vmem:[#allocation2 + $0x43a8] sm:$0xff]
    %v2227 = vld [vmem:[#allocation2 + $0x43b0] sm:$0xff]
    %v2228 = vld [vmem:[#allocation2 + $0x43b8] sm:$0xff]
    %v2229 = vld [vmem:[#allocation2 + $0x43c0] sm:$0xff]
    %v2230 = vld [vmem:[#allocation2 + $0x43c8] sm:$0xff]
    %v2231 = vld [vmem:[#allocation2 + $0x43d0] sm:$0xff]
    %v2232 = vld [vmem:[#allocation2 + $0x43d8] sm:$0xff]
    %v2233 = vld [vmem:[#allocation2 + $0x43e0] sm:$0xff]
    %v2234 = vld [vmem:[#allocation2 + $0x43e8] sm:$0xff]
    %v2235 = vld [vmem:[#allocation2 + $0x43f0] sm:$0xff]
    %v2236 = vld [vmem:[#allocation2 + $0x43f8] sm:$0xff]
    %v2237 = vld [vmem:[#allocation2 + $0x4400] sm:$0xff]
    %v2238 = vld [vmem:[#allocation2 + $0x4408] sm:$0xff]
    %v2239 = vld [vmem:[#allocation2 + $0x4410] sm:$0xff]
    %v2240 = vld [vmem:[#allocation2 + $0x4418] sm:$0xff]
    %v2241 = vld [vmem:[#allocation2 + $0x4420] sm:$0xff]
    %v2242 = vld [vmem:[#allocation2 + $0x4428] sm:$0xff]
    %v2243 = vld [vmem:[#allocation2 + $0x4430] sm:$0xff]
    %v2244 = vld [vmem:[#allocation2 + $0x4438] sm:$0xff]
    %v2245 = vld [vmem:[#allocation2 + $0x4440] sm:$0xff]
    %v2246 = vld [vmem:[#allocation2 + $0x4448] sm:$0xff]
    %v2247 = vld [vmem:[#allocation2 + $0x4450] sm:$0xff]
    %v2248 = vld [vmem:[#allocation2 + $0x4458] sm:$0xff]
    %v2249 = vld [vmem:[#allocation2 + $0x4460] sm:$0xff]
    %v2250 = vld [vmem:[#allocation2 + $0x4468] sm:$0xff]
    %v2251 = vld [vmem:[#allocation2 + $0x4470] sm:$0xff]
    %v2252 = vld [vmem:[#allocation2 + $0x4478] sm:$0xff]
    %v2253 = vld [vmem:[#allocation2 + $0x4480] sm:$0xff]
    %v2254 = vld [vmem:[#allocation2 + $0x4488] sm:$0xff]
    %v2255 = vld [vmem:[#allocation2 + $0x4490] sm:$0xff]
    %v2256 = vld [vmem:[#allocation2 + $0x4498] sm:$0xff]
    %v2257 = vld [vmem:[#allocation2 + $0x44a0] sm:$0xff]
    %v2258 = vld [vmem:[#allocation2 + $0x44a8] sm:$0xff]
    %v2259 = vld [vmem:[#allocation2 + $0x44b0] sm:$0xff]
    %v2260 = vld [vmem:[#allocation2 + $0x44b8] sm:$0xff]
    %v2261 = vld [vmem:[#allocation2 + $0x44c0] sm:$0xff]
    %v2262 = vld [vmem:[#allocation2 + $0x44c8] sm:$0xff]
    %v2263 = vld [vmem:[#allocation2 + $0x44d0] sm:$0xff]
    %v2264 = vld [vmem:[#allocation2 + $0x44d8] sm:$0xff]
    %v2265 = vld [vmem:[#allocation2 + $0x44e0] sm:$0xff]
    %v2266 = vld [vmem:[#allocation2 + $0x44e8] sm:$0xff]
    %v2267 = vld [vmem:[#allocation2 + $0x44f0] sm:$0xff]
    %v2268 = vld [vmem:[#allocation2 + $0x44f8] sm:$0xff]
    %v2269 = vld [vmem:[#allocation2 + $0x4500] sm:$0xff]
    %v2270 = vld [vmem:[#allocation2 + $0x4508] sm:$0xff]
    %v2271 = vld [vmem:[#allocation2 + $0x4510] sm:$0xff]
    %v2272 = vld [vmem:[#allocation2 + $0x4518] sm:$0xff]
    %v2273 = vld [vmem:[#allocation2 + $0x4520] sm:$0xff]
    %v2274 = vld [vmem:[#allocation2 + $0x4528] sm:$0xff]
    %v2275 = vld [vmem:[#allocation2 + $0x4530] sm:$0xff]
    %v2276 = vld [vmem:[#allocation2 + $0x4538] sm:$0xff]
    %v2277 = vld [vmem:[#allocation2 + $0x4540] sm:$0xff]
    %v2278 = vld [vmem:[#allocation2 + $0x4548] sm:$0xff]
    %v2279 = vld [vmem:[#allocation2 + $0x4550] sm:$0xff]
    %v2280 = vld [vmem:[#allocation2 + $0x4558] sm:$0xff]
    %v2281 = vld [vmem:[#allocation2 + $0x4560] sm:$0xff]
    %v2282 = vld [vmem:[#allocation2 + $0x4568] sm:$0xff]
    %v2283 = vld [vmem:[#allocation2 + $0x4570] sm:$0xff]
    %v2284 = vld [vmem:[#allocation2 + $0x4578] sm:$0xff]
    %v2285 = vld [vmem:[#allocation2 + $0x4580] sm:$0xff]
    %v2286 = vld [vmem:[#allocation2 + $0x4588] sm:$0xff]
    %v2287 = vld [vmem:[#allocation2 + $0x4590] sm:$0xff]
    %v2288 = vld [vmem:[#allocation2 + $0x4598] sm:$0xff]
    %v2289 = vld [vmem:[#allocation2 + $0x45a0] sm:$0xff]
    %v2290 = vld [vmem:[#allocation2 + $0x45a8] sm:$0xff]
    %v2291 = vld [vmem:[#allocation2 + $0x45b0] sm:$0xff]
    %v2292 = vld [vmem:[#allocation2 + $0x45b8] sm:$0xff]
    %v2293 = vld [vmem:[#allocation2 + $0x45c0] sm:$0xff]
    %v2294 = vld [vmem:[#allocation2 + $0x45c8] sm:$0xff]
    %v2295 = vld [vmem:[#allocation2 + $0x45d0] sm:$0xff]
    %v2296 = vld [vmem:[#allocation2 + $0x45d8] sm:$0xff]
    %v2297 = vld [vmem:[#allocation2 + $0x45e0] sm:$0xff]
    %v2298 = vld [vmem:[#allocation2 + $0x45e8] sm:$0xff]
    %v2299 = vld [vmem:[#allocation2 + $0x45f0] sm:$0xff]
    %v2300 = vld [vmem:[#allocation2 + $0x45f8] sm:$0xff]
    %v2301 = vld [vmem:[#allocation2 + $0x4600] sm:$0xff]
    %v2302 = vld [vmem:[#allocation2 + $0x4608] sm:$0xff]
    %v2303 = vld [vmem:[#allocation2 + $0x4610] sm:$0xff]
    %v2304 = vld [vmem:[#allocation2 + $0x4618] sm:$0xff]
    %v2305 = vld [vmem:[#allocation2 + $0x4620] sm:$0xff]
    %v2306 = vld [vmem:[#allocation2 + $0x4628] sm:$0xff]
    %v2307 = vld [vmem:[#allocation2 + $0x4630] sm:$0xff]
    %v2308 = vld [vmem:[#allocation2 + $0x4638] sm:$0xff]
    %v2309 = vld [vmem:[#allocation2 + $0x4640] sm:$0xff]
    %v2310 = vld [vmem:[#allocation2 + $0x4648] sm:$0xff]
    %v2311 = vld [vmem:[#allocation2 + $0x4650] sm:$0xff]
    %v2312 = vld [vmem:[#allocation2 + $0x4658] sm:$0xff]
    %v2313 = vld [vmem:[#allocation2 + $0x4660] sm:$0xff]
    %v2314 = vld [vmem:[#allocation2 + $0x4668] sm:$0xff]
    %v2315 = vld [vmem:[#allocation2 + $0x4670] sm:$0xff]
    %v2316 = vld [vmem:[#allocation2 + $0x4678] sm:$0xff]
    %v2317 = vld [vmem:[#allocation2 + $0x4680] sm:$0xff]
    %v2318 = vld [vmem:[#allocation2 + $0x4688] sm:$0xff]
    %v2319 = vld [vmem:[#allocation2 + $0x4690] sm:$0xff]
    %v2320 = vld [vmem:[#allocation2 + $0x4698] sm:$0xff]
    %v2321 = vld [vmem:[#allocation2 + $0x46a0] sm:$0xff]
    %v2322 = vld [vmem:[#allocation2 + $0x46a8] sm:$0xff]
    %v2323 = vld [vmem:[#allocation2 + $0x46b0] sm:$0xff]
    %v2324 = vld [vmem:[#allocation2 + $0x46b8] sm:$0xff]
    %v2325 = vld [vmem:[#allocation2 + $0x46c0] sm:$0xff]
    %v2326 = vld [vmem:[#allocation2 + $0x46c8] sm:$0xff]
    %v2327 = vld [vmem:[#allocation2 + $0x46d0] sm:$0xff]
    %v2328 = vld [vmem:[#allocation2 + $0x46d8] sm:$0xff]
    %v2329 = vld [vmem:[#allocation2 + $0x46e0] sm:$0xff]
    %v2330 = vld [vmem:[#allocation2 + $0x46e8] sm:$0xff]
    %v2331 = vld [vmem:[#allocation2 + $0x46f0] sm:$0xff]
    %v2332 = vld [vmem:[#allocation2 + $0x46f8] sm:$0xff]
    %v2333 = vld [vmem:[#allocation2 + $0x4700] sm:$0xff]
    %v2334 = vld [vmem:[#allocation2 + $0x4708] sm:$0xff]
    %v2335 = vld [vmem:[#allocation2 + $0x4710] sm:$0xff]
    %v2336 = vld [vmem:[#allocation2 + $0x4718] sm:$0xff]
    %v2337 = vld [vmem:[#allocation2 + $0x4720] sm:$0xff]
    %v2338 = vld [vmem:[#allocation2 + $0x4728] sm:$0xff]
    %v2339 = vld [vmem:[#allocation2 + $0x4730] sm:$0xff]
    %v2340 = vld [vmem:[#allocation2 + $0x4738] sm:$0xff]
    %v2341 = vld [vmem:[#allocation2 + $0x4740] sm:$0xff]
    %v2342 = vld [vmem:[#allocation2 + $0x4748] sm:$0xff]
    %v2343 = vld [vmem:[#allocation2 + $0x4750] sm:$0xff]
    %v2344 = vld [vmem:[#allocation2 + $0x4758] sm:$0xff]
    %v2345 = vld [vmem:[#allocation2 + $0x4760] sm:$0xff]
    %v2346 = vld [vmem:[#allocation2 + $0x4768] sm:$0xff]
    %v2347 = vld [vmem:[#allocation2 + $0x4770] sm:$0xff]
    %v2348 = vld [vmem:[#allocation2 + $0x4778] sm:$0xff]
    %v2349 = vld [vmem:[#allocation2 + $0x4780] sm:$0xff]
    %v2350 = vld [vmem:[#allocation2 + $0x4788] sm:$0xff]
    %v2351 = vld [vmem:[#allocation2 + $0x4790] sm:$0xff]
    %v2352 = vld [vmem:[#allocation2 + $0x4798] sm:$0xff]
    %v2353 = vld [vmem:[#allocation2 + $0x47a0] sm:$0xff]
    %v2354 = vld [vmem:[#allocation2 + $0x47a8] sm:$0xff]
    %v2355 = vld [vmem:[#allocation2 + $0x47b0] sm:$0xff]
    %v2356 = vld [vmem:[#allocation2 + $0x47b8] sm:$0xff]
    %v2357 = vld [vmem:[#allocation2 + $0x47c0] sm:$0xff]
    %v2358 = vld [vmem:[#allocation2 + $0x47c8] sm:$0xff]
    %v2359 = vld [vmem:[#allocation2 + $0x47d0] sm:$0xff]
    %v2360 = vld [vmem:[#allocation2 + $0x47d8] sm:$0xff]
    %v2361 = vld [vmem:[#allocation2 + $0x47e0] sm:$0xff]
    %v2362 = vld [vmem:[#allocation2 + $0x47e8] sm:$0xff]
    %v2363 = vld [vmem:[#allocation2 + $0x47f0] sm:$0xff]
    %v2364 = vld [vmem:[#allocation2 + $0x47f8] sm:$0xff]
    %v2365 = vld [vmem:[#allocation2 + $0x4800] sm:$0xff]
    %v2366 = vld [vmem:[#allocation2 + $0x4808] sm:$0xff]
    %v2367 = vld [vmem:[#allocation2 + $0x4810] sm:$0xff]
    %v2368 = vld [vmem:[#allocation2 + $0x4818] sm:$0xff]
    %v2369 = vld [vmem:[#allocation2 + $0x4820] sm:$0xff]
    %v2370 = vld [vmem:[#allocation2 + $0x4828] sm:$0xff]
    %v2371 = vld [vmem:[#allocation2 + $0x4830] sm:$0xff]
    %v2372 = vld [vmem:[#allocation2 + $0x4838] sm:$0xff]
    %v2373 = vld [vmem:[#allocation2 + $0x4840] sm:$0xff]
    %v2374 = vld [vmem:[#allocation2 + $0x4848] sm:$0xff]
    %v2375 = vld [vmem:[#allocation2 + $0x4850] sm:$0xff]
    %v2376 = vld [vmem:[#allocation2 + $0x4858] sm:$0xff]
    %v2377 = vld [vmem:[#allocation2 + $0x4860] sm:$0xff]
    %v2378 = vld [vmem:[#allocation2 + $0x4868] sm:$0xff]
    %v2379 = vld [vmem:[#allocation2 + $0x4870] sm:$0xff]
    %v2380 = vld [vmem:[#allocation2 + $0x4878] sm:$0xff]
    %v2381 = vld [vmem:[#allocation2 + $0x4880] sm:$0xff]
    %v2382 = vld [vmem:[#allocation2 + $0x4888] sm:$0xff]
    %v2383 = vld [vmem:[#allocation2 + $0x4890] sm:$0xff]
    %v2384 = vld [vmem:[#allocation2 + $0x4898] sm:$0xff]
    %v2385 = vld [vmem:[#allocation2 + $0x48a0] sm:$0xff]
    %v2386 = vld [vmem:[#allocation2 + $0x48a8] sm:$0xff]
    %v2387 = vld [vmem:[#allocation2 + $0x48b0] sm:$0xff]
    %v2388 = vld [vmem:[#allocation2 + $0x48b8] sm:$0xff]
    %v2389 = vld [vmem:[#allocation2 + $0x48c0] sm:$0xff]
    %v2390 = vld [vmem:[#allocation2 + $0x48c8] sm:$0xff]
    %v2391 = vld [vmem:[#allocation2 + $0x48d0] sm:$0xff]
    %v2392 = vld [vmem:[#allocation2 + $0x48d8] sm:$0xff]
    %v2393 = vld [vmem:[#allocation2 + $0x48e0] sm:$0xff]
    %v2394 = vld [vmem:[#allocation2 + $0x48e8] sm:$0xff]
    %v2395 = vld [vmem:[#allocation2 + $0x48f0] sm:$0xff]
    %v2396 = vld [vmem:[#allocation2 + $0x48f8] sm:$0xff]
    %v2397 = vld [vmem:[#allocation2 + $0x4900] sm:$0xff]
    %v2398 = vld [vmem:[#allocation2 + $0x4908] sm:$0xff]
    %v2399 = vld [vmem:[#allocation2 + $0x4910] sm:$0xff]
    %v2400 = vld [vmem:[#allocation2 + $0x4918] sm:$0xff]
    %v2401 = vld [vmem:[#allocation2 + $0x4920] sm:$0xff]
    %v2402 = vld [vmem:[#allocation2 + $0x4928] sm:$0xff]
    %v2403 = vld [vmem:[#allocation2 + $0x4930] sm:$0xff]
    %v2404 = vld [vmem:[#allocation2 + $0x4938] sm:$0xff]
    %v2405 = vld [vmem:[#allocation2 + $0x4940] sm:$0xff]
    %v2406 = vld [vmem:[#allocation2 + $0x4948] sm:$0xff]
    %v2407 = vld [vmem:[#allocation2 + $0x4950] sm:$0xff]
    %v2408 = vld [vmem:[#allocation2 + $0x4958] sm:$0xff]
    %v2409 = vld [vmem:[#allocation2 + $0x4960] sm:$0xff]
    %v2410 = vld [vmem:[#allocation2 + $0x4968] sm:$0xff]
    %v2411 = vld [vmem:[#allocation2 + $0x4970] sm:$0xff]
    %v2412 = vld [vmem:[#allocation2 + $0x4978] sm:$0xff]
    %v2413 = vld [vmem:[#allocation2 + $0x4980] sm:$0xff]
    %v2414 = vld [vmem:[#allocation2 + $0x4988] sm:$0xff]
    %v2415 = vld [vmem:[#allocation2 + $0x4990] sm:$0xff]
    %v2416 = vld [vmem:[#allocation2 + $0x4998] sm:$0xff]
    %v2417 = vld [vmem:[#allocation2 + $0x49a0] sm:$0xff]
    %v2418 = vld [vmem:[#allocation2 + $0x49a8] sm:$0xff]
    %v2419 = vld [vmem:[#allocation2 + $0x49b0] sm:$0xff]
    %v2420 = vld [vmem:[#allocation2 + $0x49b8] sm:$0xff]
    %v2421 = vld [vmem:[#allocation2 + $0x49c0] sm:$0xff]
    %v2422 = vld [vmem:[#allocation2 + $0x49c8] sm:$0xff]
    %v2423 = vld [vmem:[#allocation2 + $0x49d0] sm:$0xff]
    %v2424 = vld [vmem:[#allocation2 + $0x49d8] sm:$0xff]
    %v2425 = vld [vmem:[#allocation2 + $0x49e0] sm:$0xff]
    %v2426 = vld [vmem:[#allocation2 + $0x49e8] sm:$0xff]
    %v2427 = vld [vmem:[#allocation2 + $0x49f0] sm:$0xff]
    %v2428 = vld [vmem:[#allocation2 + $0x49f8] sm:$0xff]
    %v2429 = vld [vmem:[#allocation2 + $0x4a00] sm:$0xff]
    %v2430 = vld [vmem:[#allocation2 + $0x4a08] sm:$0xff]
    %v2431 = vld [vmem:[#allocation2 + $0x4a10] sm:$0xff]
    %v2432 = vld [vmem:[#allocation2 + $0x4a18] sm:$0xff]
    %v2433 = vld [vmem:[#allocation2 + $0x4a20] sm:$0xff]
    %v2434 = vld [vmem:[#allocation2 + $0x4a28] sm:$0xff]
    %v2435 = vld [vmem:[#allocation2 + $0x4a30] sm:$0xff]
    %v2436 = vld [vmem:[#allocation2 + $0x4a38] sm:$0xff]
    %v2437 = vld [vmem:[#allocation2 + $0x4a40] sm:$0xff]
    %v2438 = vld [vmem:[#allocation2 + $0x4a48] sm:$0xff]
    %v2439 = vld [vmem:[#allocation2 + $0x4a50] sm:$0xff]
    %v2440 = vld [vmem:[#allocation2 + $0x4a58] sm:$0xff]
    %v2441 = vld [vmem:[#allocation2 + $0x4a60] sm:$0xff]
    %v2442 = vld [vmem:[#allocation2 + $0x4a68] sm:$0xff]
    %v2443 = vld [vmem:[#allocation2 + $0x4a70] sm:$0xff]
    %v2444 = vld [vmem:[#allocation2 + $0x4a78] sm:$0xff]
    %v2445 = vld [vmem:[#allocation2 + $0x4a80] sm:$0xff]
    %v2446 = vld [vmem:[#allocation2 + $0x4a88] sm:$0xff]
    %v2447 = vld [vmem:[#allocation2 + $0x4a90] sm:$0xff]
    %v2448 = vld [vmem:[#allocation2 + $0x4a98] sm:$0xff]
    %v2449 = vld [vmem:[#allocation2 + $0x4aa0] sm:$0xff]
    %v2450 = vld [vmem:[#allocation2 + $0x4aa8] sm:$0xff]
    %v2451 = vld [vmem:[#allocation2 + $0x4ab0] sm:$0xff]
    %v2452 = vld [vmem:[#allocation2 + $0x4ab8] sm:$0xff]
    %v2453 = vld [vmem:[#allocation2 + $0x4ac0] sm:$0xff]
    %v2454 = vld [vmem:[#allocation2 + $0x4ac8] sm:$0xff]
    %v2455 = vld [vmem:[#allocation2 + $0x4ad0] sm:$0xff]
    %v2456 = vld [vmem:[#allocation2 + $0x4ad8] sm:$0xff]
    %v2457 = vld [vmem:[#allocation2 + $0x4ae0] sm:$0xff]
    %v2458 = vld [vmem:[#allocation2 + $0x4ae8] sm:$0xff]
    %v2459 = vld [vmem:[#allocation2 + $0x4af0] sm:$0xff]
    %v2460 = vld [vmem:[#allocation2 + $0x4af8] sm:$0xff]
    %v2461 = vld [vmem:[#allocation2 + $0x4b00] sm:$0xff]
    %v2462 = vld [vmem:[#allocation2 + $0x4b08] sm:$0xff]
    %v2463 = vld [vmem:[#allocation2 + $0x4b10] sm:$0xff]
    %v2464 = vld [vmem:[#allocation2 + $0x4b18] sm:$0xff]
    %v2465 = vld [vmem:[#allocation2 + $0x4b20] sm:$0xff]
    %v2466 = vld [vmem:[#allocation2 + $0x4b28] sm:$0xff]
    %v2467 = vld [vmem:[#allocation2 + $0x4b30] sm:$0xff]
    %v2468 = vld [vmem:[#allocation2 + $0x4b38] sm:$0xff]
    %v2469 = vld [vmem:[#allocation2 + $0x4b40] sm:$0xff]
    %v2470 = vld [vmem:[#allocation2 + $0x4b48] sm:$0xff]
    %v2471 = vld [vmem:[#allocation2 + $0x4b50] sm:$0xff]
    %v2472 = vld [vmem:[#allocation2 + $0x4b58] sm:$0xff]
    %v2473 = vld [vmem:[#allocation2 + $0x4b60] sm:$0xff]
    %v2474 = vld [vmem:[#allocation2 + $0x4b68] sm:$0xff]
    %v2475 = vld [vmem:[#allocation2 + $0x4b70] sm:$0xff]
    %v2476 = vld [vmem:[#allocation2 + $0x4b78] sm:$0xff]
    %v2477 = vld [vmem:[#allocation2 + $0x4b80] sm:$0xff]
    %v2478 = vld [vmem:[#allocation2 + $0x4b88] sm:$0xff]
    %v2479 = vld [vmem:[#allocation2 + $0x4b90] sm:$0xff]
    %v2480 = vld [vmem:[#allocation2 + $0x4b98] sm:$0xff]
    %v2481 = vld [vmem:[#allocation2 + $0x4ba0] sm:$0xff]
    %v2482 = vld [vmem:[#allocation2 + $0x4ba8] sm:$0xff]
    %v2483 = vld [vmem:[#allocation2 + $0x4bb0] sm:$0xff]
    %v2484 = vld [vmem:[#allocation2 + $0x4bb8] sm:$0xff]
    %v2485 = vld [vmem:[#allocation2 + $0x4bc0] sm:$0xff]
    %v2486 = vld [vmem:[#allocation2 + $0x4bc8] sm:$0xff]
    %v2487 = vld [vmem:[#allocation2 + $0x4bd0] sm:$0xff]
    %v2488 = vld [vmem:[#allocation2 + $0x4bd8] sm:$0xff]
    %v2489 = vld [vmem:[#allocation2 + $0x4be0] sm:$0xff]
    %v2490 = vld [vmem:[#allocation2 + $0x4be8] sm:$0xff]
    %v2491 = vld [vmem:[#allocation2 + $0x4bf0] sm:$0xff]
    %v2492 = vld [vmem:[#allocation2 + $0x4bf8] sm:$0xff]
    %v2493 = vld [vmem:[#allocation2 + $0x4c00] sm:$0xff]
    %v2494 = vld [vmem:[#allocation2 + $0x4c08] sm:$0xff]
    %v2495 = vld [vmem:[#allocation2 + $0x4c10] sm:$0xff]
    %v2496 = vld [vmem:[#allocation2 + $0x4c18] sm:$0xff]
    %v2497 = vld [vmem:[#allocation2 + $0x4c20] sm:$0xff]
    %v2498 = vld [vmem:[#allocation2 + $0x4c28] sm:$0xff]
    %v2499 = vld [vmem:[#allocation2 + $0x4c30] sm:$0xff]
    %v2500 = vld [vmem:[#allocation2 + $0x4c38] sm:$0xff]
    %v2501 = vld [vmem:[#allocation2 + $0x4c40] sm:$0xff]
    %v2502 = vld [vmem:[#allocation2 + $0x4c48] sm:$0xff]
    %v2503 = vld [vmem:[#allocation2 + $0x4c50] sm:$0xff]
    %v2504 = vld [vmem:[#allocation2 + $0x4c58] sm:$0xff]
    %v2505 = vld [vmem:[#allocation2 + $0x4c60] sm:$0xff]
    %v2506 = vld [vmem:[#allocation2 + $0x4c68] sm:$0xff]
    %v2507 = vld [vmem:[#allocation2 + $0x4c70] sm:$0xff]
    %v2508 = vld [vmem:[#allocation2 + $0x4c78] sm:$0xff]
    %v2509 = vld [vmem:[#allocation2 + $0x4c80] sm:$0xff]
    %v2510 = vld [vmem:[#allocation2 + $0x4c88] sm:$0xff]
    %v2511 = vld [vmem:[#allocation2 + $0x4c90] sm:$0xff]
    %v2512 = vld [vmem:[#allocation2 + $0x4c98] sm:$0xff]
    %v2513 = vld [vmem:[#allocation2 + $0x4ca0] sm:$0xff]
    %v2514 = vld [vmem:[#allocation2 + $0x4ca8] sm:$0xff]
    %v2515 = vld [vmem:[#allocation2 + $0x4cb0] sm:$0xff]
    %v2516 = vld [vmem:[#allocation2 + $0x4cb8] sm:$0xff]
    %v2517 = vld [vmem:[#allocation2 + $0x4cc0] sm:$0xff]
    %v2518 = vld [vmem:[#allocation2 + $0x4cc8] sm:$0xff]
    %v2519 = vld [vmem:[#allocation2 + $0x4cd0] sm:$0xff]
    %v2520 = vld [vmem:[#allocation2 + $0x4cd8] sm:$0xff]
    %v2521 = vld [vmem:[#allocation2 + $0x4ce0] sm:$0xff]
    %v2522 = vld [vmem:[#allocation2 + $0x4ce8] sm:$0xff]
    %v2523 = vld [vmem:[#allocation2 + $0x4cf0] sm:$0xff]
    %v2524 = vld [vmem:[#allocation2 + $0x4cf8] sm:$0xff]
    %v2525 = vld [vmem:[#allocation2 + $0x4d00] sm:$0xff]
    %v2526 = vld [vmem:[#allocation2 + $0x4d08] sm:$0xff]
    %v2527 = vld [vmem:[#allocation2 + $0x4d10] sm:$0xff]
    %v2528 = vld [vmem:[#allocation2 + $0x4d18] sm:$0xff]
    %v2529 = vld [vmem:[#allocation2 + $0x4d20] sm:$0xff]
    %v2530 = vld [vmem:[#allocation2 + $0x4d28] sm:$0xff]
    %v2531 = vld [vmem:[#allocation2 + $0x4d30] sm:$0xff]
    %v2532 = vld [vmem:[#allocation2 + $0x4d38] sm:$0xff]
    %v2533 = vld [vmem:[#allocation2 + $0x4d40] sm:$0xff]
    %v2534 = vld [vmem:[#allocation2 + $0x4d48] sm:$0xff]
    %v2535 = vld [vmem:[#allocation2 + $0x4d50] sm:$0xff]
    %v2536 = vld [vmem:[#allocation2 + $0x4d58] sm:$0xff]
    %v2537 = vld [vmem:[#allocation2 + $0x4d60] sm:$0xff]
    %v2538 = vld [vmem:[#allocation2 + $0x4d68] sm:$0xff]
    %v2539 = vld [vmem:[#allocation2 + $0x4d70] sm:$0xff]
    %v2540 = vld [vmem:[#allocation2 + $0x4d78] sm:$0xff]
    %v2541 = vld [vmem:[#allocation2 + $0x4d80] sm:$0xff]
    %v2542 = vld [vmem:[#allocation2 + $0x4d88] sm:$0xff]
    %v2543 = vld [vmem:[#allocation2 + $0x4d90] sm:$0xff]
    %v2544 = vld [vmem:[#allocation2 + $0x4d98] sm:$0xff]
    %v2545 = vld [vmem:[#allocation2 + $0x4da0] sm:$0xff]
    %v2546 = vld [vmem:[#allocation2 + $0x4da8] sm:$0xff]
    %v2547 = vld [vmem:[#allocation2 + $0x4db0] sm:$0xff]
    %v2548 = vld [vmem:[#allocation2 + $0x4db8] sm:$0xff]
    %v2549 = vld [vmem:[#allocation2 + $0x4dc0] sm:$0xff]
    %v2550 = vld [vmem:[#allocation2 + $0x4dc8] sm:$0xff]
    %v2551 = vld [vmem:[#allocation2 + $0x4dd0] sm:$0xff]
    %v2552 = vld [vmem:[#allocation2 + $0x4dd8] sm:$0xff]
    %v2553 = vld [vmem:[#allocation2 + $0x4de0] sm:$0xff]
    %v2554 = vld [vmem:[#allocation2 + $0x4de8] sm:$0xff]
    %v2555 = vld [vmem:[#allocation2 + $0x4df0] sm:$0xff]
    %v2556 = vld [vmem:[#allocation2 + $0x4df8] sm:$0xff]
    %v2557 = vld [vmem:[#allocation2 + $0x4e00] sm:$0xff]
    %v2558 = vld [vmem:[#allocation2 + $0x4e08] sm:$0xff]
    %v2559 = vld [vmem:[#allocation2 + $0x4e10] sm:$0xff]
    %v2560 = vld [vmem:[#allocation2 + $0x4e18] sm:$0xff]
    %v2561 = vld [vmem:[#allocation2 + $0x4e20] sm:$0xff]
    %v2562 = vld [vmem:[#allocation2 + $0x4e28] sm:$0xff]
    %v2563 = vld [vmem:[#allocation2 + $0x4e30] sm:$0xff]
    %v2564 = vld [vmem:[#allocation2 + $0x4e38] sm:$0xff]
    %v2565 = vld [vmem:[#allocation2 + $0x4e40] sm:$0xff]
    %v2566 = vld [vmem:[#allocation2 + $0x4e48] sm:$0xff]
    %v2567 = vld [vmem:[#allocation2 + $0x4e50] sm:$0xff]
    %v2568 = vld [vmem:[#allocation2 + $0x4e58] sm:$0xff]
    %v2569 = vld [vmem:[#allocation2 + $0x4e60] sm:$0xff]
    %v2570 = vld [vmem:[#allocation2 + $0x4e68] sm:$0xff]
    %v2571 = vld [vmem:[#allocation2 + $0x4e70] sm:$0xff]
    %v2572 = vld [vmem:[#allocation2 + $0x4e78] sm:$0xff]
    %v2573 = vld [vmem:[#allocation2 + $0x4e80] sm:$0xff]
    %v2574 = vld [vmem:[#allocation2 + $0x4e88] sm:$0xff]
    %v2575 = vld [vmem:[#allocation2 + $0x4e90] sm:$0xff]
    %v2576 = vld [vmem:[#allocation2 + $0x4e98] sm:$0xff]
    %v2577 = vld [vmem:[#allocation2 + $0x4ea0] sm:$0xff]
    %v2578 = vld [vmem:[#allocation2 + $0x4ea8] sm:$0xff]
    %v2579 = vld [vmem:[#allocation2 + $0x4eb0] sm:$0xff]
    %v2580 = vld [vmem:[#allocation2 + $0x4eb8] sm:$0xff]
    %v2581 = vld [vmem:[#allocation2 + $0x4ec0] sm:$0xff]
    %v2582 = vld [vmem:[#allocation2 + $0x4ec8] sm:$0xff]
    %v2583 = vld [vmem:[#allocation2 + $0x4ed0] sm:$0xff]
    %v2584 = vld [vmem:[#allocation2 + $0x4ed8] sm:$0xff]
    %v2585 = vld [vmem:[#allocation2 + $0x4ee0] sm:$0xff]
    %v2586 = vld [vmem:[#allocation2 + $0x4ee8] sm:$0xff]
    %v2587 = vld [vmem:[#allocation2 + $0x4ef0] sm:$0xff]
    %v2588 = vld [vmem:[#allocation2 + $0x4ef8] sm:$0xff]
    %v2589 = vld [vmem:[#allocation2 + $0x4f00] sm:$0xff]
    %v2590 = vld [vmem:[#allocation2 + $0x4f08] sm:$0xff]
    %v2591 = vld [vmem:[#allocation2 + $0x4f10] sm:$0xff]
    %v2592 = vld [vmem:[#allocation2 + $0x4f18] sm:$0xff]
    %v2593 = vld [vmem:[#allocation2 + $0x4f20] sm:$0xff]
    %v2594 = vld [vmem:[#allocation2 + $0x4f28] sm:$0xff]
    %v2595 = vld [vmem:[#allocation2 + $0x4f30] sm:$0xff]
    %v2596 = vld [vmem:[#allocation2 + $0x4f38] sm:$0xff]
    %v2597 = vld [vmem:[#allocation2 + $0x4f40] sm:$0xff]
    %v2598 = vld [vmem:[#allocation2 + $0x4f48] sm:$0xff]
    %v2599 = vld [vmem:[#allocation2 + $0x4f50] sm:$0xff]
    %v2600 = vld [vmem:[#allocation2 + $0x4f58] sm:$0xff]
    %v2601 = vld [vmem:[#allocation2 + $0x4f60] sm:$0xff]
    %v2602 = vld [vmem:[#allocation2 + $0x4f68] sm:$0xff]
    %v2603 = vld [vmem:[#allocation2 + $0x4f70] sm:$0xff]
    %v2604 = vld [vmem:[#allocation2 + $0x4f78] sm:$0xff]
    %v2605 = vld [vmem:[#allocation2 + $0x4f80] sm:$0xff]
    %v2606 = vld [vmem:[#allocation2 + $0x4f88] sm:$0xff]
    %v2607 = vld [vmem:[#allocation2 + $0x4f90] sm:$0xff]
    %v2608 = vld [vmem:[#allocation2 + $0x4f98] sm:$0xff]
    %v2609 = vld [vmem:[#allocation2 + $0x4fa0] sm:$0xff]
    %v2610 = vld [vmem:[#allocation2 + $0x4fa8] sm:$0xff]
    %v2611 = vld [vmem:[#allocation2 + $0x4fb0] sm:$0xff]
    %v2612 = vld [vmem:[#allocation2 + $0x4fb8] sm:$0xff]
    %v2613 = vld [vmem:[#allocation2 + $0x4fc0] sm:$0xff]
    %v2614 = vld [vmem:[#allocation2 + $0x4fc8] sm:$0xff]
    %v2615 = vld [vmem:[#allocation2 + $0x4fd0] sm:$0xff]
    %v2616 = vld [vmem:[#allocation2 + $0x4fd8] sm:$0xff]
    %v2617 = vld [vmem:[#allocation2 + $0x4fe0] sm:$0xff]
    %v2618 = vld [vmem:[#allocation2 + $0x4fe8] sm:$0xff]
    %v2619 = vld [vmem:[#allocation2 + $0x4ff0] sm:$0xff]
    %v2620 = vld [vmem:[#allocation2 + $0x4ff8] sm:$0xff]
    %v2621 = vld [vmem:[#allocation2 + $0x5000] sm:$0xff]
    %v2622 = vld [vmem:[#allocation2 + $0x5008] sm:$0xff]
    %v2623 = vld [vmem:[#allocation2 + $0x5010] sm:$0xff]
    %v2624 = vld [vmem:[#allocation2 + $0x5018] sm:$0xff]
    %v2625 = vld [vmem:[#allocation2 + $0x5020] sm:$0xff]
    %v2626 = vld [vmem:[#allocation2 + $0x5028] sm:$0xff]
    %v2627 = vld [vmem:[#allocation2 + $0x5030] sm:$0xff]
    %v2628 = vld [vmem:[#allocation2 + $0x5038] sm:$0xff]
    %v2629 = vld [vmem:[#allocation2 + $0x5040] sm:$0xff]
    %v2630 = vld [vmem:[#allocation2 + $0x5048] sm:$0xff]
    %v2631 = vld [vmem:[#allocation2 + $0x5050] sm:$0xff]
    %v2632 = vld [vmem:[#allocation2 + $0x5058] sm:$0xff]
    %v2633 = vld [vmem:[#allocation2 + $0x5060] sm:$0xff]
    %v2634 = vld [vmem:[#allocation2 + $0x5068] sm:$0xff]
    %v2635 = vld [vmem:[#allocation2 + $0x5070] sm:$0xff]
    %v2636 = vld [vmem:[#allocation2 + $0x5078] sm:$0xff]
    %v2637 = vld [vmem:[#allocation2 + $0x5080] sm:$0xff]
    %v2638 = vld [vmem:[#allocation2 + $0x5088] sm:$0xff]
    %v2639 = vld [vmem:[#allocation2 + $0x5090] sm:$0xff]
    %v2640 = vld [vmem:[#allocation2 + $0x5098] sm:$0xff]
    %v2641 = vld [vmem:[#allocation2 + $0x50a0] sm:$0xff]
    %v2642 = vld [vmem:[#allocation2 + $0x50a8] sm:$0xff]
    %v2643 = vld [vmem:[#allocation2 + $0x50b0] sm:$0xff]
    %v2644 = vld [vmem:[#allocation2 + $0x50b8] sm:$0xff]
    %v2645 = vld [vmem:[#allocation2 + $0x50c0] sm:$0xff]
    %v2646 = vld [vmem:[#allocation2 + $0x50c8] sm:$0xff]
    %v2647 = vld [vmem:[#allocation2 + $0x50d0] sm:$0xff]
    %v2648 = vld [vmem:[#allocation2 + $0x50d8] sm:$0xff]
    %v2649 = vld [vmem:[#allocation2 + $0x50e0] sm:$0xff]
    %v2650 = vld [vmem:[#allocation2 + $0x50e8] sm:$0xff]
    %v2651 = vld [vmem:[#allocation2 + $0x50f0] sm:$0xff]
    %v2652 = vld [vmem:[#allocation2 + $0x50f8] sm:$0xff]
    %v2653 = vld [vmem:[#allocation5] sm:$0xff]
    %v2654 = vld [vmem:[#allocation5 + $0x8] sm:$0xff]
    %v2657 = vlaneseq
    %v2658 = vshrl.u32 %v2657, 7
    %v2659 = vsub.s32 0, %v2658
    %v2660 = vrot.slane %v2653, %v2659
    %v2661 = vlaneseq
    %v2662 = vshrl.u32 %v2661, 7
    %v2663 = vsub.s32 1, %v2662
    %v2664 = vrot.slane %v2653, %v2663
    %v2665 = vlaneseq
    %v2666 = vshrl.u32 %v2665, 7
    %v2667 = vsub.s32 2, %v2666
    %v2668 = vrot.slane %v2653, %v2667
    %v2669 = vlaneseq
    %v2670 = vshrl.u32 %v2669, 7
    %v2671 = vsub.s32 3, %v2670
    %v2672 = vrot.slane %v2653, %v2671
    %v2673 = vlaneseq
    %v2674 = vshrl.u32 %v2673, 7
    %v2675 = vsub.s32 4, %v2674
    %v2676 = vrot.slane %v2653, %v2675
    %v2677 = vlaneseq
    %v2678 = vshrl.u32 %v2677, 7
    %v2679 = vsub.s32 5, %v2678
    %v2680 = vrot.slane %v2653, %v2679
    %v2681 = vlaneseq
    %v2682 = vshrl.u32 %v2681, 7
    %v2683 = vsub.s32 6, %v2682
    %v2684 = vrot.slane %v2653, %v2683
    %v2685 = vlaneseq
    %v2686 = vshrl.u32 %v2685, 7
    %v2687 = vsub.s32 7, %v2686
    %v2688 = vrot.slane %v2653, %v2687
    %v2689 = vlaneseq
    %v2690 = vshrl.u32 %v2689, 7
    %v2691 = vsub.s32 0, %v2690
    %v2692 = vrot.slane %v2654, %v2691
    %v2693 = vlaneseq
    %v2694 = vshrl.u32 %v2693, 7
    %v2695 = vsub.s32 1, %v2694
    %v2696 = vrot.slane %v2654, %v2695
    %v2697 = vlaneseq
    %v2698 = vshrl.u32 %v2697, 7
    %v2699 = vsub.s32 2, %v2698
    %v2700 = vrot.slane %v2654, %v2699
    %v2701 = vlaneseq
    %v2702 = vshrl.u32 %v2701, 7
    %v2703 = vsub.s32 3, %v2702
    %v2704 = vrot.slane %v2654, %v2703
    %v2705 = vlaneseq
    %v2706 = vshrl.u32 %v2705, 7
    %v2707 = vsub.s32 4, %v2706
    %v2708 = vrot.slane %v2654, %v2707
    %v2709 = vlaneseq
    %v2710 = vshrl.u32 %v2709, 7
    %v2711 = vsub.s32 5, %v2710
    %v2712 = vrot.slane %v2654, %v2711
    %v2713 = vlaneseq
    %v2714 = vshrl.u32 %v2713, 7
    %v2715 = vsub.s32 6, %v2714
    %v2716 = vrot.slane %v2654, %v2715
    %v2717 = vlaneseq
    %v2718 = vshrl.u32 %v2717, 7
    %v2719 = vsub.s32 7, %v2718
    %v2720 = vrot.slane %v2654, %v2719
    %v2740 = vcombine.high %v58, %v58
    %v2742 = vunpack.c.l.s4 1983009808
    %v2743 = vunpack.c.0.s8 %v2742
    %v2744 = vlaneseq
    %v2745 = vshrl.u32 %v2744, 7
    %v2746 = vsub.s32 %v2743, %v2745
    %v2747 = vrot.slane %v58, %v2746
    %v2749 = vunpack.c.l.s4 1983009808
    %v2750 = vunpack.c.0.s8 %v2749
    %v2751 = vlaneseq
    %v2752 = vshrl.u32 %v2751, 7
    %v2753 = vsub.s32 %v2750, %v2752
    %v2754 = vrot.slane %v2740, %v2753
    %v2755 = vcombine.high %v2747, %v2747
    %v2756 = vcombine.high %v2754, %v2754
    %v2757 = vcombine.high %v59, %v59
    %v2759 = vunpack.c.l.s4 1983009808
    %v2760 = vunpack.c.0.s8 %v2759
    %v2761 = vlaneseq
    %v2762 = vshrl.u32 %v2761, 7
    %v2763 = vsub.s32 %v2760, %v2762
    %v2764 = vrot.slane %v59, %v2763
    %v2766 = vunpack.c.l.s4 1983009808
    %v2767 = vunpack.c.0.s8 %v2766
    %v2768 = vlaneseq
    %v2769 = vshrl.u32 %v2768, 7
    %v2770 = vsub.s32 %v2767, %v2769
    %v2771 = vrot.slane %v2757, %v2770
    %v2772 = vcombine.high %v2764, %v2764
    %v2773 = vcombine.high %v2771, %v2771
    %v2774 = vcombine.high %v60, %v60
    %v2776 = vunpack.c.l.s4 1983009808
    %v2777 = vunpack.c.0.s8 %v2776
    %v2778 = vlaneseq
    %v2779 = vshrl.u32 %v2778, 7
    %v2780 = vsub.s32 %v2777, %v2779
    %v2781 = vrot.slane %v60, %v2780
    %v2783 = vunpack.c.l.s4 1983009808
    %v2784 = vunpack.c.0.s8 %v2783
    %v2785 = vlaneseq
    %v2786 = vshrl.u32 %v2785, 7
    %v2787 = vsub.s32 %v2784, %v2786
    %v2788 = vrot.slane %v2774, %v2787
    %v2789 = vcombine.high %v2781, %v2781
    %vm2800 = vcmask 130048
    %v2801 = vsel %vm2800, %v2788, 0
    %2803 = vmatprep.subr.mxu0 %v62
    %2804 = vmatpush1.msra.mxu0 %v61
    %2805 = vmatprep.subr.mxu0 %v78
    %2806 = vmatpush1.msra.mxu0 %v77
    %2807 = vmatprep.subr.mxu0 %v94
    %2808 = vmatpush1.msra.mxu0 %v93
    %2809 = vmatprep.subr.mxu0 %v110
    %2810 = vmatpush1.msra.mxu0 %v109
    %2811 = vmatprep.subr.mxu0 %v126
    %2812 = vmatpush1.msra.mxu0 %v125
    %2813 = vmatprep.subr.mxu0 %v142
    %2814 = vmatpush1.msra.mxu0 %v141
    %2815 = vmatprep.subr.mxu0 %v158
    %2816 = vmatpush1.msra.mxu0 %v157
    %2817 = vmatprep.subr.mxu0 %v174
    %2818 = vmatpush1.msra.mxu0 %v173
    %2819 = vmatprep.subr.mxu0 %v190
    %2820 = vmatpush1.msra.mxu0 %v189
    %2821 = vmatprep.subr.mxu0 %v206
    %2822 = vmatpush1.msra.mxu0 %v205
    %2823 = vmatprep.subr.mxu0 %v222
    %2824 = vmatpush1.msra.mxu0 %v221
    %2825 = vmatprep.subr.mxu0 %v238
    %2826 = vmatpush1.msra.mxu0 %v237
    %2827 = vmatprep.subr.mxu0 %v254
    %2828 = vmatpush1.msra.mxu0 %v253
    %2829 = vmatprep.subr.mxu0 %v270
    %2830 = vmatpush1.msra.mxu0 %v269
    %2831 = vmatprep.subr.mxu0 %v286
    %2832 = vmatpush1.msra.mxu0 %v285
    %2833 = vmatprep.subr.mxu0 %v302
    %2834 = vmatpush1.msra.mxu0 %v301
    %2835 = vmatprep.subr.mxu0 %v318
    %2836 = vmatpush1.msra.mxu0 %v317
    %2837 = vmatprep.subr.mxu0 %v334
    %2838 = vmatpush1.msra.mxu0 %v333
    %2839 = vmatprep.subr.mxu0 %v350
    %2840 = vmatpush1.msra.mxu0 %v349
    %2841 = vmatprep.subr.mxu0 %v366
    %2842 = vmatpush1.msra.mxu0 %v365
    %2843 = vmatprep.subr.mxu0 %v382
    %2844 = vmatpush1.msra.mxu0 %v381
    %2845 = vmatprep.subr.mxu0 %v398
    %2846 = vmatpush1.msra.mxu0 %v397
    %2847 = vmatprep.subr.mxu0 %v414
    %2848 = vmatpush1.msra.mxu0 %v413
    %2849 = vmatprep.subr.mxu0 %v430
    %2850 = vmatpush1.msra.mxu0 %v429
    %2851 = vmatprep.subr.mxu0 %v446
    %2852 = vmatpush1.msra.mxu0 %v445
    %2853 = vmatprep.subr.mxu0 %v462
    %2854 = vmatpush1.msra.mxu0 %v461
    %2855 = vmatprep.subr.mxu0 %v478
    %2856 = vmatpush1.msra.mxu0 %v477
    %2857 = vmatprep.subr.mxu0 %v494
    %2858 = vmatpush1.msra.mxu0 %v493
    %2859 = vmatprep.subr.mxu0 %v510
    %2860 = vmatpush1.msra.mxu0 %v509
    %2861 = vmatprep.subr.mxu0 %v526
    %2862 = vmatpush1.msra.mxu0 %v525
    %2863 = vmatprep.subr.mxu0 %v542
    %2864 = vmatpush1.msra.mxu0 %v541
    %2865 = vmatprep.subr.mxu0 %v558
    %2866 = vmatpush1.msra.mxu0 %v557
    %2867 = vmatprep.mubr.f32.mxu0 %v2755
    %2868 = vmatmul.mubr.f32.gmra.mrb[0].mxu0 %v2747
    %v2869 = vpop.f32.mrb[0].mxu0
    %v2870 = vadd.f32 %v2660, %v2869
    %v2871 = vpop.f32.mrb[0].mxu0
    %v2872 = vadd.f32 %v2664, %v2871
    %2873 = vdwg.mxu0
    %2874 = vmatprep.subr.mxu0 %v574
    %2875 = vmatpush1.msra.mxu0 %v573
    %2876 = vmatprep.subr.mxu0 %v590
    %2877 = vmatpush1.msra.mxu0 %v589
    %2878 = vmatprep.subr.mxu0 %v606
    %2879 = vmatpush1.msra.mxu0 %v605
    %2880 = vmatprep.subr.mxu0 %v622
    %2881 = vmatpush1.msra.mxu0 %v621
    %2882 = vmatprep.subr.mxu0 %v638
    %2883 = vmatpush1.msra.mxu0 %v637
    %2884 = vmatprep.subr.mxu0 %v654
    %2885 = vmatpush1.msra.mxu0 %v653
    %2886 = vmatprep.subr.mxu0 %v670
    %2887 = vmatpush1.msra.mxu0 %v669
    %2888 = vmatprep.subr.mxu0 %v686
    %2889 = vmatpush1.msra.mxu0 %v685
    %2890 = vmatprep.subr.mxu0 %v702
    %2891 = vmatpush1.msra.mxu0 %v701
    %2892 = vmatprep.subr.mxu0 %v718
    %2893 = vmatpush1.msra.mxu0 %v717
    %2894 = vmatprep.subr.mxu0 %v734
    %2895 = vmatpush1.msra.mxu0 %v733
    %2896 = vmatprep.subr.mxu0 %v750
    %2897 = vmatpush1.msra.mxu0 %v749
    %2898 = vmatprep.subr.mxu0 %v766
    %2899 = vmatpush1.msra.mxu0 %v765
    %2900 = vmatprep.subr.mxu0 %v782
    %2901 = vmatpush1.msra.mxu0 %v781
    %2902 = vmatprep.subr.mxu0 %v798
    %2903 = vmatpush1.msra.mxu0 %v797
    %2904 = vmatprep.subr.mxu0 %v814
    %2905 = vmatpush1.msra.mxu0 %v813
    %2906 = vmatprep.subr.mxu0 %v830
    %2907 = vmatpush1.msra.mxu0 %v829
    %2908 = vmatprep.subr.mxu0 %v846
    %2909 = vmatpush1.msra.mxu0 %v845
    %2910 = vmatprep.subr.mxu0 %v862
    %2911 = vmatpush1.msra.mxu0 %v861
    %2912 = vmatprep.subr.mxu0 %v878
    %2913 = vmatpush1.msra.mxu0 %v877
    %2914 = vmatprep.subr.mxu0 %v894
    %2915 = vmatpush1.msra.mxu0 %v893
    %2916 = vmatprep.subr.mxu0 %v910
    %2917 = vmatpush1.msra.mxu0 %v909
    %2918 = vmatprep.subr.mxu0 %v926
    %2919 = vmatpush1.msra.mxu0 %v925
    %2920 = vmatprep.subr.mxu0 %v942
    %2921 = vmatpush1.msra.mxu0 %v941
    %2922 = vmatprep.subr.mxu0 %v958
    %2923 = vmatpush1.msra.mxu0 %v957
    %2924 = vmatprep.subr.mxu0 %v974
    %2925 = vmatpush1.msra.mxu0 %v973
    %2926 = vmatprep.subr.mxu0 %v990
    %2927 = vmatpush1.msra.mxu0 %v989
    %2928 = vmatprep.subr.mxu0 %v1006
    %2929 = vmatpush1.msra.mxu0 %v1005
    %2930 = vmatprep.subr.mxu0 %v1022
    %2931 = vmatpush1.msra.mxu0 %v1021
    %2932 = vmatprep.subr.mxu0 %v1038
    %2933 = vmatpush1.msra.mxu0 %v1037
    %2934 = vmatprep.subr.mxu0 %v1054
    %2935 = vmatpush1.msra.mxu0 %v1053
    %2936 = vmatprep.subr.mxu0 %v1070
    %2937 = vmatpush1.msra.mxu0 %v1069
    %2938 = vmatprep.mubr.f32.mxu0 %v2756
    %2939 = vmatmul.mubr.f32.gmra.mrb[0].mxu0 %v2754
    %v2940 = vpop.f32.mrb[0].mxu0
    %v2941 = vadd.f32 %v2870, %v2940
    %v2942 = vpop.f32.mrb[0].mxu0
    %v2943 = vadd.f32 %v2872, %v2942
    %2944 = vdwg.mxu0
    %2945 = vmatprep.subr.mxu0 %v1086
    %2946 = vmatpush1.msra.mxu0 %v1085
    %2947 = vmatprep.subr.mxu0 %v1102
    %2948 = vmatpush1.msra.mxu0 %v1101
    %2949 = vmatprep.subr.mxu0 %v1118
    %2950 = vmatpush1.msra.mxu0 %v1117
    %2951 = vmatprep.subr.mxu0 %v1134
    %2952 = vmatpush1.msra.mxu0 %v1133
    %2953 = vmatprep.subr.mxu0 %v1150
    %2954 = vmatpush1.msra.mxu0 %v1149
    %2955 = vmatprep.subr.mxu0 %v1166
    %2956 = vmatpush1.msra.mxu0 %v1165
    %2957 = vmatprep.subr.mxu0 %v1182
    %2958 = vmatpush1.msra.mxu0 %v1181
    %2959 = vmatprep.subr.mxu0 %v1198
    %2960 = vmatpush1.msra.mxu0 %v1197
    %2961 = vmatprep.subr.mxu0 %v1214
    %2962 = vmatpush1.msra.mxu0 %v1213
    %2963 = vmatprep.subr.mxu0 %v1230
    %2964 = vmatpush1.msra.mxu0 %v1229
    %2965 = vmatprep.subr.mxu0 %v1246
    %2966 = vmatpush1.msra.mxu0 %v1245
    %2967 = vmatprep.subr.mxu0 %v1262
    %2968 = vmatpush1.msra.mxu0 %v1261
    %2969 = vmatprep.subr.mxu0 %v1278
    %2970 = vmatpush1.msra.mxu0 %v1277
    %2971 = vmatprep.subr.mxu0 %v1294
    %2972 = vmatpush1.msra.mxu0 %v1293
    %2973 = vmatprep.subr.mxu0 %v1310
    %2974 = vmatpush1.msra.mxu0 %v1309
    %2975 = vmatprep.subr.mxu0 %v1326
    %2976 = vmatpush1.msra.mxu0 %v1325
    %2977 = vmatprep.subr.mxu0 %v1342
    %2978 = vmatpush1.msra.mxu0 %v1341
    %2979 = vmatprep.subr.mxu0 %v1358
    %2980 = vmatpush1.msra.mxu0 %v1357
    %2981 = vmatprep.subr.mxu0 %v1374
    %2982 = vmatpush1.msra.mxu0 %v1373
    %2983 = vmatprep.subr.mxu0 %v1390
    %2984 = vmatpush1.msra.mxu0 %v1389
    %2985 = vmatprep.subr.mxu0 %v1406
    %2986 = vmatpush1.msra.mxu0 %v1405
    %2987 = vmatprep.subr.mxu0 %v1422
    %2988 = vmatpush1.msra.mxu0 %v1421
    %2989 = vmatprep.subr.mxu0 %v1438
    %2990 = vmatpush1.msra.mxu0 %v1437
    %2991 = vmatprep.subr.mxu0 %v1454
    %2992 = vmatpush1.msra.mxu0 %v1453
    %2993 = vmatprep.subr.mxu0 %v1470
    %2994 = vmatpush1.msra.mxu0 %v1469
    %2995 = vmatprep.subr.mxu0 %v1486
    %2996 = vmatpush1.msra.mxu0 %v1485
    %2997 = vmatprep.subr.mxu0 %v1502
    %2998 = vmatpush1.msra.mxu0 %v1501
    %2999 = vmatprep.subr.mxu0 %v1518
    %3000 = vmatpush1.msra.mxu0 %v1517
    %3001 = vmatprep.subr.mxu0 %v1534
    %3002 = vmatpush1.msra.mxu0 %v1533
    %3003 = vmatprep.subr.mxu0 %v1550
    %3004 = vmatpush1.msra.mxu0 %v1549
    %3005 = vmatprep.subr.mxu0 %v1566
    %3006 = vmatpush1.msra.mxu0 %v1565
    %3007 = vmatprep.subr.mxu0 %v1582
    %3008 = vmatpush1.msra.mxu0 %v1581
    %3009 = vmatprep.mubr.f32.mxu0 %v2772
    %3010 = vmatmul.mubr.f32.gmra.mrb[0].mxu0 %v2764
    %v3011 = vpop.f32.mrb[0].mxu0
    %v3012 = vadd.f32 %v2941, %v3011
    %v3013 = vpop.f32.mrb[0].mxu0
    %v3014 = vadd.f32 %v2943, %v3013
    %3015 = vdwg.mxu0
    %3016 = vmatprep.subr.mxu0 %v1598
    %3017 = vmatpush1.msra.mxu0 %v1597
    %3018 = vmatprep.subr.mxu0 %v1614
    %3019 = vmatpush1.msra.mxu0 %v1613
    %3020 = vmatprep.subr.mxu0 %v1630
    %3021 = vmatpush1.msra.mxu0 %v1629
    %3022 = vmatprep.subr.mxu0 %v1646
    %3023 = vmatpush1.msra.mxu0 %v1645
    %3024 = vmatprep.subr.mxu0 %v1662
    %3025 = vmatpush1.msra.mxu0 %v1661
    %3026 = vmatprep.subr.mxu0 %v1678
    %3027 = vmatpush1.msra.mxu0 %v1677
    %3028 = vmatprep.subr.mxu0 %v1694
    %3029 = vmatpush1.msra.mxu0 %v1693
    %3030 = vmatprep.subr.mxu0 %v1710
    %3031 = vmatpush1.msra.mxu0 %v1709
    %3032 = vmatprep.subr.mxu0 %v1726
    %3033 = vmatpush1.msra.mxu0 %v1725
    %3034 = vmatprep.subr.mxu0 %v1742
    %3035 = vmatpush1.msra.mxu0 %v1741
    %3036 = vmatprep.subr.mxu0 %v1758
    %3037 = vmatpush1.msra.mxu0 %v1757
    %3038 = vmatprep.subr.mxu0 %v1774
    %3039 = vmatpush1.msra.mxu0 %v1773
    %3040 = vmatprep.subr.mxu0 %v1790
    %3041 = vmatpush1.msra.mxu0 %v1789
    %3042 = vmatprep.subr.mxu0 %v1806
    %3043 = vmatpush1.msra.mxu0 %v1805
    %3044 = vmatprep.subr.mxu0 %v1822
    %3045 = vmatpush1.msra.mxu0 %v1821
    %3046 = vmatprep.subr.mxu0 %v1838
    %3047 = vmatpush1.msra.mxu0 %v1837
    %3048 = vmatprep.subr.mxu0 %v1854
    %3049 = vmatpush1.msra.mxu0 %v1853
    %3050 = vmatprep.subr.mxu0 %v1870
    %3051 = vmatpush1.msra.mxu0 %v1869
    %3052 = vmatprep.subr.mxu0 %v1886
    %3053 = vmatpush1.msra.mxu0 %v1885
    %3054 = vmatprep.subr.mxu0 %v1902
    %3055 = vmatpush1.msra.mxu0 %v1901
    %3056 = vmatprep.subr.mxu0 %v1918
    %3057 = vmatpush1.msra.mxu0 %v1917
    %3058 = vmatprep.subr.mxu0 %v1934
    %3059 = vmatpush1.msra.mxu0 %v1933
    %3060 = vmatprep.subr.mxu0 %v1950
    %3061 = vmatpush1.msra.mxu0 %v1949
    %3062 = vmatprep.subr.mxu0 %v1966
    %3063 = vmatpush1.msra.mxu0 %v1965
    %3064 = vmatprep.subr.mxu0 %v1982
    %3065 = vmatpush1.msra.mxu0 %v1981
    %3066 = vmatprep.subr.mxu0 %v1998
    %3067 = vmatpush1.msra.mxu0 %v1997
    %3068 = vmatprep.subr.mxu0 %v2014
    %3069 = vmatpush1.msra.mxu0 %v2013
    %3070 = vmatprep.subr.mxu0 %v2030
    %3071 = vmatpush1.msra.mxu0 %v2029
    %3072 = vmatprep.subr.mxu0 %v2046
    %3073 = vmatpush1.msra.mxu0 %v2045
    %3074 = vmatprep.subr.mxu0 %v2062
    %3075 = vmatpush1.msra.mxu0 %v2061
    %3076 = vmatprep.subr.mxu0 %v2078
    %3077 = vmatpush1.msra.mxu0 %v2077
    %3078 = vmatprep.subr.mxu0 %v2094
    %3079 = vmatpush1.msra.mxu0 %v2093
    %3080 = vmatprep.mubr.f32.mxu0 %v2773
    %3081 = vmatmul.mubr.f32.gmra.mrb[0].mxu0 %v2771
    %v3082 = vpop.f32.mrb[0].mxu0
    %v3083 = vadd.f32 %v3012, %v3082
    %v3084 = vpop.f32.mrb[0].mxu0
    %v3085 = vadd.f32 %v3014, %v3084
    %3086 = vdwg.mxu0
    %3087 = vmatprep.subr.mxu0 %v2110
    %3088 = vmatpush1.msra.mxu0 %v2109
    %3089 = vmatprep.subr.mxu0 %v2126
    %3090 = vmatpush1.msra.mxu0 %v2125
    %3091 = vmatprep.subr.mxu0 %v2142
    %3092 = vmatpush1.msra.mxu0 %v2141
    %3093 = vmatprep.subr.mxu0 %v2158
    %3094 = vmatpush1.msra.mxu0 %v2157
    %3095 = vmatprep.subr.mxu0 %v2174
    %3096 = vmatpush1.msra.mxu0 %v2173
    %3097 = vmatprep.subr.mxu0 %v2190
    %3098 = vmatpush1.msra.mxu0 %v2189
    %3099 = vmatprep.subr.mxu0 %v2206
    %3100 = vmatpush1.msra.mxu0 %v2205
    %3101 = vmatprep.subr.mxu0 %v2222
    %3102 = vmatpush1.msra.mxu0 %v2221
    %3103 = vmatprep.subr.mxu0 %v2238
    %3104 = vmatpush1.msra.mxu0 %v2237
    %3105 = vmatprep.subr.mxu0 %v2254
    %3106 = vmatpush1.msra.mxu0 %v2253
    %3107 = vmatprep.subr.mxu0 %v2270
    %3108 = vmatpush1.msra.mxu0 %v2269
    %3109 = vmatprep.subr.mxu0 %v2286
    %3110 = vmatpush1.msra.mxu0 %v2285
    %3111 = vmatprep.subr.mxu0 %v2302
    %3112 = vmatpush1.msra.mxu0 %v2301
    %3113 = vmatprep.subr.mxu0 %v2318
    %3114 = vmatpush1.msra.mxu0 %v2317
    %3115 = vmatprep.subr.mxu0 %v2334
    %3116 = vmatpush1.msra.mxu0 %v2333
    %3117 = vmatprep.subr.mxu0 %v2350
    %3118 = vmatpush1.msra.mxu0 %v2349
    %3119 = vmatprep.subr.mxu0 %v2366
    %3120 = vmatpush1.msra.mxu0 %v2365
    %3121 = vmatprep.subr.mxu0 %v2382
    %3122 = vmatpush1.msra.mxu0 %v2381
    %3123 = vmatprep.subr.mxu0 %v2398
    %3124 = vmatpush1.msra.mxu0 %v2397
    %3125 = vmatprep.subr.mxu0 %v2414
    %3126 = vmatpush1.msra.mxu0 %v2413
    %3127 = vmatprep.subr.mxu0 %v2430
    %3128 = vmatpush1.msra.mxu0 %v2429
    %3129 = vmatprep.subr.mxu0 %v2446
    %3130 = vmatpush1.msra.mxu0 %v2445
    %3131 = vmatprep.subr.mxu0 %v2462
    %3132 = vmatpush1.msra.mxu0 %v2461
    %3133 = vmatprep.subr.mxu0 %v2478
    %3134 = vmatpush1.msra.mxu0 %v2477
    %3135 = vmatprep.subr.mxu0 %v2494
    %3136 = vmatpush1.msra.mxu0 %v2493
    %3137 = vmatprep.subr.mxu0 %v2510
    %3138 = vmatpush1.msra.mxu0 %v2509
    %3139 = vmatprep.subr.mxu0 %v2526
    %3140 = vmatpush1.msra.mxu0 %v2525
    %3141 = vmatprep.subr.mxu0 %v2542
    %3142 = vmatpush1.msra.mxu0 %v2541
    %3143 = vmatprep.subr.mxu0 %v2558
    %3144 = vmatpush1.msra.mxu0 %v2557
    %3145 = vmatprep.subr.mxu0 %v2574
    %3146 = vmatpush1.msra.mxu0 %v2573
    %3147 = vmatprep.subr.mxu0 %v2590
    %3148 = vmatpush1.msra.mxu0 %v2589
    %3149 = vmatprep.subr.mxu0 %v2606
    %3150 = vmatpush1.msra.mxu0 %v2605
    %3151 = vmatprep.mubr.f32.mxu0 %v2789
    %3152 = vmatmul.mubr.f32.gmra.mrb[0].mxu0 %v2781
    %v3153 = vpop.f32.mrb[0].mxu0
    %v3154 = vadd.f32 %v3083, %v3153
    %v3155 = vpop.f32.mrb[0].mxu0
    %v3156 = vadd.f32 %v3085, %v3155
    %3157 = vdwg.mxu0
    %3158 = vmatprep.subr.mxu0 %v2622
    %3159 = vmatpush1.msra.mxu0 %v2621
    %3160 = vmatprep.subr.mxu0 %v2638
    %3161 = vmatpush1.msra.mxu0 %v2637
    %3162 = vmatprep.subr.mxu0 0.0
    %3163 = vmatpush1.msra.mxu0 0.0
    %3164 = vmatprep.subr.mxu0 0.0
    %3165 = vmatpush1.msra.mxu0 0.0
    %3166 = vmatprep.subr.mxu0 0.0
    %3167 = vmatpush1.msra.mxu0 0.0
    %3168 = vmatprep.subr.mxu0 0.0
    %3169 = vmatpush1.msra.mxu0 0.0
    %3170 = vmatprep.subr.mxu0 0.0
    %3171 = vmatpush1.msra.mxu0 0.0
    %3172 = vmatprep.subr.mxu0 0.0
    %3173 = vmatpush1.msra.mxu0 0.0
    %3174 = vmatprep.subr.mxu0 0.0
    %3175 = vmatpush1.msra.mxu0 0.0
    %3176 = vmatprep.subr.mxu0 0.0
    %3177 = vmatpush1.msra.mxu0 0.0
    %3178 = vmatprep.subr.mxu0 0.0
    %3179 = vmatpush1.msra.mxu0 0.0
    %3180 = vmatprep.subr.mxu0 0.0
    %3181 = vmatpush1.msra.mxu0 0.0
    %3182 = vmatprep.subr.mxu0 0.0
    %3183 = vmatpush1.msra.mxu0 0.0
    %3184 = vmatprep.subr.mxu0 0.0
    %3185 = vmatpush1.msra.mxu0 0.0
    %3186 = vmatprep.subr.mxu0 0.0
    %3187 = vmatpush1.msra.mxu0 0.0
    %3188 = vmatprep.subr.mxu0 0.0
    %3189 = vmatpush1.msra.mxu0 0.0
    %3190 = vmatprep.subr.mxu0 0.0
    %3191 = vmatpush1.msra.mxu0 0.0
    %3192 = vmatprep.subr.mxu0 0.0
    %3193 = vmatpush1.msra.mxu0 0.0
    %3194 = vmatprep.subr.mxu0 0.0
    %3195 = vmatpush1.msra.mxu0 0.0
    %3196 = vmatprep.subr.mxu0 0.0
    %3197 = vmatpush1.msra.mxu0 0.0
    %3198 = vmatprep.subr.mxu0 0.0
    %3199 = vmatpush1.msra.mxu0 0.0
    %3200 = vmatprep.subr.mxu0 0.0
    %3201 = vmatpush1.msra.mxu0 0.0
    %3202 = vmatprep.subr.mxu0 0.0
    %3203 = vmatpush1.msra.mxu0 0.0
    %3204 = vmatprep.subr.mxu0 0.0
    %3205 = vmatpush1.msra.mxu0 0.0
    %3206 = vmatprep.subr.mxu0 0.0
    %3207 = vmatpush1.msra.mxu0 0.0
    %3208 = vmatprep.subr.mxu0 0.0
    %3209 = vmatpush1.msra.mxu0 0.0
    %3210 = vmatprep.subr.mxu0 0.0
    %3211 = vmatpush1.msra.mxu0 0.0
    %3212 = vmatprep.subr.mxu0 0.0
    %3213 = vmatpush1.msra.mxu0 0.0
    %3214 = vmatprep.subr.mxu0 0.0
    %3215 = vmatpush1.msra.mxu0 0.0
    %3216 = vmatprep.subr.mxu0 0.0
    %3217 = vmatpush1.msra.mxu0 0.0
    %3218 = vmatprep.subr.mxu0 0.0
    %3219 = vmatpush1.msra.mxu0 0.0
    %3220 = vmatprep.subr.mxu0 0.0
    %3221 = vmatpush1.msra.mxu0 0.0
    %3222 = vmatprep.mubr.f32.mxu0 0.0
    %3223 = vmatmul.mubr.f32.gmra.mrb[0].mxu0 %v2801
    %v3224 = vpop.f32.mrb[0].mxu0
    %v3225 = vadd.f32 %v3154, %v3224
    %v3226 = vpop.f32.mrb[0].mxu0
    %v3227 = vadd.f32 %v3156, %v3226
    %3228 = vdwg.mxu0
    %3229 = vmatprep.subr.mxu0 %v64
    %3230 = vmatpush1.msra.mxu0 %v63
    %3231 = vmatprep.subr.mxu0 %v80
    %3232 = vmatpush1.msra.mxu0 %v79
    %3233 = vmatprep.subr.mxu0 %v96
    %3234 = vmatpush1.msra.mxu0 %v95
    %3235 = vmatprep.subr.mxu0 %v112
    %3236 = vmatpush1.msra.mxu0 %v111
    %3237 = vmatprep.subr.mxu0 %v128
    %3238 = vmatpush1.msra.mxu0 %v127
    %3239 = vmatprep.subr.mxu0 %v144
    %3240 = vmatpush1.msra.mxu0 %v143
    %3241 = vmatprep.subr.mxu0 %v160
    %3242 = vmatpush1.msra.mxu0 %v159
    %3243 = vmatprep.subr.mxu0 %v176
    %3244 = vmatpush1.msra.mxu0 %v175
    %3245 = vmatprep.subr.mxu0 %v192
    %3246 = vmatpush1.msra.mxu0 %v191
    %3247 = vmatprep.subr.mxu0 %v208
    %3248 = vmatpush1.msra.mxu0 %v207
    %3249 = vmatprep.subr.mxu0 %v224
    %3250 = vmatpush1.msra.mxu0 %v223
    %3251 = vmatprep.subr.mxu0 %v240
    %3252 = vmatpush1.msra.mxu0 %v239
    %3253 = vmatprep.subr.mxu0 %v256
    %3254 = vmatpush1.msra.mxu0 %v255
    %3255 = vmatprep.subr.mxu0 %v272
    %3256 = vmatpush1.msra.mxu0 %v271
    %3257 = vmatprep.subr.mxu0 %v288
    %3258 = vmatpush1.msra.mxu0 %v287
    %3259 = vmatprep.subr.mxu0 %v304
    %3260 = vmatpush1.msra.mxu0 %v303
    %3261 = vmatprep.subr.mxu0 %v320
    %3262 = vmatpush1.msra.mxu0 %v319
    %3263 = vmatprep.subr.mxu0 %v336
    %3264 = vmatpush1.msra.mxu0 %v335
    %3265 = vmatprep.subr.mxu0 %v352
    %3266 = vmatpush1.msra.mxu0 %v351
    %3267 = vmatprep.subr.mxu0 %v368
    %3268 = vmatpush1.msra.mxu0 %v367
    %3269 = vmatprep.subr.mxu0 %v384
    %3270 = vmatpush1.msra.mxu0 %v383
    %3271 = vmatprep.subr.mxu0 %v400
    %3272 = vmatpush1.msra.mxu0 %v399
    %3273 = vmatprep.subr.mxu0 %v416
    %3274 = vmatpush1.msra.mxu0 %v415
    %3275 = vmatprep.subr.mxu0 %v432
    %3276 = vmatpush1.msra.mxu0 %v431
    %3277 = vmatprep.subr.mxu0 %v448
    %3278 = vmatpush1.msra.mxu0 %v447
    %3279 = vmatprep.subr.mxu0 %v464
    %3280 = vmatpush1.msra.mxu0 %v463
    %3281 = vmatprep.subr.mxu0 %v480
    %3282 = vmatpush1.msra.mxu0 %v479
    %3283 = vmatprep.subr.mxu0 %v496
    %3284 = vmatpush1.msra.mxu0 %v495
    %3285 = vmatprep.subr.mxu0 %v512
    %3286 = vmatpush1.msra.mxu0 %v511
    %3287 = vmatprep.subr.mxu0 %v528
    %3288 = vmatpush1.msra.mxu0 %v527
    %3289 = vmatprep.subr.mxu0 %v544
    %3290 = vmatpush1.msra.mxu0 %v543
    %3291 = vmatprep.subr.mxu0 %v560
    %3292 = vmatpush1.msra.mxu0 %v559
    %3293 = vmatprep.mubr.f32.mxu0 %v2755
    %3294 = vmatmul.mubr.f32.gmra.mrb[0].mxu0 %v2747
    %v3295 = vpop.f32.mrb[0].mxu0
    %v3296 = vadd.f32 %v2668, %v3295
    %v3297 = vpop.f32.mrb[0].mxu0
    %v3298 = vadd.f32 %v2672, %v3297
    %3299 = vdwg.mxu0
    %3300 = vmatprep.subr.mxu0 %v576
    %3301 = vmatpush1.msra.mxu0 %v575
    %3302 = vmatprep.subr.mxu0 %v592
    %3303 = vmatpush1.msra.mxu0 %v591
    %3304 = vmatprep.subr.mxu0 %v608
    %3305 = vmatpush1.msra.mxu0 %v607
    %3306 = vmatprep.subr.mxu0 %v624
    %3307 = vmatpush1.msra.mxu0 %v623
    %3308 = vmatprep.subr.mxu0 %v640
    %3309 = vmatpush1.msra.mxu0 %v639
    %3310 = vmatprep.subr.mxu0 %v656
    %3311 = vmatpush1.msra.mxu0 %v655
    %3312 = vmatprep.subr.mxu0 %v672
    %3313 = vmatpush1.msra.mxu0 %v671
    %3314 = vmatprep.subr.mxu0 %v688
    %3315 = vmatpush1.msra.mxu0 %v687
    %3316 = vmatprep.subr.mxu0 %v704
    %3317 = vmatpush1.msra.mxu0 %v703
    %3318 = vmatprep.subr.mxu0 %v720
    %3319 = vmatpush1.msra.mxu0 %v719
    %3320 = vmatprep.subr.mxu0 %v736
    %3321 = vmatpush1.msra.mxu0 %v735
    %3322 = vmatprep.subr.mxu0 %v752
    %3323 = vmatpush1.msra.mxu0 %v751
    %3324 = vmatprep.subr.mxu0 %v768
    %3325 = vmatpush1.msra.mxu0 %v767
    %3326 = vmatprep.subr.mxu0 %v784
    %3327 = vmatpush1.msra.mxu0 %v783
    %3328 = vmatprep.subr.mxu0 %v800
    %3329 = vmatpush1.msra.mxu0 %v799
    %3330 = vmatprep.subr.mxu0 %v816
    %3331 = vmatpush1.msra.mxu0 %v815
    %3332 = vmatprep.subr.mxu0 %v832
    %3333 = vmatpush1.msra.mxu0 %v831
    %3334 = vmatprep.subr.mxu0 %v848
    %3335 = vmatpush1.msra.mxu0 %v847
    %3336 = vmatprep.subr.mxu0 %v864
    %3337 = vmatpush1.msra.mxu0 %v863
    %3338 = vmatprep.subr.mxu0 %v880
    %3339 = vmatpush1.msra.mxu0 %v879
    %3340 = vmatprep.subr.mxu0 %v896
    %3341 = vmatpush1.msra.mxu0 %v895
    %3342 = vmatprep.subr.mxu0 %v912
    %3343 = vmatpush1.msra.mxu0 %v911
    %3344 = vmatprep.subr.mxu0 %v928
    %3345 = vmatpush1.msra.mxu0 %v927
    %3346 = vmatprep.subr.mxu0 %v944
    %3347 = vmatpush1.msra.mxu0 %v943
    %3348 = vmatprep.subr.mxu0 %v960
    %3349 = vmatpush1.msra.mxu0 %v959
    %3350 = vmatprep.subr.mxu0 %v976
    %3351 = vmatpush1.msra.mxu0 %v975
    %3352 = vmatprep.subr.mxu0 %v992
    %3353 = vmatpush1.msra.mxu0 %v991
    %3354 = vmatprep.subr.mxu0 %v1008
    %3355 = vmatpush1.msra.mxu0 %v1007
    %3356 = vmatprep.subr.mxu0 %v1024
    %3357 = vmatpush1.msra.mxu0 %v1023
    %3358 = vmatprep.subr.mxu0 %v1040
    %3359 = vmatpush1.msra.mxu0 %v1039
    %3360 = vmatprep.subr.mxu0 %v1056
    %3361 = vmatpush1.msra.mxu0 %v1055
    %3362 = vmatprep.subr.mxu0 %v1072
    %3363 = vmatpush1.msra.mxu0 %v1071
    %3364 = vmatprep.mubr.f32.mxu0 %v2756
    %3365 = vmatmul.mubr.f32.gmra.mrb[0].mxu0 %v2754
    %v3366 = vpop.f32.mrb[0].mxu0
    %v3367 = vadd.f32 %v3296, %v3366
    %v3368 = vpop.f32.mrb[0].mxu0
    %v3369 = vadd.f32 %v3298, %v3368
    %3370 = vdwg.mxu0
    %3371 = vmatprep.subr.mxu0 %v1088
    %3372 = vmatpush1.msra.mxu0 %v1087
    %3373 = vmatprep.subr.mxu0 %v1104
    %3374 = vmatpush1.msra.mxu0 %v1103
    %3375 = vmatprep.subr.mxu0 %v1120
    %3376 = vmatpush1.msra.mxu0 %v1119
    %3377 = vmatprep.subr.mxu0 %v1136
    %3378 = vmatpush1.msra.mxu0 %v1135
    %3379 = vmatprep.subr.mxu0 %v1152
    %3380 = vmatpush1.msra.mxu0 %v1151
    %3381 = vmatprep.subr.mxu0 %v1168
    %3382 = vmatpush1.msra.mxu0 %v1167
    %3383 = vmatprep.subr.mxu0 %v1184
    %3384 = vmatpush1.msra.mxu0 %v1183
    %3385 = vmatprep.subr.mxu0 %v1200
    %3386 = vmatpush1.msra.mxu0 %v1199
    %3387 = vmatprep.subr.mxu0 %v1216
    %3388 = vmatpush1.msra.mxu0 %v1215
    %3389 = vmatprep.subr.mxu0 %v1232
    %3390 = vmatpush1.msra.mxu0 %v1231
    %3391 = vmatprep.subr.mxu0 %v1248
    %3392 = vmatpush1.msra.mxu0 %v1247
    %3393 = vmatprep.subr.mxu0 %v1264
    %3394 = vmatpush1.msra.mxu0 %v1263
    %3395 = vmatprep.subr.mxu0 %v1280
    %3396 = vmatpush1.msra.mxu0 %v1279
    %3397 = vmatprep.subr.mxu0 %v1296
    %3398 = vmatpush1.msra.mxu0 %v1295
    %3399 = vmatprep.subr.mxu0 %v1312
    %3400 = vmatpush1.msra.mxu0 %v1311
    %3401 = vmatprep.subr.mxu0 %v1328
    %3402 = vmatpush1.msra.mxu0 %v1327
    %3403 = vmatprep.subr.mxu0 %v1344
    %3404 = vmatpush1.msra.mxu0 %v1343
    %3405 = vmatprep.subr.mxu0 %v1360
    %3406 = vmatpush1.msra.mxu0 %v1359
    %3407 = vmatprep.subr.mxu0 %v1376
    %3408 = vmatpush1.msra.mxu0 %v1375
    %3409 = vmatprep.subr.mxu0 %v1392
    %3410 = vmatpush1.msra.mxu0 %v1391
    %3411 = vmatprep.subr.mxu0 %v1408
    %3412 = vmatpush1.msra.mxu0 %v1407
    %3413 = vmatprep.subr.mxu0 %v1424
    %3414 = vmatpush1.msra.mxu0 %v1423
    %3415 = vmatprep.subr.mxu0 %v1440
    %3416 = vmatpush1.msra.mxu0 %v1439
    %3417 = vmatprep.subr.mxu0 %v1456
    %3418 = vmatpush1.msra.mxu0 %v1455
    %3419 = vmatprep.subr.mxu0 %v1472
    %3420 = vmatpush1.msra.mxu0 %v1471
    %3421 = vmatprep.subr.mxu0 %v1488
    %3422 = vmatpush1.msra.mxu0 %v1487
    %3423 = vmatprep.subr.mxu0 %v1504
    %3424 = vmatpush1.msra.mxu0 %v1503
    %3425 = vmatprep.subr.mxu0 %v1520
    %3426 = vmatpush1.msra.mxu0 %v1519
    %3427 = vmatprep.subr.mxu0 %v1536
    %3428 = vmatpush1.msra.mxu0 %v1535
    %3429 = vmatprep.subr.mxu0 %v1552
    %3430 = vmatpush1.msra.mxu0 %v1551
    %3431 = vmatprep.subr.mxu0 %v1568
    %3432 = vmatpush1.msra.mxu0 %v1567
    %3433 = vmatprep.subr.mxu0 %v1584
    %3434 = vmatpush1.msra.mxu0 %v1583
    %3435 = vmatprep.mubr.f32.mxu0 %v2772
    %3436 = vmatmul.mubr.f32.gmra.mrb[0].mxu0 %v2764
    %v3437 = vpop.f32.mrb[0].mxu0
    %v3438 = vadd.f32 %v3367, %v3437
    %v3439 = vpop.f32.mrb[0].mxu0
    %v3440 = vadd.f32 %v3369, %v3439
    %3441 = vdwg.mxu0
    %3442 = vmatprep.subr.mxu0 %v1600
    %3443 = vmatpush1.msra.mxu0 %v1599
    %3444 = vmatprep.subr.mxu0 %v1616
    %3445 = vmatpush1.msra.mxu0 %v1615
    %3446 = vmatprep.subr.mxu0 %v1632
    %3447 = vmatpush1.msra.mxu0 %v1631
    %3448 = vmatprep.subr.mxu0 %v1648
    %3449 = vmatpush1.msra.mxu0 %v1647
    %3450 = vmatprep.subr.mxu0 %v1664
    %3451 = vmatpush1.msra.mxu0 %v1663
    %3452 = vmatprep.subr.mxu0 %v1680
    %3453 = vmatpush1.msra.mxu0 %v1679
    %3454 = vmatprep.subr.mxu0 %v1696
    %3455 = vmatpush1.msra.mxu0 %v1695
    %3456 = vmatprep.subr.mxu0 %v1712
    %3457 = vmatpush1.msra.mxu0 %v1711
    %3458 = vmatprep.subr.mxu0 %v1728
    %3459 = vmatpush1.msra.mxu0 %v1727
    %3460 = vmatprep.subr.mxu0 %v1744
    %3461 = vmatpush1.msra.mxu0 %v1743
    %3462 = vmatprep.subr.mxu0 %v1760
    %3463 = vmatpush1.msra.mxu0 %v1759
    %3464 = vmatprep.subr.mxu0 %v1776
    %3465 = vmatpush1.msra.mxu0 %v1775
    %3466 = vmatprep.subr.mxu0 %v1792
    %3467 = vmatpush1.msra.mxu0 %v1791
    %3468 = vmatprep.subr.mxu0 %v1808
    %3469 = vmatpush1.msra.mxu0 %v1807
    %3470 = vmatprep.subr.mxu0 %v1824
    %3471 = vmatpush1.msra.mxu0 %v1823
    %3472 = vmatprep.subr.mxu0 %v1840
    %3473 = vmatpush1.msra.mxu0 %v1839
    %3474 = vmatprep.subr.mxu0 %v1856
    %3475 = vmatpush1.msra.mxu0 %v1855
    %3476 = vmatprep.subr.mxu0 %v1872
    %3477 = vmatpush1.msra.mxu0 %v1871
    %3478 = vmatprep.subr.mxu0 %v1888
    %3479 = vmatpush1.msra.mxu0 %v1887
    %3480 = vmatprep.subr.mxu0 %v1904
    %3481 = vmatpush1.msra.mxu0 %v1903
    %3482 = vmatprep.subr.mxu0 %v1920
    %3483 = vmatpush1.msra.mxu0 %v1919
    %3484 = vmatprep.subr.mxu0 %v1936
    %3485 = vmatpush1.msra.mxu0 %v1935
    %3486 = vmatprep.subr.mxu0 %v1952
    %3487 = vmatpush1.msra.mxu0 %v1951
    %3488 = vmatprep.subr.mxu0 %v1968
    %3489 = vmatpush1.msra.mxu0 %v1967
    %3490 = vmatprep.subr.mxu0 %v1984
    %3491 = vmatpush1.msra.mxu0 %v1983
    %3492 = vmatprep.subr.mxu0 %v2000
    %3493 = vmatpush1.msra.mxu0 %v1999
    %3494 = vmatprep.subr.mxu0 %v2016
    %3495 = vmatpush1.msra.mxu0 %v2015
    %3496 = vmatprep.subr.mxu0 %v2032
    %3497 = vmatpush1.msra.mxu0 %v2031
    %3498 = vmatprep.subr.mxu0 %v2048
    %3499 = vmatpush1.msra.mxu0 %v2047
    %3500 = vmatprep.subr.mxu0 %v2064
    %3501 = vmatpush1.msra.mxu0 %v2063
    %3502 = vmatprep.subr.mxu0 %v2080
    %3503 = vmatpush1.msra.mxu0 %v2079
    %3504 = vmatprep.subr.mxu0 %v2096
    %3505 = vmatpush1.msra.mxu0 %v2095
    %3506 = vmatprep.mubr.f32.mxu0 %v2773
    %3507 = vmatmul.mubr.f32.gmra.mrb[0].mxu0 %v2771
    %v3508 = vpop.f32.mrb[0].mxu0
    %v3509 = vadd.f32 %v3438, %v3508
    %v3510 = vpop.f32.mrb[0].mxu0
    %v3511 = vadd.f32 %v3440, %v3510
    %3512 = vdwg.mxu0
    %3513 = vmatprep.subr.mxu0 %v2112
    %3514 = vmatpush1.msra.mxu0 %v2111
    %3515 = vmatprep.subr.mxu0 %v2128
    %3516 = vmatpush1.msra.mxu0 %v2127
    %3517 = vmatprep.subr.mxu0 %v2144
    %3518 = vmatpush1.msra.mxu0 %v2143
    %3519 = vmatprep.subr.mxu0 %v2160
    %3520 = vmatpush1.msra.mxu0 %v2159
    %3521 = vmatprep.subr.mxu0 %v2176
    %3522 = vmatpush1.msra.mxu0 %v2175
    %3523 = vmatprep.subr.mxu0 %v2192
    %3524 = vmatpush1.msra.mxu0 %v2191
    %3525 = vmatprep.subr.mxu0 %v2208
    %3526 = vmatpush1.msra.mxu0 %v2207
    %3527 = vmatprep.subr.mxu0 %v2224
    %3528 = vmatpush1.msra.mxu0 %v2223
    %3529 = vmatprep.subr.mxu0 %v2240
    %3530 = vmatpush1.msra.mxu0 %v2239
    %3531 = vmatprep.subr.mxu0 %v2256
    %3532 = vmatpush1.msra.mxu0 %v2255
    %3533 = vmatprep.subr.mxu0 %v2272
    %3534 = vmatpush1.msra.mxu0 %v2271
    %3535 = vmatprep.subr.mxu0 %v2288
    %3536 = vmatpush1.msra.mxu0 %v2287
    %3537 = vmatprep.subr.mxu0 %v2304
    %3538 = vmatpush1.msra.mxu0 %v2303
    %3539 = vmatprep.subr.mxu0 %v2320
    %3540 = vmatpush1.msra.mxu0 %v2319
    %3541 = vmatprep.subr.mxu0 %v2336
    %3542 = vmatpush1.msra.mxu0 %v2335
    %3543 = vmatprep.subr.mxu0 %v2352
    %3544 = vmatpush1.msra.mxu0 %v2351
    %3545 = vmatprep.subr.mxu0 %v2368
    %3546 = vmatpush1.msra.mxu0 %v2367
    %3547 = vmatprep.subr.mxu0 %v2384
    %3548 = vmatpush1.msra.mxu0 %v2383
    %3549 = vmatprep.subr.mxu0 %v2400
    %3550 = vmatpush1.msra.mxu0 %v2399
    %3551 = vmatprep.subr.mxu0 %v2416
    %3552 = vmatpush1.msra.mxu0 %v2415
    %3553 = vmatprep.subr.mxu0 %v2432
    %3554 = vmatpush1.msra.mxu0 %v2431
    %3555 = vmatprep.subr.mxu0 %v2448
    %3556 = vmatpush1.msra.mxu0 %v2447
    %3557 = vmatprep.subr.mxu0 %v2464
    %3558 = vmatpush1.msra.mxu0 %v2463
    %3559 = vmatprep.subr.mxu0 %v2480
    %3560 = vmatpush1.msra.mxu0 %v2479
    %3561 = vmatprep.subr.mxu0 %v2496
    %3562 = vmatpush1.msra.mxu0 %v2495
    %3563 = vmatprep.subr.mxu0 %v2512
    %3564 = vmatpush1.msra.mxu0 %v2511
    %3565 = vmatprep.subr.mxu0 %v2528
    %3566 = vmatpush1.msra.mxu0 %v2527
    %3567 = vmatprep.subr.mxu0 %v2544
    %3568 = vmatpush1.msra.mxu0 %v2543
    %3569 = vmatprep.subr.mxu0 %v2560
    %3570 = vmatpush1.msra.mxu0 %v2559
    %3571 = vmatprep.subr.mxu0 %v2576
    %3572 = vmatpush1.msra.mxu0 %v2575
    %3573 = vmatprep.subr.mxu0 %v2592
    %3574 = vmatpush1.msra.mxu0 %v2591
    %3575 = vmatprep.subr.mxu0 %v2608
    %3576 = vmatpush1.msra.mxu0 %v2607
    %3577 = vmatprep.mubr.f32.mxu0 %v2789
    %3578 = vmatmul.mubr.f32.gmra.mrb[0].mxu0 %v2781
    %v3579 = vpop.f32.mrb[0].mxu0
    %v3580 = vadd.f32 %v3509, %v3579
    %v3581 = vpop.f32.mrb[0].mxu0
    %v3582 = vadd.f32 %v3511, %v3581
    %3583 = vdwg.mxu0
    %3584 = vmatprep.subr.mxu0 %v2624
    %3585 = vmatpush1.msra.mxu0 %v2623
    %3586 = vmatprep.subr.mxu0 %v2640
    %3587 = vmatpush1.msra.mxu0 %v2639
    %3588 = vmatprep.subr.mxu0 0.0
    %3589 = vmatpush1.msra.mxu0 0.0
    %3590 = vmatprep.subr.mxu0 0.0
    %3591 = vmatpush1.msra.mxu0 0.0
    %3592 = vmatprep.subr.mxu0 0.0
    %3593 = vmatpush1.msra.mxu0 0.0
    %3594 = vmatprep.subr.mxu0 0.0
    %3595 = vmatpush1.msra.mxu0 0.0
    %3596 = vmatprep.subr.mxu0 0.0
    %3597 = vmatpush1.msra.mxu0 0.0
    %3598 = vmatprep.subr.mxu0 0.0
    %3599 = vmatpush1.msra.mxu0 0.0
    %3600 = vmatprep.subr.mxu0 0.0
    %3601 = vmatpush1.msra.mxu0 0.0
    %3602 = vmatprep.subr.mxu0 0.0
    %3603 = vmatpush1.msra.mxu0 0.0
    %3604 = vmatprep.subr.mxu0 0.0
    %3605 = vmatpush1.msra.mxu0 0.0
    %3606 = vmatprep.subr.mxu0 0.0
    %3607 = vmatpush1.msra.mxu0 0.0
    %3608 = vmatprep.subr.mxu0 0.0
    %3609 = vmatpush1.msra.mxu0 0.0
    %3610 = vmatprep.subr.mxu0 0.0
    %3611 = vmatpush1.msra.mxu0 0.0
    %3612 = vmatprep.subr.mxu0 0.0
    %3613 = vmatpush1.msra.mxu0 0.0
    %3614 = vmatprep.subr.mxu0 0.0
    %3615 = vmatpush1.msra.mxu0 0.0
    %3616 = vmatprep.subr.mxu0 0.0
    %3617 = vmatpush1.msra.mxu0 0.0
    %3618 = vmatprep.subr.mxu0 0.0
    %3619 = vmatpush1.msra.mxu0 0.0
    %3620 = vmatprep.subr.mxu0 0.0
    %3621 = vmatpush1.msra.mxu0 0.0
    %3622 = vmatprep.subr.mxu0 0.0
    %3623 = vmatpush1.msra.mxu0 0.0
    %3624 = vmatprep.subr.mxu0 0.0
    %3625 = vmatpush1.msra.mxu0 0.0
    %3626 = vmatprep.subr.mxu0 0.0
    %3627 = vmatpush1.msra.mxu0 0.0
    %3628 = vmatprep.subr.mxu0 0.0
    %3629 = vmatpush1.msra.mxu0 0.0
    %3630 = vmatprep.subr.mxu0 0.0
    %3631 = vmatpush1.msra.mxu0 0.0
    %3632 = vmatprep.subr.mxu0 0.0
    %3633 = vmatpush1.msra.mxu0 0.0
    %3634 = vmatprep.subr.mxu0 0.0
    %3635 = vmatpush1.msra.mxu0 0.0
    %3636 = vmatprep.subr.mxu0 0.0
    %3637 = vmatpush1.msra.mxu0 0.0
    %3638 = vmatprep.subr.mxu0 0.0
    %3639 = vmatpush1.msra.mxu0 0.0
    %3640 = vmatprep.subr.mxu0 0.0
    %3641 = vmatpush1.msra.mxu0 0.0
    %3642 = vmatprep.subr.mxu0 0.0
    %3643 = vmatpush1.msra.mxu0 0.0
    %3644 = vmatprep.subr.mxu0 0.0
    %3645 = vmatpush1.msra.mxu0 0.0
    %3646 = vmatprep.subr.mxu0 0.0
    %3647 = vmatpush1.msra.mxu0 0.0
    %3648 = vmatprep.mubr.f32.mxu0 0.0
    %3649 = vmatmul.mubr.f32.gmra.mrb[0].mxu0 %v2801
    %v3650 = vpop.f32.mrb[0].mxu0
    %v3651 = vadd.f32 %v3580, %v3650
    %v3652 = vpop.f32.mrb[0].mxu0
    %v3653 = vadd.f32 %v3582, %v3652
    %3654 = vdwg.mxu0
    %3655 = vmatprep.subr.mxu0 %v66
    %3656 = vmatpush1.msra.mxu0 %v65
    %3657 = vmatprep.subr.mxu0 %v82
    %3658 = vmatpush1.msra.mxu0 %v81
    %3659 = vmatprep.subr.mxu0 %v98
    %3660 = vmatpush1.msra.mxu0 %v97
    %3661 = vmatprep.subr.mxu0 %v114
    %3662 = vmatpush1.msra.mxu0 %v113
    %3663 = vmatprep.subr.mxu0 %v130
    %3664 = vmatpush1.msra.mxu0 %v129
    %3665 = vmatprep.subr.mxu0 %v146
    %3666 = vmatpush1.msra.mxu0 %v145
    %3667 = vmatprep.subr.mxu0 %v162
    %3668 = vmatpush1.msra.mxu0 %v161
    %3669 = vmatprep.subr.mxu0 %v178
    %3670 = vmatpush1.msra.mxu0 %v177
    %3671 = vmatprep.subr.mxu0 %v194
    %3672 = vmatpush1.msra.mxu0 %v193
    %3673 = vmatprep.subr.mxu0 %v210
    %3674 = vmatpush1.msra.mxu0 %v209
    %3675 = vmatprep.subr.mxu0 %v226
    %3676 = vmatpush1.msra.mxu0 %v225
    %3677 = vmatprep.subr.mxu0 %v242
    %3678 = vmatpush1.msra.mxu0 %v241
    %3679 = vmatprep.subr.mxu0 %v258
    %3680 = vmatpush1.msra.mxu0 %v257
    %3681 = vmatprep.subr.mxu0 %v274
    %3682 = vmatpush1.msra.mxu0 %v273
    %3683 = vmatprep.subr.mxu0 %v290
    %3684 = vmatpush1.msra.mxu0 %v289
    %3685 = vmatprep.subr.mxu0 %v306
    %3686 = vmatpush1.msra.mxu0 %v305
    %3687 = vmatprep.subr.mxu0 %v322
    %3688 = vmatpush1.msra.mxu0 %v321
    %3689 = vmatprep.subr.mxu0 %v338
    %3690 = vmatpush1.msra.mxu0 %v337
    %3691 = vmatprep.subr.mxu0 %v354
    %3692 = vmatpush1.msra.mxu0 %v353
    %3693 = vmatprep.subr.mxu0 %v370
    %3694 = vmatpush1.msra.mxu0 %v369
    %3695 = vmatprep.subr.mxu0 %v386
    %3696 = vmatpush1.msra.mxu0 %v385
    %3697 = vmatprep.subr.mxu0 %v402
    %3698 = vmatpush1.msra.mxu0 %v401
    %3699 = vmatprep.subr.mxu0 %v418
    %3700 = vmatpush1.msra.mxu0 %v417
    %3701 = vmatprep.subr.mxu0 %v434
    %3702 = vmatpush1.msra.mxu0 %v433
    %3703 = vmatprep.subr.mxu0 %v450
    %3704 = vmatpush1.msra.mxu0 %v449
    %3705 = vmatprep.subr.mxu0 %v466
    %3706 = vmatpush1.msra.mxu0 %v465
    %3707 = vmatprep.subr.mxu0 %v482
    %3708 = vmatpush1.msra.mxu0 %v481
    %3709 = vmatprep.subr.mxu0 %v498
    %3710 = vmatpush1.msra.mxu0 %v497
    %3711 = vmatprep.subr.mxu0 %v514
    %3712 = vmatpush1.msra.mxu0 %v513
    %3713 = vmatprep.subr.mxu0 %v530
    %3714 = vmatpush1.msra.mxu0 %v529
    %3715 = vmatprep.subr.mxu0 %v546
    %3716 = vmatpush1.msra.mxu0 %v545
    %3717 = vmatprep.subr.mxu0 %v562
    %3718 = vmatpush1.msra.mxu0 %v561
    %3719 = vmatprep.mubr.f32.mxu0 %v2755
    %3720 = vmatmul.mubr.f32.gmra.mrb[0].mxu0 %v2747
    %v3721 = vpop.f32.mrb[0].mxu0
    %v3722 = vadd.f32 %v2676, %v3721
    %v3723 = vpop.f32.mrb[0].mxu0
    %v3724 = vadd.f32 %v2680, %v3723
    %3725 = vdwg.mxu0
    %3726 = vmatprep.subr.mxu0 %v578
    %3727 = vmatpush1.msra.mxu0 %v577
    %3728 = vmatprep.subr.mxu0 %v594
    %3729 = vmatpush1.msra.mxu0 %v593
    %3730 = vmatprep.subr.mxu0 %v610
    %3731 = vmatpush1.msra.mxu0 %v609
    %3732 = vmatprep.subr.mxu0 %v626
    %3733 = vmatpush1.msra.mxu0 %v625
    %3734 = vmatprep.subr.mxu0 %v642
    %3735 = vmatpush1.msra.mxu0 %v641
    %3736 = vmatprep.subr.mxu0 %v658
    %3737 = vmatpush1.msra.mxu0 %v657
    %3738 = vmatprep.subr.mxu0 %v674
    %3739 = vmatpush1.msra.mxu0 %v673
    %3740 = vmatprep.subr.mxu0 %v690
    %3741 = vmatpush1.msra.mxu0 %v689
    %3742 = vmatprep.subr.mxu0 %v706
    %3743 = vmatpush1.msra.mxu0 %v705
    %3744 = vmatprep.subr.mxu0 %v722
    %3745 = vmatpush1.msra.mxu0 %v721
    %3746 = vmatprep.subr.mxu0 %v738
    %3747 = vmatpush1.msra.mxu0 %v737
    %3748 = vmatprep.subr.mxu0 %v754
    %3749 = vmatpush1.msra.mxu0 %v753
    %3750 = vmatprep.subr.mxu0 %v770
    %3751 = vmatpush1.msra.mxu0 %v769
    %3752 = vmatprep.subr.mxu0 %v786
    %3753 = vmatpush1.msra.mxu0 %v785
    %3754 = vmatprep.subr.mxu0 %v802
    %3755 = vmatpush1.msra.mxu0 %v801
    %3756 = vmatprep.subr.mxu0 %v818
    %3757 = vmatpush1.msra.mxu0 %v817
    %3758 = vmatprep.subr.mxu0 %v834
    %3759 = vmatpush1.msra.mxu0 %v833
    %3760 = vmatprep.subr.mxu0 %v850
    %3761 = vmatpush1.msra.mxu0 %v849
    %3762 = vmatprep.subr.mxu0 %v866
    %3763 = vmatpush1.msra.mxu0 %v865
    %3764 = vmatprep.subr.mxu0 %v882
    %3765 = vmatpush1.msra.mxu0 %v881
    %3766 = vmatprep.subr.mxu0 %v898
    %3767 = vmatpush1.msra.mxu0 %v897
    %3768 = vmatprep.subr.mxu0 %v914
    %3769 = vmatpush1.msra.mxu0 %v913
    %3770 = vmatprep.subr.mxu0 %v930
    %3771 = vmatpush1.msra.mxu0 %v929
    %3772 = vmatprep.subr.mxu0 %v946
    %3773 = vmatpush1.msra.mxu0 %v945
    %3774 = vmatprep.subr.mxu0 %v962
    %3775 = vmatpush1.msra.mxu0 %v961
    %3776 = vmatprep.subr.mxu0 %v978
    %3777 = vmatpush1.msra.mxu0 %v977
    %3778 = vmatprep.subr.mxu0 %v994
    %3779 = vmatpush1.msra.mxu0 %v993
    %3780 = vmatprep.subr.mxu0 %v1010
    %3781 = vmatpush1.msra.mxu0 %v1009
    %3782 = vmatprep.subr.mxu0 %v1026
    %3783 = vmatpush1.msra.mxu0 %v1025
    %3784 = vmatprep.subr.mxu0 %v1042
    %3785 = vmatpush1.msra.mxu0 %v1041
    %3786 = vmatprep.subr.mxu0 %v1058
    %3787 = vmatpush1.msra.mxu0 %v1057
    %3788 = vmatprep.subr.mxu0 %v1074
    %3789 = vmatpush1.msra.mxu0 %v1073
    %3790 = vmatprep.mubr.f32.mxu0 %v2756
    %3791 = vmatmul.mubr.f32.gmra.mrb[0].mxu0 %v2754
    %v3792 = vpop.f32.mrb[0].mxu0
    %v3793 = vadd.f32 %v3722, %v3792
    %v3794 = vpop.f32.mrb[0].mxu0
    %v3795 = vadd.f32 %v3724, %v3794
    %3796 = vdwg.mxu0
    %3797 = vmatprep.subr.mxu0 %v1090
    %3798 = vmatpush1.msra.mxu0 %v1089
    %3799 = vmatprep.subr.mxu0 %v1106
    %3800 = vmatpush1.msra.mxu0 %v1105
    %3801 = vmatprep.subr.mxu0 %v1122
    %3802 = vmatpush1.msra.mxu0 %v1121
    %3803 = vmatprep.subr.mxu0 %v1138
    %3804 = vmatpush1.msra.mxu0 %v1137
    %3805 = vmatprep.subr.mxu0 %v1154
    %3806 = vmatpush1.msra.mxu0 %v1153
    %3807 = vmatprep.subr.mxu0 %v1170
    %3808 = vmatpush1.msra.mxu0 %v1169
    %3809 = vmatprep.subr.mxu0 %v1186
    %3810 = vmatpush1.msra.mxu0 %v1185
    %3811 = vmatprep.subr.mxu0 %v1202
    %3812 = vmatpush1.msra.mxu0 %v1201
    %3813 = vmatprep.subr.mxu0 %v1218
    %3814 = vmatpush1.msra.mxu0 %v1217
    %3815 = vmatprep.subr.mxu0 %v1234
    %3816 = vmatpush1.msra.mxu0 %v1233
    %3817 = vmatprep.subr.mxu0 %v1250
    %3818 = vmatpush1.msra.mxu0 %v1249
    %3819 = vmatprep.subr.mxu0 %v1266
    %3820 = vmatpush1.msra.mxu0 %v1265
    %3821 = vmatprep.subr.mxu0 %v1282
    %3822 = vmatpush1.msra.mxu0 %v1281
    %3823 = vmatprep.subr.mxu0 %v1298
    %3824 = vmatpush1.msra.mxu0 %v1297
    %3825 = vmatprep.subr.mxu0 %v1314
    %3826 = vmatpush1.msra.mxu0 %v1313
    %3827 = vmatprep.subr.mxu0 %v1330
    %3828 = vmatpush1.msra.mxu0 %v1329
    %3829 = vmatprep.subr.mxu0 %v1346
    %3830 = vmatpush1.msra.mxu0 %v1345
    %3831 = vmatprep.subr.mxu0 %v1362
    %3832 = vmatpush1.msra.mxu0 %v1361
    %3833 = vmatprep.subr.mxu0 %v1378
    %3834 = vmatpush1.msra.mxu0 %v1377
    %3835 = vmatprep.subr.mxu0 %v1394
    %3836 = vmatpush1.msra.mxu0 %v1393
    %3837 = vmatprep.subr.mxu0 %v1410
    %3838 = vmatpush1.msra.mxu0 %v1409
    %3839 = vmatprep.subr.mxu0 %v1426
    %3840 = vmatpush1.msra.mxu0 %v1425
    %3841 = vmatprep.subr.mxu0 %v1442
    %3842 = vmatpush1.msra.mxu0 %v1441
    %3843 = vmatprep.subr.mxu0 %v1458
    %3844 = vmatpush1.msra.mxu0 %v1457
    %3845 = vmatprep.subr.mxu0 %v1474
    %3846 = vmatpush1.msra.mxu0 %v1473
    %3847 = vmatprep.subr.mxu0 %v1490
    %3848 = vmatpush1.msra.mxu0 %v1489
    %3849 = vmatprep.subr.mxu0 %v1506
    %3850 = vmatpush1.msra.mxu0 %v1505
    %3851 = vmatprep.subr.mxu0 %v1522
    %3852 = vmatpush1.msra.mxu0 %v1521
    %3853 = vmatprep.subr.mxu0 %v1538
    %3854 = vmatpush1.msra.mxu0 %v1537
    %3855 = vmatprep.subr.mxu0 %v1554
    %3856 = vmatpush1.msra.mxu0 %v1553
    %3857 = vmatprep.subr.mxu0 %v1570
    %3858 = vmatpush1.msra.mxu0 %v1569
    %3859 = vmatprep.subr.mxu0 %v1586
    %3860 = vmatpush1.msra.mxu0 %v1585
    %3861 = vmatprep.mubr.f32.mxu0 %v2772
    %3862 = vmatmul.mubr.f32.gmra.mrb[0].mxu0 %v2764
    %v3863 = vpop.f32.mrb[0].mxu0
    %v3864 = vadd.f32 %v3793, %v3863
    %v3865 = vpop.f32.mrb[0].mxu0
    %v3866 = vadd.f32 %v3795, %v3865
    %3867 = vdwg.mxu0
    %3868 = vmatprep.subr.mxu0 %v1602
    %3869 = vmatpush1.msra.mxu0 %v1601
    %3870 = vmatprep.subr.mxu0 %v1618
    %3871 = vmatpush1.msra.mxu0 %v1617
    %3872 = vmatprep.subr.mxu0 %v1634
    %3873 = vmatpush1.msra.mxu0 %v1633
    %3874 = vmatprep.subr.mxu0 %v1650
    %3875 = vmatpush1.msra.mxu0 %v1649
    %3876 = vmatprep.subr.mxu0 %v1666
    %3877 = vmatpush1.msra.mxu0 %v1665
    %3878 = vmatprep.subr.mxu0 %v1682
    %3879 = vmatpush1.msra.mxu0 %v1681
    %3880 = vmatprep.subr.mxu0 %v1698
    %3881 = vmatpush1.msra.mxu0 %v1697
    %3882 = vmatprep.subr.mxu0 %v1714
    %3883 = vmatpush1.msra.mxu0 %v1713
    %3884 = vmatprep.subr.mxu0 %v1730
    %3885 = vmatpush1.msra.mxu0 %v1729
    %3886 = vmatprep.subr.mxu0 %v1746
    %3887 = vmatpush1.msra.mxu0 %v1745
    %3888 = vmatprep.subr.mxu0 %v1762
    %3889 = vmatpush1.msra.mxu0 %v1761
    %3890 = vmatprep.subr.mxu0 %v1778
    %3891 = vmatpush1.msra.mxu0 %v1777
    %3892 = vmatprep.subr.mxu0 %v1794
    %3893 = vmatpush1.msra.mxu0 %v1793
    %3894 = vmatprep.subr.mxu0 %v1810
    %3895 = vmatpush1.msra.mxu0 %v1809
    %3896 = vmatprep.subr.mxu0 %v1826
    %3897 = vmatpush1.msra.mxu0 %v1825
    %3898 = vmatprep.subr.mxu0 %v1842
    %3899 = vmatpush1.msra.mxu0 %v1841
    %3900 = vmatprep.subr.mxu0 %v1858
    %3901 = vmatpush1.msra.mxu0 %v1857
    %3902 = vmatprep.subr.mxu0 %v1874
    %3903 = vmatpush1.msra.mxu0 %v1873
    %3904 = vmatprep.subr.mxu0 %v1890
    %3905 = vmatpush1.msra.mxu0 %v1889
    %3906 = vmatprep.subr.mxu0 %v1906
    %3907 = vmatpush1.msra.mxu0 %v1905
    %3908 = vmatprep.subr.mxu0 %v1922
    %3909 = vmatpush1.msra.mxu0 %v1921
    %3910 = vmatprep.subr.mxu0 %v1938
    %3911 = vmatpush1.msra.mxu0 %v1937
    %3912 = vmatprep.subr.mxu0 %v1954
    %3913 = vmatpush1.msra.mxu0 %v1953
    %3914 = vmatprep.subr.mxu0 %v1970
    %3915 = vmatpush1.msra.mxu0 %v1969
    %3916 = vmatprep.subr.mxu0 %v1986
    %3917 = vmatpush1.msra.mxu0 %v1985
    %3918 = vmatprep.subr.mxu0 %v2002
    %3919 = vmatpush1.msra.mxu0 %v2001
    %3920 = vmatprep.subr.mxu0 %v2018
    %3921 = vmatpush1.msra.mxu0 %v2017
    %3922 = vmatprep.subr.mxu0 %v2034
    %3923 = vmatpush1.msra.mxu0 %v2033
    %3924 = vmatprep.subr.mxu0 %v2050
    %3925 = vmatpush1.msra.mxu0 %v2049
    %3926 = vmatprep.subr.mxu0 %v2066
    %3927 = vmatpush1.msra.mxu0 %v2065
    %3928 = vmatprep.subr.mxu0 %v2082
    %3929 = vmatpush1.msra.mxu0 %v2081
    %3930 = vmatprep.subr.mxu0 %v2098
    %3931 = vmatpush1.msra.mxu0 %v2097
    %3932 = vmatprep.mubr.f32.mxu0 %v2773
    %3933 = vmatmul.mubr.f32.gmra.mrb[0].mxu0 %v2771
    %v3934 = vpop.f32.mrb[0].mxu0
    %v3935 = vadd.f32 %v3864, %v3934
    %v3936 = vpop.f32.mrb[0].mxu0
    %v3937 = vadd.f32 %v3866, %v3936
    %3938 = vdwg.mxu0
    %3939 = vmatprep.subr.mxu0 %v2114
    %3940 = vmatpush1.msra.mxu0 %v2113
    %3941 = vmatprep.subr.mxu0 %v2130
    %3942 = vmatpush1.msra.mxu0 %v2129
    %3943 = vmatprep.subr.mxu0 %v2146
    %3944 = vmatpush1.msra.mxu0 %v2145
    %3945 = vmatprep.subr.mxu0 %v2162
    %3946 = vmatpush1.msra.mxu0 %v2161
    %3947 = vmatprep.subr.mxu0 %v2178
    %3948 = vmatpush1.msra.mxu0 %v2177
    %3949 = vmatprep.subr.mxu0 %v2194
    %3950 = vmatpush1.msra.mxu0 %v2193
    %3951 = vmatprep.subr.mxu0 %v2210
    %3952 = vmatpush1.msra.mxu0 %v2209
    %3953 = vmatprep.subr.mxu0 %v2226
    %3954 = vmatpush1.msra.mxu0 %v2225
    %3955 = vmatprep.subr.mxu0 %v2242
    %3956 = vmatpush1.msra.mxu0 %v2241
    %3957 = vmatprep.subr.mxu0 %v2258
    %3958 = vmatpush1.msra.mxu0 %v2257
    %3959 = vmatprep.subr.mxu0 %v2274
    %3960 = vmatpush1.msra.mxu0 %v2273
    %3961 = vmatprep.subr.mxu0 %v2290
    %3962 = vmatpush1.msra.mxu0 %v2289
    %3963 = vmatprep.subr.mxu0 %v2306
    %3964 = vmatpush1.msra.mxu0 %v2305
    %3965 = vmatprep.subr.mxu0 %v2322
    %3966 = vmatpush1.msra.mxu0 %v2321
    %3967 = vmatprep.subr.mxu0 %v2338
    %3968 = vmatpush1.msra.mxu0 %v2337
    %3969 = vmatprep.subr.mxu0 %v2354
    %3970 = vmatpush1.msra.mxu0 %v2353
    %3971 = vmatprep.subr.mxu0 %v2370
    %3972 = vmatpush1.msra.mxu0 %v2369
    %3973 = vmatprep.subr.mxu0 %v2386
    %3974 = vmatpush1.msra.mxu0 %v2385
    %3975 = vmatprep.subr.mxu0 %v2402
    %3976 = vmatpush1.msra.mxu0 %v2401
    %3977 = vmatprep.subr.mxu0 %v2418
    %3978 = vmatpush1.msra.mxu0 %v2417
    %3979 = vmatprep.subr.mxu0 %v2434
    %3980 = vmatpush1.msra.mxu0 %v2433
    %3981 = vmatprep.subr.mxu0 %v2450
    %3982 = vmatpush1.msra.mxu0 %v2449
    %3983 = vmatprep.subr.mxu0 %v2466
    %3984 = vmatpush1.msra.mxu0 %v2465
    %3985 = vmatprep.subr.mxu0 %v2482
    %3986 = vmatpush1.msra.mxu0 %v2481
    %3987 = vmatprep.subr.mxu0 %v2498
    %3988 = vmatpush1.msra.mxu0 %v2497
    %3989 = vmatprep.subr.mxu0 %v2514
    %3990 = vmatpush1.msra.mxu0 %v2513
    %3991 = vmatprep.subr.mxu0 %v2530
    %3992 = vmatpush1.msra.mxu0 %v2529
    %3993 = vmatprep.subr.mxu0 %v2546
    %3994 = vmatpush1.msra.mxu0 %v2545
    %3995 = vmatprep.subr.mxu0 %v2562
    %3996 = vmatpush1.msra.mxu0 %v2561
    %3997 = vmatprep.subr.mxu0 %v2578
    %3998 = vmatpush1.msra.mxu0 %v2577
    %3999 = vmatprep.subr.mxu0 %v2594
    %4000 = vmatpush1.msra.mxu0 %v2593
    %4001 = vmatprep.subr.mxu0 %v2610
    %4002 = vmatpush1.msra.mxu0 %v2609
    %4003 = vmatprep.mubr.f32.mxu0 %v2789
    %4004 = vmatmul.mubr.f32.gmra.mrb[0].mxu0 %v2781
    %v4005 = vpop.f32.mrb[0].mxu0
    %v4006 = vadd.f32 %v3935, %v4005
    %v4007 = vpop.f32.mrb[0].mxu0
    %v4008 = vadd.f32 %v3937, %v4007
    %4009 = vdwg.mxu0
    %4010 = vmatprep.subr.mxu0 %v2626
    %4011 = vmatpush1.msra.mxu0 %v2625
    %4012 = vmatprep.subr.mxu0 %v2642
    %4013 = vmatpush1.msra.mxu0 %v2641
    %4014 = vmatprep.subr.mxu0 0.0
    %4015 = vmatpush1.msra.mxu0 0.0
    %4016 = vmatprep.subr.mxu0 0.0
    %4017 = vmatpush1.msra.mxu0 0.0
    %4018 = vmatprep.subr.mxu0 0.0
    %4019 = vmatpush1.msra.mxu0 0.0
    %4020 = vmatprep.subr.mxu0 0.0
    %4021 = vmatpush1.msra.mxu0 0.0
    %4022 = vmatprep.subr.mxu0 0.0
    %4023 = vmatpush1.msra.mxu0 0.0
    %4024 = vmatprep.subr.mxu0 0.0
    %4025 = vmatpush1.msra.mxu0 0.0
    %4026 = vmatprep.subr.mxu0 0.0
    %4027 = vmatpush1.msra.mxu0 0.0
    %4028 = vmatprep.subr.mxu0 0.0
    %4029 = vmatpush1.msra.mxu0 0.0
    %4030 = vmatprep.subr.mxu0 0.0
    %4031 = vmatpush1.msra.mxu0 0.0
    %4032 = vmatprep.subr.mxu0 0.0
    %4033 = vmatpush1.msra.mxu0 0.0
    %4034 = vmatprep.subr.mxu0 0.0
    %4035 = vmatpush1.msra.mxu0 0.0
    %4036 = vmatprep.subr.mxu0 0.0
    %4037 = vmatpush1.msra.mxu0 0.0
    %4038 = vmatprep.subr.mxu0 0.0
    %4039 = vmatpush1.msra.mxu0 0.0
    %4040 = vmatprep.subr.mxu0 0.0
    %4041 = vmatpush1.msra.mxu0 0.0
    %4042 = vmatprep.subr.mxu0 0.0
    %4043 = vmatpush1.msra.mxu0 0.0
    %4044 = vmatprep.subr.mxu0 0.0
    %4045 = vmatpush1.msra.mxu0 0.0
    %4046 = vmatprep.subr.mxu0 0.0
    %4047 = vmatpush1.msra.mxu0 0.0
    %4048 = vmatprep.subr.mxu0 0.0
    %4049 = vmatpush1.msra.mxu0 0.0
    %4050 = vmatprep.subr.mxu0 0.0
    %4051 = vmatpush1.msra.mxu0 0.0
    %4052 = vmatprep.subr.mxu0 0.0
    %4053 = vmatpush1.msra.mxu0 0.0
    %4054 = vmatprep.subr.mxu0 0.0
    %4055 = vmatpush1.msra.mxu0 0.0
    %4056 = vmatprep.subr.mxu0 0.0
    %4057 = vmatpush1.msra.mxu0 0.0
    %4058 = vmatprep.subr.mxu0 0.0
    %4059 = vmatpush1.msra.mxu0 0.0
    %4060 = vmatprep.subr.mxu0 0.0
    %4061 = vmatpush1.msra.mxu0 0.0
    %4062 = vmatprep.subr.mxu0 0.0
    %4063 = vmatpush1.msra.mxu0 0.0
    %4064 = vmatprep.subr.mxu0 0.0
    %4065 = vmatpush1.msra.mxu0 0.0
    %4066 = vmatprep.subr.mxu0 0.0
    %4067 = vmatpush1.msra.mxu0 0.0
    %4068 = vmatprep.subr.mxu0 0.0
    %4069 = vmatpush1.msra.mxu0 0.0
    %4070 = vmatprep.subr.mxu0 0.0
    %4071 = vmatpush1.msra.mxu0 0.0
    %4072 = vmatprep.subr.mxu0 0.0
    %4073 = vmatpush1.msra.mxu0 0.0
    %4074 = vmatprep.mubr.f32.mxu0 0.0
    %4075 = vmatmul.mubr.f32.gmra.mrb[0].mxu0 %v2801
    %v4076 = vpop.f32.mrb[0].mxu0
    %v4077 = vadd.f32 %v4006, %v4076
    %v4078 = vpop.f32.mrb[0].mxu0
    %v4079 = vadd.f32 %v4008, %v4078
    %4080 = vdwg.mxu0
    %4081 = vmatprep.subr.mxu0 %v68
    %4082 = vmatpush1.msra.mxu0 %v67
    %4083 = vmatprep.subr.mxu0 %v84
    %4084 = vmatpush1.msra.mxu0 %v83
    %4085 = vmatprep.subr.mxu0 %v100
    %4086 = vmatpush1.msra.mxu0 %v99
    %4087 = vmatprep.subr.mxu0 %v116
    %4088 = vmatpush1.msra.mxu0 %v115
    %4089 = vmatprep.subr.mxu0 %v132
    %4090 = vmatpush1.msra.mxu0 %v131
    %4091 = vmatprep.subr.mxu0 %v148
    %4092 = vmatpush1.msra.mxu0 %v147
    %4093 = vmatprep.subr.mxu0 %v164
    %4094 = vmatpush1.msra.mxu0 %v163
    %4095 = vmatprep.subr.mxu0 %v180
    %4096 = vmatpush1.msra.mxu0 %v179
    %4097 = vmatprep.subr.mxu0 %v196
    %4098 = vmatpush1.msra.mxu0 %v195
    %4099 = vmatprep.subr.mxu0 %v212
    %4100 = vmatpush1.msra.mxu0 %v211
    %4101 = vmatprep.subr.mxu0 %v228
    %4102 = vmatpush1.msra.mxu0 %v227
    %4103 = vmatprep.subr.mxu0 %v244
    %4104 = vmatpush1.msra.mxu0 %v243
    %4105 = vmatprep.subr.mxu0 %v260
    %4106 = vmatpush1.msra.mxu0 %v259
    %4107 = vmatprep.subr.mxu0 %v276
    %4108 = vmatpush1.msra.mxu0 %v275
    %4109 = vmatprep.subr.mxu0 %v292
    %4110 = vmatpush1.msra.mxu0 %v291
    %4111 = vmatprep.subr.mxu0 %v308
    %4112 = vmatpush1.msra.mxu0 %v307
    %4113 = vmatprep.subr.mxu0 %v324
    %4114 = vmatpush1.msra.mxu0 %v323
    %4115 = vmatprep.subr.mxu0 %v340
    %4116 = vmatpush1.msra.mxu0 %v339
    %4117 = vmatprep.subr.mxu0 %v356
    %4118 = vmatpush1.msra.mxu0 %v355
    %4119 = vmatprep.subr.mxu0 %v372
    %4120 = vmatpush1.msra.mxu0 %v371
    %4121 = vmatprep.subr.mxu0 %v388
    %4122 = vmatpush1.msra.mxu0 %v387
    %4123 = vmatprep.subr.mxu0 %v404
    %4124 = vmatpush1.msra.mxu0 %v403
    %4125 = vmatprep.subr.mxu0 %v420
    %4126 = vmatpush1.msra.mxu0 %v419
    %4127 = vmatprep.subr.mxu0 %v436
    %4128 = vmatpush1.msra.mxu0 %v435
    %4129 = vmatprep.subr.mxu0 %v452
    %4130 = vmatpush1.msra.mxu0 %v451
    %4131 = vmatprep.subr.mxu0 %v468
    %4132 = vmatpush1.msra.mxu0 %v467
    %4133 = vmatprep.subr.mxu0 %v484
    %4134 = vmatpush1.msra.mxu0 %v483
    %4135 = vmatprep.subr.mxu0 %v500
    %4136 = vmatpush1.msra.mxu0 %v499
    %4137 = vmatprep.subr.mxu0 %v516
    %4138 = vmatpush1.msra.mxu0 %v515
    %4139 = vmatprep.subr.mxu0 %v532
    %4140 = vmatpush1.msra.mxu0 %v531
    %4141 = vmatprep.subr.mxu0 %v548
    %4142 = vmatpush1.msra.mxu0 %v547
    %4143 = vmatprep.subr.mxu0 %v564
    %4144 = vmatpush1.msra.mxu0 %v563
    %4145 = vmatprep.mubr.f32.mxu0 %v2755
    %4146 = vmatmul.mubr.f32.gmra.mrb[0].mxu0 %v2747
    %v4147 = vpop.f32.mrb[0].mxu0
    %v4148 = vadd.f32 %v2684, %v4147
    %v4149 = vpop.f32.mrb[0].mxu0
    %v4150 = vadd.f32 %v2688, %v4149
    %4151 = vdwg.mxu0
    %4152 = vmatprep.subr.mxu0 %v580
    %4153 = vmatpush1.msra.mxu0 %v579
    %4154 = vmatprep.subr.mxu0 %v596
    %4155 = vmatpush1.msra.mxu0 %v595
    %4156 = vmatprep.subr.mxu0 %v612
    %4157 = vmatpush1.msra.mxu0 %v611
    %4158 = vmatprep.subr.mxu0 %v628
    %4159 = vmatpush1.msra.mxu0 %v627
    %4160 = vmatprep.subr.mxu0 %v644
    %4161 = vmatpush1.msra.mxu0 %v643
    %4162 = vmatprep.subr.mxu0 %v660
    %4163 = vmatpush1.msra.mxu0 %v659
    %4164 = vmatprep.subr.mxu0 %v676
    %4165 = vmatpush1.msra.mxu0 %v675
    %4166 = vmatprep.subr.mxu0 %v692
    %4167 = vmatpush1.msra.mxu0 %v691
    %4168 = vmatprep.subr.mxu0 %v708
    %4169 = vmatpush1.msra.mxu0 %v707
    %4170 = vmatprep.subr.mxu0 %v724
    %4171 = vmatpush1.msra.mxu0 %v723
    %4172 = vmatprep.subr.mxu0 %v740
    %4173 = vmatpush1.msra.mxu0 %v739
    %4174 = vmatprep.subr.mxu0 %v756
    %4175 = vmatpush1.msra.mxu0 %v755
    %4176 = vmatprep.subr.mxu0 %v772
    %4177 = vmatpush1.msra.mxu0 %v771
    %4178 = vmatprep.subr.mxu0 %v788
    %4179 = vmatpush1.msra.mxu0 %v787
    %4180 = vmatprep.subr.mxu0 %v804
    %4181 = vmatpush1.msra.mxu0 %v803
    %4182 = vmatprep.subr.mxu0 %v820
    %4183 = vmatpush1.msra.mxu0 %v819
    %4184 = vmatprep.subr.mxu0 %v836
    %4185 = vmatpush1.msra.mxu0 %v835
    %4186 = vmatprep.subr.mxu0 %v852
    %4187 = vmatpush1.msra.mxu0 %v851
    %4188 = vmatprep.subr.mxu0 %v868
    %4189 = vmatpush1.msra.mxu0 %v867
    %4190 = vmatprep.subr.mxu0 %v884
    %4191 = vmatpush1.msra.mxu0 %v883
    %4192 = vmatprep.subr.mxu0 %v900
    %4193 = vmatpush1.msra.mxu0 %v899
    %4194 = vmatprep.subr.mxu0 %v916
    %4195 = vmatpush1.msra.mxu0 %v915
    %4196 = vmatprep.subr.mxu0 %v932
    %4197 = vmatpush1.msra.mxu0 %v931
    %4198 = vmatprep.subr.mxu0 %v948
    %4199 = vmatpush1.msra.mxu0 %v947
    %4200 = vmatprep.subr.mxu0 %v964
    %4201 = vmatpush1.msra.mxu0 %v963
    %4202 = vmatprep.subr.mxu0 %v980
    %4203 = vmatpush1.msra.mxu0 %v979
    %4204 = vmatprep.subr.mxu0 %v996
    %4205 = vmatpush1.msra.mxu0 %v995
    %4206 = vmatprep.subr.mxu0 %v1012
    %4207 = vmatpush1.msra.mxu0 %v1011
    %4208 = vmatprep.subr.mxu0 %v1028
    %4209 = vmatpush1.msra.mxu0 %v1027
    %4210 = vmatprep.subr.mxu0 %v1044
    %4211 = vmatpush1.msra.mxu0 %v1043
    %4212 = vmatprep.subr.mxu0 %v1060
    %4213 = vmatpush1.msra.mxu0 %v1059
    %4214 = vmatprep.subr.mxu0 %v1076
    %4215 = vmatpush1.msra.mxu0 %v1075
    %4216 = vmatprep.mubr.f32.mxu0 %v2756
    %4217 = vmatmul.mubr.f32.gmra.mrb[0].mxu0 %v2754
    %v4218 = vpop.f32.mrb[0].mxu0
    %v4219 = vadd.f32 %v4148, %v4218
    %v4220 = vpop.f32.mrb[0].mxu0
    %v4221 = vadd.f32 %v4150, %v4220
    %4222 = vdwg.mxu0
    %4223 = vmatprep.subr.mxu0 %v1092
    %4224 = vmatpush1.msra.mxu0 %v1091
    %4225 = vmatprep.subr.mxu0 %v1108
    %4226 = vmatpush1.msra.mxu0 %v1107
    %4227 = vmatprep.subr.mxu0 %v1124
    %4228 = vmatpush1.msra.mxu0 %v1123
    %4229 = vmatprep.subr.mxu0 %v1140
    %4230 = vmatpush1.msra.mxu0 %v1139
    %4231 = vmatprep.subr.mxu0 %v1156
    %4232 = vmatpush1.msra.mxu0 %v1155
    %4233 = vmatprep.subr.mxu0 %v1172
    %4234 = vmatpush1.msra.mxu0 %v1171
    %4235 = vmatprep.subr.mxu0 %v1188
    %4236 = vmatpush1.msra.mxu0 %v1187
    %4237 = vmatprep.subr.mxu0 %v1204
    %4238 = vmatpush1.msra.mxu0 %v1203
    %4239 = vmatprep.subr.mxu0 %v1220
    %4240 = vmatpush1.msra.mxu0 %v1219
    %4241 = vmatprep.subr.mxu0 %v1236
    %4242 = vmatpush1.msra.mxu0 %v1235
    %4243 = vmatprep.subr.mxu0 %v1252
    %4244 = vmatpush1.msra.mxu0 %v1251
    %4245 = vmatprep.subr.mxu0 %v1268
    %4246 = vmatpush1.msra.mxu0 %v1267
    %4247 = vmatprep.subr.mxu0 %v1284
    %4248 = vmatpush1.msra.mxu0 %v1283
    %4249 = vmatprep.subr.mxu0 %v1300
    %4250 = vmatpush1.msra.mxu0 %v1299
    %4251 = vmatprep.subr.mxu0 %v1316
    %4252 = vmatpush1.msra.mxu0 %v1315
    %4253 = vmatprep.subr.mxu0 %v1332
    %4254 = vmatpush1.msra.mxu0 %v1331
    %4255 = vmatprep.subr.mxu0 %v1348
    %4256 = vmatpush1.msra.mxu0 %v1347
    %4257 = vmatprep.subr.mxu0 %v1364
    %4258 = vmatpush1.msra.mxu0 %v1363
    %4259 = vmatprep.subr.mxu0 %v1380
    %4260 = vmatpush1.msra.mxu0 %v1379
    %4261 = vmatprep.subr.mxu0 %v1396
    %4262 = vmatpush1.msra.mxu0 %v1395
    %4263 = vmatprep.subr.mxu0 %v1412
    %4264 = vmatpush1.msra.mxu0 %v1411
    %4265 = vmatprep.subr.mxu0 %v1428
    %4266 = vmatpush1.msra.mxu0 %v1427
    %4267 = vmatprep.subr.mxu0 %v1444
    %4268 = vmatpush1.msra.mxu0 %v1443
    %4269 = vmatprep.subr.mxu0 %v1460
    %4270 = vmatpush1.msra.mxu0 %v1459
    %4271 = vmatprep.subr.mxu0 %v1476
    %4272 = vmatpush1.msra.mxu0 %v1475
    %4273 = vmatprep.subr.mxu0 %v1492
    %4274 = vmatpush1.msra.mxu0 %v1491
    %4275 = vmatprep.subr.mxu0 %v1508
    %4276 = vmatpush1.msra.mxu0 %v1507
    %4277 = vmatprep.subr.mxu0 %v1524
    %4278 = vmatpush1.msra.mxu0 %v1523
    %4279 = vmatprep.subr.mxu0 %v1540
    %4280 = vmatpush1.msra.mxu0 %v1539
    %4281 = vmatprep.subr.mxu0 %v1556
    %4282 = vmatpush1.msra.mxu0 %v1555
    %4283 = vmatprep.subr.mxu0 %v1572
    %4284 = vmatpush1.msra.mxu0 %v1571
    %4285 = vmatprep.subr.mxu0 %v1588
    %4286 = vmatpush1.msra.mxu0 %v1587
    %4287 = vmatprep.mubr.f32.mxu0 %v2772
    %4288 = vmatmul.mubr.f32.gmra.mrb[0].mxu0 %v2764
    %v4289 = vpop.f32.mrb[0].mxu0
    %v4290 = vadd.f32 %v4219, %v4289
    %v4291 = vpop.f32.mrb[0].mxu0
    %v4292 = vadd.f32 %v4221, %v4291
    %4293 = vdwg.mxu0
    %4294 = vmatprep.subr.mxu0 %v1604
    %4295 = vmatpush1.msra.mxu0 %v1603
    %4296 = vmatprep.subr.mxu0 %v1620
    %4297 = vmatpush1.msra.mxu0 %v1619
    %4298 = vmatprep.subr.mxu0 %v1636
    %4299 = vmatpush1.msra.mxu0 %v1635
    %4300 = vmatprep.subr.mxu0 %v1652
    %4301 = vmatpush1.msra.mxu0 %v1651
    %4302 = vmatprep.subr.mxu0 %v1668
    %4303 = vmatpush1.msra.mxu0 %v1667
    %4304 = vmatprep.subr.mxu0 %v1684
    %4305 = vmatpush1.msra.mxu0 %v1683
    %4306 = vmatprep.subr.mxu0 %v1700
    %4307 = vmatpush1.msra.mxu0 %v1699
    %4308 = vmatprep.subr.mxu0 %v1716
    %4309 = vmatpush1.msra.mxu0 %v1715
    %4310 = vmatprep.subr.mxu0 %v1732
    %4311 = vmatpush1.msra.mxu0 %v1731
    %4312 = vmatprep.subr.mxu0 %v1748
    %4313 = vmatpush1.msra.mxu0 %v1747
    %4314 = vmatprep.subr.mxu0 %v1764
    %4315 = vmatpush1.msra.mxu0 %v1763
    %4316 = vmatprep.subr.mxu0 %v1780
    %4317 = vmatpush1.msra.mxu0 %v1779
    %4318 = vmatprep.subr.mxu0 %v1796
    %4319 = vmatpush1.msra.mxu0 %v1795
    %4320 = vmatprep.subr.mxu0 %v1812
    %4321 = vmatpush1.msra.mxu0 %v1811
    %4322 = vmatprep.subr.mxu0 %v1828
    %4323 = vmatpush1.msra.mxu0 %v1827
    %4324 = vmatprep.subr.mxu0 %v1844
    %4325 = vmatpush1.msra.mxu0 %v1843
    %4326 = vmatprep.subr.mxu0 %v1860
    %4327 = vmatpush1.msra.mxu0 %v1859
    %4328 = vmatprep.subr.mxu0 %v1876
    %4329 = vmatpush1.msra.mxu0 %v1875
    %4330 = vmatprep.subr.mxu0 %v1892
    %4331 = vmatpush1.msra.mxu0 %v1891
    %4332 = vmatprep.subr.mxu0 %v1908
    %4333 = vmatpush1.msra.mxu0 %v1907
    %4334 = vmatprep.subr.mxu0 %v1924
    %4335 = vmatpush1.msra.mxu0 %v1923
    %4336 = vmatprep.subr.mxu0 %v1940
    %4337 = vmatpush1.msra.mxu0 %v1939
    %4338 = vmatprep.subr.mxu0 %v1956
    %4339 = vmatpush1.msra.mxu0 %v1955
    %4340 = vmatprep.subr.mxu0 %v1972
    %4341 = vmatpush1.msra.mxu0 %v1971
    %4342 = vmatprep.subr.mxu0 %v1988
    %4343 = vmatpush1.msra.mxu0 %v1987
    %4344 = vmatprep.subr.mxu0 %v2004
    %4345 = vmatpush1.msra.mxu0 %v2003
    %4346 = vmatprep.subr.mxu0 %v2020
    %4347 = vmatpush1.msra.mxu0 %v2019
    %4348 = vmatprep.subr.mxu0 %v2036
    %4349 = vmatpush1.msra.mxu0 %v2035
    %4350 = vmatprep.subr.mxu0 %v2052
    %4351 = vmatpush1.msra.mxu0 %v2051
    %4352 = vmatprep.subr.mxu0 %v2068
    %4353 = vmatpush1.msra.mxu0 %v2067
    %4354 = vmatprep.subr.mxu0 %v2084
    %4355 = vmatpush1.msra.mxu0 %v2083
    %4356 = vmatprep.subr.mxu0 %v2100
    %4357 = vmatpush1.msra.mxu0 %v2099
    %4358 = vmatprep.mubr.f32.mxu0 %v2773
    %4359 = vmatmul.mubr.f32.gmra.mrb[0].mxu0 %v2771
    %v4360 = vpop.f32.mrb[0].mxu0
    %v4361 = vadd.f32 %v4290, %v4360
    %v4362 = vpop.f32.mrb[0].mxu0
    %v4363 = vadd.f32 %v4292, %v4362
    %4364 = vdwg.mxu0
    %4365 = vmatprep.subr.mxu0 %v2116
    %4366 = vmatpush1.msra.mxu0 %v2115
    %4367 = vmatprep.subr.mxu0 %v2132
    %4368 = vmatpush1.msra.mxu0 %v2131
    %4369 = vmatprep.subr.mxu0 %v2148
    %4370 = vmatpush1.msra.mxu0 %v2147
    %4371 = vmatprep.subr.mxu0 %v2164
    %4372 = vmatpush1.msra.mxu0 %v2163
    %4373 = vmatprep.subr.mxu0 %v2180
    %4374 = vmatpush1.msra.mxu0 %v2179
    %4375 = vmatprep.subr.mxu0 %v2196
    %4376 = vmatpush1.msra.mxu0 %v2195
    %4377 = vmatprep.subr.mxu0 %v2212
    %4378 = vmatpush1.msra.mxu0 %v2211
    %4379 = vmatprep.subr.mxu0 %v2228
    %4380 = vmatpush1.msra.mxu0 %v2227
    %4381 = vmatprep.subr.mxu0 %v2244
    %4382 = vmatpush1.msra.mxu0 %v2243
    %4383 = vmatprep.subr.mxu0 %v2260
    %4384 = vmatpush1.msra.mxu0 %v2259
    %4385 = vmatprep.subr.mxu0 %v2276
    %4386 = vmatpush1.msra.mxu0 %v2275
    %4387 = vmatprep.subr.mxu0 %v2292
    %4388 = vmatpush1.msra.mxu0 %v2291
    %4389 = vmatprep.subr.mxu0 %v2308
    %4390 = vmatpush1.msra.mxu0 %v2307
    %4391 = vmatprep.subr.mxu0 %v2324
    %4392 = vmatpush1.msra.mxu0 %v2323
    %4393 = vmatprep.subr.mxu0 %v2340
    %4394 = vmatpush1.msra.mxu0 %v2339
    %4395 = vmatprep.subr.mxu0 %v2356
    %4396 = vmatpush1.msra.mxu0 %v2355
    %4397 = vmatprep.subr.mxu0 %v2372
    %4398 = vmatpush1.msra.mxu0 %v2371
    %4399 = vmatprep.subr.mxu0 %v2388
    %4400 = vmatpush1.msra.mxu0 %v2387
    %4401 = vmatprep.subr.mxu0 %v2404
    %4402 = vmatpush1.msra.mxu0 %v2403
    %4403 = vmatprep.subr.mxu0 %v2420
    %4404 = vmatpush1.msra.mxu0 %v2419
    %4405 = vmatprep.subr.mxu0 %v2436
    %4406 = vmatpush1.msra.mxu0 %v2435
    %4407 = vmatprep.subr.mxu0 %v2452
    %4408 = vmatpush1.msra.mxu0 %v2451
    %4409 = vmatprep.subr.mxu0 %v2468
    %4410 = vmatpush1.msra.mxu0 %v2467
    %4411 = vmatprep.subr.mxu0 %v2484
    %4412 = vmatpush1.msra.mxu0 %v2483
    %4413 = vmatprep.subr.mxu0 %v2500
    %4414 = vmatpush1.msra.mxu0 %v2499
    %4415 = vmatprep.subr.mxu0 %v2516
    %4416 = vmatpush1.msra.mxu0 %v2515
    %4417 = vmatprep.subr.mxu0 %v2532
    %4418 = vmatpush1.msra.mxu0 %v2531
    %4419 = vmatprep.subr.mxu0 %v2548
    %4420 = vmatpush1.msra.mxu0 %v2547
    %4421 = vmatprep.subr.mxu0 %v2564
    %4422 = vmatpush1.msra.mxu0 %v2563
    %4423 = vmatprep.subr.mxu0 %v2580
    %4424 = vmatpush1.msra.mxu0 %v2579
    %4425 = vmatprep.subr.mxu0 %v2596
    %4426 = vmatpush1.msra.mxu0 %v2595
    %4427 = vmatprep.subr.mxu0 %v2612
    %4428 = vmatpush1.msra.mxu0 %v2611
    %4429 = vmatprep.mubr.f32.mxu0 %v2789
    %4430 = vmatmul.mubr.f32.gmra.mrb[0].mxu0 %v2781
    %v4431 = vpop.f32.mrb[0].mxu0
    %v4432 = vadd.f32 %v4361, %v4431
    %v4433 = vpop.f32.mrb[0].mxu0
    %v4434 = vadd.f32 %v4363, %v4433
    %4435 = vdwg.mxu0
    %4436 = vmatprep.subr.mxu0 %v2628
    %4437 = vmatpush1.msra.mxu0 %v2627
    %4438 = vmatprep.subr.mxu0 %v2644
    %4439 = vmatpush1.msra.mxu0 %v2643
    %4440 = vmatprep.subr.mxu0 0.0
    %4441 = vmatpush1.msra.mxu0 0.0
    %4442 = vmatprep.subr.mxu0 0.0
    %4443 = vmatpush1.msra.mxu0 0.0
    %4444 = vmatprep.subr.mxu0 0.0
    %4445 = vmatpush1.msra.mxu0 0.0
    %4446 = vmatprep.subr.mxu0 0.0
    %4447 = vmatpush1.msra.mxu0 0.0
    %4448 = vmatprep.subr.mxu0 0.0
    %4449 = vmatpush1.msra.mxu0 0.0
    %4450 = vmatprep.subr.mxu0 0.0
    %4451 = vmatpush1.msra.mxu0 0.0
    %4452 = vmatprep.subr.mxu0 0.0
    %4453 = vmatpush1.msra.mxu0 0.0
    %4454 = vmatprep.subr.mxu0 0.0
    %4455 = vmatpush1.msra.mxu0 0.0
    %4456 = vmatprep.subr.mxu0 0.0
    %4457 = vmatpush1.msra.mxu0 0.0
    %4458 = vmatprep.subr.mxu0 0.0
    %4459 = vmatpush1.msra.mxu0 0.0
    %4460 = vmatprep.subr.mxu0 0.0
    %4461 = vmatpush1.msra.mxu0 0.0
    %4462 = vmatprep.subr.mxu0 0.0
    %4463 = vmatpush1.msra.mxu0 0.0
    %4464 = vmatprep.subr.mxu0 0.0
    %4465 = vmatpush1.msra.mxu0 0.0
    %4466 = vmatprep.subr.mxu0 0.0
    %4467 = vmatpush1.msra.mxu0 0.0
    %4468 = vmatprep.subr.mxu0 0.0
    %4469 = vmatpush1.msra.mxu0 0.0
    %4470 = vmatprep.subr.mxu0 0.0
    %4471 = vmatpush1.msra.mxu0 0.0
    %4472 = vmatprep.subr.mxu0 0.0
    %4473 = vmatpush1.msra.mxu0 0.0
    %4474 = vmatprep.subr.mxu0 0.0
    %4475 = vmatpush1.msra.mxu0 0.0
    %4476 = vmatprep.subr.mxu0 0.0
    %4477 = vmatpush1.msra.mxu0 0.0
    %4478 = vmatprep.subr.mxu0 0.0
    %4479 = vmatpush1.msra.mxu0 0.0
    %4480 = vmatprep.subr.mxu0 0.0
    %4481 = vmatpush1.msra.mxu0 0.0
    %4482 = vmatprep.subr.mxu0 0.0
    %4483 = vmatpush1.msra.mxu0 0.0
    %4484 = vmatprep.subr.mxu0 0.0
    %4485 = vmatpush1.msra.mxu0 0.0
    %4486 = vmatprep.subr.mxu0 0.0
    %4487 = vmatpush1.msra.mxu0 0.0
    %4488 = vmatprep.subr.mxu0 0.0
    %4489 = vmatpush1.msra.mxu0 0.0
    %4490 = vmatprep.subr.mxu0 0.0
    %4491 = vmatpush1.msra.mxu0 0.0
    %4492 = vmatprep.subr.mxu0 0.0
    %4493 = vmatpush1.msra.mxu0 0.0
    %4494 = vmatprep.subr.mxu0 0.0
    %4495 = vmatpush1.msra.mxu0 0.0
    %4496 = vmatprep.subr.mxu0 0.0
    %4497 = vmatpush1.msra.mxu0 0.0
    %4498 = vmatprep.subr.mxu0 0.0
    %4499 = vmatpush1.msra.mxu0 0.0
    %4500 = vmatprep.mubr.f32.mxu0 0.0
    %4501 = vmatmul.mubr.f32.gmra.mrb[0].mxu0 %v2801
    %v4502 = vpop.f32.mrb[0].mxu0
    %v4503 = vadd.f32 %v4432, %v4502
    %v4504 = vpop.f32.mrb[0].mxu0
    %v4505 = vadd.f32 %v4434, %v4504
    %4506 = vdwg.mxu0
    %4507 = vmatprep.subr.mxu0 %v70
    %4508 = vmatpush1.msra.mxu0 %v69
    %4509 = vmatprep.subr.mxu0 %v86
    %4510 = vmatpush1.msra.mxu0 %v85
    %4511 = vmatprep.subr.mxu0 %v102
    %4512 = vmatpush1.msra.mxu0 %v101
    %4513 = vmatprep.subr.mxu0 %v118
    %4514 = vmatpush1.msra.mxu0 %v117
    %4515 = vmatprep.subr.mxu0 %v134
    %4516 = vmatpush1.msra.mxu0 %v133
    %4517 = vmatprep.subr.mxu0 %v150
    %4518 = vmatpush1.msra.mxu0 %v149
    %4519 = vmatprep.subr.mxu0 %v166
    %4520 = vmatpush1.msra.mxu0 %v165
    %4521 = vmatprep.subr.mxu0 %v182
    %4522 = vmatpush1.msra.mxu0 %v181
    %4523 = vmatprep.subr.mxu0 %v198
    %4524 = vmatpush1.msra.mxu0 %v197
    %4525 = vmatprep.subr.mxu0 %v214
    %4526 = vmatpush1.msra.mxu0 %v213
    %4527 = vmatprep.subr.mxu0 %v230
    %4528 = vmatpush1.msra.mxu0 %v229
    %4529 = vmatprep.subr.mxu0 %v246
    %4530 = vmatpush1.msra.mxu0 %v245
    %4531 = vmatprep.subr.mxu0 %v262
    %4532 = vmatpush1.msra.mxu0 %v261
    %4533 = vmatprep.subr.mxu0 %v278
    %4534 = vmatpush1.msra.mxu0 %v277
    %4535 = vmatprep.subr.mxu0 %v294
    %4536 = vmatpush1.msra.mxu0 %v293
    %4537 = vmatprep.subr.mxu0 %v310
    %4538 = vmatpush1.msra.mxu0 %v309
    %4539 = vmatprep.subr.mxu0 %v326
    %4540 = vmatpush1.msra.mxu0 %v325
    %4541 = vmatprep.subr.mxu0 %v342
    %4542 = vmatpush1.msra.mxu0 %v341
    %4543 = vmatprep.subr.mxu0 %v358
    %4544 = vmatpush1.msra.mxu0 %v357
    %4545 = vmatprep.subr.mxu0 %v374
    %4546 = vmatpush1.msra.mxu0 %v373
    %4547 = vmatprep.subr.mxu0 %v390
    %4548 = vmatpush1.msra.mxu0 %v389
    %4549 = vmatprep.subr.mxu0 %v406
    %4550 = vmatpush1.msra.mxu0 %v405
    %4551 = vmatprep.subr.mxu0 %v422
    %4552 = vmatpush1.msra.mxu0 %v421
    %4553 = vmatprep.subr.mxu0 %v438
    %4554 = vmatpush1.msra.mxu0 %v437
    %4555 = vmatprep.subr.mxu0 %v454
    %4556 = vmatpush1.msra.mxu0 %v453
    %4557 = vmatprep.subr.mxu0 %v470
    %4558 = vmatpush1.msra.mxu0 %v469
    %4559 = vmatprep.subr.mxu0 %v486
    %4560 = vmatpush1.msra.mxu0 %v485
    %4561 = vmatprep.subr.mxu0 %v502
    %4562 = vmatpush1.msra.mxu0 %v501
    %4563 = vmatprep.subr.mxu0 %v518
    %4564 = vmatpush1.msra.mxu0 %v517
    %4565 = vmatprep.subr.mxu0 %v534
    %4566 = vmatpush1.msra.mxu0 %v533
    %4567 = vmatprep.subr.mxu0 %v550
    %4568 = vmatpush1.msra.mxu0 %v549
    %4569 = vmatprep.subr.mxu0 %v566
    %4570 = vmatpush1.msra.mxu0 %v565
    %4571 = vmatprep.mubr.f32.mxu0 %v2755
    %4572 = vmatmul.mubr.f32.gmra.mrb[0].mxu0 %v2747
    %v4573 = vpop.f32.mrb[0].mxu0
    %v4574 = vadd.f32 %v2692, %v4573
    %v4575 = vpop.f32.mrb[0].mxu0
    %v4576 = vadd.f32 %v2696, %v4575
    %4577 = vdwg.mxu0
    %4578 = vmatprep.subr.mxu0 %v582
    %4579 = vmatpush1.msra.mxu0 %v581
    %4580 = vmatprep.subr.mxu0 %v598
    %4581 = vmatpush1.msra.mxu0 %v597
    %4582 = vmatprep.subr.mxu0 %v614
    %4583 = vmatpush1.msra.mxu0 %v613
    %4584 = vmatprep.subr.mxu0 %v630
    %4585 = vmatpush1.msra.mxu0 %v629
    %4586 = vmatprep.subr.mxu0 %v646
    %4587 = vmatpush1.msra.mxu0 %v645
    %4588 = vmatprep.subr.mxu0 %v662
    %4589 = vmatpush1.msra.mxu0 %v661
    %4590 = vmatprep.subr.mxu0 %v678
    %4591 = vmatpush1.msra.mxu0 %v677
    %4592 = vmatprep.subr.mxu0 %v694
    %4593 = vmatpush1.msra.mxu0 %v693
    %4594 = vmatprep.subr.mxu0 %v710
    %4595 = vmatpush1.msra.mxu0 %v709
    %4596 = vmatprep.subr.mxu0 %v726
    %4597 = vmatpush1.msra.mxu0 %v725
    %4598 = vmatprep.subr.mxu0 %v742
    %4599 = vmatpush1.msra.mxu0 %v741
    %4600 = vmatprep.subr.mxu0 %v758
    %4601 = vmatpush1.msra.mxu0 %v757
    %4602 = vmatprep.subr.mxu0 %v774
    %4603 = vmatpush1.msra.mxu0 %v773
    %4604 = vmatprep.subr.mxu0 %v790
    %4605 = vmatpush1.msra.mxu0 %v789
    %4606 = vmatprep.subr.mxu0 %v806
    %4607 = vmatpush1.msra.mxu0 %v805
    %4608 = vmatprep.subr.mxu0 %v822
    %4609 = vmatpush1.msra.mxu0 %v821
    %4610 = vmatprep.subr.mxu0 %v838
    %4611 = vmatpush1.msra.mxu0 %v837
    %4612 = vmatprep.subr.mxu0 %v854
    %4613 = vmatpush1.msra.mxu0 %v853
    %4614 = vmatprep.subr.mxu0 %v870
    %4615 = vmatpush1.msra.mxu0 %v869
    %4616 = vmatprep.subr.mxu0 %v886
    %4617 = vmatpush1.msra.mxu0 %v885
    %4618 = vmatprep.subr.mxu0 %v902
    %4619 = vmatpush1.msra.mxu0 %v901
    %4620 = vmatprep.subr.mxu0 %v918
    %4621 = vmatpush1.msra.mxu0 %v917
    %4622 = vmatprep.subr.mxu0 %v934
    %4623 = vmatpush1.msra.mxu0 %v933
    %4624 = vmatprep.subr.mxu0 %v950
    %4625 = vmatpush1.msra.mxu0 %v949
    %4626 = vmatprep.subr.mxu0 %v966
    %4627 = vmatpush1.msra.mxu0 %v965
    %4628 = vmatprep.subr.mxu0 %v982
    %4629 = vmatpush1.msra.mxu0 %v981
    %4630 = vmatprep.subr.mxu0 %v998
    %4631 = vmatpush1.msra.mxu0 %v997
    %4632 = vmatprep.subr.mxu0 %v1014
    %4633 = vmatpush1.msra.mxu0 %v1013
    %4634 = vmatprep.subr.mxu0 %v1030
    %4635 = vmatpush1.msra.mxu0 %v1029
    %4636 = vmatprep.subr.mxu0 %v1046
    %4637 = vmatpush1.msra.mxu0 %v1045
    %4638 = vmatprep.subr.mxu0 %v1062
    %4639 = vmatpush1.msra.mxu0 %v1061
    %4640 = vmatprep.subr.mxu0 %v1078
    %4641 = vmatpush1.msra.mxu0 %v1077
    %4642 = vmatprep.mubr.f32.mxu0 %v2756
    %4643 = vmatmul.mubr.f32.gmra.mrb[0].mxu0 %v2754
    %v4644 = vpop.f32.mrb[0].mxu0
    %v4645 = vadd.f32 %v4574, %v4644
    %v4646 = vpop.f32.mrb[0].mxu0
    %v4647 = vadd.f32 %v4576, %v4646
    %4648 = vdwg.mxu0
    %4649 = vmatprep.subr.mxu0 %v1094
    %4650 = vmatpush1.msra.mxu0 %v1093
    %4651 = vmatprep.subr.mxu0 %v1110
    %4652 = vmatpush1.msra.mxu0 %v1109
    %4653 = vmatprep.subr.mxu0 %v1126
    %4654 = vmatpush1.msra.mxu0 %v1125
    %4655 = vmatprep.subr.mxu0 %v1142
    %4656 = vmatpush1.msra.mxu0 %v1141
    %4657 = vmatprep.subr.mxu0 %v1158
    %4658 = vmatpush1.msra.mxu0 %v1157
    %4659 = vmatprep.subr.mxu0 %v1174
    %4660 = vmatpush1.msra.mxu0 %v1173
    %4661 = vmatprep.subr.mxu0 %v1190
    %4662 = vmatpush1.msra.mxu0 %v1189
    %4663 = vmatprep.subr.mxu0 %v1206
    %4664 = vmatpush1.msra.mxu0 %v1205
    %4665 = vmatprep.subr.mxu0 %v1222
    %4666 = vmatpush1.msra.mxu0 %v1221
    %4667 = vmatprep.subr.mxu0 %v1238
    %4668 = vmatpush1.msra.mxu0 %v1237
    %4669 = vmatprep.subr.mxu0 %v1254
    %4670 = vmatpush1.msra.mxu0 %v1253
    %4671 = vmatprep.subr.mxu0 %v1270
    %4672 = vmatpush1.msra.mxu0 %v1269
    %4673 = vmatprep.subr.mxu0 %v1286
    %4674 = vmatpush1.msra.mxu0 %v1285
    %4675 = vmatprep.subr.mxu0 %v1302
    %4676 = vmatpush1.msra.mxu0 %v1301
    %4677 = vmatprep.subr.mxu0 %v1318
    %4678 = vmatpush1.msra.mxu0 %v1317
    %4679 = vmatprep.subr.mxu0 %v1334
    %4680 = vmatpush1.msra.mxu0 %v1333
    %4681 = vmatprep.subr.mxu0 %v1350
    %4682 = vmatpush1.msra.mxu0 %v1349
    %4683 = vmatprep.subr.mxu0 %v1366
    %4684 = vmatpush1.msra.mxu0 %v1365
    %4685 = vmatprep.subr.mxu0 %v1382
    %4686 = vmatpush1.msra.mxu0 %v1381
    %4687 = vmatprep.subr.mxu0 %v1398
    %4688 = vmatpush1.msra.mxu0 %v1397
    %4689 = vmatprep.subr.mxu0 %v1414
    %4690 = vmatpush1.msra.mxu0 %v1413
    %4691 = vmatprep.subr.mxu0 %v1430
    %4692 = vmatpush1.msra.mxu0 %v1429
    %4693 = vmatprep.subr.mxu0 %v1446
    %4694 = vmatpush1.msra.mxu0 %v1445
    %4695 = vmatprep.subr.mxu0 %v1462
    %4696 = vmatpush1.msra.mxu0 %v1461
    %4697 = vmatprep.subr.mxu0 %v1478
    %4698 = vmatpush1.msra.mxu0 %v1477
    %4699 = vmatprep.subr.mxu0 %v1494
    %4700 = vmatpush1.msra.mxu0 %v1493
    %4701 = vmatprep.subr.mxu0 %v1510
    %4702 = vmatpush1.msra.mxu0 %v1509
    %4703 = vmatprep.subr.mxu0 %v1526
    %4704 = vmatpush1.msra.mxu0 %v1525
    %4705 = vmatprep.subr.mxu0 %v1542
    %4706 = vmatpush1.msra.mxu0 %v1541
    %4707 = vmatprep.subr.mxu0 %v1558
    %4708 = vmatpush1.msra.mxu0 %v1557
    %4709 = vmatprep.subr.mxu0 %v1574
    %4710 = vmatpush1.msra.mxu0 %v1573
    %4711 = vmatprep.subr.mxu0 %v1590
    %4712 = vmatpush1.msra.mxu0 %v1589
    %4713 = vmatprep.mubr.f32.mxu0 %v2772
    %4714 = vmatmul.mubr.f32.gmra.mrb[0].mxu0 %v2764
    %v4715 = vpop.f32.mrb[0].mxu0
    %v4716 = vadd.f32 %v4645, %v4715
    %v4717 = vpop.f32.mrb[0].mxu0
    %v4718 = vadd.f32 %v4647, %v4717
    %4719 = vdwg.mxu0
    %4720 = vmatprep.subr.mxu0 %v1606
    %4721 = vmatpush1.msra.mxu0 %v1605
    %4722 = vmatprep.subr.mxu0 %v1622
    %4723 = vmatpush1.msra.mxu0 %v1621
    %4724 = vmatprep.subr.mxu0 %v1638
    %4725 = vmatpush1.msra.mxu0 %v1637
    %4726 = vmatprep.subr.mxu0 %v1654
    %4727 = vmatpush1.msra.mxu0 %v1653
    %4728 = vmatprep.subr.mxu0 %v1670
    %4729 = vmatpush1.msra.mxu0 %v1669
    %4730 = vmatprep.subr.mxu0 %v1686
    %4731 = vmatpush1.msra.mxu0 %v1685
    %4732 = vmatprep.subr.mxu0 %v1702
    %4733 = vmatpush1.msra.mxu0 %v1701
    %4734 = vmatprep.subr.mxu0 %v1718
    %4735 = vmatpush1.msra.mxu0 %v1717
    %4736 = vmatprep.subr.mxu0 %v1734
    %4737 = vmatpush1.msra.mxu0 %v1733
    %4738 = vmatprep.subr.mxu0 %v1750
    %4739 = vmatpush1.msra.mxu0 %v1749
    %4740 = vmatprep.subr.mxu0 %v1766
    %4741 = vmatpush1.msra.mxu0 %v1765
    %4742 = vmatprep.subr.mxu0 %v1782
    %4743 = vmatpush1.msra.mxu0 %v1781
    %4744 = vmatprep.subr.mxu0 %v1798
    %4745 = vmatpush1.msra.mxu0 %v1797
    %4746 = vmatprep.subr.mxu0 %v1814
    %4747 = vmatpush1.msra.mxu0 %v1813
    %4748 = vmatprep.subr.mxu0 %v1830
    %4749 = vmatpush1.msra.mxu0 %v1829
    %4750 = vmatprep.subr.mxu0 %v1846
    %4751 = vmatpush1.msra.mxu0 %v1845
    %4752 = vmatprep.subr.mxu0 %v1862
    %4753 = vmatpush1.msra.mxu0 %v1861
    %4754 = vmatprep.subr.mxu0 %v1878
    %4755 = vmatpush1.msra.mxu0 %v1877
    %4756 = vmatprep.subr.mxu0 %v1894
    %4757 = vmatpush1.msra.mxu0 %v1893
    %4758 = vmatprep.subr.mxu0 %v1910
    %4759 = vmatpush1.msra.mxu0 %v1909
    %4760 = vmatprep.subr.mxu0 %v1926
    %4761 = vmatpush1.msra.mxu0 %v1925
    %4762 = vmatprep.subr.mxu0 %v1942
    %4763 = vmatpush1.msra.mxu0 %v1941
    %4764 = vmatprep.subr.mxu0 %v1958
    %4765 = vmatpush1.msra.mxu0 %v1957
    %4766 = vmatprep.subr.mxu0 %v1974
    %4767 = vmatpush1.msra.mxu0 %v1973
    %4768 = vmatprep.subr.mxu0 %v1990
    %4769 = vmatpush1.msra.mxu0 %v1989
    %4770 = vmatprep.subr.mxu0 %v2006
    %4771 = vmatpush1.msra.mxu0 %v2005
    %4772 = vmatprep.subr.mxu0 %v2022
    %4773 = vmatpush1.msra.mxu0 %v2021
    %4774 = vmatprep.subr.mxu0 %v2038
    %4775 = vmatpush1.msra.mxu0 %v2037
    %4776 = vmatprep.subr.mxu0 %v2054
    %4777 = vmatpush1.msra.mxu0 %v2053
    %4778 = vmatprep.subr.mxu0 %v2070
    %4779 = vmatpush1.msra.mxu0 %v2069
    %4780 = vmatprep.subr.mxu0 %v2086
    %4781 = vmatpush1.msra.mxu0 %v2085
    %4782 = vmatprep.subr.mxu0 %v2102
    %4783 = vmatpush1.msra.mxu0 %v2101
    %4784 = vmatprep.mubr.f32.mxu0 %v2773
    %4785 = vmatmul.mubr.f32.gmra.mrb[0].mxu0 %v2771
    %v4786 = vpop.f32.mrb[0].mxu0
    %v4787 = vadd.f32 %v4716, %v4786
    %v4788 = vpop.f32.mrb[0].mxu0
    %v4789 = vadd.f32 %v4718, %v4788
    %4790 = vdwg.mxu0
    %4791 = vmatprep.subr.mxu0 %v2118
    %4792 = vmatpush1.msra.mxu0 %v2117
    %4793 = vmatprep.subr.mxu0 %v2134
    %4794 = vmatpush1.msra.mxu0 %v2133
    %4795 = vmatprep.subr.mxu0 %v2150
    %4796 = vmatpush1.msra.mxu0 %v2149
    %4797 = vmatprep.subr.mxu0 %v2166
    %4798 = vmatpush1.msra.mxu0 %v2165
    %4799 = vmatprep.subr.mxu0 %v2182
    %4800 = vmatpush1.msra.mxu0 %v2181
    %4801 = vmatprep.subr.mxu0 %v2198
    %4802 = vmatpush1.msra.mxu0 %v2197
    %4803 = vmatprep.subr.mxu0 %v2214
    %4804 = vmatpush1.msra.mxu0 %v2213
    %4805 = vmatprep.subr.mxu0 %v2230
    %4806 = vmatpush1.msra.mxu0 %v2229
    %4807 = vmatprep.subr.mxu0 %v2246
    %4808 = vmatpush1.msra.mxu0 %v2245
    %4809 = vmatprep.subr.mxu0 %v2262
    %4810 = vmatpush1.msra.mxu0 %v2261
    %4811 = vmatprep.subr.mxu0 %v2278
    %4812 = vmatpush1.msra.mxu0 %v2277
    %4813 = vmatprep.subr.mxu0 %v2294
    %4814 = vmatpush1.msra.mxu0 %v2293
    %4815 = vmatprep.subr.mxu0 %v2310
    %4816 = vmatpush1.msra.mxu0 %v2309
    %4817 = vmatprep.subr.mxu0 %v2326
    %4818 = vmatpush1.msra.mxu0 %v2325
    %4819 = vmatprep.subr.mxu0 %v2342
    %4820 = vmatpush1.msra.mxu0 %v2341
    %4821 = vmatprep.subr.mxu0 %v2358
    %4822 = vmatpush1.msra.mxu0 %v2357
    %4823 = vmatprep.subr.mxu0 %v2374
    %4824 = vmatpush1.msra.mxu0 %v2373
    %4825 = vmatprep.subr.mxu0 %v2390
    %4826 = vmatpush1.msra.mxu0 %v2389
    %4827 = vmatprep.subr.mxu0 %v2406
    %4828 = vmatpush1.msra.mxu0 %v2405
    %4829 = vmatprep.subr.mxu0 %v2422
    %4830 = vmatpush1.msra.mxu0 %v2421
    %4831 = vmatprep.subr.mxu0 %v2438
    %4832 = vmatpush1.msra.mxu0 %v2437
    %4833 = vmatprep.subr.mxu0 %v2454
    %4834 = vmatpush1.msra.mxu0 %v2453
    %4835 = vmatprep.subr.mxu0 %v2470
    %4836 = vmatpush1.msra.mxu0 %v2469
    %4837 = vmatprep.subr.mxu0 %v2486
    %4838 = vmatpush1.msra.mxu0 %v2485
    %4839 = vmatprep.subr.mxu0 %v2502
    %4840 = vmatpush1.msra.mxu0 %v2501
    %4841 = vmatprep.subr.mxu0 %v2518
    %4842 = vmatpush1.msra.mxu0 %v2517
    %4843 = vmatprep.subr.mxu0 %v2534
    %4844 = vmatpush1.msra.mxu0 %v2533
    %4845 = vmatprep.subr.mxu0 %v2550
    %4846 = vmatpush1.msra.mxu0 %v2549
    %4847 = vmatprep.subr.mxu0 %v2566
    %4848 = vmatpush1.msra.mxu0 %v2565
    %4849 = vmatprep.subr.mxu0 %v2582
    %4850 = vmatpush1.msra.mxu0 %v2581
    %4851 = vmatprep.subr.mxu0 %v2598
    %4852 = vmatpush1.msra.mxu0 %v2597
    %4853 = vmatprep.subr.mxu0 %v2614
    %4854 = vmatpush1.msra.mxu0 %v2613
    %4855 = vmatprep.mubr.f32.mxu0 %v2789
    %4856 = vmatmul.mubr.f32.gmra.mrb[0].mxu0 %v2781
    %v4857 = vpop.f32.mrb[0].mxu0
    %v4858 = vadd.f32 %v4787, %v4857
    %v4859 = vpop.f32.mrb[0].mxu0
    %v4860 = vadd.f32 %v4789, %v4859
    %4861 = vdwg.mxu0
    %4862 = vmatprep.subr.mxu0 %v2630
    %4863 = vmatpush1.msra.mxu0 %v2629
    %4864 = vmatprep.subr.mxu0 %v2646
    %4865 = vmatpush1.msra.mxu0 %v2645
    %4866 = vmatprep.subr.mxu0 0.0
    %4867 = vmatpush1.msra.mxu0 0.0
    %4868 = vmatprep.subr.mxu0 0.0
    %4869 = vmatpush1.msra.mxu0 0.0
    %4870 = vmatprep.subr.mxu0 0.0
    %4871 = vmatpush1.msra.mxu0 0.0
    %4872 = vmatprep.subr.mxu0 0.0
    %4873 = vmatpush1.msra.mxu0 0.0
    %4874 = vmatprep.subr.mxu0 0.0
    %4875 = vmatpush1.msra.mxu0 0.0
    %4876 = vmatprep.subr.mxu0 0.0
    %4877 = vmatpush1.msra.mxu0 0.0
    %4878 = vmatprep.subr.mxu0 0.0
    %4879 = vmatpush1.msra.mxu0 0.0
    %4880 = vmatprep.subr.mxu0 0.0
    %4881 = vmatpush1.msra.mxu0 0.0
    %4882 = vmatprep.subr.mxu0 0.0
    %4883 = vmatpush1.msra.mxu0 0.0
    %4884 = vmatprep.subr.mxu0 0.0
    %4885 = vmatpush1.msra.mxu0 0.0
    %4886 = vmatprep.subr.mxu0 0.0
    %4887 = vmatpush1.msra.mxu0 0.0
    %4888 = vmatprep.subr.mxu0 0.0
    %4889 = vmatpush1.msra.mxu0 0.0
    %4890 = vmatprep.subr.mxu0 0.0
    %4891 = vmatpush1.msra.mxu0 0.0
    %4892 = vmatprep.subr.mxu0 0.0
    %4893 = vmatpush1.msra.mxu0 0.0
    %4894 = vmatprep.subr.mxu0 0.0
    %4895 = vmatpush1.msra.mxu0 0.0
    %4896 = vmatprep.subr.mxu0 0.0
    %4897 = vmatpush1.msra.mxu0 0.0
    %4898 = vmatprep.subr.mxu0 0.0
    %4899 = vmatpush1.msra.mxu0 0.0
    %4900 = vmatprep.subr.mxu0 0.0
    %4901 = vmatpush1.msra.mxu0 0.0
    %4902 = vmatprep.subr.mxu0 0.0
    %4903 = vmatpush1.msra.mxu0 0.0
    %4904 = vmatprep.subr.mxu0 0.0
    %4905 = vmatpush1.msra.mxu0 0.0
    %4906 = vmatprep.subr.mxu0 0.0
    %4907 = vmatpush1.msra.mxu0 0.0
    %4908 = vmatprep.subr.mxu0 0.0
    %4909 = vmatpush1.msra.mxu0 0.0
    %4910 = vmatprep.subr.mxu0 0.0
    %4911 = vmatpush1.msra.mxu0 0.0
    %4912 = vmatprep.subr.mxu0 0.0
    %4913 = vmatpush1.msra.mxu0 0.0
    %4914 = vmatprep.subr.mxu0 0.0
    %4915 = vmatpush1.msra.mxu0 0.0
    %4916 = vmatprep.subr.mxu0 0.0
    %4917 = vmatpush1.msra.mxu0 0.0
    %4918 = vmatprep.subr.mxu0 0.0
    %4919 = vmatpush1.msra.mxu0 0.0
    %4920 = vmatprep.subr.mxu0 0.0
    %4921 = vmatpush1.msra.mxu0 0.0
    %4922 = vmatprep.subr.mxu0 0.0
    %4923 = vmatpush1.msra.mxu0 0.0
    %4924 = vmatprep.subr.mxu0 0.0
    %4925 = vmatpush1.msra.mxu0 0.0
    %4926 = vmatprep.mubr.f32.mxu0 0.0
    %4927 = vmatmul.mubr.f32.gmra.mrb[0].mxu0 %v2801
    %v4928 = vpop.f32.mrb[0].mxu0
    %v4929 = vadd.f32 %v4858, %v4928
    %v4930 = vpop.f32.mrb[0].mxu0
    %v4931 = vadd.f32 %v4860, %v4930
    %4932 = vdwg.mxu0
    %4933 = vmatprep.subr.mxu0 %v72
    %4934 = vmatpush1.msra.mxu0 %v71
    %4935 = vmatprep.subr.mxu0 %v88
    %4936 = vmatpush1.msra.mxu0 %v87
    %4937 = vmatprep.subr.mxu0 %v104
    %4938 = vmatpush1.msra.mxu0 %v103
    %4939 = vmatprep.subr.mxu0 %v120
    %4940 = vmatpush1.msra.mxu0 %v119
    %4941 = vmatprep.subr.mxu0 %v136
    %4942 = vmatpush1.msra.mxu0 %v135
    %4943 = vmatprep.subr.mxu0 %v152
    %4944 = vmatpush1.msra.mxu0 %v151
    %4945 = vmatprep.subr.mxu0 %v168
    %4946 = vmatpush1.msra.mxu0 %v167
    %4947 = vmatprep.subr.mxu0 %v184
    %4948 = vmatpush1.msra.mxu0 %v183
    %4949 = vmatprep.subr.mxu0 %v200
    %4950 = vmatpush1.msra.mxu0 %v199
    %4951 = vmatprep.subr.mxu0 %v216
    %4952 = vmatpush1.msra.mxu0 %v215
    %4953 = vmatprep.subr.mxu0 %v232
    %4954 = vmatpush1.msra.mxu0 %v231
    %4955 = vmatprep.subr.mxu0 %v248
    %4956 = vmatpush1.msra.mxu0 %v247
    %4957 = vmatprep.subr.mxu0 %v264
    %4958 = vmatpush1.msra.mxu0 %v263
    %4959 = vmatprep.subr.mxu0 %v280
    %4960 = vmatpush1.msra.mxu0 %v279
    %4961 = vmatprep.subr.mxu0 %v296
    %4962 = vmatpush1.msra.mxu0 %v295
    %4963 = vmatprep.subr.mxu0 %v312
    %4964 = vmatpush1.msra.mxu0 %v311
    %4965 = vmatprep.subr.mxu0 %v328
    %4966 = vmatpush1.msra.mxu0 %v327
    %4967 = vmatprep.subr.mxu0 %v344
    %4968 = vmatpush1.msra.mxu0 %v343
    %4969 = vmatprep.subr.mxu0 %v360
    %4970 = vmatpush1.msra.mxu0 %v359
    %4971 = vmatprep.subr.mxu0 %v376
    %4972 = vmatpush1.msra.mxu0 %v375
    %4973 = vmatprep.subr.mxu0 %v392
    %4974 = vmatpush1.msra.mxu0 %v391
    %4975 = vmatprep.subr.mxu0 %v408
    %4976 = vmatpush1.msra.mxu0 %v407
    %4977 = vmatprep.subr.mxu0 %v424
    %4978 = vmatpush1.msra.mxu0 %v423
    %4979 = vmatprep.subr.mxu0 %v440
    %4980 = vmatpush1.msra.mxu0 %v439
    %4981 = vmatprep.subr.mxu0 %v456
    %4982 = vmatpush1.msra.mxu0 %v455
    %4983 = vmatprep.subr.mxu0 %v472
    %4984 = vmatpush1.msra.mxu0 %v471
    %4985 = vmatprep.subr.mxu0 %v488
    %4986 = vmatpush1.msra.mxu0 %v487
    %4987 = vmatprep.subr.mxu0 %v504
    %4988 = vmatpush1.msra.mxu0 %v503
    %4989 = vmatprep.subr.mxu0 %v520
    %4990 = vmatpush1.msra.mxu0 %v519
    %4991 = vmatprep.subr.mxu0 %v536
    %4992 = vmatpush1.msra.mxu0 %v535
    %4993 = vmatprep.subr.mxu0 %v552
    %4994 = vmatpush1.msra.mxu0 %v551
    %4995 = vmatprep.subr.mxu0 %v568
    %4996 = vmatpush1.msra.mxu0 %v567
    %4997 = vmatprep.mubr.f32.mxu0 %v2755
    %4998 = vmatmul.mubr.f32.gmra.mrb[0].mxu0 %v2747
    %v4999 = vpop.f32.mrb[0].mxu0
    %v5000 = vadd.f32 %v2700, %v4999
    %v5001 = vpop.f32.mrb[0].mxu0
    %v5002 = vadd.f32 %v2704, %v5001
    %5003 = vdwg.mxu0
    %5004 = vmatprep.subr.mxu0 %v584
    %5005 = vmatpush1.msra.mxu0 %v583
    %5006 = vmatprep.subr.mxu0 %v600
    %5007 = vmatpush1.msra.mxu0 %v599
    %5008 = vmatprep.subr.mxu0 %v616
    %5009 = vmatpush1.msra.mxu0 %v615
    %5010 = vmatprep.subr.mxu0 %v632
    %5011 = vmatpush1.msra.mxu0 %v631
    %5012 = vmatprep.subr.mxu0 %v648
    %5013 = vmatpush1.msra.mxu0 %v647
    %5014 = vmatprep.subr.mxu0 %v664
    %5015 = vmatpush1.msra.mxu0 %v663
    %5016 = vmatprep.subr.mxu0 %v680
    %5017 = vmatpush1.msra.mxu0 %v679
    %5018 = vmatprep.subr.mxu0 %v696
    %5019 = vmatpush1.msra.mxu0 %v695
    %5020 = vmatprep.subr.mxu0 %v712
    %5021 = vmatpush1.msra.mxu0 %v711
    %5022 = vmatprep.subr.mxu0 %v728
    %5023 = vmatpush1.msra.mxu0 %v727
    %5024 = vmatprep.subr.mxu0 %v744
    %5025 = vmatpush1.msra.mxu0 %v743
    %5026 = vmatprep.subr.mxu0 %v760
    %5027 = vmatpush1.msra.mxu0 %v759
    %5028 = vmatprep.subr.mxu0 %v776
    %5029 = vmatpush1.msra.mxu0 %v775
    %5030 = vmatprep.subr.mxu0 %v792
    %5031 = vmatpush1.msra.mxu0 %v791
    %5032 = vmatprep.subr.mxu0 %v808
    %5033 = vmatpush1.msra.mxu0 %v807
    %5034 = vmatprep.subr.mxu0 %v824
    %5035 = vmatpush1.msra.mxu0 %v823
    %5036 = vmatprep.subr.mxu0 %v840
    %5037 = vmatpush1.msra.mxu0 %v839
    %5038 = vmatprep.subr.mxu0 %v856
    %5039 = vmatpush1.msra.mxu0 %v855
    %5040 = vmatprep.subr.mxu0 %v872
    %5041 = vmatpush1.msra.mxu0 %v871
    %5042 = vmatprep.subr.mxu0 %v888
    %5043 = vmatpush1.msra.mxu0 %v887
    %5044 = vmatprep.subr.mxu0 %v904
    %5045 = vmatpush1.msra.mxu0 %v903
    %5046 = vmatprep.subr.mxu0 %v920
    %5047 = vmatpush1.msra.mxu0 %v919
    %5048 = vmatprep.subr.mxu0 %v936
    %5049 = vmatpush1.msra.mxu0 %v935
    %5050 = vmatprep.subr.mxu0 %v952
    %5051 = vmatpush1.msra.mxu0 %v951
    %5052 = vmatprep.subr.mxu0 %v968
    %5053 = vmatpush1.msra.mxu0 %v967
    %5054 = vmatprep.subr.mxu0 %v984
    %5055 = vmatpush1.msra.mxu0 %v983
    %5056 = vmatprep.subr.mxu0 %v1000
    %5057 = vmatpush1.msra.mxu0 %v999
    %5058 = vmatprep.subr.mxu0 %v1016
    %5059 = vmatpush1.msra.mxu0 %v1015
    %5060 = vmatprep.subr.mxu0 %v1032
    %5061 = vmatpush1.msra.mxu0 %v1031
    %5062 = vmatprep.subr.mxu0 %v1048
    %5063 = vmatpush1.msra.mxu0 %v1047
    %5064 = vmatprep.subr.mxu0 %v1064
    %5065 = vmatpush1.msra.mxu0 %v1063
    %5066 = vmatprep.subr.mxu0 %v1080
    %5067 = vmatpush1.msra.mxu0 %v1079
    %5068 = vmatprep.mubr.f32.mxu0 %v2756
    %5069 = vmatmul.mubr.f32.gmra.mrb[0].mxu0 %v2754
    %v5070 = vpop.f32.mrb[0].mxu0
    %v5071 = vadd.f32 %v5000, %v5070
    %v5072 = vpop.f32.mrb[0].mxu0
    %v5073 = vadd.f32 %v5002, %v5072
    %5074 = vdwg.mxu0
    %5075 = vmatprep.subr.mxu0 %v1096
    %5076 = vmatpush1.msra.mxu0 %v1095
    %5077 = vmatprep.subr.mxu0 %v1112
    %5078 = vmatpush1.msra.mxu0 %v1111
    %5079 = vmatprep.subr.mxu0 %v1128
    %5080 = vmatpush1.msra.mxu0 %v1127
    %5081 = vmatprep.subr.mxu0 %v1144
    %5082 = vmatpush1.msra.mxu0 %v1143
    %5083 = vmatprep.subr.mxu0 %v1160
    %5084 = vmatpush1.msra.mxu0 %v1159
    %5085 = vmatprep.subr.mxu0 %v1176
    %5086 = vmatpush1.msra.mxu0 %v1175
    %5087 = vmatprep.subr.mxu0 %v1192
    %5088 = vmatpush1.msra.mxu0 %v1191
    %5089 = vmatprep.subr.mxu0 %v1208
    %5090 = vmatpush1.msra.mxu0 %v1207
    %5091 = vmatprep.subr.mxu0 %v1224
    %5092 = vmatpush1.msra.mxu0 %v1223
    %5093 = vmatprep.subr.mxu0 %v1240
    %5094 = vmatpush1.msra.mxu0 %v1239
    %5095 = vmatprep.subr.mxu0 %v1256
    %5096 = vmatpush1.msra.mxu0 %v1255
    %5097 = vmatprep.subr.mxu0 %v1272
    %5098 = vmatpush1.msra.mxu0 %v1271
    %5099 = vmatprep.subr.mxu0 %v1288
    %5100 = vmatpush1.msra.mxu0 %v1287
    %5101 = vmatprep.subr.mxu0 %v1304
    %5102 = vmatpush1.msra.mxu0 %v1303
    %5103 = vmatprep.subr.mxu0 %v1320
    %5104 = vmatpush1.msra.mxu0 %v1319
    %5105 = vmatprep.subr.mxu0 %v1336
    %5106 = vmatpush1.msra.mxu0 %v1335
    %5107 = vmatprep.subr.mxu0 %v1352
    %5108 = vmatpush1.msra.mxu0 %v1351
    %5109 = vmatprep.subr.mxu0 %v1368
    %5110 = vmatpush1.msra.mxu0 %v1367
    %5111 = vmatprep.subr.mxu0 %v1384
    %5112 = vmatpush1.msra.mxu0 %v1383
    %5113 = vmatprep.subr.mxu0 %v1400
    %5114 = vmatpush1.msra.mxu0 %v1399
    %5115 = vmatprep.subr.mxu0 %v1416
    %5116 = vmatpush1.msra.mxu0 %v1415
    %5117 = vmatprep.subr.mxu0 %v1432
    %5118 = vmatpush1.msra.mxu0 %v1431
    %5119 = vmatprep.subr.mxu0 %v1448
    %5120 = vmatpush1.msra.mxu0 %v1447
    %5121 = vmatprep.subr.mxu0 %v1464
    %5122 = vmatpush1.msra.mxu0 %v1463
    %5123 = vmatprep.subr.mxu0 %v1480
    %5124 = vmatpush1.msra.mxu0 %v1479
    %5125 = vmatprep.subr.mxu0 %v1496
    %5126 = vmatpush1.msra.mxu0 %v1495
    %5127 = vmatprep.subr.mxu0 %v1512
    %5128 = vmatpush1.msra.mxu0 %v1511
    %5129 = vmatprep.subr.mxu0 %v1528
    %5130 = vmatpush1.msra.mxu0 %v1527
    %5131 = vmatprep.subr.mxu0 %v1544
    %5132 = vmatpush1.msra.mxu0 %v1543
    %5133 = vmatprep.subr.mxu0 %v1560
    %5134 = vmatpush1.msra.mxu0 %v1559
    %5135 = vmatprep.subr.mxu0 %v1576
    %5136 = vmatpush1.msra.mxu0 %v1575
    %5137 = vmatprep.subr.mxu0 %v1592
    %5138 = vmatpush1.msra.mxu0 %v1591
    %5139 = vmatprep.mubr.f32.mxu0 %v2772
    %5140 = vmatmul.mubr.f32.gmra.mrb[0].mxu0 %v2764
    %v5141 = vpop.f32.mrb[0].mxu0
    %v5142 = vadd.f32 %v5071, %v5141
    %v5143 = vpop.f32.mrb[0].mxu0
    %v5144 = vadd.f32 %v5073, %v5143
    %5145 = vdwg.mxu0
    %5146 = vmatprep.subr.mxu0 %v1608
    %5147 = vmatpush1.msra.mxu0 %v1607
    %5148 = vmatprep.subr.mxu0 %v1624
    %5149 = vmatpush1.msra.mxu0 %v1623
    %5150 = vmatprep.subr.mxu0 %v1640
    %5151 = vmatpush1.msra.mxu0 %v1639
    %5152 = vmatprep.subr.mxu0 %v1656
    %5153 = vmatpush1.msra.mxu0 %v1655
    %5154 = vmatprep.subr.mxu0 %v1672
    %5155 = vmatpush1.msra.mxu0 %v1671
    %5156 = vmatprep.subr.mxu0 %v1688
    %5157 = vmatpush1.msra.mxu0 %v1687
    %5158 = vmatprep.subr.mxu0 %v1704
    %5159 = vmatpush1.msra.mxu0 %v1703
    %5160 = vmatprep.subr.mxu0 %v1720
    %5161 = vmatpush1.msra.mxu0 %v1719
    %5162 = vmatprep.subr.mxu0 %v1736
    %5163 = vmatpush1.msra.mxu0 %v1735
    %5164 = vmatprep.subr.mxu0 %v1752
    %5165 = vmatpush1.msra.mxu0 %v1751
    %5166 = vmatprep.subr.mxu0 %v1768
    %5167 = vmatpush1.msra.mxu0 %v1767
    %5168 = vmatprep.subr.mxu0 %v1784
    %5169 = vmatpush1.msra.mxu0 %v1783
    %5170 = vmatprep.subr.mxu0 %v1800
    %5171 = vmatpush1.msra.mxu0 %v1799
    %5172 = vmatprep.subr.mxu0 %v1816
    %5173 = vmatpush1.msra.mxu0 %v1815
    %5174 = vmatprep.subr.mxu0 %v1832
    %5175 = vmatpush1.msra.mxu0 %v1831
    %5176 = vmatprep.subr.mxu0 %v1848
    %5177 = vmatpush1.msra.mxu0 %v1847
    %5178 = vmatprep.subr.mxu0 %v1864
    %5179 = vmatpush1.msra.mxu0 %v1863
    %5180 = vmatprep.subr.mxu0 %v1880
    %5181 = vmatpush1.msra.mxu0 %v1879
    %5182 = vmatprep.subr.mxu0 %v1896
    %5183 = vmatpush1.msra.mxu0 %v1895
    %5184 = vmatprep.subr.mxu0 %v1912
    %5185 = vmatpush1.msra.mxu0 %v1911
    %5186 = vmatprep.subr.mxu0 %v1928
    %5187 = vmatpush1.msra.mxu0 %v1927
    %5188 = vmatprep.subr.mxu0 %v1944
    %5189 = vmatpush1.msra.mxu0 %v1943
    %5190 = vmatprep.subr.mxu0 %v1960
    %5191 = vmatpush1.msra.mxu0 %v1959
    %5192 = vmatprep.subr.mxu0 %v1976
    %5193 = vmatpush1.msra.mxu0 %v1975
    %5194 = vmatprep.subr.mxu0 %v1992
    %5195 = vmatpush1.msra.mxu0 %v1991
    %5196 = vmatprep.subr.mxu0 %v2008
    %5197 = vmatpush1.msra.mxu0 %v2007
    %5198 = vmatprep.subr.mxu0 %v2024
    %5199 = vmatpush1.msra.mxu0 %v2023
    %5200 = vmatprep.subr.mxu0 %v2040
    %5201 = vmatpush1.msra.mxu0 %v2039
    %5202 = vmatprep.subr.mxu0 %v2056
    %5203 = vmatpush1.msra.mxu0 %v2055
    %5204 = vmatprep.subr.mxu0 %v2072
    %5205 = vmatpush1.msra.mxu0 %v2071
    %5206 = vmatprep.subr.mxu0 %v2088
    %5207 = vmatpush1.msra.mxu0 %v2087
    %5208 = vmatprep.subr.mxu0 %v2104
    %5209 = vmatpush1.msra.mxu0 %v2103
    %5210 = vmatprep.mubr.f32.mxu0 %v2773
    %5211 = vmatmul.mubr.f32.gmra.mrb[0].mxu0 %v2771
    %v5212 = vpop.f32.mrb[0].mxu0
    %v5213 = vadd.f32 %v5142, %v5212
    %v5214 = vpop.f32.mrb[0].mxu0
    %v5215 = vadd.f32 %v5144, %v5214
    %5216 = vdwg.mxu0
    %5217 = vmatprep.subr.mxu0 %v2120
    %5218 = vmatpush1.msra.mxu0 %v2119
    %5219 = vmatprep.subr.mxu0 %v2136
    %5220 = vmatpush1.msra.mxu0 %v2135
    %5221 = vmatprep.subr.mxu0 %v2152
    %5222 = vmatpush1.msra.mxu0 %v2151
    %5223 = vmatprep.subr.mxu0 %v2168
    %5224 = vmatpush1.msra.mxu0 %v2167
    %5225 = vmatprep.subr.mxu0 %v2184
    %5226 = vmatpush1.msra.mxu0 %v2183
    %5227 = vmatprep.subr.mxu0 %v2200
    %5228 = vmatpush1.msra.mxu0 %v2199
    %5229 = vmatprep.subr.mxu0 %v2216
    %5230 = vmatpush1.msra.mxu0 %v2215
    %5231 = vmatprep.subr.mxu0 %v2232
    %5232 = vmatpush1.msra.mxu0 %v2231
    %5233 = vmatprep.subr.mxu0 %v2248
    %5234 = vmatpush1.msra.mxu0 %v2247
    %5235 = vmatprep.subr.mxu0 %v2264
    %5236 = vmatpush1.msra.mxu0 %v2263
    %5237 = vmatprep.subr.mxu0 %v2280
    %5238 = vmatpush1.msra.mxu0 %v2279
    %5239 = vmatprep.subr.mxu0 %v2296
    %5240 = vmatpush1.msra.mxu0 %v2295
    %5241 = vmatprep.subr.mxu0 %v2312
    %5242 = vmatpush1.msra.mxu0 %v2311
    %5243 = vmatprep.subr.mxu0 %v2328
    %5244 = vmatpush1.msra.mxu0 %v2327
    %5245 = vmatprep.subr.mxu0 %v2344
    %5246 = vmatpush1.msra.mxu0 %v2343
    %5247 = vmatprep.subr.mxu0 %v2360
    %5248 = vmatpush1.msra.mxu0 %v2359
    %5249 = vmatprep.subr.mxu0 %v2376
    %5250 = vmatpush1.msra.mxu0 %v2375
    %5251 = vmatprep.subr.mxu0 %v2392
    %5252 = vmatpush1.msra.mxu0 %v2391
    %5253 = vmatprep.subr.mxu0 %v2408
    %5254 = vmatpush1.msra.mxu0 %v2407
    %5255 = vmatprep.subr.mxu0 %v2424
    %5256 = vmatpush1.msra.mxu0 %v2423
    %5257 = vmatprep.subr.mxu0 %v2440
    %5258 = vmatpush1.msra.mxu0 %v2439
    %5259 = vmatprep.subr.mxu0 %v2456
    %5260 = vmatpush1.msra.mxu0 %v2455
    %5261 = vmatprep.subr.mxu0 %v2472
    %5262 = vmatpush1.msra.mxu0 %v2471
    %5263 = vmatprep.subr.mxu0 %v2488
    %5264 = vmatpush1.msra.mxu0 %v2487
    %5265 = vmatprep.subr.mxu0 %v2504
    %5266 = vmatpush1.msra.mxu0 %v2503
    %5267 = vmatprep.subr.mxu0 %v2520
    %5268 = vmatpush1.msra.mxu0 %v2519
    %5269 = vmatprep.subr.mxu0 %v2536
    %5270 = vmatpush1.msra.mxu0 %v2535
    %5271 = vmatprep.subr.mxu0 %v2552
    %5272 = vmatpush1.msra.mxu0 %v2551
    %5273 = vmatprep.subr.mxu0 %v2568
    %5274 = vmatpush1.msra.mxu0 %v2567
    %5275 = vmatprep.subr.mxu0 %v2584
    %5276 = vmatpush1.msra.mxu0 %v2583
    %5277 = vmatprep.subr.mxu0 %v2600
    %5278 = vmatpush1.msra.mxu0 %v2599
    %5279 = vmatprep.subr.mxu0 %v2616
    %5280 = vmatpush1.msra.mxu0 %v2615
    %5281 = vmatprep.mubr.f32.mxu0 %v2789
    %5282 = vmatmul.mubr.f32.gmra.mrb[0].mxu0 %v2781
    %v5283 = vpop.f32.mrb[0].mxu0
    %v5284 = vadd.f32 %v5213, %v5283
    %v5285 = vpop.f32.mrb[0].mxu0
    %v5286 = vadd.f32 %v5215, %v5285
    %5287 = vdwg.mxu0
    %5288 = vmatprep.subr.mxu0 %v2632
    %5289 = vmatpush1.msra.mxu0 %v2631
    %5290 = vmatprep.subr.mxu0 %v2648
    %5291 = vmatpush1.msra.mxu0 %v2647
    %5292 = vmatprep.subr.mxu0 0.0
    %5293 = vmatpush1.msra.mxu0 0.0
    %5294 = vmatprep.subr.mxu0 0.0
    %5295 = vmatpush1.msra.mxu0 0.0
    %5296 = vmatprep.subr.mxu0 0.0
    %5297 = vmatpush1.msra.mxu0 0.0
    %5298 = vmatprep.subr.mxu0 0.0
    %5299 = vmatpush1.msra.mxu0 0.0
    %5300 = vmatprep.subr.mxu0 0.0
    %5301 = vmatpush1.msra.mxu0 0.0
    %5302 = vmatprep.subr.mxu0 0.0
    %5303 = vmatpush1.msra.mxu0 0.0
    %5304 = vmatprep.subr.mxu0 0.0
    %5305 = vmatpush1.msra.mxu0 0.0
    %5306 = vmatprep.subr.mxu0 0.0
    %5307 = vmatpush1.msra.mxu0 0.0
    %5308 = vmatprep.subr.mxu0 0.0
    %5309 = vmatpush1.msra.mxu0 0.0
    %5310 = vmatprep.subr.mxu0 0.0
    %5311 = vmatpush1.msra.mxu0 0.0
    %5312 = vmatprep.subr.mxu0 0.0
    %5313 = vmatpush1.msra.mxu0 0.0
    %5314 = vmatprep.subr.mxu0 0.0
    %5315 = vmatpush1.msra.mxu0 0.0
    %5316 = vmatprep.subr.mxu0 0.0
    %5317 = vmatpush1.msra.mxu0 0.0
    %5318 = vmatprep.subr.mxu0 0.0
    %5319 = vmatpush1.msra.mxu0 0.0
    %5320 = vmatprep.subr.mxu0 0.0
    %5321 = vmatpush1.msra.mxu0 0.0
    %5322 = vmatprep.subr.mxu0 0.0
    %5323 = vmatpush1.msra.mxu0 0.0
    %5324 = vmatprep.subr.mxu0 0.0
    %5325 = vmatpush1.msra.mxu0 0.0
    %5326 = vmatprep.subr.mxu0 0.0
    %5327 = vmatpush1.msra.mxu0 0.0
    %5328 = vmatprep.subr.mxu0 0.0
    %5329 = vmatpush1.msra.mxu0 0.0
    %5330 = vmatprep.subr.mxu0 0.0
    %5331 = vmatpush1.msra.mxu0 0.0
    %5332 = vmatprep.subr.mxu0 0.0
    %5333 = vmatpush1.msra.mxu0 0.0
    %5334 = vmatprep.subr.mxu0 0.0
    %5335 = vmatpush1.msra.mxu0 0.0
    %5336 = vmatprep.subr.mxu0 0.0
    %5337 = vmatpush1.msra.mxu0 0.0
    %5338 = vmatprep.subr.mxu0 0.0
    %5339 = vmatpush1.msra.mxu0 0.0
    %5340 = vmatprep.subr.mxu0 0.0
    %5341 = vmatpush1.msra.mxu0 0.0
    %5342 = vmatprep.subr.mxu0 0.0
    %5343 = vmatpush1.msra.mxu0 0.0
    %5344 = vmatprep.subr.mxu0 0.0
    %5345 = vmatpush1.msra.mxu0 0.0
    %5346 = vmatprep.subr.mxu0 0.0
    %5347 = vmatpush1.msra.mxu0 0.0
    %5348 = vmatprep.subr.mxu0 0.0
    %5349 = vmatpush1.msra.mxu0 0.0
    %5350 = vmatprep.subr.mxu0 0.0
    %5351 = vmatpush1.msra.mxu0 0.0
    %5352 = vmatprep.mubr.f32.mxu0 0.0
    %5353 = vmatmul.mubr.f32.gmra.mrb[0].mxu0 %v2801
    %v5354 = vpop.f32.mrb[0].mxu0
    %v5355 = vadd.f32 %v5284, %v5354
    %v5356 = vpop.f32.mrb[0].mxu0
    %v5357 = vadd.f32 %v5286, %v5356
    %5358 = vdwg.mxu0
    %5359 = vmatprep.subr.mxu0 %v74
    %5360 = vmatpush1.msra.mxu0 %v73
    %5361 = vmatprep.subr.mxu0 %v90
    %5362 = vmatpush1.msra.mxu0 %v89
    %5363 = vmatprep.subr.mxu0 %v106
    %5364 = vmatpush1.msra.mxu0 %v105
    %5365 = vmatprep.subr.mxu0 %v122
    %5366 = vmatpush1.msra.mxu0 %v121
    %5367 = vmatprep.subr.mxu0 %v138
    %5368 = vmatpush1.msra.mxu0 %v137
    %5369 = vmatprep.subr.mxu0 %v154
    %5370 = vmatpush1.msra.mxu0 %v153
    %5371 = vmatprep.subr.mxu0 %v170
    %5372 = vmatpush1.msra.mxu0 %v169
    %5373 = vmatprep.subr.mxu0 %v186
    %5374 = vmatpush1.msra.mxu0 %v185
    %5375 = vmatprep.subr.mxu0 %v202
    %5376 = vmatpush1.msra.mxu0 %v201
    %5377 = vmatprep.subr.mxu0 %v218
    %5378 = vmatpush1.msra.mxu0 %v217
    %5379 = vmatprep.subr.mxu0 %v234
    %5380 = vmatpush1.msra.mxu0 %v233
    %5381 = vmatprep.subr.mxu0 %v250
    %5382 = vmatpush1.msra.mxu0 %v249
    %5383 = vmatprep.subr.mxu0 %v266
    %5384 = vmatpush1.msra.mxu0 %v265
    %5385 = vmatprep.subr.mxu0 %v282
    %5386 = vmatpush1.msra.mxu0 %v281
    %5387 = vmatprep.subr.mxu0 %v298
    %5388 = vmatpush1.msra.mxu0 %v297
    %5389 = vmatprep.subr.mxu0 %v314
    %5390 = vmatpush1.msra.mxu0 %v313
    %5391 = vmatprep.subr.mxu0 %v330
    %5392 = vmatpush1.msra.mxu0 %v329
    %5393 = vmatprep.subr.mxu0 %v346
    %5394 = vmatpush1.msra.mxu0 %v345
    %5395 = vmatprep.subr.mxu0 %v362
    %5396 = vmatpush1.msra.mxu0 %v361
    %5397 = vmatprep.subr.mxu0 %v378
    %5398 = vmatpush1.msra.mxu0 %v377
    %5399 = vmatprep.subr.mxu0 %v394
    %5400 = vmatpush1.msra.mxu0 %v393
    %5401 = vmatprep.subr.mxu0 %v410
    %5402 = vmatpush1.msra.mxu0 %v409
    %5403 = vmatprep.subr.mxu0 %v426
    %5404 = vmatpush1.msra.mxu0 %v425
    %5405 = vmatprep.subr.mxu0 %v442
    %5406 = vmatpush1.msra.mxu0 %v441
    %5407 = vmatprep.subr.mxu0 %v458
    %5408 = vmatpush1.msra.mxu0 %v457
    %5409 = vmatprep.subr.mxu0 %v474
    %5410 = vmatpush1.msra.mxu0 %v473
    %5411 = vmatprep.subr.mxu0 %v490
    %5412 = vmatpush1.msra.mxu0 %v489
    %5413 = vmatprep.subr.mxu0 %v506
    %5414 = vmatpush1.msra.mxu0 %v505
    %5415 = vmatprep.subr.mxu0 %v522
    %5416 = vmatpush1.msra.mxu0 %v521
    %5417 = vmatprep.subr.mxu0 %v538
    %5418 = vmatpush1.msra.mxu0 %v537
    %5419 = vmatprep.subr.mxu0 %v554
    %5420 = vmatpush1.msra.mxu0 %v553
    %5421 = vmatprep.subr.mxu0 %v570
    %5422 = vmatpush1.msra.mxu0 %v569
    %5423 = vmatprep.mubr.f32.mxu0 %v2755
    %5424 = vmatmul.mubr.f32.gmra.mrb[0].mxu0 %v2747
    %v5425 = vpop.f32.mrb[0].mxu0
    %v5426 = vadd.f32 %v2708, %v5425
    %v5427 = vpop.f32.mrb[0].mxu0
    %v5428 = vadd.f32 %v2712, %v5427
    %5429 = vdwg.mxu0
    %5430 = vmatprep.subr.mxu0 %v586
    %5431 = vmatpush1.msra.mxu0 %v585
    %5432 = vmatprep.subr.mxu0 %v602
    %5433 = vmatpush1.msra.mxu0 %v601
    %5434 = vmatprep.subr.mxu0 %v618
    %5435 = vmatpush1.msra.mxu0 %v617
    %5436 = vmatprep.subr.mxu0 %v634
    %5437 = vmatpush1.msra.mxu0 %v633
    %5438 = vmatprep.subr.mxu0 %v650
    %5439 = vmatpush1.msra.mxu0 %v649
    %5440 = vmatprep.subr.mxu0 %v666
    %5441 = vmatpush1.msra.mxu0 %v665
    %5442 = vmatprep.subr.mxu0 %v682
    %5443 = vmatpush1.msra.mxu0 %v681
    %5444 = vmatprep.subr.mxu0 %v698
    %5445 = vmatpush1.msra.mxu0 %v697
    %5446 = vmatprep.subr.mxu0 %v714
    %5447 = vmatpush1.msra.mxu0 %v713
    %5448 = vmatprep.subr.mxu0 %v730
    %5449 = vmatpush1.msra.mxu0 %v729
    %5450 = vmatprep.subr.mxu0 %v746
    %5451 = vmatpush1.msra.mxu0 %v745
    %5452 = vmatprep.subr.mxu0 %v762
    %5453 = vmatpush1.msra.mxu0 %v761
    %5454 = vmatprep.subr.mxu0 %v778
    %5455 = vmatpush1.msra.mxu0 %v777
    %5456 = vmatprep.subr.mxu0 %v794
    %5457 = vmatpush1.msra.mxu0 %v793
    %5458 = vmatprep.subr.mxu0 %v810
    %5459 = vmatpush1.msra.mxu0 %v809
    %5460 = vmatprep.subr.mxu0 %v826
    %5461 = vmatpush1.msra.mxu0 %v825
    %5462 = vmatprep.subr.mxu0 %v842
    %5463 = vmatpush1.msra.mxu0 %v841
    %5464 = vmatprep.subr.mxu0 %v858
    %5465 = vmatpush1.msra.mxu0 %v857
    %5466 = vmatprep.subr.mxu0 %v874
    %5467 = vmatpush1.msra.mxu0 %v873
    %5468 = vmatprep.subr.mxu0 %v890
    %5469 = vmatpush1.msra.mxu0 %v889
    %5470 = vmatprep.subr.mxu0 %v906
    %5471 = vmatpush1.msra.mxu0 %v905
    %5472 = vmatprep.subr.mxu0 %v922
    %5473 = vmatpush1.msra.mxu0 %v921
    %5474 = vmatprep.subr.mxu0 %v938
    %5475 = vmatpush1.msra.mxu0 %v937
    %5476 = vmatprep.subr.mxu0 %v954
    %5477 = vmatpush1.msra.mxu0 %v953
    %5478 = vmatprep.subr.mxu0 %v970
    %5479 = vmatpush1.msra.mxu0 %v969
    %5480 = vmatprep.subr.mxu0 %v986
    %5481 = vmatpush1.msra.mxu0 %v985
    %5482 = vmatprep.subr.mxu0 %v1002
    %5483 = vmatpush1.msra.mxu0 %v1001
    %5484 = vmatprep.subr.mxu0 %v1018
    %5485 = vmatpush1.msra.mxu0 %v1017
    %5486 = vmatprep.subr.mxu0 %v1034
    %5487 = vmatpush1.msra.mxu0 %v1033
    %5488 = vmatprep.subr.mxu0 %v1050
    %5489 = vmatpush1.msra.mxu0 %v1049
    %5490 = vmatprep.subr.mxu0 %v1066
    %5491 = vmatpush1.msra.mxu0 %v1065
    %5492 = vmatprep.subr.mxu0 %v1082
    %5493 = vmatpush1.msra.mxu0 %v1081
    %5494 = vmatprep.mubr.f32.mxu0 %v2756
    %5495 = vmatmul.mubr.f32.gmra.mrb[0].mxu0 %v2754
    %v5496 = vpop.f32.mrb[0].mxu0
    %v5497 = vadd.f32 %v5426, %v5496
    %v5498 = vpop.f32.mrb[0].mxu0
    %v5499 = vadd.f32 %v5428, %v5498
    %5500 = vdwg.mxu0
    %5501 = vmatprep.subr.mxu0 %v1098
    %5502 = vmatpush1.msra.mxu0 %v1097
    %5503 = vmatprep.subr.mxu0 %v1114
    %5504 = vmatpush1.msra.mxu0 %v1113
    %5505 = vmatprep.subr.mxu0 %v1130
    %5506 = vmatpush1.msra.mxu0 %v1129
    %5507 = vmatprep.subr.mxu0 %v1146
    %5508 = vmatpush1.msra.mxu0 %v1145
    %5509 = vmatprep.subr.mxu0 %v1162
    %5510 = vmatpush1.msra.mxu0 %v1161
    %5511 = vmatprep.subr.mxu0 %v1178
    %5512 = vmatpush1.msra.mxu0 %v1177
    %5513 = vmatprep.subr.mxu0 %v1194
    %5514 = vmatpush1.msra.mxu0 %v1193
    %5515 = vmatprep.subr.mxu0 %v1210
    %5516 = vmatpush1.msra.mxu0 %v1209
    %5517 = vmatprep.subr.mxu0 %v1226
    %5518 = vmatpush1.msra.mxu0 %v1225
    %5519 = vmatprep.subr.mxu0 %v1242
    %5520 = vmatpush1.msra.mxu0 %v1241
    %5521 = vmatprep.subr.mxu0 %v1258
    %5522 = vmatpush1.msra.mxu0 %v1257
    %5523 = vmatprep.subr.mxu0 %v1274
    %5524 = vmatpush1.msra.mxu0 %v1273
    %5525 = vmatprep.subr.mxu0 %v1290
    %5526 = vmatpush1.msra.mxu0 %v1289
    %5527 = vmatprep.subr.mxu0 %v1306
    %5528 = vmatpush1.msra.mxu0 %v1305
    %5529 = vmatprep.subr.mxu0 %v1322
    %5530 = vmatpush1.msra.mxu0 %v1321
    %5531 = vmatprep.subr.mxu0 %v1338
    %5532 = vmatpush1.msra.mxu0 %v1337
    %5533 = vmatprep.subr.mxu0 %v1354
    %5534 = vmatpush1.msra.mxu0 %v1353
    %5535 = vmatprep.subr.mxu0 %v1370
    %5536 = vmatpush1.msra.mxu0 %v1369
    %5537 = vmatprep.subr.mxu0 %v1386
    %5538 = vmatpush1.msra.mxu0 %v1385
    %5539 = vmatprep.subr.mxu0 %v1402
    %5540 = vmatpush1.msra.mxu0 %v1401
    %5541 = vmatprep.subr.mxu0 %v1418
    %5542 = vmatpush1.msra.mxu0 %v1417
    %5543 = vmatprep.subr.mxu0 %v1434
    %5544 = vmatpush1.msra.mxu0 %v1433
    %5545 = vmatprep.subr.mxu0 %v1450
    %5546 = vmatpush1.msra.mxu0 %v1449
    %5547 = vmatprep.subr.mxu0 %v1466
    %5548 = vmatpush1.msra.mxu0 %v1465
    %5549 = vmatprep.subr.mxu0 %v1482
    %5550 = vmatpush1.msra.mxu0 %v1481
    %5551 = vmatprep.subr.mxu0 %v1498
    %5552 = vmatpush1.msra.mxu0 %v1497
    %5553 = vmatprep.subr.mxu0 %v1514
    %5554 = vmatpush1.msra.mxu0 %v1513
    %5555 = vmatprep.subr.mxu0 %v1530
    %5556 = vmatpush1.msra.mxu0 %v1529
    %5557 = vmatprep.subr.mxu0 %v1546
    %5558 = vmatpush1.msra.mxu0 %v1545
    %5559 = vmatprep.subr.mxu0 %v1562
    %5560 = vmatpush1.msra.mxu0 %v1561
    %5561 = vmatprep.subr.mxu0 %v1578
    %5562 = vmatpush1.msra.mxu0 %v1577
    %5563 = vmatprep.subr.mxu0 %v1594
    %5564 = vmatpush1.msra.mxu0 %v1593
    %5565 = vmatprep.mubr.f32.mxu0 %v2772
    %5566 = vmatmul.mubr.f32.gmra.mrb[0].mxu0 %v2764
    %v5567 = vpop.f32.mrb[0].mxu0
    %v5568 = vadd.f32 %v5497, %v5567
    %v5569 = vpop.f32.mrb[0].mxu0
    %v5570 = vadd.f32 %v5499, %v5569
    %5571 = vdwg.mxu0
    %5572 = vmatprep.subr.mxu0 %v1610
    %5573 = vmatpush1.msra.mxu0 %v1609
    %5574 = vmatprep.subr.mxu0 %v1626
    %5575 = vmatpush1.msra.mxu0 %v1625
    %5576 = vmatprep.subr.mxu0 %v1642
    %5577 = vmatpush1.msra.mxu0 %v1641
    %5578 = vmatprep.subr.mxu0 %v1658
    %5579 = vmatpush1.msra.mxu0 %v1657
    %5580 = vmatprep.subr.mxu0 %v1674
    %5581 = vmatpush1.msra.mxu0 %v1673
    %5582 = vmatprep.subr.mxu0 %v1690
    %5583 = vmatpush1.msra.mxu0 %v1689
    %5584 = vmatprep.subr.mxu0 %v1706
    %5585 = vmatpush1.msra.mxu0 %v1705
    %5586 = vmatprep.subr.mxu0 %v1722
    %5587 = vmatpush1.msra.mxu0 %v1721
    %5588 = vmatprep.subr.mxu0 %v1738
    %5589 = vmatpush1.msra.mxu0 %v1737
    %5590 = vmatprep.subr.mxu0 %v1754
    %5591 = vmatpush1.msra.mxu0 %v1753
    %5592 = vmatprep.subr.mxu0 %v1770
    %5593 = vmatpush1.msra.mxu0 %v1769
    %5594 = vmatprep.subr.mxu0 %v1786
    %5595 = vmatpush1.msra.mxu0 %v1785
    %5596 = vmatprep.subr.mxu0 %v1802
    %5597 = vmatpush1.msra.mxu0 %v1801
    %5598 = vmatprep.subr.mxu0 %v1818
    %5599 = vmatpush1.msra.mxu0 %v1817
    %5600 = vmatprep.subr.mxu0 %v1834
    %5601 = vmatpush1.msra.mxu0 %v1833
    %5602 = vmatprep.subr.mxu0 %v1850
    %5603 = vmatpush1.msra.mxu0 %v1849
    %5604 = vmatprep.subr.mxu0 %v1866
    %5605 = vmatpush1.msra.mxu0 %v1865
    %5606 = vmatprep.subr.mxu0 %v1882
    %5607 = vmatpush1.msra.mxu0 %v1881
    %5608 = vmatprep.subr.mxu0 %v1898
    %5609 = vmatpush1.msra.mxu0 %v1897
    %5610 = vmatprep.subr.mxu0 %v1914
    %5611 = vmatpush1.msra.mxu0 %v1913
    %5612 = vmatprep.subr.mxu0 %v1930
    %5613 = vmatpush1.msra.mxu0 %v1929
    %5614 = vmatprep.subr.mxu0 %v1946
    %5615 = vmatpush1.msra.mxu0 %v1945
    %5616 = vmatprep.subr.mxu0 %v1962
    %5617 = vmatpush1.msra.mxu0 %v1961
    %5618 = vmatprep.subr.mxu0 %v1978
    %5619 = vmatpush1.msra.mxu0 %v1977
    %5620 = vmatprep.subr.mxu0 %v1994
    %5621 = vmatpush1.msra.mxu0 %v1993
    %5622 = vmatprep.subr.mxu0 %v2010
    %5623 = vmatpush1.msra.mxu0 %v2009
    %5624 = vmatprep.subr.mxu0 %v2026
    %5625 = vmatpush1.msra.mxu0 %v2025
    %5626 = vmatprep.subr.mxu0 %v2042
    %5627 = vmatpush1.msra.mxu0 %v2041
    %5628 = vmatprep.subr.mxu0 %v2058
    %5629 = vmatpush1.msra.mxu0 %v2057
    %5630 = vmatprep.subr.mxu0 %v2074
    %5631 = vmatpush1.msra.mxu0 %v2073
    %5632 = vmatprep.subr.mxu0 %v2090
    %5633 = vmatpush1.msra.mxu0 %v2089
    %5634 = vmatprep.subr.mxu0 %v2106
    %5635 = vmatpush1.msra.mxu0 %v2105
    %5636 = vmatprep.mubr.f32.mxu0 %v2773
    %5637 = vmatmul.mubr.f32.gmra.mrb[0].mxu0 %v2771
    %v5638 = vpop.f32.mrb[0].mxu0
    %v5639 = vadd.f32 %v5568, %v5638
    %v5640 = vpop.f32.mrb[0].mxu0
    %v5641 = vadd.f32 %v5570, %v5640
    %5642 = vdwg.mxu0
    %5643 = vmatprep.subr.mxu0 %v2122
    %5644 = vmatpush1.msra.mxu0 %v2121
    %5645 = vmatprep.subr.mxu0 %v2138
    %5646 = vmatpush1.msra.mxu0 %v2137
    %5647 = vmatprep.subr.mxu0 %v2154
    %5648 = vmatpush1.msra.mxu0 %v2153
    %5649 = vmatprep.subr.mxu0 %v2170
    %5650 = vmatpush1.msra.mxu0 %v2169
    %5651 = vmatprep.subr.mxu0 %v2186
    %5652 = vmatpush1.msra.mxu0 %v2185
    %5653 = vmatprep.subr.mxu0 %v2202
    %5654 = vmatpush1.msra.mxu0 %v2201
    %5655 = vmatprep.subr.mxu0 %v2218
    %5656 = vmatpush1.msra.mxu0 %v2217
    %5657 = vmatprep.subr.mxu0 %v2234
    %5658 = vmatpush1.msra.mxu0 %v2233
    %5659 = vmatprep.subr.mxu0 %v2250
    %5660 = vmatpush1.msra.mxu0 %v2249
    %5661 = vmatprep.subr.mxu0 %v2266
    %5662 = vmatpush1.msra.mxu0 %v2265
    %5663 = vmatprep.subr.mxu0 %v2282
    %5664 = vmatpush1.msra.mxu0 %v2281
    %5665 = vmatprep.subr.mxu0 %v2298
    %5666 = vmatpush1.msra.mxu0 %v2297
    %5667 = vmatprep.subr.mxu0 %v2314
    %5668 = vmatpush1.msra.mxu0 %v2313
    %5669 = vmatprep.subr.mxu0 %v2330
    %5670 = vmatpush1.msra.mxu0 %v2329
    %5671 = vmatprep.subr.mxu0 %v2346
    %5672 = vmatpush1.msra.mxu0 %v2345
    %5673 = vmatprep.subr.mxu0 %v2362
    %5674 = vmatpush1.msra.mxu0 %v2361
    %5675 = vmatprep.subr.mxu0 %v2378
    %5676 = vmatpush1.msra.mxu0 %v2377
    %5677 = vmatprep.subr.mxu0 %v2394
    %5678 = vmatpush1.msra.mxu0 %v2393
    %5679 = vmatprep.subr.mxu0 %v2410
    %5680 = vmatpush1.msra.mxu0 %v2409
    %5681 = vmatprep.subr.mxu0 %v2426
    %5682 = vmatpush1.msra.mxu0 %v2425
    %5683 = vmatprep.subr.mxu0 %v2442
    %5684 = vmatpush1.msra.mxu0 %v2441
    %5685 = vmatprep.subr.mxu0 %v2458
    %5686 = vmatpush1.msra.mxu0 %v2457
    %5687 = vmatprep.subr.mxu0 %v2474
    %5688 = vmatpush1.msra.mxu0 %v2473
    %5689 = vmatprep.subr.mxu0 %v2490
    %5690 = vmatpush1.msra.mxu0 %v2489
    %5691 = vmatprep.subr.mxu0 %v2506
    %5692 = vmatpush1.msra.mxu0 %v2505
    %5693 = vmatprep.subr.mxu0 %v2522
    %5694 = vmatpush1.msra.mxu0 %v2521
    %5695 = vmatprep.subr.mxu0 %v2538
    %5696 = vmatpush1.msra.mxu0 %v2537
    %5697 = vmatprep.subr.mxu0 %v2554
    %5698 = vmatpush1.msra.mxu0 %v2553
    %5699 = vmatprep.subr.mxu0 %v2570
    %5700 = vmatpush1.msra.mxu0 %v2569
    %5701 = vmatprep.subr.mxu0 %v2586
    %5702 = vmatpush1.msra.mxu0 %v2585
    %5703 = vmatprep.subr.mxu0 %v2602
    %5704 = vmatpush1.msra.mxu0 %v2601
    %5705 = vmatprep.subr.mxu0 %v2618
    %5706 = vmatpush1.msra.mxu0 %v2617
    %5707 = vmatprep.mubr.f32.mxu0 %v2789
    %5708 = vmatmul.mubr.f32.gmra.mrb[0].mxu0 %v2781
    %v5709 = vpop.f32.mrb[0].mxu0
    %v5710 = vadd.f32 %v5639, %v5709
    %v5711 = vpop.f32.mrb[0].mxu0
    %v5712 = vadd.f32 %v5641, %v5711
    %5713 = vdwg.mxu0
    %5714 = vmatprep.subr.mxu0 %v2634
    %5715 = vmatpush1.msra.mxu0 %v2633
    %5716 = vmatprep.subr.mxu0 %v2650
    %5717 = vmatpush1.msra.mxu0 %v2649
    %5718 = vmatprep.subr.mxu0 0.0
    %5719 = vmatpush1.msra.mxu0 0.0
    %5720 = vmatprep.subr.mxu0 0.0
    %5721 = vmatpush1.msra.mxu0 0.0
    %5722 = vmatprep.subr.mxu0 0.0
    %5723 = vmatpush1.msra.mxu0 0.0
    %5724 = vmatprep.subr.mxu0 0.0
    %5725 = vmatpush1.msra.mxu0 0.0
    %5726 = vmatprep.subr.mxu0 0.0
    %5727 = vmatpush1.msra.mxu0 0.0
    %5728 = vmatprep.subr.mxu0 0.0
    %5729 = vmatpush1.msra.mxu0 0.0
    %5730 = vmatprep.subr.mxu0 0.0
    %5731 = vmatpush1.msra.mxu0 0.0
    %5732 = vmatprep.subr.mxu0 0.0
    %5733 = vmatpush1.msra.mxu0 0.0
    %5734 = vmatprep.subr.mxu0 0.0
    %5735 = vmatpush1.msra.mxu0 0.0
    %5736 = vmatprep.subr.mxu0 0.0
    %5737 = vmatpush1.msra.mxu0 0.0
    %5738 = vmatprep.subr.mxu0 0.0
    %5739 = vmatpush1.msra.mxu0 0.0
    %5740 = vmatprep.subr.mxu0 0.0
    %5741 = vmatpush1.msra.mxu0 0.0
    %5742 = vmatprep.subr.mxu0 0.0
    %5743 = vmatpush1.msra.mxu0 0.0
    %5744 = vmatprep.subr.mxu0 0.0
    %5745 = vmatpush1.msra.mxu0 0.0
    %5746 = vmatprep.subr.mxu0 0.0
    %5747 = vmatpush1.msra.mxu0 0.0
    %5748 = vmatprep.subr.mxu0 0.0
    %5749 = vmatpush1.msra.mxu0 0.0
    %5750 = vmatprep.subr.mxu0 0.0
    %5751 = vmatpush1.msra.mxu0 0.0
    %5752 = vmatprep.subr.mxu0 0.0
    %5753 = vmatpush1.msra.mxu0 0.0
    %5754 = vmatprep.subr.mxu0 0.0
    %5755 = vmatpush1.msra.mxu0 0.0
    %5756 = vmatprep.subr.mxu0 0.0
    %5757 = vmatpush1.msra.mxu0 0.0
    %5758 = vmatprep.subr.mxu0 0.0
    %5759 = vmatpush1.msra.mxu0 0.0
    %5760 = vmatprep.subr.mxu0 0.0
    %5761 = vmatpush1.msra.mxu0 0.0
    %5762 = vmatprep.subr.mxu0 0.0
    %5763 = vmatpush1.msra.mxu0 0.0
    %5764 = vmatprep.subr.mxu0 0.0
    %5765 = vmatpush1.msra.mxu0 0.0
    %5766 = vmatprep.subr.mxu0 0.0
    %5767 = vmatpush1.msra.mxu0 0.0
    %5768 = vmatprep.subr.mxu0 0.0
    %5769 = vmatpush1.msra.mxu0 0.0
    %5770 = vmatprep.subr.mxu0 0.0
    %5771 = vmatpush1.msra.mxu0 0.0
    %5772 = vmatprep.subr.mxu0 0.0
    %5773 = vmatpush1.msra.mxu0 0.0
    %5774 = vmatprep.subr.mxu0 0.0
    %5775 = vmatpush1.msra.mxu0 0.0
    %5776 = vmatprep.subr.mxu0 0.0
    %5777 = vmatpush1.msra.mxu0 0.0
    %5778 = vmatprep.mubr.f32.mxu0 0.0
    %5779 = vmatmul.mubr.f32.gmra.mrb[0].mxu0 %v2801
    %v5780 = vpop.f32.mrb[0].mxu0
    %v5781 = vadd.f32 %v5710, %v5780
    %v5782 = vpop.f32.mrb[0].mxu0
    %v5783 = vadd.f32 %v5712, %v5782
    %5784 = vdwg.mxu0
    %5785 = vmatprep.subr.mxu0 %v76
    %5786 = vmatpush1.msra.mxu0 %v75
    %5787 = vmatprep.subr.mxu0 %v92
    %5788 = vmatpush1.msra.mxu0 %v91
    %5789 = vmatprep.subr.mxu0 %v108
    %5790 = vmatpush1.msra.mxu0 %v107
    %5791 = vmatprep.subr.mxu0 %v124
    %5792 = vmatpush1.msra.mxu0 %v123
    %5793 = vmatprep.subr.mxu0 %v140
    %5794 = vmatpush1.msra.mxu0 %v139
    %5795 = vmatprep.subr.mxu0 %v156
    %5796 = vmatpush1.msra.mxu0 %v155
    %5797 = vmatprep.subr.mxu0 %v172
    %5798 = vmatpush1.msra.mxu0 %v171
    %5799 = vmatprep.subr.mxu0 %v188
    %5800 = vmatpush1.msra.mxu0 %v187
    %5801 = vmatprep.subr.mxu0 %v204
    %5802 = vmatpush1.msra.mxu0 %v203
    %5803 = vmatprep.subr.mxu0 %v220
    %5804 = vmatpush1.msra.mxu0 %v219
    %5805 = vmatprep.subr.mxu0 %v236
    %5806 = vmatpush1.msra.mxu0 %v235
    %5807 = vmatprep.subr.mxu0 %v252
    %5808 = vmatpush1.msra.mxu0 %v251
    %5809 = vmatprep.subr.mxu0 %v268
    %5810 = vmatpush1.msra.mxu0 %v267
    %5811 = vmatprep.subr.mxu0 %v284
    %5812 = vmatpush1.msra.mxu0 %v283
    %5813 = vmatprep.subr.mxu0 %v300
    %5814 = vmatpush1.msra.mxu0 %v299
    %5815 = vmatprep.subr.mxu0 %v316
    %5816 = vmatpush1.msra.mxu0 %v315
    %5817 = vmatprep.subr.mxu0 %v332
    %5818 = vmatpush1.msra.mxu0 %v331
    %5819 = vmatprep.subr.mxu0 %v348
    %5820 = vmatpush1.msra.mxu0 %v347
    %5821 = vmatprep.subr.mxu0 %v364
    %5822 = vmatpush1.msra.mxu0 %v363
    %5823 = vmatprep.subr.mxu0 %v380
    %5824 = vmatpush1.msra.mxu0 %v379
    %5825 = vmatprep.subr.mxu0 %v396
    %5826 = vmatpush1.msra.mxu0 %v395
    %5827 = vmatprep.subr.mxu0 %v412
    %5828 = vmatpush1.msra.mxu0 %v411
    %5829 = vmatprep.subr.mxu0 %v428
    %5830 = vmatpush1.msra.mxu0 %v427
    %5831 = vmatprep.subr.mxu0 %v444
    %5832 = vmatpush1.msra.mxu0 %v443
    %5833 = vmatprep.subr.mxu0 %v460
    %5834 = vmatpush1.msra.mxu0 %v459
    %5835 = vmatprep.subr.mxu0 %v476
    %5836 = vmatpush1.msra.mxu0 %v475
    %5837 = vmatprep.subr.mxu0 %v492
    %5838 = vmatpush1.msra.mxu0 %v491
    %5839 = vmatprep.subr.mxu0 %v508
    %5840 = vmatpush1.msra.mxu0 %v507
    %5841 = vmatprep.subr.mxu0 %v524
    %5842 = vmatpush1.msra.mxu0 %v523
    %5843 = vmatprep.subr.mxu0 %v540
    %5844 = vmatpush1.msra.mxu0 %v539
    %5845 = vmatprep.subr.mxu0 %v556
    %5846 = vmatpush1.msra.mxu0 %v555
    %5847 = vmatprep.subr.mxu0 %v572
    %5848 = vmatpush1.msra.mxu0 %v571
    %5849 = vmatprep.mubr.f32.mxu0 %v2755
    %5850 = vmatmul.mubr.f32.gmra.mrb[0].mxu0 %v2747
    %v5851 = vpop.f32.mrb[0].mxu0
    %v5852 = vadd.f32 %v2716, %v5851
    %v5853 = vpop.f32.mrb[0].mxu0
    %v5854 = vadd.f32 %v2720, %v5853
    %5855 = vdwg.mxu0
    %5856 = vmatprep.subr.mxu0 %v588
    %5857 = vmatpush1.msra.mxu0 %v587
    %5858 = vmatprep.subr.mxu0 %v604
    %5859 = vmatpush1.msra.mxu0 %v603
    %5860 = vmatprep.subr.mxu0 %v620
    %5861 = vmatpush1.msra.mxu0 %v619
    %5862 = vmatprep.subr.mxu0 %v636
    %5863 = vmatpush1.msra.mxu0 %v635
    %5864 = vmatprep.subr.mxu0 %v652
    %5865 = vmatpush1.msra.mxu0 %v651
    %5866 = vmatprep.subr.mxu0 %v668
    %5867 = vmatpush1.msra.mxu0 %v667
    %5868 = vmatprep.subr.mxu0 %v684
    %5869 = vmatpush1.msra.mxu0 %v683
    %5870 = vmatprep.subr.mxu0 %v700
    %5871 = vmatpush1.msra.mxu0 %v699
    %5872 = vmatprep.subr.mxu0 %v716
    %5873 = vmatpush1.msra.mxu0 %v715
    %5874 = vmatprep.subr.mxu0 %v732
    %5875 = vmatpush1.msra.mxu0 %v731
    %5876 = vmatprep.subr.mxu0 %v748
    %5877 = vmatpush1.msra.mxu0 %v747
    %5878 = vmatprep.subr.mxu0 %v764
    %5879 = vmatpush1.msra.mxu0 %v763
    %5880 = vmatprep.subr.mxu0 %v780
    %5881 = vmatpush1.msra.mxu0 %v779
    %5882 = vmatprep.subr.mxu0 %v796
    %5883 = vmatpush1.msra.mxu0 %v795
    %5884 = vmatprep.subr.mxu0 %v812
    %5885 = vmatpush1.msra.mxu0 %v811
    %5886 = vmatprep.subr.mxu0 %v828
    %5887 = vmatpush1.msra.mxu0 %v827
    %5888 = vmatprep.subr.mxu0 %v844
    %5889 = vmatpush1.msra.mxu0 %v843
    %5890 = vmatprep.subr.mxu0 %v860
    %5891 = vmatpush1.msra.mxu0 %v859
    %5892 = vmatprep.subr.mxu0 %v876
    %5893 = vmatpush1.msra.mxu0 %v875
    %5894 = vmatprep.subr.mxu0 %v892
    %5895 = vmatpush1.msra.mxu0 %v891
    %5896 = vmatprep.subr.mxu0 %v908
    %5897 = vmatpush1.msra.mxu0 %v907
    %5898 = vmatprep.subr.mxu0 %v924
    %5899 = vmatpush1.msra.mxu0 %v923
    %5900 = vmatprep.subr.mxu0 %v940
    %5901 = vmatpush1.msra.mxu0 %v939
    %5902 = vmatprep.subr.mxu0 %v956
    %5903 = vmatpush1.msra.mxu0 %v955
    %5904 = vmatprep.subr.mxu0 %v972
    %5905 = vmatpush1.msra.mxu0 %v971
    %5906 = vmatprep.subr.mxu0 %v988
    %5907 = vmatpush1.msra.mxu0 %v987
    %5908 = vmatprep.subr.mxu0 %v1004
    %5909 = vmatpush1.msra.mxu0 %v1003
    %5910 = vmatprep.subr.mxu0 %v1020
    %5911 = vmatpush1.msra.mxu0 %v1019
    %5912 = vmatprep.subr.mxu0 %v1036
    %5913 = vmatpush1.msra.mxu0 %v1035
    %5914 = vmatprep.subr.mxu0 %v1052
    %5915 = vmatpush1.msra.mxu0 %v1051
    %5916 = vmatprep.subr.mxu0 %v1068
    %5917 = vmatpush1.msra.mxu0 %v1067
    %5918 = vmatprep.subr.mxu0 %v1084
    %5919 = vmatpush1.msra.mxu0 %v1083
    %5920 = vmatprep.mubr.f32.mxu0 %v2756
    %5921 = vmatmul.mubr.f32.gmra.mrb[0].mxu0 %v2754
    %v5922 = vpop.f32.mrb[0].mxu0
    %v5923 = vadd.f32 %v5852, %v5922
    %v5924 = vpop.f32.mrb[0].mxu0
    %v5925 = vadd.f32 %v5854, %v5924
    %5926 = vdwg.mxu0
    %5927 = vmatprep.subr.mxu0 %v1100
    %5928 = vmatpush1.msra.mxu0 %v1099
    %5929 = vmatprep.subr.mxu0 %v1116
    %5930 = vmatpush1.msra.mxu0 %v1115
    %5931 = vmatprep.subr.mxu0 %v1132
    %5932 = vmatpush1.msra.mxu0 %v1131
    %5933 = vmatprep.subr.mxu0 %v1148
    %5934 = vmatpush1.msra.mxu0 %v1147
    %5935 = vmatprep.subr.mxu0 %v1164
    %5936 = vmatpush1.msra.mxu0 %v1163
    %5937 = vmatprep.subr.mxu0 %v1180
    %5938 = vmatpush1.msra.mxu0 %v1179
    %5939 = vmatprep.subr.mxu0 %v1196
    %5940 = vmatpush1.msra.mxu0 %v1195
    %5941 = vmatprep.subr.mxu0 %v1212
    %5942 = vmatpush1.msra.mxu0 %v1211
    %5943 = vmatprep.subr.mxu0 %v1228
    %5944 = vmatpush1.msra.mxu0 %v1227
    %5945 = vmatprep.subr.mxu0 %v1244
    %5946 = vmatpush1.msra.mxu0 %v1243
    %5947 = vmatprep.subr.mxu0 %v1260
    %5948 = vmatpush1.msra.mxu0 %v1259
    %5949 = vmatprep.subr.mxu0 %v1276
    %5950 = vmatpush1.msra.mxu0 %v1275
    %5951 = vmatprep.subr.mxu0 %v1292
    %5952 = vmatpush1.msra.mxu0 %v1291
    %5953 = vmatprep.subr.mxu0 %v1308
    %5954 = vmatpush1.msra.mxu0 %v1307
    %5955 = vmatprep.subr.mxu0 %v1324
    %5956 = vmatpush1.msra.mxu0 %v1323
    %5957 = vmatprep.subr.mxu0 %v1340
    %5958 = vmatpush1.msra.mxu0 %v1339
    %5959 = vmatprep.subr.mxu0 %v1356
    %5960 = vmatpush1.msra.mxu0 %v1355
    %5961 = vmatprep.subr.mxu0 %v1372
    %5962 = vmatpush1.msra.mxu0 %v1371
    %5963 = vmatprep.subr.mxu0 %v1388
    %5964 = vmatpush1.msra.mxu0 %v1387
    %5965 = vmatprep.subr.mxu0 %v1404
    %5966 = vmatpush1.msra.mxu0 %v1403
    %5967 = vmatprep.subr.mxu0 %v1420
    %5968 = vmatpush1.msra.mxu0 %v1419
    %5969 = vmatprep.subr.mxu0 %v1436
    %5970 = vmatpush1.msra.mxu0 %v1435
    %5971 = vmatprep.subr.mxu0 %v1452
    %5972 = vmatpush1.msra.mxu0 %v1451
    %5973 = vmatprep.subr.mxu0 %v1468
    %5974 = vmatpush1.msra.mxu0 %v1467
    %5975 = vmatprep.subr.mxu0 %v1484
    %5976 = vmatpush1.msra.mxu0 %v1483
    %5977 = vmatprep.subr.mxu0 %v1500
    %5978 = vmatpush1.msra.mxu0 %v1499
    %5979 = vmatprep.subr.mxu0 %v1516
    %5980 = vmatpush1.msra.mxu0 %v1515
    %5981 = vmatprep.subr.mxu0 %v1532
    %5982 = vmatpush1.msra.mxu0 %v1531
    %5983 = vmatprep.subr.mxu0 %v1548
    %5984 = vmatpush1.msra.mxu0 %v1547
    %5985 = vmatprep.subr.mxu0 %v1564
    %5986 = vmatpush1.msra.mxu0 %v1563
    %5987 = vmatprep.subr.mxu0 %v1580
    %5988 = vmatpush1.msra.mxu0 %v1579
    %5989 = vmatprep.subr.mxu0 %v1596
    %5990 = vmatpush1.msra.mxu0 %v1595
    %5991 = vmatprep.mubr.f32.mxu0 %v2772
    %5992 = vmatmul.mubr.f32.gmra.mrb[0].mxu0 %v2764
    %v5993 = vpop.f32.mrb[0].mxu0
    %v5994 = vadd.f32 %v5923, %v5993
    %v5995 = vpop.f32.mrb[0].mxu0
    %v5996 = vadd.f32 %v5925, %v5995
    %5997 = vdwg.mxu0
    %5998 = vmatprep.subr.mxu0 %v1612
    %5999 = vmatpush1.msra.mxu0 %v1611
    %6000 = vmatprep.subr.mxu0 %v1628
    %6001 = vmatpush1.msra.mxu0 %v1627
    %6002 = vmatprep.subr.mxu0 %v1644
    %6003 = vmatpush1.msra.mxu0 %v1643
    %6004 = vmatprep.subr.mxu0 %v1660
    %6005 = vmatpush1.msra.mxu0 %v1659
    %6006 = vmatprep.subr.mxu0 %v1676
    %6007 = vmatpush1.msra.mxu0 %v1675
    %6008 = vmatprep.subr.mxu0 %v1692
    %6009 = vmatpush1.msra.mxu0 %v1691
    %6010 = vmatprep.subr.mxu0 %v1708
    %6011 = vmatpush1.msra.mxu0 %v1707
    %6012 = vmatprep.subr.mxu0 %v1724
    %6013 = vmatpush1.msra.mxu0 %v1723
    %6014 = vmatprep.subr.mxu0 %v1740
    %6015 = vmatpush1.msra.mxu0 %v1739
    %6016 = vmatprep.subr.mxu0 %v1756
    %6017 = vmatpush1.msra.mxu0 %v1755
    %6018 = vmatprep.subr.mxu0 %v1772
    %6019 = vmatpush1.msra.mxu0 %v1771
    %6020 = vmatprep.subr.mxu0 %v1788
    %6021 = vmatpush1.msra.mxu0 %v1787
    %6022 = vmatprep.subr.mxu0 %v1804
    %6023 = vmatpush1.msra.mxu0 %v1803
    %6024 = vmatprep.subr.mxu0 %v1820
    %6025 = vmatpush1.msra.mxu0 %v1819
    %6026 = vmatprep.subr.mxu0 %v1836
    %6027 = vmatpush1.msra.mxu0 %v1835
    %6028 = vmatprep.subr.mxu0 %v1852
    %6029 = vmatpush1.msra.mxu0 %v1851
    %6030 = vmatprep.subr.mxu0 %v1868
    %6031 = vmatpush1.msra.mxu0 %v1867
    %6032 = vmatprep.subr.mxu0 %v1884
    %6033 = vmatpush1.msra.mxu0 %v1883
    %6034 = vmatprep.subr.mxu0 %v1900
    %6035 = vmatpush1.msra.mxu0 %v1899
    %6036 = vmatprep.subr.mxu0 %v1916
    %6037 = vmatpush1.msra.mxu0 %v1915
    %6038 = vmatprep.subr.mxu0 %v1932
    %6039 = vmatpush1.msra.mxu0 %v1931
    %6040 = vmatprep.subr.mxu0 %v1948
    %6041 = vmatpush1.msra.mxu0 %v1947
    %6042 = vmatprep.subr.mxu0 %v1964
    %6043 = vmatpush1.msra.mxu0 %v1963
    %6044 = vmatprep.subr.mxu0 %v1980
    %6045 = vmatpush1.msra.mxu0 %v1979
    %6046 = vmatprep.subr.mxu0 %v1996
    %6047 = vmatpush1.msra.mxu0 %v1995
    %6048 = vmatprep.subr.mxu0 %v2012
    %6049 = vmatpush1.msra.mxu0 %v2011
    %6050 = vmatprep.subr.mxu0 %v2028
    %6051 = vmatpush1.msra.mxu0 %v2027
    %6052 = vmatprep.subr.mxu0 %v2044
    %6053 = vmatpush1.msra.mxu0 %v2043
    %6054 = vmatprep.subr.mxu0 %v2060
    %6055 = vmatpush1.msra.mxu0 %v2059
    %6056 = vmatprep.subr.mxu0 %v2076
    %6057 = vmatpush1.msra.mxu0 %v2075
    %6058 = vmatprep.subr.mxu0 %v2092
    %6059 = vmatpush1.msra.mxu0 %v2091
    %6060 = vmatprep.subr.mxu0 %v2108
    %6061 = vmatpush1.msra.mxu0 %v2107
    %6062 = vmatprep.mubr.f32.mxu0 %v2773
    %6063 = vmatmul.mubr.f32.gmra.mrb[0].mxu0 %v2771
    %v6064 = vpop.f32.mrb[0].mxu0
    %v6065 = vadd.f32 %v5994, %v6064
    %v6066 = vpop.f32.mrb[0].mxu0
    %v6067 = vadd.f32 %v5996, %v6066
    %6068 = vdwg.mxu0
    %6069 = vmatprep.subr.mxu0 %v2124
    %6070 = vmatpush1.msra.mxu0 %v2123
    %6071 = vmatprep.subr.mxu0 %v2140
    %6072 = vmatpush1.msra.mxu0 %v2139
    %6073 = vmatprep.subr.mxu0 %v2156
    %6074 = vmatpush1.msra.mxu0 %v2155
    %6075 = vmatprep.subr.mxu0 %v2172
    %6076 = vmatpush1.msra.mxu0 %v2171
    %6077 = vmatprep.subr.mxu0 %v2188
    %6078 = vmatpush1.msra.mxu0 %v2187
    %6079 = vmatprep.subr.mxu0 %v2204
    %6080 = vmatpush1.msra.mxu0 %v2203
    %6081 = vmatprep.subr.mxu0 %v2220
    %6082 = vmatpush1.msra.mxu0 %v2219
    %6083 = vmatprep.subr.mxu0 %v2236
    %6084 = vmatpush1.msra.mxu0 %v2235
    %6085 = vmatprep.subr.mxu0 %v2252
    %6086 = vmatpush1.msra.mxu0 %v2251
    %6087 = vmatprep.subr.mxu0 %v2268
    %6088 = vmatpush1.msra.mxu0 %v2267
    %6089 = vmatprep.subr.mxu0 %v2284
    %6090 = vmatpush1.msra.mxu0 %v2283
    %6091 = vmatprep.subr.mxu0 %v2300
    %6092 = vmatpush1.msra.mxu0 %v2299
    %6093 = vmatprep.subr.mxu0 %v2316
    %6094 = vmatpush1.msra.mxu0 %v2315
    %6095 = vmatprep.subr.mxu0 %v2332
    %6096 = vmatpush1.msra.mxu0 %v2331
    %6097 = vmatprep.subr.mxu0 %v2348
    %6098 = vmatpush1.msra.mxu0 %v2347
    %6099 = vmatprep.subr.mxu0 %v2364
    %6100 = vmatpush1.msra.mxu0 %v2363
    %6101 = vmatprep.subr.mxu0 %v2380
    %6102 = vmatpush1.msra.mxu0 %v2379
    %6103 = vmatprep.subr.mxu0 %v2396
    %6104 = vmatpush1.msra.mxu0 %v2395
    %6105 = vmatprep.subr.mxu0 %v2412
    %6106 = vmatpush1.msra.mxu0 %v2411
    %6107 = vmatprep.subr.mxu0 %v2428
    %6108 = vmatpush1.msra.mxu0 %v2427
    %6109 = vmatprep.subr.mxu0 %v2444
    %6110 = vmatpush1.msra.mxu0 %v2443
    %6111 = vmatprep.subr.mxu0 %v2460
    %6112 = vmatpush1.msra.mxu0 %v2459
    %6113 = vmatprep.subr.mxu0 %v2476
    %6114 = vmatpush1.msra.mxu0 %v2475
    %6115 = vmatprep.subr.mxu0 %v2492
    %6116 = vmatpush1.msra.mxu0 %v2491
    %6117 = vmatprep.subr.mxu0 %v2508
    %6118 = vmatpush1.msra.mxu0 %v2507
    %6119 = vmatprep.subr.mxu0 %v2524
    %6120 = vmatpush1.msra.mxu0 %v2523
    %6121 = vmatprep.subr.mxu0 %v2540
    %6122 = vmatpush1.msra.mxu0 %v2539
    %6123 = vmatprep.subr.mxu0 %v2556
    %6124 = vmatpush1.msra.mxu0 %v2555
    %6125 = vmatprep.subr.mxu0 %v2572
    %6126 = vmatpush1.msra.mxu0 %v2571
    %6127 = vmatprep.subr.mxu0 %v2588
    %6128 = vmatpush1.msra.mxu0 %v2587
    %6129 = vmatprep.subr.mxu0 %v2604
    %6130 = vmatpush1.msra.mxu0 %v2603
    %6131 = vmatprep.subr.mxu0 %v2620
    %6132 = vmatpush1.msra.mxu0 %v2619
    %6133 = vmatprep.mubr.f32.mxu0 %v2789
    %6134 = vmatmul.mubr.f32.gmra.mrb[0].mxu0 %v2781
    %v6135 = vpop.f32.mrb[0].mxu0
    %v6136 = vadd.f32 %v6065, %v6135
    %v6137 = vpop.f32.mrb[0].mxu0
    %v6138 = vadd.f32 %v6067, %v6137
    %6139 = vdwg.mxu0
    %6140 = vmatprep.subr.mxu0 %v2636
    %6141 = vmatpush1.msra.mxu0 %v2635
    %6142 = vmatprep.subr.mxu0 %v2652
    %6143 = vmatpush1.msra.mxu0 %v2651
    %6144 = vmatprep.subr.mxu0 0.0
    %6145 = vmatpush1.msra.mxu0 0.0
    %6146 = vmatprep.subr.mxu0 0.0
    %6147 = vmatpush1.msra.mxu0 0.0
    %6148 = vmatprep.subr.mxu0 0.0
    %6149 = vmatpush1.msra.mxu0 0.0
    %6150 = vmatprep.subr.mxu0 0.0
    %6151 = vmatpush1.msra.mxu0 0.0
    %6152 = vmatprep.subr.mxu0 0.0
    %6153 = vmatpush1.msra.mxu0 0.0
    %6154 = vmatprep.subr.mxu0 0.0
    %6155 = vmatpush1.msra.mxu0 0.0
    %6156 = vmatprep.subr.mxu0 0.0
    %6157 = vmatpush1.msra.mxu0 0.0
    %6158 = vmatprep.subr.mxu0 0.0
    %6159 = vmatpush1.msra.mxu0 0.0
    %6160 = vmatprep.subr.mxu0 0.0
    %6161 = vmatpush1.msra.mxu0 0.0
    %6162 = vmatprep.subr.mxu0 0.0
    %6163 = vmatpush1.msra.mxu0 0.0
    %6164 = vmatprep.subr.mxu0 0.0
    %6165 = vmatpush1.msra.mxu0 0.0
    %6166 = vmatprep.subr.mxu0 0.0
    %6167 = vmatpush1.msra.mxu0 0.0
    %6168 = vmatprep.subr.mxu0 0.0
    %6169 = vmatpush1.msra.mxu0 0.0
    %6170 = vmatprep.subr.mxu0 0.0
    %6171 = vmatpush1.msra.mxu0 0.0
    %6172 = vmatprep.subr.mxu0 0.0
    %6173 = vmatpush1.msra.mxu0 0.0
    %6174 = vmatprep.subr.mxu0 0.0
    %6175 = vmatpush1.msra.mxu0 0.0
    %6176 = vmatprep.subr.mxu0 0.0
    %6177 = vmatpush1.msra.mxu0 0.0
    %6178 = vmatprep.subr.mxu0 0.0
    %6179 = vmatpush1.msra.mxu0 0.0
    %6180 = vmatprep.subr.mxu0 0.0
    %6181 = vmatpush1.msra.mxu0 0.0
    %6182 = vmatprep.subr.mxu0 0.0
    %6183 = vmatpush1.msra.mxu0 0.0
    %6184 = vmatprep.subr.mxu0 0.0
    %6185 = vmatpush1.msra.mxu0 0.0
    %6186 = vmatprep.subr.mxu0 0.0
    %6187 = vmatpush1.msra.mxu0 0.0
    %6188 = vmatprep.subr.mxu0 0.0
    %6189 = vmatpush1.msra.mxu0 0.0
    %6190 = vmatprep.subr.mxu0 0.0
    %6191 = vmatpush1.msra.mxu0 0.0
    %6192 = vmatprep.subr.mxu0 0.0
    %6193 = vmatpush1.msra.mxu0 0.0
    %6194 = vmatprep.subr.mxu0 0.0
    %6195 = vmatpush1.msra.mxu0 0.0
    %6196 = vmatprep.subr.mxu0 0.0
    %6197 = vmatpush1.msra.mxu0 0.0
    %6198 = vmatprep.subr.mxu0 0.0
    %6199 = vmatpush1.msra.mxu0 0.0
    %6200 = vmatprep.subr.mxu0 0.0
    %6201 = vmatpush1.msra.mxu0 0.0
    %6202 = vmatprep.subr.mxu0 0.0
    %6203 = vmatpush1.msra.mxu0 0.0
    %6204 = vmatprep.mubr.f32.mxu0 0.0
    %6205 = vmatmul.mubr.f32.gmra.mrb[0].mxu0 %v2801
    %v6206 = vpop.f32.mrb[0].mxu0
    %v6207 = vadd.f32 %v6136, %v6206
    %v6208 = vpop.f32.mrb[0].mxu0
    %v6209 = vadd.f32 %v6138, %v6208
    %6210 = vdwg.mxu0
    %v6211 = vmax.f32 %v3225, 0.0
    %v6212 = vmax.f32 %v3227, 0.0
    %v6213 = vmax.f32 %v3651, 0.0
    %v6214 = vmax.f32 %v3653, 0.0
    %v6215 = vmax.f32 %v4077, 0.0
    %v6216 = vmax.f32 %v4079, 0.0
    %v6217 = vmax.f32 %v4503, 0.0
    %v6218 = vmax.f32 %v4505, 0.0
    %v6219 = vmax.f32 %v4929, 0.0
    %v6220 = vmax.f32 %v4931, 0.0
    %v6221 = vmax.f32 %v5355, 0.0
    %v6222 = vmax.f32 %v5357, 0.0
    %v6223 = vmax.f32 %v5781, 0.0
    %v6224 = vmax.f32 %v5783, 0.0
    %v6225 = vmax.f32 %v6207, 0.0
    %v6226 = vmax.f32 %v6209, 0.0
    %v6227 = vld [vmem:[%s3] sm:$0xff]
    %v6228 = vld [vmem:[%s3 + $0x8] sm:$0xff]
    %v6229 = vld [vmem:[%s3 + $0x10] sm:$0xff]
    %v6230 = vld [vmem:[%s3 + $0x18] sm:$0xff]
    %v6231 = vld [vmem:[%s3 + $0x20] sm:$0xff]
    %v6232 = vld [vmem:[%s3 + $0x28] sm:$0xff]
    %v6233 = vld [vmem:[%s3 + $0x30] sm:$0xff]
    %v6234 = vld [vmem:[%s3 + $0x38] sm:$0xff]
    %v6235 = vld [vmem:[%s3 + $0x40] sm:$0xff]
    %v6236 = vld [vmem:[%s3 + $0x48] sm:$0xff]
    %v6237 = vld [vmem:[%s3 + $0x50] sm:$0xff]
    %v6238 = vld [vmem:[%s3 + $0x58] sm:$0xff]
    %v6239 = vld [vmem:[%s3 + $0x60] sm:$0xff]
    %v6240 = vld [vmem:[%s3 + $0x68] sm:$0xff]
    %v6241 = vld [vmem:[%s3 + $0x70] sm:$0xff]
    %v6242 = vld [vmem:[%s3 + $0x78] sm:$0xff]
    %v6243 = vld [vmem:[%s3 + $0x80] sm:$0xff]
    %v6244 = vld [vmem:[%s3 + $0x88] sm:$0xff]
    %v6245 = vld [vmem:[%s3 + $0x90] sm:$0xff]
    %v6246 = vld [vmem:[%s3 + $0x98] sm:$0xff]
    %v6247 = vld [vmem:[%s3 + $0xa0] sm:$0xff]
    %v6248 = vld [vmem:[%s3 + $0xa8] sm:$0xff]
    %v6249 = vld [vmem:[%s3 + $0xb0] sm:$0xff]
    %v6250 = vld [vmem:[%s3 + $0xb8] sm:$0xff]
    %v6251 = vld [vmem:[%s3 + $0xc0] sm:$0xff]
    %v6252 = vld [vmem:[%s3 + $0xc8] sm:$0xff]
    %v6253 = vld [vmem:[%s3 + $0xd0] sm:$0xff]
    %v6254 = vld [vmem:[%s3 + $0xd8] sm:$0xff]
    %v6255 = vld [vmem:[%s3 + $0xe0] sm:$0xff]
    %v6256 = vld [vmem:[%s3 + $0xe8] sm:$0xff]
    %v6257 = vld [vmem:[%s3 + $0xf0] sm:$0xff]
    %v6258 = vld [vmem:[%s3 + $0xf8] sm:$0xff]
    %v6259 = vld [vmem:[%s3 + $0x100] sm:$0xff]
    %v6260 = vld [vmem:[%s3 + $0x108] sm:$0xff]
    %v6261 = vld [vmem:[%s3 + $0x110] sm:$0xff]
    %v6262 = vld [vmem:[%s3 + $0x118] sm:$0xff]
    %v6263 = vld [vmem:[%s3 + $0x120] sm:$0xff]
    %v6264 = vld [vmem:[%s3 + $0x128] sm:$0xff]
    %v6265 = vld [vmem:[%s3 + $0x130] sm:$0xff]
    %v6266 = vld [vmem:[%s3 + $0x138] sm:$0xff]
    %v6267 = vld [vmem:[%s3 + $0x140] sm:$0xff]
    %v6268 = vld [vmem:[%s3 + $0x148] sm:$0xff]
    %v6269 = vld [vmem:[%s3 + $0x150] sm:$0xff]
    %v6270 = vld [vmem:[%s3 + $0x158] sm:$0xff]
    %v6271 = vld [vmem:[%s3 + $0x160] sm:$0xff]
    %v6272 = vld [vmem:[%s3 + $0x168] sm:$0xff]
    %v6273 = vld [vmem:[%s3 + $0x170] sm:$0xff]
    %v6274 = vld [vmem:[%s3 + $0x178] sm:$0xff]
    %v6275 = vld [vmem:[%s3 + $0x180] sm:$0xff]
    %v6276 = vld [vmem:[%s3 + $0x188] sm:$0xff]
    %v6277 = vld [vmem:[%s3 + $0x190] sm:$0xff]
    %v6278 = vld [vmem:[%s3 + $0x198] sm:$0xff]
    %v6279 = vld [vmem:[%s3 + $0x1a0] sm:$0xff]
    %v6280 = vld [vmem:[%s3 + $0x1a8] sm:$0xff]
    %v6281 = vld [vmem:[%s3 + $0x1b0] sm:$0xff]
    %v6282 = vld [vmem:[%s3 + $0x1b8] sm:$0xff]
    %v6283 = vld [vmem:[%s3 + $0x1c0] sm:$0xff]
    %v6284 = vld [vmem:[%s3 + $0x1c8] sm:$0xff]
    %v6285 = vld [vmem:[%s3 + $0x1d0] sm:$0xff]
    %v6286 = vld [vmem:[%s3 + $0x1d8] sm:$0xff]
    %v6287 = vld [vmem:[%s3 + $0x1e0] sm:$0xff]
    %v6288 = vld [vmem:[%s3 + $0x1e8] sm:$0xff]
    %v6289 = vld [vmem:[%s3 + $0x1f0] sm:$0xff]
    %v6290 = vld [vmem:[%s3 + $0x1f8] sm:$0xff]
    %v6291 = vld [vmem:[%s3 + $0x200] sm:$0xff]
    %v6292 = vld [vmem:[%s3 + $0x208] sm:$0xff]
    %v6293 = vld [vmem:[%s3 + $0x210] sm:$0xff]
    %v6294 = vld [vmem:[%s3 + $0x218] sm:$0xff]
    %v6295 = vld [vmem:[%s3 + $0x220] sm:$0xff]
    %v6296 = vld [vmem:[%s3 + $0x228] sm:$0xff]
    %v6297 = vld [vmem:[%s3 + $0x230] sm:$0xff]
    %v6298 = vld [vmem:[%s3 + $0x238] sm:$0xff]
    %v6299 = vld [vmem:[%s3 + $0x240] sm:$0xff]
    %v6300 = vld [vmem:[%s3 + $0x248] sm:$0xff]
    %v6301 = vld [vmem:[%s3 + $0x250] sm:$0xff]
    %v6302 = vld [vmem:[%s3 + $0x258] sm:$0xff]
    %v6303 = vld [vmem:[%s3 + $0x260] sm:$0xff]
    %v6304 = vld [vmem:[%s3 + $0x268] sm:$0xff]
    %v6305 = vld [vmem:[%s3 + $0x270] sm:$0xff]
    %v6306 = vld [vmem:[%s3 + $0x278] sm:$0xff]
    %v6307 = vld [vmem:[%s3 + $0x280] sm:$0xff]
    %v6308 = vld [vmem:[%s3 + $0x288] sm:$0xff]
    %v6309 = vld [vmem:[%s3 + $0x290] sm:$0xff]
    %v6310 = vld [vmem:[%s3 + $0x298] sm:$0xff]
    %v6311 = vld [vmem:[%s3 + $0x2a0] sm:$0xff]
    %v6312 = vld [vmem:[%s3 + $0x2a8] sm:$0xff]
    %v6313 = vld [vmem:[%s3 + $0x2b0] sm:$0xff]
    %v6314 = vld [vmem:[%s3 + $0x2b8] sm:$0xff]
    %v6315 = vld [vmem:[%s3 + $0x2c0] sm:$0xff]
    %v6316 = vld [vmem:[%s3 + $0x2c8] sm:$0xff]
    %v6317 = vld [vmem:[%s3 + $0x2d0] sm:$0xff]
    %v6318 = vld [vmem:[%s3 + $0x2d8] sm:$0xff]
    %v6319 = vld [vmem:[%s3 + $0x2e0] sm:$0xff]
    %v6320 = vld [vmem:[%s3 + $0x2e8] sm:$0xff]
    %v6321 = vld [vmem:[%s3 + $0x2f0] sm:$0xff]
    %v6322 = vld [vmem:[%s3 + $0x2f8] sm:$0xff]
    %v6323 = vld [vmem:[%s3 + $0x300] sm:$0xff]
    %v6324 = vld [vmem:[%s3 + $0x308] sm:$0xff]
    %v6325 = vld [vmem:[%s3 + $0x310] sm:$0xff]
    %v6326 = vld [vmem:[%s3 + $0x318] sm:$0xff]
    %v6327 = vld [vmem:[%s3 + $0x320] sm:$0xff]
    %v6328 = vld [vmem:[%s3 + $0x328] sm:$0xff]
    %v6329 = vld [vmem:[%s3 + $0x330] sm:$0xff]
    %v6330 = vld [vmem:[%s3 + $0x338] sm:$0xff]
    %v6331 = vld [vmem:[%s3 + $0x340] sm:$0xff]
    %v6332 = vld [vmem:[%s3 + $0x348] sm:$0xff]
    %v6333 = vld [vmem:[%s3 + $0x350] sm:$0xff]
    %v6334 = vld [vmem:[%s3 + $0x358] sm:$0xff]
    %v6335 = vld [vmem:[%s3 + $0x360] sm:$0xff]
    %v6336 = vld [vmem:[%s3 + $0x368] sm:$0xff]
    %v6337 = vld [vmem:[%s3 + $0x370] sm:$0xff]
    %v6338 = vld [vmem:[%s3 + $0x378] sm:$0xff]
    %v6339 = vld [vmem:[%s3 + $0x380] sm:$0xff]
    %v6340 = vld [vmem:[%s3 + $0x388] sm:$0xff]
    %v6341 = vld [vmem:[%s3 + $0x390] sm:$0xff]
    %v6342 = vld [vmem:[%s3 + $0x398] sm:$0xff]
    %v6343 = vld [vmem:[%s3 + $0x3a0] sm:$0xff]
    %v6344 = vld [vmem:[%s3 + $0x3a8] sm:$0xff]
    %v6345 = vld [vmem:[%s3 + $0x3b0] sm:$0xff]
    %v6346 = vld [vmem:[%s3 + $0x3b8] sm:$0xff]
    %v6347 = vld [vmem:[%s3 + $0x3c0] sm:$0xff]
    %v6348 = vld [vmem:[%s3 + $0x3c8] sm:$0xff]
    %v6349 = vld [vmem:[%s3 + $0x3d0] sm:$0xff]
    %v6350 = vld [vmem:[%s3 + $0x3d8] sm:$0xff]
    %v6351 = vld [vmem:[%s3 + $0x3e0] sm:$0xff]
    %v6352 = vld [vmem:[%s3 + $0x3e8] sm:$0xff]
    %v6353 = vld [vmem:[%s3 + $0x3f0] sm:$0xff]
    %v6354 = vld [vmem:[%s3 + $0x3f8] sm:$0xff]
    %v6355 = vld [vmem:[%s3 + $0x400] sm:$0xff]
    %v6356 = vld [vmem:[%s3 + $0x408] sm:$0xff]
    %v6357 = vld [vmem:[%s3 + $0x410] sm:$0xff]
    %v6358 = vld [vmem:[%s3 + $0x418] sm:$0xff]
    %v6359 = vld [vmem:[%s3 + $0x420] sm:$0xff]
    %v6360 = vld [vmem:[%s3 + $0x428] sm:$0xff]
    %v6361 = vld [vmem:[%s3 + $0x430] sm:$0xff]
    %v6362 = vld [vmem:[%s3 + $0x438] sm:$0xff]
    %v6363 = vld [vmem:[%s3 + $0x440] sm:$0xff]
    %v6364 = vld [vmem:[%s3 + $0x448] sm:$0xff]
    %v6365 = vld [vmem:[%s3 + $0x450] sm:$0xff]
    %v6366 = vld [vmem:[%s3 + $0x458] sm:$0xff]
    %v6367 = vld [vmem:[%s3 + $0x460] sm:$0xff]
    %v6368 = vld [vmem:[%s3 + $0x468] sm:$0xff]
    %v6369 = vld [vmem:[%s3 + $0x470] sm:$0xff]
    %v6370 = vld [vmem:[%s3 + $0x478] sm:$0xff]
    %v6371 = vld [vmem:[%s3 + $0x480] sm:$0xff]
    %v6372 = vld [vmem:[%s3 + $0x488] sm:$0xff]
    %v6373 = vld [vmem:[%s3 + $0x490] sm:$0xff]
    %v6374 = vld [vmem:[%s3 + $0x498] sm:$0xff]
    %v6375 = vld [vmem:[%s3 + $0x4a0] sm:$0xff]
    %v6376 = vld [vmem:[%s3 + $0x4a8] sm:$0xff]
    %v6377 = vld [vmem:[%s3 + $0x4b0] sm:$0xff]
    %v6378 = vld [vmem:[%s3 + $0x4b8] sm:$0xff]
    %v6379 = vld [vmem:[%s3 + $0x4c0] sm:$0xff]
    %v6380 = vld [vmem:[%s3 + $0x4c8] sm:$0xff]
    %v6381 = vld [vmem:[%s3 + $0x4d0] sm:$0xff]
    %v6382 = vld [vmem:[%s3 + $0x4d8] sm:$0xff]
    %v6383 = vld [vmem:[%s3 + $0x4e0] sm:$0xff]
    %v6384 = vld [vmem:[%s3 + $0x4e8] sm:$0xff]
    %v6385 = vld [vmem:[%s3 + $0x4f0] sm:$0xff]
    %v6386 = vld [vmem:[%s3 + $0x4f8] sm:$0xff]
    %v6387 = vld [vmem:[%s3 + $0x500] sm:$0xff]
    %v6388 = vld [vmem:[%s3 + $0x508] sm:$0xff]
    %v6389 = vld [vmem:[%s3 + $0x510] sm:$0xff]
    %v6390 = vld [vmem:[%s3 + $0x518] sm:$0xff]
    %v6391 = vld [vmem:[%s3 + $0x520] sm:$0xff]
    %v6392 = vld [vmem:[%s3 + $0x528] sm:$0xff]
    %v6393 = vld [vmem:[%s3 + $0x530] sm:$0xff]
    %v6394 = vld [vmem:[%s3 + $0x538] sm:$0xff]
    %v6395 = vld [vmem:[%s3 + $0x540] sm:$0xff]
    %v6396 = vld [vmem:[%s3 + $0x548] sm:$0xff]
    %v6397 = vld [vmem:[%s3 + $0x550] sm:$0xff]
    %v6398 = vld [vmem:[%s3 + $0x558] sm:$0xff]
    %v6399 = vld [vmem:[%s3 + $0x560] sm:$0xff]
    %v6400 = vld [vmem:[%s3 + $0x568] sm:$0xff]
    %v6401 = vld [vmem:[%s3 + $0x570] sm:$0xff]
    %v6402 = vld [vmem:[%s3 + $0x578] sm:$0xff]
    %v6403 = vld [vmem:[%s3 + $0x580] sm:$0xff]
    %v6404 = vld [vmem:[%s3 + $0x588] sm:$0xff]
    %v6405 = vld [vmem:[%s3 + $0x590] sm:$0xff]
    %v6406 = vld [vmem:[%s3 + $0x598] sm:$0xff]
    %v6407 = vld [vmem:[%s3 + $0x5a0] sm:$0xff]
    %v6408 = vld [vmem:[%s3 + $0x5a8] sm:$0xff]
    %v6409 = vld [vmem:[%s3 + $0x5b0] sm:$0xff]
    %v6410 = vld [vmem:[%s3 + $0x5b8] sm:$0xff]
    %v6411 = vld [vmem:[%s3 + $0x5c0] sm:$0xff]
    %v6412 = vld [vmem:[%s3 + $0x5c8] sm:$0xff]
    %v6413 = vld [vmem:[%s3 + $0x5d0] sm:$0xff]
    %v6414 = vld [vmem:[%s3 + $0x5d8] sm:$0xff]
    %v6415 = vld [vmem:[%s3 + $0x5e0] sm:$0xff]
    %v6416 = vld [vmem:[%s3 + $0x5e8] sm:$0xff]
    %v6417 = vld [vmem:[%s3 + $0x5f0] sm:$0xff]
    %v6418 = vld [vmem:[%s3 + $0x5f8] sm:$0xff]
    %v6419 = vld [vmem:[%s3 + $0x600] sm:$0xff]
    %v6420 = vld [vmem:[%s3 + $0x608] sm:$0xff]
    %v6421 = vld [vmem:[%s3 + $0x610] sm:$0xff]
    %v6422 = vld [vmem:[%s3 + $0x618] sm:$0xff]
    %v6423 = vld [vmem:[%s3 + $0x620] sm:$0xff]
    %v6424 = vld [vmem:[%s3 + $0x628] sm:$0xff]
    %v6425 = vld [vmem:[%s3 + $0x630] sm:$0xff]
    %v6426 = vld [vmem:[%s3 + $0x638] sm:$0xff]
    %v6427 = vld [vmem:[%s3 + $0x640] sm:$0xff]
    %v6428 = vld [vmem:[%s3 + $0x648] sm:$0xff]
    %v6429 = vld [vmem:[%s3 + $0x650] sm:$0xff]
    %v6430 = vld [vmem:[%s3 + $0x658] sm:$0xff]
    %v6431 = vld [vmem:[%s3 + $0x660] sm:$0xff]
    %v6432 = vld [vmem:[%s3 + $0x668] sm:$0xff]
    %v6433 = vld [vmem:[%s3 + $0x670] sm:$0xff]
    %v6434 = vld [vmem:[%s3 + $0x678] sm:$0xff]
    %v6435 = vld [vmem:[%s3 + $0x680] sm:$0xff]
    %v6436 = vld [vmem:[%s3 + $0x688] sm:$0xff]
    %v6437 = vld [vmem:[%s3 + $0x690] sm:$0xff]
    %v6438 = vld [vmem:[%s3 + $0x698] sm:$0xff]
    %v6439 = vld [vmem:[%s3 + $0x6a0] sm:$0xff]
    %v6440 = vld [vmem:[%s3 + $0x6a8] sm:$0xff]
    %v6441 = vld [vmem:[%s3 + $0x6b0] sm:$0xff]
    %v6442 = vld [vmem:[%s3 + $0x6b8] sm:$0xff]
    %v6443 = vld [vmem:[%s3 + $0x6c0] sm:$0xff]
    %v6444 = vld [vmem:[%s3 + $0x6c8] sm:$0xff]
    %v6445 = vld [vmem:[%s3 + $0x6d0] sm:$0xff]
    %v6446 = vld [vmem:[%s3 + $0x6d8] sm:$0xff]
    %v6447 = vld [vmem:[%s3 + $0x6e0] sm:$0xff]
    %v6448 = vld [vmem:[%s3 + $0x6e8] sm:$0xff]
    %v6449 = vld [vmem:[%s3 + $0x6f0] sm:$0xff]
    %v6450 = vld [vmem:[%s3 + $0x6f8] sm:$0xff]
    %v6451 = vld [vmem:[%s3 + $0x700] sm:$0xff]
    %v6452 = vld [vmem:[%s3 + $0x708] sm:$0xff]
    %v6453 = vld [vmem:[%s3 + $0x710] sm:$0xff]
    %v6454 = vld [vmem:[%s3 + $0x718] sm:$0xff]
    %v6455 = vld [vmem:[%s3 + $0x720] sm:$0xff]
    %v6456 = vld [vmem:[%s3 + $0x728] sm:$0xff]
    %v6457 = vld [vmem:[%s3 + $0x730] sm:$0xff]
    %v6458 = vld [vmem:[%s3 + $0x738] sm:$0xff]
    %v6459 = vld [vmem:[%s3 + $0x740] sm:$0xff]
    %v6460 = vld [vmem:[%s3 + $0x748] sm:$0xff]
    %v6461 = vld [vmem:[%s3 + $0x750] sm:$0xff]
    %v6462 = vld [vmem:[%s3 + $0x758] sm:$0xff]
    %v6463 = vld [vmem:[%s3 + $0x760] sm:$0xff]
    %v6464 = vld [vmem:[%s3 + $0x768] sm:$0xff]
    %v6465 = vld [vmem:[%s3 + $0x770] sm:$0xff]
    %v6466 = vld [vmem:[%s3 + $0x778] sm:$0xff]
    %v6467 = vld [vmem:[%s3 + $0x780] sm:$0xff]
    %v6468 = vld [vmem:[%s3 + $0x788] sm:$0xff]
    %v6469 = vld [vmem:[%s3 + $0x790] sm:$0xff]
    %v6470 = vld [vmem:[%s3 + $0x798] sm:$0xff]
    %v6471 = vld [vmem:[%s3 + $0x7a0] sm:$0xff]
    %v6472 = vld [vmem:[%s3 + $0x7a8] sm:$0xff]
    %v6473 = vld [vmem:[%s3 + $0x7b0] sm:$0xff]
    %v6474 = vld [vmem:[%s3 + $0x7b8] sm:$0xff]
    %v6475 = vld [vmem:[%s3 + $0x7c0] sm:$0xff]
    %v6476 = vld [vmem:[%s3 + $0x7c8] sm:$0xff]
    %v6477 = vld [vmem:[%s3 + $0x7d0] sm:$0xff]
    %v6478 = vld [vmem:[%s3 + $0x7d8] sm:$0xff]
    %v6479 = vld [vmem:[%s3 + $0x7e0] sm:$0xff]
    %v6480 = vld [vmem:[%s3 + $0x7e8] sm:$0xff]
    %v6481 = vld [vmem:[%s3 + $0x7f0] sm:$0xff]
    %v6482 = vld [vmem:[%s3 + $0x7f8] sm:$0xff]
    %v6483 = vld [vmem:[#allocation7] sm:$0x1]
    %v6485 = vlaneseq
    %v6486 = vshrl.u32 %v6485, 7
    %v6487 = vsub.s32 0, %v6486
    %v6488 = vrot.slane %v6483, %v6487
    %6490 = vmatprep.subr.mxu0 0.0
    %6491 = vmatpush1.msra.mxu0 %v6227
    %6492 = vmatprep.subr.mxu0 0.0
    %6493 = vmatpush1.msra.mxu0 %v6228
    %6494 = vmatprep.subr.mxu0 0.0
    %6495 = vmatpush1.msra.mxu0 %v6229
    %6496 = vmatprep.subr.mxu0 0.0
    %6497 = vmatpush1.msra.mxu0 %v6230
    %6498 = vmatprep.subr.mxu0 0.0
    %6499 = vmatpush1.msra.mxu0 %v6231
    %6500 = vmatprep.subr.mxu0 0.0
    %6501 = vmatpush1.msra.mxu0 %v6232
    %6502 = vmatprep.subr.mxu0 0.0
    %6503 = vmatpush1.msra.mxu0 %v6233
    %6504 = vmatprep.subr.mxu0 0.0
    %6505 = vmatpush1.msra.mxu0 %v6234
    %6506 = vmatprep.subr.mxu0 0.0
    %6507 = vmatpush1.msra.mxu0 %v6235
    %6508 = vmatprep.subr.mxu0 0.0
    %6509 = vmatpush1.msra.mxu0 %v6236
    %6510 = vmatprep.subr.mxu0 0.0
    %6511 = vmatpush1.msra.mxu0 %v6237
    %6512 = vmatprep.subr.mxu0 0.0
    %6513 = vmatpush1.msra.mxu0 %v6238
    %6514 = vmatprep.subr.mxu0 0.0
    %6515 = vmatpush1.msra.mxu0 %v6239
    %6516 = vmatprep.subr.mxu0 0.0
    %6517 = vmatpush1.msra.mxu0 %v6240
    %6518 = vmatprep.subr.mxu0 0.0
    %6519 = vmatpush1.msra.mxu0 %v6241
    %6520 = vmatprep.subr.mxu0 0.0
    %6521 = vmatpush1.msra.mxu0 %v6242
    %6522 = vmatprep.subr.mxu0 0.0
    %6523 = vmatpush1.msra.mxu0 %v6243
    %6524 = vmatprep.subr.mxu0 0.0
    %6525 = vmatpush1.msra.mxu0 %v6244
    %6526 = vmatprep.subr.mxu0 0.0
    %6527 = vmatpush1.msra.mxu0 %v6245
    %6528 = vmatprep.subr.mxu0 0.0
    %6529 = vmatpush1.msra.mxu0 %v6246
    %6530 = vmatprep.subr.mxu0 0.0
    %6531 = vmatpush1.msra.mxu0 %v6247
    %6532 = vmatprep.subr.mxu0 0.0
    %6533 = vmatpush1.msra.mxu0 %v6248
    %6534 = vmatprep.subr.mxu0 0.0
    %6535 = vmatpush1.msra.mxu0 %v6249
    %6536 = vmatprep.subr.mxu0 0.0
    %6537 = vmatpush1.msra.mxu0 %v6250
    %6538 = vmatprep.subr.mxu0 0.0
    %6539 = vmatpush1.msra.mxu0 %v6251
    %6540 = vmatprep.subr.mxu0 0.0
    %6541 = vmatpush1.msra.mxu0 %v6252
    %6542 = vmatprep.subr.mxu0 0.0
    %6543 = vmatpush1.msra.mxu0 %v6253
    %6544 = vmatprep.subr.mxu0 0.0
    %6545 = vmatpush1.msra.mxu0 %v6254
    %6546 = vmatprep.subr.mxu0 0.0
    %6547 = vmatpush1.msra.mxu0 %v6255
    %6548 = vmatprep.subr.mxu0 0.0
    %6549 = vmatpush1.msra.mxu0 %v6256
    %6550 = vmatprep.subr.mxu0 0.0
    %6551 = vmatpush1.msra.mxu0 %v6257
    %6552 = vmatprep.subr.mxu0 0.0
    %6553 = vmatpush1.msra.mxu0 %v6258
    %6554 = vmatprep.mubr.f32.mxu0 %v6212
    %6555 = vmatmul.mubr.f32.gmra.mrb[0].mxu0 %v6211
    %v6556 = vpop.f32.mrb[0].mxu0
    %v6557 = vadd.f32 %v6488, %v6556
    %v6558 = vpop.f32.mrb[0].mxu0
    %6559 = vdwg.mxu0
    %6560 = vmatprep.subr.mxu0 0.0
    %6561 = vmatpush1.msra.mxu0 %v6259
    %6562 = vmatprep.subr.mxu0 0.0
    %6563 = vmatpush1.msra.mxu0 %v6260
    %6564 = vmatprep.subr.mxu0 0.0
    %6565 = vmatpush1.msra.mxu0 %v6261
    %6566 = vmatprep.subr.mxu0 0.0
    %6567 = vmatpush1.msra.mxu0 %v6262
    %6568 = vmatprep.subr.mxu0 0.0
    %6569 = vmatpush1.msra.mxu0 %v6263
    %6570 = vmatprep.subr.mxu0 0.0
    %6571 = vmatpush1.msra.mxu0 %v6264
    %6572 = vmatprep.subr.mxu0 0.0
    %6573 = vmatpush1.msra.mxu0 %v6265
    %6574 = vmatprep.subr.mxu0 0.0
    %6575 = vmatpush1.msra.mxu0 %v6266
    %6576 = vmatprep.subr.mxu0 0.0
    %6577 = vmatpush1.msra.mxu0 %v6267
    %6578 = vmatprep.subr.mxu0 0.0
    %6579 = vmatpush1.msra.mxu0 %v6268
    %6580 = vmatprep.subr.mxu0 0.0
    %6581 = vmatpush1.msra.mxu0 %v6269
    %6582 = vmatprep.subr.mxu0 0.0
    %6583 = vmatpush1.msra.mxu0 %v6270
    %6584 = vmatprep.subr.mxu0 0.0
    %6585 = vmatpush1.msra.mxu0 %v6271
    %6586 = vmatprep.subr.mxu0 0.0
    %6587 = vmatpush1.msra.mxu0 %v6272
    %6588 = vmatprep.subr.mxu0 0.0
    %6589 = vmatpush1.msra.mxu0 %v6273
    %6590 = vmatprep.subr.mxu0 0.0
    %6591 = vmatpush1.msra.mxu0 %v6274
    %6592 = vmatprep.subr.mxu0 0.0
    %6593 = vmatpush1.msra.mxu0 %v6275
    %6594 = vmatprep.subr.mxu0 0.0
    %6595 = vmatpush1.msra.mxu0 %v6276
    %6596 = vmatprep.subr.mxu0 0.0
    %6597 = vmatpush1.msra.mxu0 %v6277
    %6598 = vmatprep.subr.mxu0 0.0
    %6599 = vmatpush1.msra.mxu0 %v6278
    %6600 = vmatprep.subr.mxu0 0.0
    %6601 = vmatpush1.msra.mxu0 %v6279
    %6602 = vmatprep.subr.mxu0 0.0
    %6603 = vmatpush1.msra.mxu0 %v6280
    %6604 = vmatprep.subr.mxu0 0.0
    %6605 = vmatpush1.msra.mxu0 %v6281
    %6606 = vmatprep.subr.mxu0 0.0
    %6607 = vmatpush1.msra.mxu0 %v6282
    %6608 = vmatprep.subr.mxu0 0.0
    %6609 = vmatpush1.msra.mxu0 %v6283
    %6610 = vmatprep.subr.mxu0 0.0
    %6611 = vmatpush1.msra.mxu0 %v6284
    %6612 = vmatprep.subr.mxu0 0.0
    %6613 = vmatpush1.msra.mxu0 %v6285
    %6614 = vmatprep.subr.mxu0 0.0
    %6615 = vmatpush1.msra.mxu0 %v6286
    %6616 = vmatprep.subr.mxu0 0.0
    %6617 = vmatpush1.msra.mxu0 %v6287
    %6618 = vmatprep.subr.mxu0 0.0
    %6619 = vmatpush1.msra.mxu0 %v6288
    %6620 = vmatprep.subr.mxu0 0.0
    %6621 = vmatpush1.msra.mxu0 %v6289
    %6622 = vmatprep.subr.mxu0 0.0
    %6623 = vmatpush1.msra.mxu0 %v6290
    %6624 = vmatprep.mubr.f32.mxu0 %v6214
    %6625 = vmatmul.mubr.f32.gmra.mrb[0].mxu0 %v6213
    %v6626 = vpop.f32.mrb[0].mxu0
    %v6627 = vadd.f32 %v6557, %v6626
    %v6628 = vpop.f32.mrb[0].mxu0
    %6629 = vdwg.mxu0
    %6630 = vmatprep.subr.mxu0 0.0
    %6631 = vmatpush1.msra.mxu0 %v6291
    %6632 = vmatprep.subr.mxu0 0.0
    %6633 = vmatpush1.msra.mxu0 %v6292
    %6634 = vmatprep.subr.mxu0 0.0
    %6635 = vmatpush1.msra.mxu0 %v6293
    %6636 = vmatprep.subr.mxu0 0.0
    %6637 = vmatpush1.msra.mxu0 %v6294
    %6638 = vmatprep.subr.mxu0 0.0
    %6639 = vmatpush1.msra.mxu0 %v6295
    %6640 = vmatprep.subr.mxu0 0.0
    %6641 = vmatpush1.msra.mxu0 %v6296
    %6642 = vmatprep.subr.mxu0 0.0
    %6643 = vmatpush1.msra.mxu0 %v6297
    %6644 = vmatprep.subr.mxu0 0.0
    %6645 = vmatpush1.msra.mxu0 %v6298
    %6646 = vmatprep.subr.mxu0 0.0
    %6647 = vmatpush1.msra.mxu0 %v6299
    %6648 = vmatprep.subr.mxu0 0.0
    %6649 = vmatpush1.msra.mxu0 %v6300
    %6650 = vmatprep.subr.mxu0 0.0
    %6651 = vmatpush1.msra.mxu0 %v6301
    %6652 = vmatprep.subr.mxu0 0.0
    %6653 = vmatpush1.msra.mxu0 %v6302
    %6654 = vmatprep.subr.mxu0 0.0
    %6655 = vmatpush1.msra.mxu0 %v6303
    %6656 = vmatprep.subr.mxu0 0.0
    %6657 = vmatpush1.msra.mxu0 %v6304
    %6658 = vmatprep.subr.mxu0 0.0
    %6659 = vmatpush1.msra.mxu0 %v6305
    %6660 = vmatprep.subr.mxu0 0.0
    %6661 = vmatpush1.msra.mxu0 %v6306
    %6662 = vmatprep.subr.mxu0 0.0
    %6663 = vmatpush1.msra.mxu0 %v6307
    %6664 = vmatprep.subr.mxu0 0.0
    %6665 = vmatpush1.msra.mxu0 %v6308
    %6666 = vmatprep.subr.mxu0 0.0
    %6667 = vmatpush1.msra.mxu0 %v6309
    %6668 = vmatprep.subr.mxu0 0.0
    %6669 = vmatpush1.msra.mxu0 %v6310
    %6670 = vmatprep.subr.mxu0 0.0
    %6671 = vmatpush1.msra.mxu0 %v6311
    %6672 = vmatprep.subr.mxu0 0.0
    %6673 = vmatpush1.msra.mxu0 %v6312
    %6674 = vmatprep.subr.mxu0 0.0
    %6675 = vmatpush1.msra.mxu0 %v6313
    %6676 = vmatprep.subr.mxu0 0.0
    %6677 = vmatpush1.msra.mxu0 %v6314
    %6678 = vmatprep.subr.mxu0 0.0
    %6679 = vmatpush1.msra.mxu0 %v6315
    %6680 = vmatprep.subr.mxu0 0.0
    %6681 = vmatpush1.msra.mxu0 %v6316
    %6682 = vmatprep.subr.mxu0 0.0
    %6683 = vmatpush1.msra.mxu0 %v6317
    %6684 = vmatprep.subr.mxu0 0.0
    %6685 = vmatpush1.msra.mxu0 %v6318
    %6686 = vmatprep.subr.mxu0 0.0
    %6687 = vmatpush1.msra.mxu0 %v6319
    %6688 = vmatprep.subr.mxu0 0.0
    %6689 = vmatpush1.msra.mxu0 %v6320
    %6690 = vmatprep.subr.mxu0 0.0
    %6691 = vmatpush1.msra.mxu0 %v6321
    %6692 = vmatprep.subr.mxu0 0.0
    %6693 = vmatpush1.msra.mxu0 %v6322
    %6694 = vmatprep.mubr.f32.mxu0 %v6216
    %6695 = vmatmul.mubr.f32.gmra.mrb[0].mxu0 %v6215
    %v6696 = vpop.f32.mrb[0].mxu0
    %v6697 = vadd.f32 %v6627, %v6696
    %v6698 = vpop.f32.mrb[0].mxu0
    %6699 = vdwg.mxu0
    %6700 = vmatprep.subr.mxu0 0.0
    %6701 = vmatpush1.msra.mxu0 %v6323
    %6702 = vmatprep.subr.mxu0 0.0
    %6703 = vmatpush1.msra.mxu0 %v6324
    %6704 = vmatprep.subr.mxu0 0.0
    %6705 = vmatpush1.msra.mxu0 %v6325
    %6706 = vmatprep.subr.mxu0 0.0
    %6707 = vmatpush1.msra.mxu0 %v6326
    %6708 = vmatprep.subr.mxu0 0.0
    %6709 = vmatpush1.msra.mxu0 %v6327
    %6710 = vmatprep.subr.mxu0 0.0
    %6711 = vmatpush1.msra.mxu0 %v6328
    %6712 = vmatprep.subr.mxu0 0.0
    %6713 = vmatpush1.msra.mxu0 %v6329
    %6714 = vmatprep.subr.mxu0 0.0
    %6715 = vmatpush1.msra.mxu0 %v6330
    %6716 = vmatprep.subr.mxu0 0.0
    %6717 = vmatpush1.msra.mxu0 %v6331
    %6718 = vmatprep.subr.mxu0 0.0
    %6719 = vmatpush1.msra.mxu0 %v6332
    %6720 = vmatprep.subr.mxu0 0.0
    %6721 = vmatpush1.msra.mxu0 %v6333
    %6722 = vmatprep.subr.mxu0 0.0
    %6723 = vmatpush1.msra.mxu0 %v6334
    %6724 = vmatprep.subr.mxu0 0.0
    %6725 = vmatpush1.msra.mxu0 %v6335
    %6726 = vmatprep.subr.mxu0 0.0
    %6727 = vmatpush1.msra.mxu0 %v6336
    %6728 = vmatprep.subr.mxu0 0.0
    %6729 = vmatpush1.msra.mxu0 %v6337
    %6730 = vmatprep.subr.mxu0 0.0
    %6731 = vmatpush1.msra.mxu0 %v6338
    %6732 = vmatprep.subr.mxu0 0.0
    %6733 = vmatpush1.msra.mxu0 %v6339
    %6734 = vmatprep.subr.mxu0 0.0
    %6735 = vmatpush1.msra.mxu0 %v6340
    %6736 = vmatprep.subr.mxu0 0.0
    %6737 = vmatpush1.msra.mxu0 %v6341
    %6738 = vmatprep.subr.mxu0 0.0
    %6739 = vmatpush1.msra.mxu0 %v6342
    %6740 = vmatprep.subr.mxu0 0.0
    %6741 = vmatpush1.msra.mxu0 %v6343
    %6742 = vmatprep.subr.mxu0 0.0
    %6743 = vmatpush1.msra.mxu0 %v6344
    %6744 = vmatprep.subr.mxu0 0.0
    %6745 = vmatpush1.msra.mxu0 %v6345
    %6746 = vmatprep.subr.mxu0 0.0
    %6747 = vmatpush1.msra.mxu0 %v6346
    %6748 = vmatprep.subr.mxu0 0.0
    %6749 = vmatpush1.msra.mxu0 %v6347
    %6750 = vmatprep.subr.mxu0 0.0
    %6751 = vmatpush1.msra.mxu0 %v6348
    %6752 = vmatprep.subr.mxu0 0.0
    %6753 = vmatpush1.msra.mxu0 %v6349
    %6754 = vmatprep.subr.mxu0 0.0
    %6755 = vmatpush1.msra.mxu0 %v6350
    %6756 = vmatprep.subr.mxu0 0.0
    %6757 = vmatpush1.msra.mxu0 %v6351
    %6758 = vmatprep.subr.mxu0 0.0
    %6759 = vmatpush1.msra.mxu0 %v6352
    %6760 = vmatprep.subr.mxu0 0.0
    %6761 = vmatpush1.msra.mxu0 %v6353
    %6762 = vmatprep.subr.mxu0 0.0
    %6763 = vmatpush1.msra.mxu0 %v6354
    %6764 = vmatprep.mubr.f32.mxu0 %v6218
    %6765 = vmatmul.mubr.f32.gmra.mrb[0].mxu0 %v6217
    %v6766 = vpop.f32.mrb[0].mxu0
    %v6767 = vadd.f32 %v6697, %v6766
    %v6768 = vpop.f32.mrb[0].mxu0
    %6769 = vdwg.mxu0
    %6770 = vmatprep.subr.mxu0 0.0
    %6771 = vmatpush1.msra.mxu0 %v6355
    %6772 = vmatprep.subr.mxu0 0.0
    %6773 = vmatpush1.msra.mxu0 %v6356
    %6774 = vmatprep.subr.mxu0 0.0
    %6775 = vmatpush1.msra.mxu0 %v6357
    %6776 = vmatprep.subr.mxu0 0.0
    %6777 = vmatpush1.msra.mxu0 %v6358
    %6778 = vmatprep.subr.mxu0 0.0
    %6779 = vmatpush1.msra.mxu0 %v6359
    %6780 = vmatprep.subr.mxu0 0.0
    %6781 = vmatpush1.msra.mxu0 %v6360
    %6782 = vmatprep.subr.mxu0 0.0
    %6783 = vmatpush1.msra.mxu0 %v6361
    %6784 = vmatprep.subr.mxu0 0.0
    %6785 = vmatpush1.msra.mxu0 %v6362
    %6786 = vmatprep.subr.mxu0 0.0
    %6787 = vmatpush1.msra.mxu0 %v6363
    %6788 = vmatprep.subr.mxu0 0.0
    %6789 = vmatpush1.msra.mxu0 %v6364
    %6790 = vmatprep.subr.mxu0 0.0
    %6791 = vmatpush1.msra.mxu0 %v6365
    %6792 = vmatprep.subr.mxu0 0.0
    %6793 = vmatpush1.msra.mxu0 %v6366
    %6794 = vmatprep.subr.mxu0 0.0
    %6795 = vmatpush1.msra.mxu0 %v6367
    %6796 = vmatprep.subr.mxu0 0.0
    %6797 = vmatpush1.msra.mxu0 %v6368
    %6798 = vmatprep.subr.mxu0 0.0
    %6799 = vmatpush1.msra.mxu0 %v6369
    %6800 = vmatprep.subr.mxu0 0.0
    %6801 = vmatpush1.msra.mxu0 %v6370
    %6802 = vmatprep.subr.mxu0 0.0
    %6803 = vmatpush1.msra.mxu0 %v6371
    %6804 = vmatprep.subr.mxu0 0.0
    %6805 = vmatpush1.msra.mxu0 %v6372
    %6806 = vmatprep.subr.mxu0 0.0
    %6807 = vmatpush1.msra.mxu0 %v6373
    %6808 = vmatprep.subr.mxu0 0.0
    %6809 = vmatpush1.msra.mxu0 %v6374
    %6810 = vmatprep.subr.mxu0 0.0
    %6811 = vmatpush1.msra.mxu0 %v6375
    %6812 = vmatprep.subr.mxu0 0.0
    %6813 = vmatpush1.msra.mxu0 %v6376
    %6814 = vmatprep.subr.mxu0 0.0
    %6815 = vmatpush1.msra.mxu0 %v6377
    %6816 = vmatprep.subr.mxu0 0.0
    %6817 = vmatpush1.msra.mxu0 %v6378
    %6818 = vmatprep.subr.mxu0 0.0
    %6819 = vmatpush1.msra.mxu0 %v6379
    %6820 = vmatprep.subr.mxu0 0.0
    %6821 = vmatpush1.msra.mxu0 %v6380
    %6822 = vmatprep.subr.mxu0 0.0
    %6823 = vmatpush1.msra.mxu0 %v6381
    %6824 = vmatprep.subr.mxu0 0.0
    %6825 = vmatpush1.msra.mxu0 %v6382
    %6826 = vmatprep.subr.mxu0 0.0
    %6827 = vmatpush1.msra.mxu0 %v6383
    %6828 = vmatprep.subr.mxu0 0.0
    %6829 = vmatpush1.msra.mxu0 %v6384
    %6830 = vmatprep.subr.mxu0 0.0
    %6831 = vmatpush1.msra.mxu0 %v6385
    %6832 = vmatprep.subr.mxu0 0.0
    %6833 = vmatpush1.msra.mxu0 %v6386
    %6834 = vmatprep.mubr.f32.mxu0 %v6220
    %6835 = vmatmul.mubr.f32.gmra.mrb[0].mxu0 %v6219
    %v6836 = vpop.f32.mrb[0].mxu0
    %v6837 = vadd.f32 %v6767, %v6836
    %v6838 = vpop.f32.mrb[0].mxu0
    %6839 = vdwg.mxu0
    %6840 = vmatprep.subr.mxu0 0.0
    %6841 = vmatpush1.msra.mxu0 %v6387
    %6842 = vmatprep.subr.mxu0 0.0
    %6843 = vmatpush1.msra.mxu0 %v6388
    %6844 = vmatprep.subr.mxu0 0.0
    %6845 = vmatpush1.msra.mxu0 %v6389
    %6846 = vmatprep.subr.mxu0 0.0
    %6847 = vmatpush1.msra.mxu0 %v6390
    %6848 = vmatprep.subr.mxu0 0.0
    %6849 = vmatpush1.msra.mxu0 %v6391
    %6850 = vmatprep.subr.mxu0 0.0
    %6851 = vmatpush1.msra.mxu0 %v6392
    %6852 = vmatprep.subr.mxu0 0.0
    %6853 = vmatpush1.msra.mxu0 %v6393
    %6854 = vmatprep.subr.mxu0 0.0
    %6855 = vmatpush1.msra.mxu0 %v6394
    %6856 = vmatprep.subr.mxu0 0.0
    %6857 = vmatpush1.msra.mxu0 %v6395
    %6858 = vmatprep.subr.mxu0 0.0
    %6859 = vmatpush1.msra.mxu0 %v6396
    %6860 = vmatprep.subr.mxu0 0.0
    %6861 = vmatpush1.msra.mxu0 %v6397
    %6862 = vmatprep.subr.mxu0 0.0
    %6863 = vmatpush1.msra.mxu0 %v6398
    %6864 = vmatprep.subr.mxu0 0.0
    %6865 = vmatpush1.msra.mxu0 %v6399
    %6866 = vmatprep.subr.mxu0 0.0
    %6867 = vmatpush1.msra.mxu0 %v6400
    %6868 = vmatprep.subr.mxu0 0.0
    %6869 = vmatpush1.msra.mxu0 %v6401
    %6870 = vmatprep.subr.mxu0 0.0
    %6871 = vmatpush1.msra.mxu0 %v6402
    %6872 = vmatprep.subr.mxu0 0.0
    %6873 = vmatpush1.msra.mxu0 %v6403
    %6874 = vmatprep.subr.mxu0 0.0
    %6875 = vmatpush1.msra.mxu0 %v6404
    %6876 = vmatprep.subr.mxu0 0.0
    %6877 = vmatpush1.msra.mxu0 %v6405
    %6878 = vmatprep.subr.mxu0 0.0
    %6879 = vmatpush1.msra.mxu0 %v6406
    %6880 = vmatprep.subr.mxu0 0.0
    %6881 = vmatpush1.msra.mxu0 %v6407
    %6882 = vmatprep.subr.mxu0 0.0
    %6883 = vmatpush1.msra.mxu0 %v6408
    %6884 = vmatprep.subr.mxu0 0.0
    %6885 = vmatpush1.msra.mxu0 %v6409
    %6886 = vmatprep.subr.mxu0 0.0
    %6887 = vmatpush1.msra.mxu0 %v6410
    %6888 = vmatprep.subr.mxu0 0.0
    %6889 = vmatpush1.msra.mxu0 %v6411
    %6890 = vmatprep.subr.mxu0 0.0
    %6891 = vmatpush1.msra.mxu0 %v6412
    %6892 = vmatprep.subr.mxu0 0.0
    %6893 = vmatpush1.msra.mxu0 %v6413
    %6894 = vmatprep.subr.mxu0 0.0
    %6895 = vmatpush1.msra.mxu0 %v6414
    %6896 = vmatprep.subr.mxu0 0.0
    %6897 = vmatpush1.msra.mxu0 %v6415
    %6898 = vmatprep.subr.mxu0 0.0
    %6899 = vmatpush1.msra.mxu0 %v6416
    %6900 = vmatprep.subr.mxu0 0.0
    %6901 = vmatpush1.msra.mxu0 %v6417
    %6902 = vmatprep.subr.mxu0 0.0
    %6903 = vmatpush1.msra.mxu0 %v6418
    %6904 = vmatprep.mubr.f32.mxu0 %v6222
    %6905 = vmatmul.mubr.f32.gmra.mrb[0].mxu0 %v6221
    %v6906 = vpop.f32.mrb[0].mxu0
    %v6907 = vadd.f32 %v6837, %v6906
    %v6908 = vpop.f32.mrb[0].mxu0
    %6909 = vdwg.mxu0
    %6910 = vmatprep.subr.mxu0 0.0
    %6911 = vmatpush1.msra.mxu0 %v6419
    %6912 = vmatprep.subr.mxu0 0.0
    %6913 = vmatpush1.msra.mxu0 %v6420
    %6914 = vmatprep.subr.mxu0 0.0
    %6915 = vmatpush1.msra.mxu0 %v6421
    %6916 = vmatprep.subr.mxu0 0.0
    %6917 = vmatpush1.msra.mxu0 %v6422
    %6918 = vmatprep.subr.mxu0 0.0
    %6919 = vmatpush1.msra.mxu0 %v6423
    %6920 = vmatprep.subr.mxu0 0.0
    %6921 = vmatpush1.msra.mxu0 %v6424
    %6922 = vmatprep.subr.mxu0 0.0
    %6923 = vmatpush1.msra.mxu0 %v6425
    %6924 = vmatprep.subr.mxu0 0.0
    %6925 = vmatpush1.msra.mxu0 %v6426
    %6926 = vmatprep.subr.mxu0 0.0
    %6927 = vmatpush1.msra.mxu0 %v6427
    %6928 = vmatprep.subr.mxu0 0.0
    %6929 = vmatpush1.msra.mxu0 %v6428
    %6930 = vmatprep.subr.mxu0 0.0
    %6931 = vmatpush1.msra.mxu0 %v6429
    %6932 = vmatprep.subr.mxu0 0.0
    %6933 = vmatpush1.msra.mxu0 %v6430
    %6934 = vmatprep.subr.mxu0 0.0
    %6935 = vmatpush1.msra.mxu0 %v6431
    %6936 = vmatprep.subr.mxu0 0.0
    %6937 = vmatpush1.msra.mxu0 %v6432
    %6938 = vmatprep.subr.mxu0 0.0
    %6939 = vmatpush1.msra.mxu0 %v6433
    %6940 = vmatprep.subr.mxu0 0.0
    %6941 = vmatpush1.msra.mxu0 %v6434
    %6942 = vmatprep.subr.mxu0 0.0
    %6943 = vmatpush1.msra.mxu0 %v6435
    %6944 = vmatprep.subr.mxu0 0.0
    %6945 = vmatpush1.msra.mxu0 %v6436
    %6946 = vmatprep.subr.mxu0 0.0
    %6947 = vmatpush1.msra.mxu0 %v6437
    %6948 = vmatprep.subr.mxu0 0.0
    %6949 = vmatpush1.msra.mxu0 %v6438
    %6950 = vmatprep.subr.mxu0 0.0
    %6951 = vmatpush1.msra.mxu0 %v6439
    %6952 = vmatprep.subr.mxu0 0.0
    %6953 = vmatpush1.msra.mxu0 %v6440
    %6954 = vmatprep.subr.mxu0 0.0
    %6955 = vmatpush1.msra.mxu0 %v6441
    %6956 = vmatprep.subr.mxu0 0.0
    %6957 = vmatpush1.msra.mxu0 %v6442
    %6958 = vmatprep.subr.mxu0 0.0
    %6959 = vmatpush1.msra.mxu0 %v6443
    %6960 = vmatprep.subr.mxu0 0.0
    %6961 = vmatpush1.msra.mxu0 %v6444
    %6962 = vmatprep.subr.mxu0 0.0
    %6963 = vmatpush1.msra.mxu0 %v6445
    %6964 = vmatprep.subr.mxu0 0.0
    %6965 = vmatpush1.msra.mxu0 %v6446
    %6966 = vmatprep.subr.mxu0 0.0
    %6967 = vmatpush1.msra.mxu0 %v6447
    %6968 = vmatprep.subr.mxu0 0.0
    %6969 = vmatpush1.msra.mxu0 %v6448
    %6970 = vmatprep.subr.mxu0 0.0
    %6971 = vmatpush1.msra.mxu0 %v6449
    %6972 = vmatprep.subr.mxu0 0.0
    %6973 = vmatpush1.msra.mxu0 %v6450
    %6974 = vmatprep.mubr.f32.mxu0 %v6224
    %6975 = vmatmul.mubr.f32.gmra.mrb[0].mxu0 %v6223
    %v6976 = vpop.f32.mrb[0].mxu0
    %v6977 = vadd.f32 %v6907, %v6976
    %v6978 = vpop.f32.mrb[0].mxu0
    %6979 = vdwg.mxu0
    %6980 = vmatprep.subr.mxu0 0.0
    %6981 = vmatpush1.msra.mxu0 %v6451
    %6982 = vmatprep.subr.mxu0 0.0
    %6983 = vmatpush1.msra.mxu0 %v6452
    %6984 = vmatprep.subr.mxu0 0.0
    %6985 = vmatpush1.msra.mxu0 %v6453
    %6986 = vmatprep.subr.mxu0 0.0
    %6987 = vmatpush1.msra.mxu0 %v6454
    %6988 = vmatprep.subr.mxu0 0.0
    %6989 = vmatpush1.msra.mxu0 %v6455
    %6990 = vmatprep.subr.mxu0 0.0
    %6991 = vmatpush1.msra.mxu0 %v6456
    %6992 = vmatprep.subr.mxu0 0.0
    %6993 = vmatpush1.msra.mxu0 %v6457
    %6994 = vmatprep.subr.mxu0 0.0
    %6995 = vmatpush1.msra.mxu0 %v6458
    %6996 = vmatprep.subr.mxu0 0.0
    %6997 = vmatpush1.msra.mxu0 %v6459
    %6998 = vmatprep.subr.mxu0 0.0
    %6999 = vmatpush1.msra.mxu0 %v6460
    %7000 = vmatprep.subr.mxu0 0.0
    %7001 = vmatpush1.msra.mxu0 %v6461
    %7002 = vmatprep.subr.mxu0 0.0
    %7003 = vmatpush1.msra.mxu0 %v6462
    %7004 = vmatprep.subr.mxu0 0.0
    %7005 = vmatpush1.msra.mxu0 %v6463
    %7006 = vmatprep.subr.mxu0 0.0
    %7007 = vmatpush1.msra.mxu0 %v6464
    %7008 = vmatprep.subr.mxu0 0.0
    %7009 = vmatpush1.msra.mxu0 %v6465
    %7010 = vmatprep.subr.mxu0 0.0
    %7011 = vmatpush1.msra.mxu0 %v6466
    %7012 = vmatprep.subr.mxu0 0.0
    %7013 = vmatpush1.msra.mxu0 %v6467
    %7014 = vmatprep.subr.mxu0 0.0
    %7015 = vmatpush1.msra.mxu0 %v6468
    %7016 = vmatprep.subr.mxu0 0.0
    %7017 = vmatpush1.msra.mxu0 %v6469
    %7018 = vmatprep.subr.mxu0 0.0
    %7019 = vmatpush1.msra.mxu0 %v6470
    %7020 = vmatprep.subr.mxu0 0.0
    %7021 = vmatpush1.msra.mxu0 %v6471
    %7022 = vmatprep.subr.mxu0 0.0
    %7023 = vmatpush1.msra.mxu0 %v6472
    %7024 = vmatprep.subr.mxu0 0.0
    %7025 = vmatpush1.msra.mxu0 %v6473
    %7026 = vmatprep.subr.mxu0 0.0
    %7027 = vmatpush1.msra.mxu0 %v6474
    %7028 = vmatprep.subr.mxu0 0.0
    %7029 = vmatpush1.msra.mxu0 %v6475
    %7030 = vmatprep.subr.mxu0 0.0
    %7031 = vmatpush1.msra.mxu0 %v6476
    %7032 = vmatprep.subr.mxu0 0.0
    %7033 = vmatpush1.msra.mxu0 %v6477
    %7034 = vmatprep.subr.mxu0 0.0
    %7035 = vmatpush1.msra.mxu0 %v6478
    %7036 = vmatprep.subr.mxu0 0.0
    %7037 = vmatpush1.msra.mxu0 %v6479
    %7038 = vmatprep.subr.mxu0 0.0
    %7039 = vmatpush1.msra.mxu0 %v6480
    %7040 = vmatprep.subr.mxu0 0.0
    %7041 = vmatpush1.msra.mxu0 %v6481
    %7042 = vmatprep.subr.mxu0 0.0
    %7043 = vmatpush1.msra.mxu0 %v6482
    %7044 = vmatprep.mubr.f32.mxu0 %v6226
    %7045 = vmatmul.mubr.f32.gmra.mrb[0].mxu0 %v6225
    %v7046 = vpop.f32.mrb[0].mxu0
    %v7047 = vadd.f32 %v6977, %v7046
    %v7048 = vpop.f32.mrb[0].mxu0
    %7049 = vdwg.mxu0
    %vm7050 = vcmask 254976
    %7051 = vst.msk [vmem:[#allocation8] sm:$0x3] %vm7050, %v7047
    // Predicated region
    $region34: #{model_forward.1} parent=1 // pred_check
      _
    $region35: #{model_forward.1} parent=1 // pred_check_branch
      %7053 = sbr.rel (0) target = $region37
    $region36: #{model_forward.1} parent=1 // pred_region
      %s7055 = ssub.s32 32, 32
      %7056 = vsyncadd [#allocation4], %s7055
      %s7058 = sshll.u32 [#allocation8], 4
      %s7059 = int_to_ptr.vmem [resolvable:$true] %s7058
      %7061 = dma.vmem_to_hbm [thread:$0]  %s7059, 32, %s5, [#allocation4]
    $region37: #{model_forward.1} parent=1 // pred_fallthru
      _
    // Predicated region
    $region38: #{model_forward.1} parent=1 // pred_check
      _
    $region39: #{model_forward.1} parent=1 // pred_check_branch
      %7063 = sbr.rel (0) target = $region41
    $region40: #{model_forward.1} parent=1 // pred_region
      %7064 = dma.done [#allocation4], 32
    $region41: #{model_forward.1} parent=1 // pred_fallthru
      _
    %7065 = vsyncpa [#allocation3], 1
    %7066 = vsyncpa [#allocation6], 1
    %7067 = vsyncpa [#allocation4], 1

</llo_original>
